<compile_context>
chip_gen: v7x
topology: tpu7x:2x2x1
jax: 0.10.0
libtpu: 0.0.40
codegen_flags: <defaults>
</compile_context>

<pallas_src>
import math

import jax
import jax.numpy as jnp
from jax import lax
from jax.experimental import pallas as pl
from jax.experimental.pallas import tpu as pltpu

DIM_H = 60        # logical dim_ote_h
DIM_2H = 120      # logical 2 * dim_ote_h
DIM_OTE_Y = 4
DIM_TS_Y = 7
D_BERT = 768

HP = 64           # padded hidden per direction
HP2 = 128         # padded 2 * hidden (lane-dense)
HP3 = 192         # padded 3 gates per direction

_VMEM = pl.BlockSpec(memory_space=pltpu.MemorySpace.VMEM)


# ----------------------------------------------------------------------------
# Kernels
# ----------------------------------------------------------------------------
def _proj_kernel(x_ref, w_ref, b_ref, o_ref):
    """y = x @ W + b (row-chunked, gridded; used for the hoisted GRU-ote input proj)."""
    o_ref[...] = (jnp.dot(x_ref[...], w_ref[...],
                          preferred_element_type=jnp.float32) + b_ref[...])


def _proj_split_kernel(x_ref, w_ref, b_ref, xp_ref, stm_ref):
    """One matmul computing [gru_ts input projection | stm_lm] from ote_hs."""
    y = (jnp.dot(x_ref[...], w_ref[...], preferred_element_type=jnp.float32)
         + b_ref[...])
    xp_ref[...] = y[:, :2 * HP3]
    stm_ref[...] = y[:, 2 * HP3:]


def _gru_cell(xp, h, wh, bhn):
    """One GRU step.  xp: (B, 3*HP) pre-projected input (biases for r/z folded in)."""
    hp = jnp.dot(h, wh, preferred_element_type=jnp.float32)          # (B, 3*HP)
    r = jax.nn.sigmoid(xp[:, 0:HP] + hp[:, 0:HP])
    z = jax.nn.sigmoid(xp[:, HP:2 * HP] + hp[:, HP:2 * HP])
    n = jnp.tanh(xp[:, 2 * HP:3 * HP] + r * (hp[:, 2 * HP:3 * HP] + bhn))
    return (1.0 - z) * n + z * h


def _bidir_gru(xp_ref, whf, whb, bhnf, bhnb, dst_ref, T, B, unroll):
    """Interleaved fwd/bwd GRU recurrence writing into dst_ref (T, B, HP2)."""
    def step(t, carry):
        h_f, h_b = carry
        tb = T - 1 - t
        xf = xp_ref[t]                                 # (B, 2*HP3)
        xb = xp_ref[tb]
        h_f = _gru_cell(xf[:, :HP3], h_f, whf, bhnf)
        h_b = _gru_cell(xb[:, HP3:], h_b, whb, bhnb)
        dst_ref[t, :, 0:HP] = h_f
        dst_ref[tb, :, HP:HP2] = h_b
        return (h_f, h_b)

    h0 = jnp.zeros((B, HP), jnp.float32)
    lax.fori_loop(0, T, step, (h0, h0), unroll=unroll)


def _gru_ote_kernel(xp_ref, whf_ref, whb_ref, bhnf_ref, bhnb_ref, out_ref):
    T, B = xp_ref.shape[0], xp_ref.shape[1]
    _bidir_gru(xp_ref, whf_ref[...], whb_ref[...], bhnf_ref[...], bhnb_ref[...],
               out_ref, T, B, unroll=(T <= 32))


def _gru_ts_gate_kernel(xp_ref, whf_ref, whb_ref, bhnf_ref, bhnb_ref, wg_ref,
                        out_ref, hbuf_ref, g_ref):
    """gru_ts recurrence + hoisted gate matmul + gated temporal fuse (h~)."""
    T, B = xp_ref.shape[0], xp_ref.shape[1]
    unroll = T <= 32

    # 1) bidirectional recurrence into VMEM scratch
    _bidir_gru(xp_ref, whf_ref[...], whb_ref[...], bhnf_ref[...], bhnb_ref[...],
               hbuf_ref, T, B, unroll)

    # 2) gate matmul hoisted off the serial chain: g_t = sigmoid(h_t @ W_gate)
    wg = wg_ref[...]

    def gmm(t, c):
        g_ref[t] = jax.nn.sigmoid(
            jnp.dot(hbuf_ref[t], wg, preferred_element_type=jnp.float32))
        return c

    lax.fori_loop(0, T, gmm, 0, unroll=unroll)

    # 3) cheap element-wise scan: h~_t = g_t*h_t + (1-g_t)*h~_{t-1}
    h0 = hbuf_ref[0]
    out_ref[0] = h0

    def blend(t, carry):
        h_t = hbuf_ref[t]
        g = g_ref[t]
        h_tilde = g * h_t + (1.0 - g) * carry
        out_ref[t] = h_tilde
        return h_tilde

    lax.fori_loop(1, T, blend, h0, unroll=unroll)


def _tail_kernel(stm_lm_ref, tst_ref, wts_ref, bts_ref, wote_ref, bote_ref,
                 wfts_ref, bfts_ref, trans_ref, ote_out_ref, tst_out_ref):
    """Fused per-token tail: stm_ts, fc_ote, fc_ts, softmax + GINI + transition blend."""
    stm_ts = (jnp.dot(tst_ref[...], wts_ref[...],
                      preferred_element_type=jnp.float32) + bts_ref[...])
    p_ote = (jnp.dot(stm_lm_ref[...], wote_ref[...],
                     preferred_element_type=jnp.float32) + bote_ref[...])     # (rc, 4)
    p_ts = (jnp.dot(stm_ts, wfts_ref[...],
                    preferred_element_type=jnp.float32) + bfts_ref[...])      # (rc, 7)

    def _softmax(x):
        m = jnp.max(x, axis=-1, keepdims=True)
        e = jnp.exp(x - m)
        return e * pl.reciprocal(jnp.sum(e, axis=-1, keepdims=True), approx=True)

    ote_soft = _softmax(p_ote)
    ts_soft = _softmax(p_ts)
    alpha = (1.0 - jnp.sum(ote_soft * ote_soft, axis=-1, keepdims=True)) * 0.5

    # (N,4) x (4,7) contraction with raw ote logits (matches the PyTorch reference);
    # K=4 is tiny, unrolled as VPU broadcasts.
    trans = trans_ref[...]
    ote2ts = jnp.zeros_like(p_ts)
    for k in range(DIM_OTE_Y):
        ote2ts = ote2ts + p_ote[:, k:k + 1] * trans[k:k + 1, :]

    ote_out_ref[...] = p_ote
    tst_out_ref[...] = alpha * ote2ts + (1.0 - alpha) * ts_soft


# ----------------------------------------------------------------------------
# pallas_call wrappers
# ----------------------------------------------------------------------------
def _row_block(n, max_rows=512):
    """Largest row-chunk <= max_rows that is a multiple of 8 and divides n."""
    if n <= max_rows:
        return n
    for rc in range(max_rows - max_rows % 8, 7, -8):
        if n % rc == 0:
            return rc
    return n


def _call_proj(x, w, b):
    n, d_in = x.shape
    d_out = w.shape[1]
    rc = _row_block(n)
    return pl.pallas_call(
        _proj_kernel,
        out_shape=jax.ShapeDtypeStruct((n, d_out), jnp.float32),
        grid=(n // rc,),
        in_specs=[pl.BlockSpec((rc, d_in), lambda i: (i, 0)),
                  pl.BlockSpec((d_in, d_out), lambda i: (0, 0)),
                  pl.BlockSpec((1, d_out), lambda i: (0, 0))],
        out_specs=pl.BlockSpec((rc, d_out), lambda i: (i, 0)),
        compiler_params=pltpu.CompilerParams(dimension_semantics=("parallel",)),
    )(x, w, b)


def _call_proj_split(x, w, b):
    n = x.shape[0]
    d_out = w.shape[1]
    rc = _row_block(n)
    return pl.pallas_call(
        _proj_split_kernel,
        out_shape=(jax.ShapeDtypeStruct((n, 2 * HP3), jnp.float32),
                   jax.ShapeDtypeStruct((n, HP2), jnp.float32)),
        grid=(n // rc,),
        in_specs=[pl.BlockSpec((rc, HP2), lambda i: (i, 0)),
                  pl.BlockSpec((HP2, d_out), lambda i: (0, 0)),
                  pl.BlockSpec((1, d_out), lambda i: (0, 0))],
        out_specs=(pl.BlockSpec((rc, 2 * HP3), lambda i: (i, 0)),
                   pl.BlockSpec((rc, HP2), lambda i: (i, 0))),
        compiler_params=pltpu.CompilerParams(dimension_semantics=("parallel",)),
    )(x, w, b)


def _call_gru_ote(xp_tbd, wh_f, wh_b, bhn_f, bhn_b):
    T, B, _ = xp_tbd.shape
    return pl.pallas_call(
        _gru_ote_kernel,
        out_shape=jax.ShapeDtypeStruct((T, B, HP2), jnp.float32),
        in_specs=[_VMEM] * 5,
        out_specs=_VMEM,
        compiler_params=pltpu.CompilerParams(vmem_limit_bytes=48 * 1024 * 1024),
    )(xp_tbd, wh_f, wh_b, bhn_f, bhn_b)


def _call_gru_ts(xp_tbd, wh_f, wh_b, bhn_f, bhn_b, w_gate):
    T, B, _ = xp_tbd.shape
    return pl.pallas_call(
        _gru_ts_gate_kernel,
        out_shape=jax.ShapeDtypeStruct((T, B, HP2), jnp.float32),
        in_specs=[_VMEM] * 6,
        out_specs=_VMEM,
        scratch_shapes=[pltpu.VMEM((T, B, HP2), jnp.float32),
                        pltpu.VMEM((T, B, HP2), jnp.float32)],
        compiler_params=pltpu.CompilerParams(vmem_limit_bytes=48 * 1024 * 1024),
    )(xp_tbd, wh_f, wh_b, bhn_f, bhn_b, w_gate)


def _call_tail(stm_lm_hs, ts_tilde, p):
    n = stm_lm_hs.shape[0]
    rc = _row_block(n)
    return pl.pallas_call(
        _tail_kernel,
        out_shape=(jax.ShapeDtypeStruct((n, DIM_OTE_Y), jnp.float32),
                   jax.ShapeDtypeStruct((n, DIM_TS_Y), jnp.float32)),
        grid=(n // rc,),
        in_specs=[pl.BlockSpec((rc, HP2), lambda i: (i, 0)),
                  pl.BlockSpec((rc, HP2), lambda i: (i, 0)),
                  pl.BlockSpec((HP2, HP2), lambda i: (0, 0)),
                  pl.BlockSpec((1, HP2), lambda i: (0, 0)),
                  pl.BlockSpec((HP2, DIM_OTE_Y), lambda i: (0, 0)),
                  pl.BlockSpec((1, DIM_OTE_Y), lambda i: (0, 0)),
                  pl.BlockSpec((HP2, DIM_TS_Y), lambda i: (0, 0)),
                  pl.BlockSpec((1, DIM_TS_Y), lambda i: (0, 0)),
                  pl.BlockSpec((DIM_OTE_Y, DIM_TS_Y), lambda i: (0, 0))],
        out_specs=(pl.BlockSpec((rc, DIM_OTE_Y), lambda i: (i, 0)),
                   pl.BlockSpec((rc, DIM_TS_Y), lambda i: (i, 0))),
        compiler_params=pltpu.CompilerParams(dimension_semantics=("parallel",)),
    )(stm_lm_hs, ts_tilde, p["stm_ts_w"], p["stm_ts_b"], p["fc_ote_w"],
      p["fc_ote_b"], p["fc_ts_w"], p["fc_ts_b"], p["transition_scores"])


# ----------------------------------------------------------------------------
# Parameter init (deterministic, synthetic), with zero padding to the lane-dense
# 64/128 layout.  Logical hidden indices 0:60 (fwd) map to padded 0:60 and
# logical 60:120 (bwd) map to padded 64:124; padded rows/cols/biases are zero.
# ----------------------------------------------------------------------------
def _uniform(key, shape, bound):
    return jax.random.uniform(key, shape, jnp.float32, -bound, bound)


def _pad2(a, rows, cols):
    return jnp.pad(a, ((0, rows - a.shape[0]), (0, cols - a.shape[1])))


def _pad_hidden_rows(w):      # (120, C) -> (128, C)
    z = jnp.zeros((HP - DIM_H, w.shape[1]), jnp.float32)
    return jnp.concatenate([w[:DIM_H], z, w[DIM_H:], z], axis=0)


def _pad_hidden_cols(w):      # (R, 120) -> (R, 128)
    z = jnp.zeros((w.shape[0], HP - DIM_H), jnp.float32)
    return jnp.concatenate([w[:, :DIM_H], z, w[:, DIM_H:], z], axis=1)


def _pad_hidden_vec(b):       # (120,) -> (128,)
    z = jnp.zeros((HP - DIM_H,), jnp.float32)
    return jnp.concatenate([b[:DIM_H], z, b[DIM_H:], z])


def _init_gru_dir(key, d_in, hidden_input):
    """Fused/padded single-direction GRU params.

    Returns wi (d_in_p, 3*HP), wh (HP, 3*HP), bi (1, 3*HP) with b_hr/b_hz folded,
    bhn (1, HP).  Gate order [r | z | n].
    """
    ks = jax.random.split(key, 12)
    bound = 1.0 / math.sqrt(DIM_H)
    wir, wiz, win = (_uniform(ks[i], (d_in, DIM_H), bound) for i in range(3))
    whr, whz, whn = (_uniform(ks[3 + i], (DIM_H, DIM_H), bound) for i in range(3))
    bir, biz, bin_ = (_uniform(ks[6 + i], (DIM_H,), bound) for i in range(3))
    bhr, bhz, bhn = (_uniform(ks[9 + i], (DIM_H,), bound) for i in range(3))

    def pad_wi(w):
        if hidden_input:
            w = _pad_hidden_rows(w)                    # (128, 60)
        return _pad2(w, w.shape[0], HP)                # (d_in_p, 64)

    def pad_wh(w):
        return _pad2(w, HP, HP)                        # (64, 64)

    def pad_b(b):
        return jnp.pad(b, (0, HP - DIM_H))[None, :]    # (1, 64)

    wi = jnp.concatenate([pad_wi(wir), pad_wi(wiz), pad_wi(win)], axis=1)
    wh = jnp.concatenate([pad_wh(whr), pad_wh(whz), pad_wh(whn)], axis=1)
    bi = jnp.concatenate([pad_b(bir + bhr), pad_b(biz + bhz), pad_b(bin_)], axis=1)
    return wi, wh, bi, pad_b(bhn)


def _init_gru_bidir(key, d_in, hidden_input):
    kf, kb = jax.random.split(key)
    wi_f, wh_f, bi_f, bhn_f = _init_gru_dir(kf, d_in, hidden_input)
    wi_b, wh_b, bi_b, bhn_b = _init_gru_dir(kb, d_in, hidden_input)
    return {"wi": jnp.concatenate([wi_f, wi_b], axis=1),     # (d_in_p, 384)
            "bi": jnp.concatenate([bi_f, bi_b], axis=1),     # (1, 384)
            "wh_f": wh_f, "wh_b": wh_b, "bhn_f": bhn_f, "bhn_b": bhn_b}


def _init_linear_120(key, d_out_logical, pad_out):
    k1, k2 = jax.random.split(key)
    bound = 1.0 / math.sqrt(DIM_2H)
    w = _uniform(k1, (DIM_2H, d_out_logical), bound)
    b = _uniform(k2, (d_out_logical,), bound)
    w = _pad_hidden_rows(w)                            # (128, d_out)
    if pad_out:
        w = _pad_hidden_cols(w)                        # (128, 128)
        b = _pad_hidden_vec(b)
    return w, b[None, :]


def init_params(key):
    ks = jax.random.split(key, 8)
    p = {}
    p["gru_ote"] = _init_gru_bidir(ks[0], D_BERT, hidden_input=False)
    p["gru_ts"] = _init_gru_bidir(ks[1], DIM_2H, hidden_input=True)
    p["stm_lm_w"], p["stm_lm_b"] = _init_linear_120(ks[2], DIM_2H, pad_out=True)
    p["stm_ts_w"], p["stm_ts_b"] = _init_linear_120(ks[3], DIM_2H, pad_out=True)
    p["fc_ote_w"], p["fc_ote_b"] = _init_linear_120(ks[4], DIM_OTE_Y, pad_out=False)
    p["fc_ts_w"], p["fc_ts_b"] = _init_linear_120(ks[5], DIM_TS_Y, pad_out=False)

    xavier_bound = math.sqrt(6.0 / (DIM_2H + DIM_2H))
    wg = _uniform(ks[6], (DIM_2H, DIM_2H), xavier_bound)
    p["w_gate"] = _pad_hidden_cols(_pad_hidden_rows(wg))          # (128, 128)

    # transition_scores (4, 7) exactly as built in __init__.
    trans = jnp.zeros((DIM_OTE_Y, DIM_TS_Y), jnp.float32)
    trans = trans.at[0, 0].set(1.0)                     # O -> O
    trans = trans.at[1, 1].set(0.5).at[1, 4].set(0.5)   # B -> B-PRO / B-CON
    trans = trans.at[2, 2].set(0.5).at[2, 5].set(0.5)   # I -> I-PRO / I-CON
    trans = trans.at[3, 3].set(0.5).at[3, 6].set(0.5)   # E -> E-PRO / E-CON
    p["transition_scores"] = trans

    # fused weight for [gru_ts input projection | stm_lm]  (one matmul kernel)
    p["ts_stm_w"] = jnp.concatenate([p["gru_ts"]["wi"], p["stm_lm_w"]], axis=1)  # (128, 512)
    p["ts_stm_b"] = jnp.concatenate([p["gru_ts"]["bi"], p["stm_lm_b"]], axis=1)  # (1, 512)
    return p


# ----------------------------------------------------------------------------
# Forward
# ----------------------------------------------------------------------------
def token_indicator_forward(sequence_output, params):
    """sequence_output: (B, T, 768) float32 (BERT output; dropout = identity).

    Returns (p_y_x_ote, p_y_x_ts_tilde): CRF emission scores,
    shapes (B, T, 4) and (B, T, 7).
    """
    B, T, _ = sequence_output.shape
    n = B * T

    # 1) hoisted gru_ote input projection (fwd+bwd fused), on batch-major rows
    #    (reshape is a free bitcast); then one small transpose of the 384-wide
    #    projection to time-major rows -- the 768-wide input is never transposed.
    x_flat = sequence_output.reshape(n, D_BERT)
    xp_ote = _call_proj(x_flat, params["gru_ote"]["wi"], params["gru_ote"]["bi"])
    xp_ote_tbd = jnp.transpose(xp_ote.reshape(B, T, 2 * HP3), (1, 0, 2))     # (T,B,384)

    # 2) bidirectional GRU (ote): fwd/bwd interleaved in one serial loop
    g = params["gru_ote"]
    ote_hs = _call_gru_ote(xp_ote_tbd, g["wh_f"], g["wh_b"], g["bhn_f"], g["bhn_b"])

    # 3) fused: gru_ts input projection + stm_lm (single matmul)
    ote_flat = ote_hs.reshape(T * B, HP2)
    xp_ts, stm_lm_hs = _call_proj_split(ote_flat, params["ts_stm_w"], params["ts_stm_b"])

    # 4) gru_ts recurrence + hoisted gate matmul + gated temporal fuse (one kernel)
    gt = params["gru_ts"]
    ts_tilde = _call_gru_ts(xp_ts.reshape(T, B, 2 * HP3),
                            gt["wh_f"], gt["wh_b"], gt["bhn_f"], gt["bhn_b"],
                            params["w_gate"])                                 # (T,B,128)

    # 5) fused tail: stm_ts + fc_ote + fc_ts + softmax / GINI / transition blend
    p_ote_flat, p_ts_tilde_flat = _call_tail(
        stm_lm_hs, ts_tilde.reshape(T * B, HP2), params)

    p_y_x_ote = jnp.transpose(p_ote_flat.reshape(T, B, DIM_OTE_Y), (1, 0, 2))
    p_y_x_ts_tilde = jnp.transpose(p_ts_tilde_flat.reshape(T, B, DIM_TS_Y), (1, 0, 2))
    return p_y_x_ote, p_y_x_ts_tilde


# ----------------------------------------------------------------------------
if __name__ == "__main__":
    key = jax.random.PRNGKey(0)
    k_param, k_x = jax.random.split(key)

    B, T = 2, 8
    params = init_params(k_param)
    sequence_output = jax.random.normal(k_x, (B, T, D_BERT), dtype=jnp.float32)

    fwd = jax.jit(token_indicator_forward)
    p_ote, p_ts_tilde = fwd(sequence_output, params)
    jax.block_until_ready((p_ote, p_ts_tilde))

    assert p_ote.shape == (B, T, DIM_OTE_Y)
    assert p_ts_tilde.shape == (B, T, DIM_TS_Y)
    assert bool(jnp.all(jnp.isfinite(p_ote))) and bool(jnp.all(jnp.isfinite(p_ts_tilde)))
    print("KERNEL_OK")
</pallas_src>

<mosaic_0001>
module attributes {stable_mosaic.version = 11 : i64} {
  func.func @_proj_split_kernel(%arg0: i32, %arg1: memref<16x128xf32, #tpu.memory_space<vmem>>, %arg2: memref<128x512xf32, #tpu.memory_space<vmem>>, %arg3: memref<1x512xf32, #tpu.memory_space<vmem>>, %arg4: memref<16x384xf32, #tpu.memory_space<vmem>>, %arg5: memref<16x128xf32, #tpu.memory_space<vmem>>) attributes {dimension_semantics = [#tpu.dimension_semantics<parallel>], iteration_bounds = array<i64: 1>, scalar_prefetch = 0 : i64, scratch_operands = 0 : i64, tpu.core_type = #tpu.core_type<tc>, window_params = [{transform_indices = @transform_0, window_bounds = array<i64: 16, 128>}, {pipeline_mode = #tpu.pipeline_mode<synchronous>, transform_indices = @transform_1, window_bounds = array<i64: 128, 512>}, {pipeline_mode = #tpu.pipeline_mode<synchronous>, transform_indices = @transform_2, window_bounds = array<i64: 1, 512>}, {transform_indices = @transform_3, window_bounds = array<i64: 16, 384>}, {transform_indices = @transform_4, window_bounds = array<i64: 16, 128>}]} {
    %c0 = arith.constant 0 : index
    %c0_0 = arith.constant 0 : index
    %0 = vector.load %arg1[%c0, %c0_0] : memref<16x128xf32, #tpu.memory_space<vmem>>, vector<16x128xf32>
    %c0_1 = arith.constant 0 : index
    %c0_2 = arith.constant 0 : index
    %1 = vector.load %arg2[%c0_1, %c0_2] : memref<128x512xf32, #tpu.memory_space<vmem>>, vector<128x512xf32>
    %cst = arith.constant dense<0.000000e+00> : vector<16x512xf32>
    %2 = tpu.matmul %0, %1, %cst {dimension_numbers = #tpu.dot_dimension_numbers<[1], [0], [0], [1], [0, 0, 1, 1], [], []>} : vector<16x128xf32>, vector<128x512xf32>, vector<16x512xf32> -> vector<16x512xf32>
    %c0_3 = arith.constant 0 : index
    %c0_4 = arith.constant 0 : index
    %3 = vector.load %arg3[%c0_3, %c0_4] : memref<1x512xf32, #tpu.memory_space<vmem>>, vector<1x512xf32>
    %4 = vector.broadcast %3 : vector<1x512xf32> to vector<16x512xf32>
    %5 = arith.addf %2, %4 : vector<16x512xf32>
    %6 = vector.extract_strided_slice %5 {offsets = [0, 0], sizes = [16, 384], strides = [1, 1]} : vector<16x512xf32> to vector<16x384xf32>
    %c0_5 = arith.constant 0 : index
    %c0_6 = arith.constant 0 : index
    %7 = vector.load %arg4[%c0_5, %c0_6] : memref<16x384xf32, #tpu.memory_space<vmem>>, vector<16x384xf32>
    tpu.vector_store %arg4[%c0_5, %c0_6], %6 {strides = array<i32>} : memref<16x384xf32, #tpu.memory_space<vmem>>, vector<16x384xf32>,
    %8 = vector.extract_strided_slice %5 {offsets = [0, 384], sizes = [16, 128], strides = [1, 1]} : vector<16x512xf32> to vector<16x128xf32>
    %c0_7 = arith.constant 0 : index
    %c0_8 = arith.constant 0 : index
    %9 = vector.load %arg5[%c0_7, %c0_8] : memref<16x128xf32, #tpu.memory_space<vmem>>, vector<16x128xf32>
    tpu.vector_store %arg5[%c0_7, %c0_8], %8 {strides = array<i32>} : memref<16x128xf32, #tpu.memory_space<vmem>>, vector<16x128xf32>,
    return
  }
  func.func @transform_0(%arg0: i32) -> (i32, i32) {
    %c0_i32 = arith.constant 0 : i32
    %c0_i32_0 = arith.constant 0 : i32
    return %arg0, %c0_i32 : i32, i32
  }
  func.func @transform_1(%arg0: i32) -> (i32, i32) {
    %c0_i32 = arith.constant 0 : i32
    %c0_i32_0 = arith.constant 0 : i32
    %c0_i32_1 = arith.constant 0 : i32
    return %c0_i32, %c0_i32_0 : i32, i32
  }
  func.func @transform_2(%arg0: i32) -> (i32, i32) {
    %c0_i32 = arith.constant 0 : i32
    %c0_i32_0 = arith.constant 0 : i32
    %c0_i32_1 = arith.constant 0 : i32
    return %c0_i32, %c0_i32_0 : i32, i32
  }
  func.func @transform_3(%arg0: i32) -> (i32, i32) {
    %c0_i32 = arith.constant 0 : i32
    %c0_i32_0 = arith.constant 0 : i32
    return %arg0, %c0_i32 : i32, i32
  }
  func.func @transform_4(%arg0: i32) -> (i32, i32) {
    %c0_i32 = arith.constant 0 : i32
    %c0_i32_0 = arith.constant 0 : i32
    return %arg0, %c0_i32 : i32, i32
  }
}

module attributes {stable_mosaic.version = 11 : i64} {
  func.func @_proj_kernel(%arg0: i32, %arg1: memref<16x768xf32, #tpu.memory_space<vmem>>, %arg2: memref<768x384xf32, #tpu.memory_space<vmem>>, %arg3: memref<1x384xf32, #tpu.memory_space<vmem>>, %arg4: memref<16x384xf32, #tpu.memory_space<vmem>>) attributes {dimension_semantics = [#tpu.dimension_semantics<parallel>], iteration_bounds = array<i64: 1>, scalar_prefetch = 0 : i64, scratch_operands = 0 : i64, tpu.core_type = #tpu.core_type<tc>, window_params = [{transform_indices = @transform_0, window_bounds = array<i64: 16, 768>}, {pipeline_mode = #tpu.pipeline_mode<synchronous>, transform_indices = @transform_1, window_bounds = array<i64: 768, 384>}, {pipeline_mode = #tpu.pipeline_mode<synchronous>, transform_indices = @transform_2, window_bounds = array<i64: 1, 384>}, {transform_indices = @transform_3, window_bounds = array<i64: 16, 384>}]} {
    %c0 = arith.constant 0 : index
    %c0_0 = arith.constant 0 : index
    %0 = vector.load %arg1[%c0, %c0_0] : memref<16x768xf32, #tpu.memory_space<vmem>>, vector<16x768xf32>
    %c0_1 = arith.constant 0 : index
    %c0_2 = arith.constant 0 : index
    %1 = vector.load %arg2[%c0_1, %c0_2] : memref<768x384xf32, #tpu.memory_space<vmem>>, vector<768x384xf32>
    %cst = arith.constant dense<0.000000e+00> : vector<16x384xf32>
    %2 = tpu.matmul %0, %1, %cst {dimension_numbers = #tpu.dot_dimension_numbers<[1], [0], [0], [1], [0, 0, 1, 1], [], []>} : vector<16x768xf32>, vector<768x384xf32>, vector<16x384xf32> -> vector<16x384xf32>
    %c0_3 = arith.constant 0 : index
    %c0_4 = arith.constant 0 : index
    %3 = vector.load %arg3[%c0_3, %c0_4] : memref<1x384xf32, #tpu.memory_space<vmem>>, vector<1x384xf32>
    %4 = vector.broadcast %3 : vector<1x384xf32> to vector<16x384xf32>
    %5 = arith.addf %2, %4 : vector<16x384xf32>
    %c0_5 = arith.constant 0 : index
    %c0_6 = arith.constant 0 : index
    %6 = vector.load %arg4[%c0_5, %c0_6] : memref<16x384xf32, #tpu.memory_space<vmem>>, vector<16x384xf32>
    tpu.vector_store %arg4[%c0_5, %c0_6], %5 {strides = array<i32>} : memref<16x384xf32, #tpu.memory_space<vmem>>, vector<16x384xf32>,
    return
  }
  func.func @transform_0(%arg0: i32) -> (i32, i32) {
    %c0_i32 = arith.constant 0 : i32
    %c0_i32_0 = arith.constant 0 : i32
    return %arg0, %c0_i32 : i32, i32
  }
  func.func @transform_1(%arg0: i32) -> (i32, i32) {
    %c0_i32 = arith.constant 0 : i32
    %c0_i32_0 = arith.constant 0 : i32
    %c0_i32_1 = arith.constant 0 : i32
    return %c0_i32, %c0_i32_0 : i32, i32
  }
  func.func @transform_2(%arg0: i32) -> (i32, i32) {
    %c0_i32 = arith.constant 0 : i32
    %c0_i32_0 = arith.constant 0 : i32
    %c0_i32_1 = arith.constant 0 : i32
    return %c0_i32, %c0_i32_0 : i32, i32
  }
  func.func @transform_3(%arg0: i32) -> (i32, i32) {
    %c0_i32 = arith.constant 0 : i32
    %c0_i32_0 = arith.constant 0 : i32
    return %arg0, %c0_i32 : i32, i32
  }
}

module attributes {stable_mosaic.version = 11 : i64} {
  func.func @_gru_ote_kernel(%arg0: memref<8x2x384xf32, #tpu.memory_space<vmem>>, %arg1: memref<64x192xf32, #tpu.memory_space<vmem>>, %arg2: memref<64x192xf32, #tpu.memory_space<vmem>>, %arg3: memref<1x64xf32, #tpu.memory_space<vmem>>, %arg4: memref<1x64xf32, #tpu.memory_space<vmem>>, %arg5: memref<8x2x128xf32, #tpu.memory_space<vmem>>) attributes {dimension_semantics = [], scalar_prefetch = 0 : i64, scratch_operands = 0 : i64, tpu.core_type = #tpu.core_type<tc>} {
    %c0 = arith.constant 0 : index
    %c0_0 = arith.constant 0 : index
    %0 = vector.load %arg1[%c0, %c0_0] : memref<64x192xf32, #tpu.memory_space<vmem>>, vector<64x192xf32>
    %c0_1 = arith.constant 0 : index
    %c0_2 = arith.constant 0 : index
    %1 = vector.load %arg2[%c0_1, %c0_2] : memref<64x192xf32, #tpu.memory_space<vmem>>, vector<64x192xf32>
    %c0_3 = arith.constant 0 : index
    %c0_4 = arith.constant 0 : index
    %2 = vector.load %arg3[%c0_3, %c0_4] : memref<1x64xf32, #tpu.memory_space<vmem>>, vector<1x64xf32>
    %c0_5 = arith.constant 0 : index
    %c0_6 = arith.constant 0 : index
    %3 = vector.load %arg4[%c0_5, %c0_6] : memref<1x64xf32, #tpu.memory_space<vmem>>, vector<1x64xf32>
    %cst = arith.constant 0.000000e+00 : f32
    %4 = vector.broadcast %cst : f32 to vector<2x64xf32>
    %c0_i32 = arith.constant 0 : i32
    %c7_i32 = arith.constant 7 : i32
    %5 = arith.subi %c7_i32, %c0_i32 : i32
    %6 = arith.index_cast %c0_i32 : i32 to index
    %c0_7 = arith.constant 0 : index
    %c0_8 = arith.constant 0 : index
    %7 = vector.load %arg0[%6, %c0_7, %c0_8] : memref<8x2x384xf32, #tpu.memory_space<vmem>>, vector<1x2x384xf32>
    %8 = vector.shape_cast %7 : vector<1x2x384xf32> to vector<2x384xf32>
    %9 = arith.index_cast %5 : i32 to index
    %c0_9 = arith.constant 0 : index
    %c0_10 = arith.constant 0 : index
    %10 = vector.load %arg0[%9, %c0_9, %c0_10] : memref<8x2x384xf32, #tpu.memory_space<vmem>>, vector<1x2x384xf32>
    %11 = vector.shape_cast %10 : vector<1x2x384xf32> to vector<2x384xf32>
    %12 = vector.extract_strided_slice %8 {offsets = [0, 0], sizes = [2, 192], strides = [1, 1]} : vector<2x384xf32> to vector<2x192xf32>
    %cst_11 = arith.constant dense<0.000000e+00> : vector<2x192xf32>
    %13 = tpu.matmul %4, %0, %cst_11 {dimension_numbers = #tpu.dot_dimension_numbers<[1], [0], [0], [1], [0, 0, 1, 1], [], []>} : vector<2x64xf32>, vector<64x192xf32>, vector<2x192xf32> -> vector<2x192xf32>
    %14 = vector.extract_strided_slice %12 {offsets = [0, 0], sizes = [2, 64], strides = [1, 1]} : vector<2x192xf32> to vector<2x64xf32>
    %15 = vector.extract_strided_slice %13 {offsets = [0, 0], sizes = [2, 64], strides = [1, 1]} : vector<2x192xf32> to vector<2x64xf32>
    %16 = arith.addf %14, %15 : vector<2x64xf32>
    %17 = arith.negf %16 : vector<2x64xf32>
    %18 = math.exp %17 : vector<2x64xf32>
    %cst_12 = arith.constant 1.000000e+00 : f32
    %19 = vector.broadcast %cst_12 : f32 to vector<2x64xf32>
    %20 = arith.addf %19, %18 : vector<2x64xf32>
    %21 = arith.divf %19, %20 : vector<2x64xf32>
    %22 = vector.extract_strided_slice %12 {offsets = [0, 64], sizes = [2, 64], strides = [1, 1]} : vector<2x192xf32> to vector<2x64xf32>
    %23 = vector.extract_strided_slice %13 {offsets = [0, 64], sizes = [2, 64], strides = [1, 1]} : vector<2x192xf32> to vector<2x64xf32>
    %24 = arith.addf %22, %23 : vector<2x64xf32>
    %25 = arith.negf %24 : vector<2x64xf32>
    %26 = math.exp %25 : vector<2x64xf32>
    %cst_13 = arith.constant 1.000000e+00 : f32
    %27 = vector.broadcast %cst_13 : f32 to vector<2x64xf32>
    %28 = arith.addf %27, %26 : vector<2x64xf32>
    %29 = arith.divf %27, %28 : vector<2x64xf32>
    %30 = vector.extract_strided_slice %12 {offsets = [0, 128], sizes = [2, 64], strides = [1, 1]} : vector<2x192xf32> to vector<2x64xf32>
    %31 = vector.extract_strided_slice %13 {offsets = [0, 128], sizes = [2, 64], strides = [1, 1]} : vector<2x192xf32> to vector<2x64xf32>
    %32 = vector.broadcast %2 : vector<1x64xf32> to vector<2x64xf32>
    %33 = arith.addf %31, %32 : vector<2x64xf32>
    %34 = arith.mulf %21, %33 : vector<2x64xf32>
    %35 = arith.addf %30, %34 : vector<2x64xf32>
    %36 = math.tanh %35 : vector<2x64xf32>
    %cst_14 = arith.constant 1.000000e+00 : f32
    %37 = vector.broadcast %cst_14 : f32 to vector<2x64xf32>
    %38 = arith.subf %37, %29 : vector<2x64xf32>
    %39 = arith.mulf %38, %36 : vector<2x64xf32>
    %40 = arith.mulf %29, %4 : vector<2x64xf32>
    %41 = arith.addf %39, %40 : vector<2x64xf32>
    %42 = vector.extract_strided_slice %11 {offsets = [0, 192], sizes = [2, 192], strides = [1, 1]} : vector<2x384xf32> to vector<2x192xf32>
    %cst_15 = arith.constant dense<0.000000e+00> : vector<2x192xf32>
    %43 = tpu.matmul %4, %1, %cst_15 {dimension_numbers = #tpu.dot_dimension_numbers<[1], [0], [0], [1], [0, 0, 1, 1], [], []>} : vector<2x64xf32>, vector<64x192xf32>, vector<2x192xf32> -> vector<2x192xf32>
    %44 = vector.extract_strided_slice %42 {offsets = [0, 0], sizes = [2, 64], strides = [1, 1]} : vector<2x192xf32> to vector<2x64xf32>
    %45 = vector.extract_strided_slice %43 {offsets = [0, 0], sizes = [2, 64], strides = [1, 1]} : vector<2x192xf32> to vector<2x64xf32>
    %46 = arith.addf %44, %45 : vector<2x64xf32>
    %47 = arith.negf %46 : vector<2x64xf32>
    %48 = math.exp %47 : vector<2x64xf32>
    %cst_16 = arith.constant 1.000000e+00 : f32
    %49 = vector.broadcast %cst_16 : f32 to vector<2x64xf32>
    %50 = arith.addf %49, %48 : vector<2x64xf32>
    %51 = arith.divf %49, %50 : vector<2x64xf32>
    %52 = vector.extract_strided_slice %42 {offsets = [0, 64], sizes = [2, 64], strides = [1, 1]} : vector<2x192xf32> to vector<2x64xf32>
    %53 = vector.extract_strided_slice %43 {offsets = [0, 64], sizes = [2, 64], strides = [1, 1]} : vector<2x192xf32> to vector<2x64xf32>
    %54 = arith.addf %52, %53 : vector<2x64xf32>
    %55 = arith.negf %54 : vector<2x64xf32>
    %56 = math.exp %55 : vector<2x64xf32>
    %cst_17 = arith.constant 1.000000e+00 : f32
    %57 = vector.broadcast %cst_17 : f32 to vector<2x64xf32>
    %58 = arith.addf %57, %56 : vector<2x64xf32>
    %59 = arith.divf %57, %58 : vector<2x64xf32>
    %60 = vector.extract_strided_slice %42 {offsets = [0, 128], sizes = [2, 64], strides = [1, 1]} : vector<2x192xf32> to vector<2x64xf32>
    %61 = vector.extract_strided_slice %43 {offsets = [0, 128], sizes = [2, 64], strides = [1, 1]} : vector<2x192xf32> to vector<2x64xf32>
    %62 = vector.broadcast %3 : vector<1x64xf32> to vector<2x64xf32>
    %63 = arith.addf %61, %62 : vector<2x64xf32>
    %64 = arith.mulf %51, %63 : vector<2x64xf32>
    %65 = arith.addf %60, %64 : vector<2x64xf32>
    %66 = math.tanh %65 : vector<2x64xf32>
    %cst_18 = arith.constant 1.000000e+00 : f32
    %67 = vector.broadcast %cst_18 : f32 to vector<2x64xf32>
    %68 = arith.subf %67, %59 : vector<2x64xf32>
    %69 = arith.mulf %68, %66 : vector<2x64xf32>
    %70 = arith.mulf %59, %4 : vector<2x64xf32>
    %71 = arith.addf %69, %70 : vector<2x64xf32>
    %72 = arith.index_cast %c0_i32 : i32 to index
    %c0_19 = arith.constant 0 : index
    %c0_20 = arith.constant 0 : index
    %73 = vector.load %arg5[%72, %c0_19, %c0_20] : memref<8x2x128xf32, #tpu.memory_space<vmem>>, vector<1x2x64xf32>
    %74 = vector.shape_cast %73 : vector<1x2x64xf32> to vector<2x64xf32>
    %75 = vector.shape_cast %41 : vector<2x64xf32> to vector<1x2x64xf32>
    tpu.vector_store %arg5[%72, %c0_19, %c0_20], %75 {strides = array<i32>} : memref<8x2x128xf32, #tpu.memory_space<vmem>>, vector<1x2x64xf32>,
    %76 = arith.index_cast %5 : i32 to index
    %c0_21 = arith.constant 0 : index
    %c64 = arith.constant 64 : index
    %77 = vector.load %arg5[%76, %c0_21, %c64] : memref<8x2x128xf32, #tpu.memory_space<vmem>>, vector<1x2x64xf32>
    %78 = vector.shape_cast %77 : vector<1x2x64xf32> to vector<2x64xf32>
    %79 = vector.shape_cast %71 : vector<2x64xf32> to vector<1x2x64xf32>
    tpu.vector_store %arg5[%76, %c0_21, %c64], %79 {strides = array<i32>} : memref<8x2x128xf32, #tpu.memory_space<vmem>>, vector<1x2x64xf32>,
    %c1_i32 = arith.constant 1 : i32
    %c7_i32_22 = arith.constant 7 : i32
    %80 = arith.subi %c7_i32_22, %c1_i32 : i32
    %81 = arith.index_cast %c1_i32 : i32 to index
    %c0_23 = arith.constant 0 : index
    %c0_24 = arith.constant 0 : index
    %82 = vector.load %arg0[%81, %c0_23, %c0_24] : memref<8x2x384xf32, #tpu.memory_space<vmem>>, vector<1x2x384xf32>
    %83 = vector.shape_cast %82 : vector<1x2x384xf32> to vector<2x384xf32>
    %84 = arith.index_cast %80 : i32 to index
    %c0_25 = arith.constant 0 : index
    %c0_26 = arith.constant 0 : index
    %85 = vector.load %arg0[%84, %c0_25, %c0_26] : memref<8x2x384xf32, #tpu.memory_space<vmem>>, vector<1x2x384xf32>
    %86 = vector.shape_cast %85 : vector<1x2x384xf32> to vector<2x384xf32>
    %87 = vector.extract_strided_slice %83 {offsets = [0, 0], sizes = [2, 192], strides = [1, 1]} : vector<2x384xf32> to vector<2x192xf32>
    %cst_27 = arith.constant dense<0.000000e+00> : vector<2x192xf32>
    %88 = tpu.matmul %41, %0, %cst_27 {dimension_numbers = #tpu.dot_dimension_numbers<[1], [0], [0], [1], [0, 0, 1, 1], [], []>} : vector<2x64xf32>, vector<64x192xf32>, vector<2x192xf32> -> vector<2x192xf32>
    %89 = vector.extract_strided_slice %87 {offsets = [0, 0], sizes = [2, 64], strides = [1, 1]} : vector<2x192xf32> to vector<2x64xf32>
    %90 = vector.extract_strided_slice %88 {offsets = [0, 0], sizes = [2, 64], strides = [1, 1]} : vector<2x192xf32> to vector<2x64xf32>
    %91 = arith.addf %89, %90 : vector<2x64xf32>
    %92 = arith.negf %91 : vector<2x64xf32>
    %93 = math.exp %92 : vector<2x64xf32>
    %cst_28 = arith.constant 1.000000e+00 : f32
    %94 = vector.broadcast %cst_28 : f32 to vector<2x64xf32>
    %95 = arith.addf %94, %93 : vector<2x64xf32>
    %96 = arith.divf %94, %95 : vector<2x64xf32>
    %97 = vector.extract_strided_slice %87 {offsets = [0, 64], sizes = [2, 64], strides = [1, 1]} : vector<2x192xf32> to vector<2x64xf32>
    %98 = vector.extract_strided_slice %88 {offsets = [0, 64], sizes = [2, 64], strides = [1, 1]} : vector<2x192xf32> to vector<2x64xf32>
    %99 = arith.addf %97, %98 : vector<2x64xf32>
    %100 = arith.negf %99 : vector<2x64xf32>
    %101 = math.exp %100 : vector<2x64xf32>
    %cst_29 = arith.constant 1.000000e+00 : f32
    %102 = vector.broadcast %cst_29 : f32 to vector<2x64xf32>
    %103 = arith.addf %102, %101 : vector<2x64xf32>
    %104 = arith.divf %102, %103 : vector<2x64xf32>
    %105 = vector.extract_strided_slice %87 {offsets = [0, 128], sizes = [2, 64], strides = [1, 1]} : vector<2x192xf32> to vector<2x64xf32>
    %106 = vector.extract_strided_slice %88 {offsets = [0, 128], sizes = [2, 64], strides = [1, 1]} : vector<2x192xf32> to vector<2x64xf32>
    %107 = vector.broadcast %2 : vector<1x64xf32> to vector<2x64xf32>
    %108 = arith.addf %106, %107 : vector<2x64xf32>
    %109 = arith.mulf %96, %108 : vector<2x64xf32>
    %110 = arith.addf %105, %109 : vector<2x64xf32>
    %111 = math.tanh %110 : vector<2x64xf32>
    %cst_30 = arith.constant 1.000000e+00 : f32
    %112 = vector.broadcast %cst_30 : f32 to vector<2x64xf32>
    %113 = arith.subf %112, %104 : vector<2x64xf32>
    %114 = arith.mulf %113, %111 : vector<2x64xf32>
    %115 = arith.mulf %104, %41 : vector<2x64xf32>
    %116 = arith.addf %114, %115 : vector<2x64xf32>
    %117 = vector.extract_strided_slice %86 {offsets = [0, 192], sizes = [2, 192], strides = [1, 1]} : vector<2x384xf32> to vector<2x192xf32>
    %cst_31 = arith.constant dense<0.000000e+00> : vector<2x192xf32>
    %118 = tpu.matmul %71, %1, %cst_31 {dimension_numbers = #tpu.dot_dimension_numbers<[1], [0], [0], [1], [0, 0, 1, 1], [], []>} : vector<2x64xf32>, vector<64x192xf32>, vector<2x192xf32> -> vector<2x192xf32>
    %119 = vector.extract_strided_slice %117 {offsets = [0, 0], sizes = [2, 64], strides = [1, 1]} : vector<2x192xf32> to vector<2x64xf32>
    %120 = vector.extract_strided_slice %118 {offsets = [0, 0], sizes = [2, 64], strides = [1, 1]} : vector<2x192xf32> to vector<2x64xf32>
    %121 = arith.addf %119, %120 : vector<2x64xf32>
    %122 = arith.negf %121 : vector<2x64xf32>
    %123 = math.exp %122 : vector<2x64xf32>
    %cst_32 = arith.constant 1.000000e+00 : f32
    %124 = vector.broadcast %cst_32 : f32 to vector<2x64xf32>
    %125 = arith.addf %124, %123 : vector<2x64xf32>
    %126 = arith.divf %124, %125 : vector<2x64xf32>
    %127 = vector.extract_strided_slice %117 {offsets = [0, 64], sizes = [2, 64], strides = [1, 1]} : vector<2x192xf32> to vector<2x64xf32>
    %128 = vector.extract_strided_slice %118 {offsets = [0, 64], sizes = [2, 64], strides = [1, 1]} : vector<2x192xf32> to vector<2x64xf32>
    %129 = arith.addf %127, %128 : vector<2x64xf32>
    %130 = arith.negf %129 : vector<2x64xf32>
    %131 = math.exp %130 : vector<2x64xf32>
    %cst_33 = arith.constant 1.000000e+00 : f32
    %132 = vector.broadcast %cst_33 : f32 to vector<2x64xf32>
    %133 = arith.addf %132, %131 : vector<2x64xf32>
    %134 = arith.divf %132, %133 : vector<2x64xf32>
    %135 = vector.extract_strided_slice %117 {offsets = [0, 128], sizes = [2, 64], strides = [1, 1]} : vector<2x192xf32> to vector<2x64xf32>
    %136 = vector.extract_strided_slice %118 {offsets = [0, 128], sizes = [2, 64], strides = [1, 1]} : vector<2x192xf32> to vector<2x64xf32>
    %137 = vector.broadcast %3 : vector<1x64xf32> to vector<2x64xf32>
    %138 = arith.addf %136, %137 : vector<2x64xf32>
    %139 = arith.mulf %126, %138 : vector<2x64xf32>
    %140 = arith.addf %135, %139 : vector<2x64xf32>
    %141 = math.tanh %140 : vector<2x64xf32>
    %cst_34 = arith.constant 1.000000e+00 : f32
    %142 = vector.broadcast %cst_34 : f32 to vector<2x64xf32>
    %143 = arith.subf %142, %134 : vector<2x64xf32>
    %144 = arith.mulf %143, %141 : vector<2x64xf32>
    %145 = arith.mulf %134, %71 : vector<2x64xf32>
    %146 = arith.addf %144, %145 : vector<2x64xf32>
    %147 = arith.index_cast %c1_i32 : i32 to index
    %c0_35 = arith.constant 0 : index
    %c0_36 = arith.constant 0 : index
    %148 = vector.load %arg5[%147, %c0_35, %c0_36] : memref<8x2x128xf32, #tpu.memory_space<vmem>>, vector<1x2x64xf32>
    %149 = vector.shape_cast %148 : vector<1x2x64xf32> to vector<2x64xf32>
    %150 = vector.shape_cast %116 : vector<2x64xf32> to vector<1x2x64xf32>
    tpu.vector_store %arg5[%147, %c0_35, %c0_36], %150 {strides = array<i32>} : memref<8x2x128xf32, #tpu.memory_space<vmem>>, vector<1x2x64xf32>,
    %151 = arith.index_cast %80 : i32 to index
    %c0_37 = arith.constant 0 : index
    %c64_38 = arith.constant 64 : index
    %152 = vector.load %arg5[%151, %c0_37, %c64_38] : memref<8x2x128xf32, #tpu.memory_space<vmem>>, vector<1x2x64xf32>
    %153 = vector.shape_cast %152 : vector<1x2x64xf32> to vector<2x64xf32>
    %154 = vector.shape_cast %146 : vector<2x64xf32> to vector<1x2x64xf32>
    tpu.vector_store %arg5[%151, %c0_37, %c64_38], %154 {strides = array<i32>} : memref<8x2x128xf32, #tpu.memory_space<vmem>>, vector<1x2x64xf32>,
    %c2_i32 = arith.constant 2 : i32
    %c7_i32_39 = arith.constant 7 : i32
    %155 = arith.subi %c7_i32_39, %c2_i32 : i32
    %156 = arith.index_cast %c2_i32 : i32 to index
    %c0_40 = arith.constant 0 : index
    %c0_41 = arith.constant 0 : index
    %157 = vector.load %arg0[%156, %c0_40, %c0_41] : memref<8x2x384xf32, #tpu.memory_space<vmem>>, vector<1x2x384xf32>
    %158 = vector.shape_cast %157 : vector<1x2x384xf32> to vector<2x384xf32>
    %159 = arith.index_cast %155 : i32 to index
    %c0_42 = arith.constant 0 : index
    %c0_43 = arith.constant 0 : index
    %160 = vector.load %arg0[%159, %c0_42, %c0_43] : memref<8x2x384xf32, #tpu.memory_space<vmem>>, vector<1x2x384xf32>
    %161 = vector.shape_cast %160 : vector<1x2x384xf32> to vector<2x384xf32>
    %162 = vector.extract_strided_slice %158 {offsets = [0, 0], sizes = [2, 192], strides = [1, 1]} : vector<2x384xf32> to vector<2x192xf32>
    %cst_44 = arith.constant dense<0.000000e+00> : vector<2x192xf32>
    %163 = tpu.matmul %116, %0, %cst_44 {dimension_numbers = #tpu.dot_dimension_numbers<[1], [0], [0], [1], [0, 0, 1, 1], [], []>} : vector<2x64xf32>, vector<64x192xf32>, vector<2x192xf32> -> vector<2x192xf32>
    %164 = vector.extract_strided_slice %162 {offsets = [0, 0], sizes = [2, 64], strides = [1, 1]} : vector<2x192xf32> to vector<2x64xf32>
    %165 = vector.extract_strided_slice %163 {offsets = [0, 0], sizes = [2, 64], strides = [1, 1]} : vector<2x192xf32> to vector<2x64xf32>
    %166 = arith.addf %164, %165 : vector<2x64xf32>
    %167 = arith.negf %166 : vector<2x64xf32>
    %168 = math.exp %167 : vector<2x64xf32>
    %cst_45 = arith.constant 1.000000e+00 : f32
    %169 = vector.broadcast %cst_45 : f32 to vector<2x64xf32>
    %170 = arith.addf %169, %168 : vector<2x64xf32>
    %171 = arith.divf %169, %170 : vector<2x64xf32>
    %172 = vector.extract_strided_slice %162 {offsets = [0, 64], sizes = [2, 64], strides = [1, 1]} : vector<2x192xf32> to vector<2x64xf32>
    %173 = vector.extract_strided_slice %163 {offsets = [0, 64], sizes = [2, 64], strides = [1, 1]} : vector<2x192xf32> to vector<2x64xf32>
    %174 = arith.addf %172, %173 : vector<2x64xf32>
    %175 = arith.negf %174 : vector<2x64xf32>
    %176 = math.exp %175 : vector<2x64xf32>
    %cst_46 = arith.constant 1.000000e+00 : f32
    %177 = vector.broadcast %cst_46 : f32 to vector<2x64xf32>
    %178 = arith.addf %177, %176 : vector<2x64xf32>
    %179 = arith.divf %177, %178 : vector<2x64xf32>
    %180 = vector.extract_strided_slice %162 {offsets = [0, 128], sizes = [2, 64], strides = [1, 1]} : vector<2x192xf32> to vector<2x64xf32>
    %181 = vector.extract_strided_slice %163 {offsets = [0, 128], sizes = [2, 64], strides = [1, 1]} : vector<2x192xf32> to vector<2x64xf32>
    %182 = vector.broadcast %2 : vector<1x64xf32> to vector<2x64xf32>
    %183 = arith.addf %181, %182 : vector<2x64xf32>
    %184 = arith.mulf %171, %183 : vector<2x64xf32>
    %185 = arith.addf %180, %184 : vector<2x64xf32>
    %186 = math.tanh %185 : vector<2x64xf32>
    %cst_47 = arith.constant 1.000000e+00 : f32
    %187 = vector.broadcast %cst_47 : f32 to vector<2x64xf32>
    %188 = arith.subf %187, %179 : vector<2x64xf32>
    %189 = arith.mulf %188, %186 : vector<2x64xf32>
    %190 = arith.mulf %179, %116 : vector<2x64xf32>
    %191 = arith.addf %189, %190 : vector<2x64xf32>
    %192 = vector.extract_strided_slice %161 {offsets = [0, 192], sizes = [2, 192], strides = [1, 1]} : vector<2x384xf32> to vector<2x192xf32>
    %cst_48 = arith.constant dense<0.000000e+00> : vector<2x192xf32>
    %193 = tpu.matmul %146, %1, %cst_48 {dimension_numbers = #tpu.dot_dimension_numbers<[1], [0], [0], [1], [0, 0, 1, 1], [], []>} : vector<2x64xf32>, vector<64x192xf32>, vector<2x192xf32> -> vector<2x192xf32>
    %194 = vector.extract_strided_slice %192 {offsets = [0, 0], sizes = [2, 64], strides = [1, 1]} : vector<2x192xf32> to vector<2x64xf32>
    %195 = vector.extract_strided_slice %193 {offsets = [0, 0], sizes = [2, 64], strides = [1, 1]} : vector<2x192xf32> to vector<2x64xf32>
    %196 = arith.addf %194, %195 : vector<2x64xf32>
    %197 = arith.negf %196 : vector<2x64xf32>
    %198 = math.exp %197 : vector<2x64xf32>
    %cst_49 = arith.constant 1.000000e+00 : f32
    %199 = vector.broadcast %cst_49 : f32 to vector<2x64xf32>
    %200 = arith.addf %199, %198 : vector<2x64xf32>
    %201 = arith.divf %199, %200 : vector<2x64xf32>
    %202 = vector.extract_strided_slice %192 {offsets = [0, 64], sizes = [2, 64], strides = [1, 1]} : vector<2x192xf32> to vector<2x64xf32>
    %203 = vector.extract_strided_slice %193 {offsets = [0, 64], sizes = [2, 64], strides = [1, 1]} : vector<2x192xf32> to vector<2x64xf32>
    %204 = arith.addf %202, %203 : vector<2x64xf32>
    %205 = arith.negf %204 : vector<2x64xf32>
    %206 = math.exp %205 : vector<2x64xf32>
    %cst_50 = arith.constant 1.000000e+00 : f32
    %207 = vector.broadcast %cst_50 : f32 to vector<2x64xf32>
    %208 = arith.addf %207, %206 : vector<2x64xf32>
    %209 = arith.divf %207, %208 : vector<2x64xf32>
    %210 = vector.extract_strided_slice %192 {offsets = [0, 128], sizes = [2, 64], strides = [1, 1]} : vector<2x192xf32> to vector<2x64xf32>
    %211 = vector.extract_strided_slice %193 {offsets = [0, 128], sizes = [2, 64], strides = [1, 1]} : vector<2x192xf32> to vector<2x64xf32>
    %212 = vector.broadcast %3 : vector<1x64xf32> to vector<2x64xf32>
    %213 = arith.addf %211, %212 : vector<2x64xf32>
    %214 = arith.mulf %201, %213 : vector<2x64xf32>
    %215 = arith.addf %210, %214 : vector<2x64xf32>
    %216 = math.tanh %215 : vector<2x64xf32>
    %cst_51 = arith.constant 1.000000e+00 : f32
    %217 = vector.broadcast %cst_51 : f32 to vector<2x64xf32>
    %218 = arith.subf %217, %209 : vector<2x64xf32>
    %219 = arith.mulf %218, %216 : vector<2x64xf32>
    %220 = arith.mulf %209, %146 : vector<2x64xf32>
    %221 = arith.addf %219, %220 : vector<2x64xf32>
    %222 = arith.index_cast %c2_i32 : i32 to index
    %c0_52 = arith.constant 0 : index
    %c0_53 = arith.constant 0 : index
    %223 = vector.load %arg5[%222, %c0_52, %c0_53] : memref<8x2x128xf32, #tpu.memory_space<vmem>>, vector<1x2x64xf32>
    %224 = vector.shape_cast %223 : vector<1x2x64xf32> to vector<2x64xf32>
    %225 = vector.shape_cast %191 : vector<2x64xf32> to vector<1x2x64xf32>
    tpu.vector_store %arg5[%222, %c0_52, %c0_53], %225 {strides = array<i32>} : memref<8x2x128xf32, #tpu.memory_space<vmem>>, vector<1x2x64xf32>,
    %226 = arith.index_cast %155 : i32 to index
    %c0_54 = arith.constant 0 : index
    %c64_55 = arith.constant 64 : index
    %227 = vector.load %arg5[%226, %c0_54, %c64_55] : memref<8x2x128xf32, #tpu.memory_space<vmem>>, vector<1x2x64xf32>
    %228 = vector.shape_cast %227 : vector<1x2x64xf32> to vector<2x64xf32>
    %229 = vector.shape_cast %221 : vector<2x64xf32> to vector<1x2x64xf32>
    tpu.vector_store %arg5[%226, %c0_54, %c64_55], %229 {strides = array<i32>} : memref<8x2x128xf32, #tpu.memory_space<vmem>>, vector<1x2x64xf32>,
    %c3_i32 = arith.constant 3 : i32
    %c7_i32_56 = arith.constant 7 : i32
    %230 = arith.subi %c7_i32_56, %c3_i32 : i32
    %231 = arith.index_cast %c3_i32 : i32 to index
    %c0_57 = arith.constant 0 : index
    %c0_58 = arith.constant 0 : index
    %232 = vector.load %arg0[%231, %c0_57, %c0_58] : memref<8x2x384xf32, #tpu.memory_space<vmem>>, vector<1x2x384xf32>
    %233 = vector.shape_cast %232 : vector<1x2x384xf32> to vector<2x384xf32>
    %234 = arith.index_cast %230 : i32 to index
    %c0_59 = arith.constant 0 : index
    %c0_60 = arith.constant 0 : index
    %235 = vector.load %arg0[%234, %c0_59, %c0_60] : memref<8x2x384xf32, #tpu.memory_space<vmem>>, vector<1x2x384xf32>
    %236 = vector.shape_cast %235 : vector<1x2x384xf32> to vector<2x384xf32>
    %237 = vector.extract_strided_slice %233 {offsets = [0, 0], sizes = [2, 192], strides = [1, 1]} : vector<2x384xf32> to vector<2x192xf32>
    %cst_61 = arith.constant dense<0.000000e+00> : vector<2x192xf32>
    %238 = tpu.matmul %191, %0, %cst_61 {dimension_numbers = #tpu.dot_dimension_numbers<[1], [0], [0], [1], [0, 0, 1, 1], [], []>} : vector<2x64xf32>, vector<64x192xf32>, vector<2x192xf32> -> vector<2x192xf32>
    %239 = vector.extract_strided_slice %237 {offsets = [0, 0], sizes = [2, 64], strides = [1, 1]} : vector<2x192xf32> to vector<2x64xf32>
    %240 = vector.extract_strided_slice %238 {offsets = [0, 0], sizes = [2, 64], strides = [1, 1]} : vector<2x192xf32> to vector<2x64xf32>
    %241 = arith.addf %239, %240 : vector<2x64xf32>
    %242 = arith.negf %241 : vector<2x64xf32>
    %243 = math.exp %242 : vector<2x64xf32>
    %cst_62 = arith.constant 1.000000e+00 : f32
    %244 = vector.broadcast %cst_62 : f32 to vector<2x64xf32>
    %245 = arith.addf %244, %243 : vector<2x64xf32>
    %246 = arith.divf %244, %245 : vector<2x64xf32>
    %247 = vector.extract_strided_slice %237 {offsets = [0, 64], sizes = [2, 64], strides = [1, 1]} : vector<2x192xf32> to vector<2x64xf32>
    %248 = vector.extract_strided_slice %238 {offsets = [0, 64], sizes = [2, 64], strides = [1, 1]} : vector<2x192xf32> to vector<2x64xf32>
    %249 = arith.addf %247, %248 : vector<2x64xf32>
    %250 = arith.negf %249 : vector<2x64xf32>
    %251 = math.exp %250 : vector<2x64xf32>
    %cst_63 = arith.constant 1.000000e+00 : f32
    %252 = vector.broadcast %cst_63 : f32 to vector<2x64xf32>
    %253 = arith.addf %252, %251 : vector<2x64xf32>
    %254 = arith.divf %252, %253 : vector<2x64xf32>
    %255 = vector.extract_strided_slice %237 {offsets = [0, 128], sizes = [2, 64], strides = [1, 1]} : vector<2x192xf32> to vector<2x64xf32>
    %256 = vector.extract_strided_slice %238 {offsets = [0, 128], sizes = [2, 64], strides = [1, 1]} : vector<2x192xf32> to vector<2x64xf32>
    %257 = vector.broadcast %2 : vector<1x64xf32> to vector<2x64xf32>
    %258 = arith.addf %256, %257 : vector<2x64xf32>
    %259 = arith.mulf %246, %258 : vector<2x64xf32>
    %260 = arith.addf %255, %259 : vector<2x64xf32>
    %261 = math.tanh %260 : vector<2x64xf32>
    %cst_64 = arith.constant 1.000000e+00 : f32
    %262 = vector.broadcast %cst_64 : f32 to vector<2x64xf32>
    %263 = arith.subf %262, %254 : vector<2x64xf32>
    %264 = arith.mulf %263, %261 : vector<2x64xf32>
    %265 = arith.mulf %254, %191 : vector<2x64xf32>
    %266 = arith.addf %264, %265 : vector<2x64xf32>
    %267 = vector.extract_strided_slice %236 {offsets = [0, 192], sizes = [2, 192], strides = [1, 1]} : vector<2x384xf32> to vector<2x192xf32>
    %cst_65 = arith.constant dense<0.000000e+00> : vector<2x192xf32>
    %268 = tpu.matmul %221, %1, %cst_65 {dimension_numbers = #tpu.dot_dimension_numbers<[1], [0], [0], [1], [0, 0, 1, 1], [], []>} : vector<2x64xf32>, vector<64x192xf32>, vector<2x192xf32> -> vector<2x192xf32>
    %269 = vector.extract_strided_slice %267 {offsets = [0, 0], sizes = [2, 64], strides = [1, 1]} : vector<2x192xf32> to vector<2x64xf32>
    %270 = vector.extract_strided_slice %268 {offsets = [0, 0], sizes = [2, 64], strides = [1, 1]} : vector<2x192xf32> to vector<2x64xf32>
    %271 = arith.addf %269, %270 : vector<2x64xf32>
    %272 = arith.negf %271 : vector<2x64xf32>
    %273 = math.exp %272 : vector<2x64xf32>
    %cst_66 = arith.constant 1.000000e+00 : f32
    %274 = vector.broadcast %cst_66 : f32 to vector<2x64xf32>
    %275 = arith.addf %274, %273 : vector<2x64xf32>
    %276 = arith.divf %274, %275 : vector<2x64xf32>
    %277 = vector.extract_strided_slice %267 {offsets = [0, 64], sizes = [2, 64], strides = [1, 1]} : vector<2x192xf32> to vector<2x64xf32>
    %278 = vector.extract_strided_slice %268 {offsets = [0, 64], sizes = [2, 64], strides = [1, 1]} : vector<2x192xf32> to vector<2x64xf32>
    %279 = arith.addf %277, %278 : vector<2x64xf32>
    %280 = arith.negf %279 : vector<2x64xf32>
    %281 = math.exp %280 : vector<2x64xf32>
    %cst_67 = arith.constant 1.000000e+00 : f32
    %282 = vector.broadcast %cst_67 : f32 to vector<2x64xf32>
    %283 = arith.addf %282, %281 : vector<2x64xf32>
    %284 = arith.divf %282, %283 : vector<2x64xf32>
    %285 = vector.extract_strided_slice %267 {offsets = [0, 128], sizes = [2, 64], strides = [1, 1]} : vector<2x192xf32> to vector<2x64xf32>
    %286 = vector.extract_strided_slice %268 {offsets = [0, 128], sizes = [2, 64], strides = [1, 1]} : vector<2x192xf32> to vector<2x64xf32>
    %287 = vector.broadcast %3 : vector<1x64xf32> to vector<2x64xf32>
    %288 = arith.addf %286, %287 : vector<2x64xf32>
    %289 = arith.mulf %276, %288 : vector<2x64xf32>
    %290 = arith.addf %285, %289 : vector<2x64xf32>
    %291 = math.tanh %290 : vector<2x64xf32>
    %cst_68 = arith.constant 1.000000e+00 : f32
    %292 = vector.broadcast %cst_68 : f32 to vector<2x64xf32>
    %293 = arith.subf %292, %284 : vector<2x64xf32>
    %294 = arith.mulf %293, %291 : vector<2x64xf32>
    %295 = arith.mulf %284, %221 : vector<2x64xf32>
    %296 = arith.addf %294, %295 : vector<2x64xf32>
    %297 = arith.index_cast %c3_i32 : i32 to index
    %c0_69 = arith.constant 0 : index
    %c0_70 = arith.constant 0 : index
    %298 = vector.load %arg5[%297, %c0_69, %c0_70] : memref<8x2x128xf32, #tpu.memory_space<vmem>>, vector<1x2x64xf32>
    %299 = vector.shape_cast %298 : vector<1x2x64xf32> to vector<2x64xf32>
    %300 = vector.shape_cast %266 : vector<2x64xf32> to vector<1x2x64xf32>
    tpu.vector_store %arg5[%297, %c0_69, %c0_70], %300 {strides = array<i32>} : memref<8x2x128xf32, #tpu.memory_space<vmem>>, vector<1x2x64xf32>,
    %301 = arith.index_cast %230 : i32 to index
    %c0_71 = arith.constant 0 : index
    %c64_72 = arith.constant 64 : index
    %302 = vector.load %arg5[%301, %c0_71, %c64_72] : memref<8x2x128xf32, #tpu.memory_space<vmem>>, vector<1x2x64xf32>
    %303 = vector.shape_cast %302 : vector<1x2x64xf32> to vector<2x64xf32>
    %304 = vector.shape_cast %296 : vector<2x64xf32> to vector<1x2x64xf32>
    tpu.vector_store %arg5[%301, %c0_71, %c64_72], %304 {strides = array<i32>} : memref<8x2x128xf32, #tpu.memory_space<vmem>>, vector<1x2x64xf32>,
    %c4_i32 = arith.constant 4 : i32
    %c7_i32_73 = arith.constant 7 : i32
    %305 = arith.subi %c7_i32_73, %c4_i32 : i32
    %306 = arith.index_cast %c4_i32 : i32 to index
    %c0_74 = arith.constant 0 : index
    %c0_75 = arith.constant 0 : index
    %307 = vector.load %arg0[%306, %c0_74, %c0_75] : memref<8x2x384xf32, #tpu.memory_space<vmem>>, vector<1x2x384xf32>
    %308 = vector.shape_cast %307 : vector<1x2x384xf32> to vector<2x384xf32>
    %309 = arith.index_cast %305 : i32 to index
    %c0_76 = arith.constant 0 : index
    %c0_77 = arith.constant 0 : index
    %310 = vector.load %arg0[%309, %c0_76, %c0_77] : memref<8x2x384xf32, #tpu.memory_space<vmem>>, vector<1x2x384xf32>
    %311 = vector.shape_cast %310 : vector<1x2x384xf32> to vector<2x384xf32>
    %312 = vector.extract_strided_slice %308 {offsets = [0, 0], sizes = [2, 192], strides = [1, 1]} : vector<2x384xf32> to vector<2x192xf32>
    %cst_78 = arith.constant dense<0.000000e+00> : vector<2x192xf32>
    %313 = tpu.matmul %266, %0, %cst_78 {dimension_numbers = #tpu.dot_dimension_numbers<[1], [0], [0], [1], [0, 0, 1, 1], [], []>} : vector<2x64xf32>, vector<64x192xf32>, vector<2x192xf32> -> vector<2x192xf32>
    %314 = vector.extract_strided_slice %312 {offsets = [0, 0], sizes = [2, 64], strides = [1, 1]} : vector<2x192xf32> to vector<2x64xf32>
    %315 = vector.extract_strided_slice %313 {offsets = [0, 0], sizes = [2, 64], strides = [1, 1]} : vector<2x192xf32> to vector<2x64xf32>
    %316 = arith.addf %314, %315 : vector<2x64xf32>
    %317 = arith.negf %316 : vector<2x64xf32>
    %318 = math.exp %317 : vector<2x64xf32>
    %cst_79 = arith.constant 1.000000e+00 : f32
    %319 = vector.broadcast %cst_79 : f32 to vector<2x64xf32>
    %320 = arith.addf %319, %318 : vector<2x64xf32>
    %321 = arith.divf %319, %320 : vector<2x64xf32>
    %322 = vector.extract_strided_slice %312 {offsets = [0, 64], sizes = [2, 64], strides = [1, 1]} : vector<2x192xf32> to vector<2x64xf32>
    %323 = vector.extract_strided_slice %313 {offsets = [0, 64], sizes = [2, 64], strides = [1, 1]} : vector<2x192xf32> to vector<2x64xf32>
    %324 = arith.addf %322, %323 : vector<2x64xf32>
    %325 = arith.negf %324 : vector<2x64xf32>
    %326 = math.exp %325 : vector<2x64xf32>
    %cst_80 = arith.constant 1.000000e+00 : f32
    %327 = vector.broadcast %cst_80 : f32 to vector<2x64xf32>
    %328 = arith.addf %327, %326 : vector<2x64xf32>
    %329 = arith.divf %327, %328 : vector<2x64xf32>
    %330 = vector.extract_strided_slice %312 {offsets = [0, 128], sizes = [2, 64], strides = [1, 1]} : vector<2x192xf32> to vector<2x64xf32>
    %331 = vector.extract_strided_slice %313 {offsets = [0, 128], sizes = [2, 64], strides = [1, 1]} : vector<2x192xf32> to vector<2x64xf32>
    %332 = vector.broadcast %2 : vector<1x64xf32> to vector<2x64xf32>
    %333 = arith.addf %331, %332 : vector<2x64xf32>
    %334 = arith.mulf %321, %333 : vector<2x64xf32>
    %335 = arith.addf %330, %334 : vector<2x64xf32>
    %336 = math.tanh %335 : vector<2x64xf32>
    %cst_81 = arith.constant 1.000000e+00 : f32
    %337 = vector.broadcast %cst_81 : f32 to vector<2x64xf32>
    %338 = arith.subf %337, %329 : vector<2x64xf32>
    %339 = arith.mulf %338, %336 : vector<2x64xf32>
    %340 = arith.mulf %329, %266 : vector<2x64xf32>
    %341 = arith.addf %339, %340 : vector<2x64xf32>
    %342 = vector.extract_strided_slice %311 {offsets = [0, 192], sizes = [2, 192], strides = [1, 1]} : vector<2x384xf32> to vector<2x192xf32>
    %cst_82 = arith.constant dense<0.000000e+00> : vector<2x192xf32>
    %343 = tpu.matmul %296, %1, %cst_82 {dimension_numbers = #tpu.dot_dimension_numbers<[1], [0], [0], [1], [0, 0, 1, 1], [], []>} : vector<2x64xf32>, vector<64x192xf32>, vector<2x192xf32> -> vector<2x192xf32>
    %344 = vector.extract_strided_slice %342 {offsets = [0, 0], sizes = [2, 64], strides = [1, 1]} : vector<2x192xf32> to vector<2x64xf32>
    %345 = vector.extract_strided_slice %343 {offsets = [0, 0], sizes = [2, 64], strides = [1, 1]} : vector<2x192xf32> to vector<2x64xf32>
    %346 = arith.addf %344, %345 : vector<2x64xf32>
    %347 = arith.negf %346 : vector<2x64xf32>
    %348 = math.exp %347 : vector<2x64xf32>
    %cst_83 = arith.constant 1.000000e+00 : f32
    %349 = vector.broadcast %cst_83 : f32 to vector<2x64xf32>
    %350 = arith.addf %349, %348 : vector<2x64xf32>
    %351 = arith.divf %349, %350 : vector<2x64xf32>
    %352 = vector.extract_strided_slice %342 {offsets = [0, 64], sizes = [2, 64], strides = [1, 1]} : vector<2x192xf32> to vector<2x64xf32>
    %353 = vector.extract_strided_slice %343 {offsets = [0, 64], sizes = [2, 64], strides = [1, 1]} : vector<2x192xf32> to vector<2x64xf32>
    %354 = arith.addf %352, %353 : vector<2x64xf32>
    %355 = arith.negf %354 : vector<2x64xf32>
    %356 = math.exp %355 : vector<2x64xf32>
    %cst_84 = arith.constant 1.000000e+00 : f32
    %357 = vector.broadcast %cst_84 : f32 to vector<2x64xf32>
    %358 = arith.addf %357, %356 : vector<2x64xf32>
    %359 = arith.divf %357, %358 : vector<2x64xf32>
    %360 = vector.extract_strided_slice %342 {offsets = [0, 128], sizes = [2, 64], strides = [1, 1]} : vector<2x192xf32> to vector<2x64xf32>
    %361 = vector.extract_strided_slice %343 {offsets = [0, 128], sizes = [2, 64], strides = [1, 1]} : vector<2x192xf32> to vector<2x64xf32>
    %362 = vector.broadcast %3 : vector<1x64xf32> to vector<2x64xf32>
    %363 = arith.addf %361, %362 : vector<2x64xf32>
    %364 = arith.mulf %351, %363 : vector<2x64xf32>
    %365 = arith.addf %360, %364 : vector<2x64xf32>
    %366 = math.tanh %365 : vector<2x64xf32>
    %cst_85 = arith.constant 1.000000e+00 : f32
    %367 = vector.broadcast %cst_85 : f32 to vector<2x64xf32>
    %368 = arith.subf %367, %359 : vector<2x64xf32>
    %369 = arith.mulf %368, %366 : vector<2x64xf32>
    %370 = arith.mulf %359, %296 : vector<2x64xf32>
    %371 = arith.addf %369, %370 : vector<2x64xf32>
    %372 = arith.index_cast %c4_i32 : i32 to index
    %c0_86 = arith.constant 0 : index
    %c0_87 = arith.constant 0 : index
    %373 = vector.load %arg5[%372, %c0_86, %c0_87] : memref<8x2x128xf32, #tpu.memory_space<vmem>>, vector<1x2x64xf32>
    %374 = vector.shape_cast %373 : vector<1x2x64xf32> to vector<2x64xf32>
    %375 = vector.shape_cast %341 : vector<2x64xf32> to vector<1x2x64xf32>
    tpu.vector_store %arg5[%372, %c0_86, %c0_87], %375 {strides = array<i32>} : memref<8x2x128xf32, #tpu.memory_space<vmem>>, vector<1x2x64xf32>,
    %376 = arith.index_cast %305 : i32 to index
    %c0_88 = arith.constant 0 : index
    %c64_89 = arith.constant 64 : index
    %377 = vector.load %arg5[%376, %c0_88, %c64_89] : memref<8x2x128xf32, #tpu.memory_space<vmem>>, vector<1x2x64xf32>
    %378 = vector.shape_cast %377 : vector<1x2x64xf32> to vector<2x64xf32>
    %379 = vector.shape_cast %371 : vector<2x64xf32> to vector<1x2x64xf32>
    tpu.vector_store %arg5[%376, %c0_88, %c64_89], %379 {strides = array<i32>} : memref<8x2x128xf32, #tpu.memory_space<vmem>>, vector<1x2x64xf32>,
    %c5_i32 = arith.constant 5 : i32
    %c7_i32_90 = arith.constant 7 : i32
    %380 = arith.subi %c7_i32_90, %c5_i32 : i32
    %381 = arith.index_cast %c5_i32 : i32 to index
    %c0_91 = arith.constant 0 : index
    %c0_92 = arith.constant 0 : index
    %382 = vector.load %arg0[%381, %c0_91, %c0_92] : memref<8x2x384xf32, #tpu.memory_space<vmem>>, vector<1x2x384xf32>
    %383 = vector.shape_cast %382 : vector<1x2x384xf32> to vector<2x384xf32>
    %384 = arith.index_cast %380 : i32 to index
    %c0_93 = arith.constant 0 : index
    %c0_94 = arith.constant 0 : index
    %385 = vector.load %arg0[%384, %c0_93, %c0_94] : memref<8x2x384xf32, #tpu.memory_space<vmem>>, vector<1x2x384xf32>
    %386 = vector.shape_cast %385 : vector<1x2x384xf32> to vector<2x384xf32>
    %387 = vector.extract_strided_slice %383 {offsets = [0, 0], sizes = [2, 192], strides = [1, 1]} : vector<2x384xf32> to vector<2x192xf32>
    %cst_95 = arith.constant dense<0.000000e+00> : vector<2x192xf32>
    %388 = tpu.matmul %341, %0, %cst_95 {dimension_numbers = #tpu.dot_dimension_numbers<[1], [0], [0], [1], [0, 0, 1, 1], [], []>} : vector<2x64xf32>, vector<64x192xf32>, vector<2x192xf32> -> vector<2x192xf32>
    %389 = vector.extract_strided_slice %387 {offsets = [0, 0], sizes = [2, 64], strides = [1, 1]} : vector<2x192xf32> to vector<2x64xf32>
    %390 = vector.extract_strided_slice %388 {offsets = [0, 0], sizes = [2, 64], strides = [1, 1]} : vector<2x192xf32> to vector<2x64xf32>
    %391 = arith.addf %389, %390 : vector<2x64xf32>
    %392 = arith.negf %391 : vector<2x64xf32>
    %393 = math.exp %392 : vector<2x64xf32>
    %cst_96 = arith.constant 1.000000e+00 : f32
    %394 = vector.broadcast %cst_96 : f32 to vector<2x64xf32>
    %395 = arith.addf %394, %393 : vector<2x64xf32>
    %396 = arith.divf %394, %395 : vector<2x64xf32>
    %397 = vector.extract_strided_slice %387 {offsets = [0, 64], sizes = [2, 64], strides = [1, 1]} : vector<2x192xf32> to vector<2x64xf32>
    %398 = vector.extract_strided_slice %388 {offsets = [0, 64], sizes = [2, 64], strides = [1, 1]} : vector<2x192xf32> to vector<2x64xf32>
    %399 = arith.addf %397, %398 : vector<2x64xf32>
    %400 = arith.negf %399 : vector<2x64xf32>
    %401 = math.exp %400 : vector<2x64xf32>
    %cst_97 = arith.constant 1.000000e+00 : f32
    %402 = vector.broadcast %cst_97 : f32 to vector<2x64xf32>
    %403 = arith.addf %402, %401 : vector<2x64xf32>
    %404 = arith.divf %402, %403 : vector<2x64xf32>
    %405 = vector.extract_strided_slice %387 {offsets = [0, 128], sizes = [2, 64], strides = [1, 1]} : vector<2x192xf32> to vector<2x64xf32>
    %406 = vector.extract_strided_slice %388 {offsets = [0, 128], sizes = [2, 64], strides = [1, 1]} : vector<2x192xf32> to vector<2x64xf32>
    %407 = vector.broadcast %2 : vector<1x64xf32> to vector<2x64xf32>
    %408 = arith.addf %406, %407 : vector<2x64xf32>
    %409 = arith.mulf %396, %408 : vector<2x64xf32>
    %410 = arith.addf %405, %409 : vector<2x64xf32>
    %411 = math.tanh %410 : vector<2x64xf32>
    %cst_98 = arith.constant 1.000000e+00 : f32
    %412 = vector.broadcast %cst_98 : f32 to vector<2x64xf32>
    %413 = arith.subf %412, %404 : vector<2x64xf32>
    %414 = arith.mulf %413, %411 : vector<2x64xf32>
    %415 = arith.mulf %404, %341 : vector<2x64xf32>
    %416 = arith.addf %414, %415 : vector<2x64xf32>
    %417 = vector.extract_strided_slice %386 {offsets = [0, 192], sizes = [2, 192], strides = [1, 1]} : vector<2x384xf32> to vector<2x192xf32>
    %cst_99 = arith.constant dense<0.000000e+00> : vector<2x192xf32>
    %418 = tpu.matmul %371, %1, %cst_99 {dimension_numbers = #tpu.dot_dimension_numbers<[1], [0], [0], [1], [0, 0, 1, 1], [], []>} : vector<2x64xf32>, vector<64x192xf32>, vector<2x192xf32> -> vector<2x192xf32>
    %419 = vector.extract_strided_slice %417 {offsets = [0, 0], sizes = [2, 64], strides = [1, 1]} : vector<2x192xf32> to vector<2x64xf32>
    %420 = vector.extract_strided_slice %418 {offsets = [0, 0], sizes = [2, 64], strides = [1, 1]} : vector<2x192xf32> to vector<2x64xf32>
    %421 = arith.addf %419, %420 : vector<2x64xf32>
    %422 = arith.negf %421 : vector<2x64xf32>
    %423 = math.exp %422 : vector<2x64xf32>
    %cst_100 = arith.constant 1.000000e+00 : f32
    %424 = vector.broadcast %cst_100 : f32 to vector<2x64xf32>
    %425 = arith.addf %424, %423 : vector<2x64xf32>
    %426 = arith.divf %424, %425 : vector<2x64xf32>
    %427 = vector.extract_strided_slice %417 {offsets = [0, 64], sizes = [2, 64], strides = [1, 1]} : vector<2x192xf32> to vector<2x64xf32>
    %428 = vector.extract_strided_slice %418 {offsets = [0, 64], sizes = [2, 64], strides = [1, 1]} : vector<2x192xf32> to vector<2x64xf32>
    %429 = arith.addf %427, %428 : vector<2x64xf32>
    %430 = arith.negf %429 : vector<2x64xf32>
    %431 = math.exp %430 : vector<2x64xf32>
    %cst_101 = arith.constant 1.000000e+00 : f32
    %432 = vector.broadcast %cst_101 : f32 to vector<2x64xf32>
    %433 = arith.addf %432, %431 : vector<2x64xf32>
    %434 = arith.divf %432, %433 : vector<2x64xf32>
    %435 = vector.extract_strided_slice %417 {offsets = [0, 128], sizes = [2, 64], strides = [1, 1]} : vector<2x192xf32> to vector<2x64xf32>
    %436 = vector.extract_strided_slice %418 {offsets = [0, 128], sizes = [2, 64], strides = [1, 1]} : vector<2x192xf32> to vector<2x64xf32>
    %437 = vector.broadcast %3 : vector<1x64xf32> to vector<2x64xf32>
    %438 = arith.addf %436, %437 : vector<2x64xf32>
    %439 = arith.mulf %426, %438 : vector<2x64xf32>
    %440 = arith.addf %435, %439 : vector<2x64xf32>
    %441 = math.tanh %440 : vector<2x64xf32>
    %cst_102 = arith.constant 1.000000e+00 : f32
    %442 = vector.broadcast %cst_102 : f32 to vector<2x64xf32>
    %443 = arith.subf %442, %434 : vector<2x64xf32>
    %444 = arith.mulf %443, %441 : vector<2x64xf32>
    %445 = arith.mulf %434, %371 : vector<2x64xf32>
    %446 = arith.addf %444, %445 : vector<2x64xf32>
    %447 = arith.index_cast %c5_i32 : i32 to index
    %c0_103 = arith.constant 0 : index
    %c0_104 = arith.constant 0 : index
    %448 = vector.load %arg5[%447, %c0_103, %c0_104] : memref<8x2x128xf32, #tpu.memory_space<vmem>>, vector<1x2x64xf32>
    %449 = vector.shape_cast %448 : vector<1x2x64xf32> to vector<2x64xf32>
    %450 = vector.shape_cast %416 : vector<2x64xf32> to vector<1x2x64xf32>
    tpu.vector_store %arg5[%447, %c0_103, %c0_104], %450 {strides = array<i32>} : memref<8x2x128xf32, #tpu.memory_space<vmem>>, vector<1x2x64xf32>,
    %451 = arith.index_cast %380 : i32 to index
    %c0_105 = arith.constant 0 : index
    %c64_106 = arith.constant 64 : index
    %452 = vector.load %arg5[%451, %c0_105, %c64_106] : memref<8x2x128xf32, #tpu.memory_space<vmem>>, vector<1x2x64xf32>
    %453 = vector.shape_cast %452 : vector<1x2x64xf32> to vector<2x64xf32>
    %454 = vector.shape_cast %446 : vector<2x64xf32> to vector<1x2x64xf32>
    tpu.vector_store %arg5[%451, %c0_105, %c64_106], %454 {strides = array<i32>} : memref<8x2x128xf32, #tpu.memory_space<vmem>>, vector<1x2x64xf32>,
    %c6_i32 = arith.constant 6 : i32
    %c7_i32_107 = arith.constant 7 : i32
    %455 = arith.subi %c7_i32_107, %c6_i32 : i32
    %456 = arith.index_cast %c6_i32 : i32 to index
    %c0_108 = arith.constant 0 : index
    %c0_109 = arith.constant 0 : index
    %457 = vector.load %arg0[%456, %c0_108, %c0_109] : memref<8x2x384xf32, #tpu.memory_space<vmem>>, vector<1x2x384xf32>
    %458 = vector.shape_cast %457 : vector<1x2x384xf32> to vector<2x384xf32>
    %459 = arith.index_cast %455 : i32 to index
    %c0_110 = arith.constant 0 : index
    %c0_111 = arith.constant 0 : index
    %460 = vector.load %arg0[%459, %c0_110, %c0_111] : memref<8x2x384xf32, #tpu.memory_space<vmem>>, vector<1x2x384xf32>
    %461 = vector.shape_cast %460 : vector<1x2x384xf32> to vector<2x384xf32>
    %462 = vector.extract_strided_slice %458 {offsets = [0, 0], sizes = [2, 192], strides = [1, 1]} : vector<2x384xf32> to vector<2x192xf32>
    %cst_112 = arith.constant dense<0.000000e+00> : vector<2x192xf32>
    %463 = tpu.matmul %416, %0, %cst_112 {dimension_numbers = #tpu.dot_dimension_numbers<[1], [0], [0], [1], [0, 0, 1, 1], [], []>} : vector<2x64xf32>, vector<64x192xf32>, vector<2x192xf32> -> vector<2x192xf32>
    %464 = vector.extract_strided_slice %462 {offsets = [0, 0], sizes = [2, 64], strides = [1, 1]} : vector<2x192xf32> to vector<2x64xf32>
    %465 = vector.extract_strided_slice %463 {offsets = [0, 0], sizes = [2, 64], strides = [1, 1]} : vector<2x192xf32> to vector<2x64xf32>
    %466 = arith.addf %464, %465 : vector<2x64xf32>
    %467 = arith.negf %466 : vector<2x64xf32>
    %468 = math.exp %467 : vector<2x64xf32>
    %cst_113 = arith.constant 1.000000e+00 : f32
    %469 = vector.broadcast %cst_113 : f32 to vector<2x64xf32>
    %470 = arith.addf %469, %468 : vector<2x64xf32>
    %471 = arith.divf %469, %470 : vector<2x64xf32>
    %472 = vector.extract_strided_slice %462 {offsets = [0, 64], sizes = [2, 64], strides = [1, 1]} : vector<2x192xf32> to vector<2x64xf32>
    %473 = vector.extract_strided_slice %463 {offsets = [0, 64], sizes = [2, 64], strides = [1, 1]} : vector<2x192xf32> to vector<2x64xf32>
    %474 = arith.addf %472, %473 : vector<2x64xf32>
    %475 = arith.negf %474 : vector<2x64xf32>
    %476 = math.exp %475 : vector<2x64xf32>
    %cst_114 = arith.constant 1.000000e+00 : f32
    %477 = vector.broadcast %cst_114 : f32 to vector<2x64xf32>
    %478 = arith.addf %477, %476 : vector<2x64xf32>
    %479 = arith.divf %477, %478 : vector<2x64xf32>
    %480 = vector.extract_strided_slice %462 {offsets = [0, 128], sizes = [2, 64], strides = [1, 1]} : vector<2x192xf32> to vector<2x64xf32>
    %481 = vector.extract_strided_slice %463 {offsets = [0, 128], sizes = [2, 64], strides = [1, 1]} : vector<2x192xf32> to vector<2x64xf32>
    %482 = vector.broadcast %2 : vector<1x64xf32> to vector<2x64xf32>
    %483 = arith.addf %481, %482 : vector<2x64xf32>
    %484 = arith.mulf %471, %483 : vector<2x64xf32>
    %485 = arith.addf %480, %484 : vector<2x64xf32>
    %486 = math.tanh %485 : vector<2x64xf32>
    %cst_115 = arith.constant 1.000000e+00 : f32
    %487 = vector.broadcast %cst_115 : f32 to vector<2x64xf32>
    %488 = arith.subf %487, %479 : vector<2x64xf32>
    %489 = arith.mulf %488, %486 : vector<2x64xf32>
    %490 = arith.mulf %479, %416 : vector<2x64xf32>
    %491 = arith.addf %489, %490 : vector<2x64xf32>
    %492 = vector.extract_strided_slice %461 {offsets = [0, 192], sizes = [2, 192], strides = [1, 1]} : vector<2x384xf32> to vector<2x192xf32>
    %cst_116 = arith.constant dense<0.000000e+00> : vector<2x192xf32>
    %493 = tpu.matmul %446, %1, %cst_116 {dimension_numbers = #tpu.dot_dimension_numbers<[1], [0], [0], [1], [0, 0, 1, 1], [], []>} : vector<2x64xf32>, vector<64x192xf32>, vector<2x192xf32> -> vector<2x192xf32>
    %494 = vector.extract_strided_slice %492 {offsets = [0, 0], sizes = [2, 64], strides = [1, 1]} : vector<2x192xf32> to vector<2x64xf32>
    %495 = vector.extract_strided_slice %493 {offsets = [0, 0], sizes = [2, 64], strides = [1, 1]} : vector<2x192xf32> to vector<2x64xf32>
    %496 = arith.addf %494, %495 : vector<2x64xf32>
    %497 = arith.negf %496 : vector<2x64xf32>
    %498 = math.exp %497 : vector<2x64xf32>
    %cst_117 = arith.constant 1.000000e+00 : f32
    %499 = vector.broadcast %cst_117 : f32 to vector<2x64xf32>
    %500 = arith.addf %499, %498 : vector<2x64xf32>
    %501 = arith.divf %499, %500 : vector<2x64xf32>
    %502 = vector.extract_strided_slice %492 {offsets = [0, 64], sizes = [2, 64], strides = [1, 1]} : vector<2x192xf32> to vector<2x64xf32>
    %503 = vector.extract_strided_slice %493 {offsets = [0, 64], sizes = [2, 64], strides = [1, 1]} : vector<2x192xf32> to vector<2x64xf32>
    %504 = arith.addf %502, %503 : vector<2x64xf32>
    %505 = arith.negf %504 : vector<2x64xf32>
    %506 = math.exp %505 : vector<2x64xf32>
    %cst_118 = arith.constant 1.000000e+00 : f32
    %507 = vector.broadcast %cst_118 : f32 to vector<2x64xf32>
    %508 = arith.addf %507, %506 : vector<2x64xf32>
    %509 = arith.divf %507, %508 : vector<2x64xf32>
    %510 = vector.extract_strided_slice %492 {offsets = [0, 128], sizes = [2, 64], strides = [1, 1]} : vector<2x192xf32> to vector<2x64xf32>
    %511 = vector.extract_strided_slice %493 {offsets = [0, 128], sizes = [2, 64], strides = [1, 1]} : vector<2x192xf32> to vector<2x64xf32>
    %512 = vector.broadcast %3 : vector<1x64xf32> to vector<2x64xf32>
    %513 = arith.addf %511, %512 : vector<2x64xf32>
    %514 = arith.mulf %501, %513 : vector<2x64xf32>
    %515 = arith.addf %510, %514 : vector<2x64xf32>
    %516 = math.tanh %515 : vector<2x64xf32>
    %cst_119 = arith.constant 1.000000e+00 : f32
    %517 = vector.broadcast %cst_119 : f32 to vector<2x64xf32>
    %518 = arith.subf %517, %509 : vector<2x64xf32>
    %519 = arith.mulf %518, %516 : vector<2x64xf32>
    %520 = arith.mulf %509, %446 : vector<2x64xf32>
    %521 = arith.addf %519, %520 : vector<2x64xf32>
    %522 = arith.index_cast %c6_i32 : i32 to index
    %c0_120 = arith.constant 0 : index
    %c0_121 = arith.constant 0 : index
    %523 = vector.load %arg5[%522, %c0_120, %c0_121] : memref<8x2x128xf32, #tpu.memory_space<vmem>>, vector<1x2x64xf32>
    %524 = vector.shape_cast %523 : vector<1x2x64xf32> to vector<2x64xf32>
    %525 = vector.shape_cast %491 : vector<2x64xf32> to vector<1x2x64xf32>
    tpu.vector_store %arg5[%522, %c0_120, %c0_121], %525 {strides = array<i32>} : memref<8x2x128xf32, #tpu.memory_space<vmem>>, vector<1x2x64xf32>,
    %526 = arith.index_cast %455 : i32 to index
    %c0_122 = arith.constant 0 : index
    %c64_123 = arith.constant 64 : index
    %527 = vector.load %arg5[%526, %c0_122, %c64_123] : memref<8x2x128xf32, #tpu.memory_space<vmem>>, vector<1x2x64xf32>
    %528 = vector.shape_cast %527 : vector<1x2x64xf32> to vector<2x64xf32>
    %529 = vector.shape_cast %521 : vector<2x64xf32> to vector<1x2x64xf32>
    tpu.vector_store %arg5[%526, %c0_122, %c64_123], %529 {strides = array<i32>} : memref<8x2x128xf32, #tpu.memory_space<vmem>>, vector<1x2x64xf32>,
    %c7_i32_124 = arith.constant 7 : i32
    %c7_i32_125 = arith.constant 7 : i32
    %530 = arith.subi %c7_i32_125, %c7_i32_124 : i32
    %531 = arith.index_cast %c7_i32_124 : i32 to index
    %c0_126 = arith.constant 0 : index
    %c0_127 = arith.constant 0 : index
    %532 = vector.load %arg0[%531, %c0_126, %c0_127] : memref<8x2x384xf32, #tpu.memory_space<vmem>>, vector<1x2x384xf32>
    %533 = vector.shape_cast %532 : vector<1x2x384xf32> to vector<2x384xf32>
    %534 = arith.index_cast %530 : i32 to index
    %c0_128 = arith.constant 0 : index
    %c0_129 = arith.constant 0 : index
    %535 = vector.load %arg0[%534, %c0_128, %c0_129] : memref<8x2x384xf32, #tpu.memory_space<vmem>>, vector<1x2x384xf32>
    %536 = vector.shape_cast %535 : vector<1x2x384xf32> to vector<2x384xf32>
    %537 = vector.extract_strided_slice %533 {offsets = [0, 0], sizes = [2, 192], strides = [1, 1]} : vector<2x384xf32> to vector<2x192xf32>
    %cst_130 = arith.constant dense<0.000000e+00> : vector<2x192xf32>
    %538 = tpu.matmul %491, %0, %cst_130 {dimension_numbers = #tpu.dot_dimension_numbers<[1], [0], [0], [1], [0, 0, 1, 1], [], []>} : vector<2x64xf32>, vector<64x192xf32>, vector<2x192xf32> -> vector<2x192xf32>
    %539 = vector.extract_strided_slice %537 {offsets = [0, 0], sizes = [2, 64], strides = [1, 1]} : vector<2x192xf32> to vector<2x64xf32>
    %540 = vector.extract_strided_slice %538 {offsets = [0, 0], sizes = [2, 64], strides = [1, 1]} : vector<2x192xf32> to vector<2x64xf32>
    %541 = arith.addf %539, %540 : vector<2x64xf32>
    %542 = arith.negf %541 : vector<2x64xf32>
    %543 = math.exp %542 : vector<2x64xf32>
    %cst_131 = arith.constant 1.000000e+00 : f32
    %544 = vector.broadcast %cst_131 : f32 to vector<2x64xf32>
    %545 = arith.addf %544, %543 : vector<2x64xf32>
    %546 = arith.divf %544, %545 : vector<2x64xf32>
    %547 = vector.extract_strided_slice %537 {offsets = [0, 64], sizes = [2, 64], strides = [1, 1]} : vector<2x192xf32> to vector<2x64xf32>
    %548 = vector.extract_strided_slice %538 {offsets = [0, 64], sizes = [2, 64], strides = [1, 1]} : vector<2x192xf32> to vector<2x64xf32>
    %549 = arith.addf %547, %548 : vector<2x64xf32>
    %550 = arith.negf %549 : vector<2x64xf32>
    %551 = math.exp %550 : vector<2x64xf32>
    %cst_132 = arith.constant 1.000000e+00 : f32
    %552 = vector.broadcast %cst_132 : f32 to vector<2x64xf32>
    %553 = arith.addf %552, %551 : vector<2x64xf32>
    %554 = arith.divf %552, %553 : vector<2x64xf32>
    %555 = vector.extract_strided_slice %537 {offsets = [0, 128], sizes = [2, 64], strides = [1, 1]} : vector<2x192xf32> to vector<2x64xf32>
    %556 = vector.extract_strided_slice %538 {offsets = [0, 128], sizes = [2, 64], strides = [1, 1]} : vector<2x192xf32> to vector<2x64xf32>
    %557 = vector.broadcast %2 : vector<1x64xf32> to vector<2x64xf32>
    %558 = arith.addf %556, %557 : vector<2x64xf32>
    %559 = arith.mulf %546, %558 : vector<2x64xf32>
    %560 = arith.addf %555, %559 : vector<2x64xf32>
    %561 = math.tanh %560 : vector<2x64xf32>
    %cst_133 = arith.constant 1.000000e+00 : f32
    %562 = vector.broadcast %cst_133 : f32 to vector<2x64xf32>
    %563 = arith.subf %562, %554 : vector<2x64xf32>
    %564 = arith.mulf %563, %561 : vector<2x64xf32>
    %565 = arith.mulf %554, %491 : vector<2x64xf32>
    %566 = arith.addf %564, %565 : vector<2x64xf32>
    %567 = vector.extract_strided_slice %536 {offsets = [0, 192], sizes = [2, 192], strides = [1, 1]} : vector<2x384xf32> to vector<2x192xf32>
    %cst_134 = arith.constant dense<0.000000e+00> : vector<2x192xf32>
    %568 = tpu.matmul %521, %1, %cst_134 {dimension_numbers = #tpu.dot_dimension_numbers<[1], [0], [0], [1], [0, 0, 1, 1], [], []>} : vector<2x64xf32>, vector<64x192xf32>, vector<2x192xf32> -> vector<2x192xf32>
    %569 = vector.extract_strided_slice %567 {offsets = [0, 0], sizes = [2, 64], strides = [1, 1]} : vector<2x192xf32> to vector<2x64xf32>
    %570 = vector.extract_strided_slice %568 {offsets = [0, 0], sizes = [2, 64], strides = [1, 1]} : vector<2x192xf32> to vector<2x64xf32>
    %571 = arith.addf %569, %570 : vector<2x64xf32>
    %572 = arith.negf %571 : vector<2x64xf32>
    %573 = math.exp %572 : vector<2x64xf32>
    %cst_135 = arith.constant 1.000000e+00 : f32
    %574 = vector.broadcast %cst_135 : f32 to vector<2x64xf32>
    %575 = arith.addf %574, %573 : vector<2x64xf32>
    %576 = arith.divf %574, %575 : vector<2x64xf32>
    %577 = vector.extract_strided_slice %567 {offsets = [0, 64], sizes = [2, 64], strides = [1, 1]} : vector<2x192xf32> to vector<2x64xf32>
    %578 = vector.extract_strided_slice %568 {offsets = [0, 64], sizes = [2, 64], strides = [1, 1]} : vector<2x192xf32> to vector<2x64xf32>
    %579 = arith.addf %577, %578 : vector<2x64xf32>
    %580 = arith.negf %579 : vector<2x64xf32>
    %581 = math.exp %580 : vector<2x64xf32>
    %cst_136 = arith.constant 1.000000e+00 : f32
    %582 = vector.broadcast %cst_136 : f32 to vector<2x64xf32>
    %583 = arith.addf %582, %581 : vector<2x64xf32>
    %584 = arith.divf %582, %583 : vector<2x64xf32>
    %585 = vector.extract_strided_slice %567 {offsets = [0, 128], sizes = [2, 64], strides = [1, 1]} : vector<2x192xf32> to vector<2x64xf32>
    %586 = vector.extract_strided_slice %568 {offsets = [0, 128], sizes = [2, 64], strides = [1, 1]} : vector<2x192xf32> to vector<2x64xf32>
    %587 = vector.broadcast %3 : vector<1x64xf32> to vector<2x64xf32>
    %588 = arith.addf %586, %587 : vector<2x64xf32>
    %589 = arith.mulf %576, %588 : vector<2x64xf32>
    %590 = arith.addf %585, %589 : vector<2x64xf32>
    %591 = math.tanh %590 : vector<2x64xf32>
    %cst_137 = arith.constant 1.000000e+00 : f32
    %592 = vector.broadcast %cst_137 : f32 to vector<2x64xf32>
    %593 = arith.subf %592, %584 : vector<2x64xf32>
    %594 = arith.mulf %593, %591 : vector<2x64xf32>
    %595 = arith.mulf %584, %521 : vector<2x64xf32>
    %596 = arith.addf %594, %595 : vector<2x64xf32>
    %597 = arith.index_cast %c7_i32_124 : i32 to index
    %c0_138 = arith.constant 0 : index
    %c0_139 = arith.constant 0 : index
    %598 = vector.load %arg5[%597, %c0_138, %c0_139] : memref<8x2x128xf32, #tpu.memory_space<vmem>>, vector<1x2x64xf32>
    %599 = vector.shape_cast %598 : vector<1x2x64xf32> to vector<2x64xf32>
    %600 = vector.shape_cast %566 : vector<2x64xf32> to vector<1x2x64xf32>
    tpu.vector_store %arg5[%597, %c0_138, %c0_139], %600 {strides = array<i32>} : memref<8x2x128xf32, #tpu.memory_space<vmem>>, vector<1x2x64xf32>,
    %601 = arith.index_cast %530 : i32 to index
    %c0_140 = arith.constant 0 : index
    %c64_141 = arith.constant 64 : index
    %602 = vector.load %arg5[%601, %c0_140, %c64_141] : memref<8x2x128xf32, #tpu.memory_space<vmem>>, vector<1x2x64xf32>
    %603 = vector.shape_cast %602 : vector<1x2x64xf32> to vector<2x64xf32>
    %604 = vector.shape_cast %596 : vector<2x64xf32> to vector<1x2x64xf32>
    tpu.vector_store %arg5[%601, %c0_140, %c64_141], %604 {strides = array<i32>} : memref<8x2x128xf32, #tpu.memory_space<vmem>>, vector<1x2x64xf32>,
    %c8_i32 = arith.constant 8 : i32
    return
  }
}

module attributes {stable_mosaic.version = 11 : i64} {
  func.func @_gru_ts_gate_kernel(%arg0: memref<8x2x384xf32, #tpu.memory_space<vmem>>, %arg1: memref<64x192xf32, #tpu.memory_space<vmem>>, %arg2: memref<64x192xf32, #tpu.memory_space<vmem>>, %arg3: memref<1x64xf32, #tpu.memory_space<vmem>>, %arg4: memref<1x64xf32, #tpu.memory_space<vmem>>, %arg5: memref<128x128xf32, #tpu.memory_space<vmem>>, %arg6: memref<8x2x128xf32, #tpu.memory_space<vmem>>, %arg7: memref<8x2x128xf32, #tpu.memory_space<vmem>>, %arg8: memref<8x2x128xf32, #tpu.memory_space<vmem>>) attributes {dimension_semantics = [], scalar_prefetch = 0 : i64, scratch_operands = 2 : i64, tpu.core_type = #tpu.core_type<tc>} {
    %c0 = arith.constant 0 : index
    %c0_0 = arith.constant 0 : index
    %0 = vector.load %arg1[%c0, %c0_0] : memref<64x192xf32, #tpu.memory_space<vmem>>, vector<64x192xf32>
    %c0_1 = arith.constant 0 : index
    %c0_2 = arith.constant 0 : index
    %1 = vector.load %arg2[%c0_1, %c0_2] : memref<64x192xf32, #tpu.memory_space<vmem>>, vector<64x192xf32>
    %c0_3 = arith.constant 0 : index
    %c0_4 = arith.constant 0 : index
    %2 = vector.load %arg3[%c0_3, %c0_4] : memref<1x64xf32, #tpu.memory_space<vmem>>, vector<1x64xf32>
    %c0_5 = arith.constant 0 : index
    %c0_6 = arith.constant 0 : index
    %3 = vector.load %arg4[%c0_5, %c0_6] : memref<1x64xf32, #tpu.memory_space<vmem>>, vector<1x64xf32>
    %cst = arith.constant 0.000000e+00 : f32
    %4 = vector.broadcast %cst : f32 to vector<2x64xf32>
    %c0_i32 = arith.constant 0 : i32
    %c7_i32 = arith.constant 7 : i32
    %5 = arith.subi %c7_i32, %c0_i32 : i32
    %6 = arith.index_cast %c0_i32 : i32 to index
    %c0_7 = arith.constant 0 : index
    %c0_8 = arith.constant 0 : index
    %7 = vector.load %arg0[%6, %c0_7, %c0_8] : memref<8x2x384xf32, #tpu.memory_space<vmem>>, vector<1x2x384xf32>
    %8 = vector.shape_cast %7 : vector<1x2x384xf32> to vector<2x384xf32>
    %9 = arith.index_cast %5 : i32 to index
    %c0_9 = arith.constant 0 : index
    %c0_10 = arith.constant 0 : index
    %10 = vector.load %arg0[%9, %c0_9, %c0_10] : memref<8x2x384xf32, #tpu.memory_space<vmem>>, vector<1x2x384xf32>
    %11 = vector.shape_cast %10 : vector<1x2x384xf32> to vector<2x384xf32>
    %12 = vector.extract_strided_slice %8 {offsets = [0, 0], sizes = [2, 192], strides = [1, 1]} : vector<2x384xf32> to vector<2x192xf32>
    %cst_11 = arith.constant dense<0.000000e+00> : vector<2x192xf32>
    %13 = tpu.matmul %4, %0, %cst_11 {dimension_numbers = #tpu.dot_dimension_numbers<[1], [0], [0], [1], [0, 0, 1, 1], [], []>} : vector<2x64xf32>, vector<64x192xf32>, vector<2x192xf32> -> vector<2x192xf32>
    %14 = vector.extract_strided_slice %12 {offsets = [0, 0], sizes = [2, 64], strides = [1, 1]} : vector<2x192xf32> to vector<2x64xf32>
    %15 = vector.extract_strided_slice %13 {offsets = [0, 0], sizes = [2, 64], strides = [1, 1]} : vector<2x192xf32> to vector<2x64xf32>
    %16 = arith.addf %14, %15 : vector<2x64xf32>
    %17 = arith.negf %16 : vector<2x64xf32>
    %18 = math.exp %17 : vector<2x64xf32>
    %cst_12 = arith.constant 1.000000e+00 : f32
    %19 = vector.broadcast %cst_12 : f32 to vector<2x64xf32>
    %20 = arith.addf %19, %18 : vector<2x64xf32>
    %21 = arith.divf %19, %20 : vector<2x64xf32>
    %22 = vector.extract_strided_slice %12 {offsets = [0, 64], sizes = [2, 64], strides = [1, 1]} : vector<2x192xf32> to vector<2x64xf32>
    %23 = vector.extract_strided_slice %13 {offsets = [0, 64], sizes = [2, 64], strides = [1, 1]} : vector<2x192xf32> to vector<2x64xf32>
    %24 = arith.addf %22, %23 : vector<2x64xf32>
    %25 = arith.negf %24 : vector<2x64xf32>
    %26 = math.exp %25 : vector<2x64xf32>
    %cst_13 = arith.constant 1.000000e+00 : f32
    %27 = vector.broadcast %cst_13 : f32 to vector<2x64xf32>
    %28 = arith.addf %27, %26 : vector<2x64xf32>
    %29 = arith.divf %27, %28 : vector<2x64xf32>
    %30 = vector.extract_strided_slice %12 {offsets = [0, 128], sizes = [2, 64], strides = [1, 1]} : vector<2x192xf32> to vector<2x64xf32>
    %31 = vector.extract_strided_slice %13 {offsets = [0, 128], sizes = [2, 64], strides = [1, 1]} : vector<2x192xf32> to vector<2x64xf32>
    %32 = vector.broadcast %2 : vector<1x64xf32> to vector<2x64xf32>
    %33 = arith.addf %31, %32 : vector<2x64xf32>
    %34 = arith.mulf %21, %33 : vector<2x64xf32>
    %35 = arith.addf %30, %34 : vector<2x64xf32>
    %36 = math.tanh %35 : vector<2x64xf32>
    %cst_14 = arith.constant 1.000000e+00 : f32
    %37 = vector.broadcast %cst_14 : f32 to vector<2x64xf32>
    %38 = arith.subf %37, %29 : vector<2x64xf32>
    %39 = arith.mulf %38, %36 : vector<2x64xf32>
    %40 = arith.mulf %29, %4 : vector<2x64xf32>
    %41 = arith.addf %39, %40 : vector<2x64xf32>
    %42 = vector.extract_strided_slice %11 {offsets = [0, 192], sizes = [2, 192], strides = [1, 1]} : vector<2x384xf32> to vector<2x192xf32>
    %cst_15 = arith.constant dense<0.000000e+00> : vector<2x192xf32>
    %43 = tpu.matmul %4, %1, %cst_15 {dimension_numbers = #tpu.dot_dimension_numbers<[1], [0], [0], [1], [0, 0, 1, 1], [], []>} : vector<2x64xf32>, vector<64x192xf32>, vector<2x192xf32> -> vector<2x192xf32>
    %44 = vector.extract_strided_slice %42 {offsets = [0, 0], sizes = [2, 64], strides = [1, 1]} : vector<2x192xf32> to vector<2x64xf32>
    %45 = vector.extract_strided_slice %43 {offsets = [0, 0], sizes = [2, 64], strides = [1, 1]} : vector<2x192xf32> to vector<2x64xf32>
    %46 = arith.addf %44, %45 : vector<2x64xf32>
    %47 = arith.negf %46 : vector<2x64xf32>
    %48 = math.exp %47 : vector<2x64xf32>
    %cst_16 = arith.constant 1.000000e+00 : f32
    %49 = vector.broadcast %cst_16 : f32 to vector<2x64xf32>
    %50 = arith.addf %49, %48 : vector<2x64xf32>
    %51 = arith.divf %49, %50 : vector<2x64xf32>
    %52 = vector.extract_strided_slice %42 {offsets = [0, 64], sizes = [2, 64], strides = [1, 1]} : vector<2x192xf32> to vector<2x64xf32>
    %53 = vector.extract_strided_slice %43 {offsets = [0, 64], sizes = [2, 64], strides = [1, 1]} : vector<2x192xf32> to vector<2x64xf32>
    %54 = arith.addf %52, %53 : vector<2x64xf32>
    %55 = arith.negf %54 : vector<2x64xf32>
    %56 = math.exp %55 : vector<2x64xf32>
    %cst_17 = arith.constant 1.000000e+00 : f32
    %57 = vector.broadcast %cst_17 : f32 to vector<2x64xf32>
    %58 = arith.addf %57, %56 : vector<2x64xf32>
    %59 = arith.divf %57, %58 : vector<2x64xf32>
    %60 = vector.extract_strided_slice %42 {offsets = [0, 128], sizes = [2, 64], strides = [1, 1]} : vector<2x192xf32> to vector<2x64xf32>
    %61 = vector.extract_strided_slice %43 {offsets = [0, 128], sizes = [2, 64], strides = [1, 1]} : vector<2x192xf32> to vector<2x64xf32>
    %62 = vector.broadcast %3 : vector<1x64xf32> to vector<2x64xf32>
    %63 = arith.addf %61, %62 : vector<2x64xf32>
    %64 = arith.mulf %51, %63 : vector<2x64xf32>
    %65 = arith.addf %60, %64 : vector<2x64xf32>
    %66 = math.tanh %65 : vector<2x64xf32>
    %cst_18 = arith.constant 1.000000e+00 : f32
    %67 = vector.broadcast %cst_18 : f32 to vector<2x64xf32>
    %68 = arith.subf %67, %59 : vector<2x64xf32>
    %69 = arith.mulf %68, %66 : vector<2x64xf32>
    %70 = arith.mulf %59, %4 : vector<2x64xf32>
    %71 = arith.addf %69, %70 : vector<2x64xf32>
    %72 = arith.index_cast %c0_i32 : i32 to index
    %c0_19 = arith.constant 0 : index
    %c0_20 = arith.constant 0 : index
    %73 = vector.load %arg7[%72, %c0_19, %c0_20] : memref<8x2x128xf32, #tpu.memory_space<vmem>>, vector<1x2x64xf32>
    %74 = vector.shape_cast %73 : vector<1x2x64xf32> to vector<2x64xf32>
    %75 = vector.shape_cast %41 : vector<2x64xf32> to vector<1x2x64xf32>
    tpu.vector_store %arg7[%72, %c0_19, %c0_20], %75 {strides = array<i32>} : memref<8x2x128xf32, #tpu.memory_space<vmem>>, vector<1x2x64xf32>,
    %76 = arith.index_cast %5 : i32 to index
    %c0_21 = arith.constant 0 : index
    %c64 = arith.constant 64 : index
    %77 = vector.load %arg7[%76, %c0_21, %c64] : memref<8x2x128xf32, #tpu.memory_space<vmem>>, vector<1x2x64xf32>
    %78 = vector.shape_cast %77 : vector<1x2x64xf32> to vector<2x64xf32>
    %79 = vector.shape_cast %71 : vector<2x64xf32> to vector<1x2x64xf32>
    tpu.vector_store %arg7[%76, %c0_21, %c64], %79 {strides = array<i32>} : memref<8x2x128xf32, #tpu.memory_space<vmem>>, vector<1x2x64xf32>,
    %c1_i32 = arith.constant 1 : i32
    %c7_i32_22 = arith.constant 7 : i32
    %80 = arith.subi %c7_i32_22, %c1_i32 : i32
    %81 = arith.index_cast %c1_i32 : i32 to index
    %c0_23 = arith.constant 0 : index
    %c0_24 = arith.constant 0 : index
    %82 = vector.load %arg0[%81, %c0_23, %c0_24] : memref<8x2x384xf32, #tpu.memory_space<vmem>>, vector<1x2x384xf32>
    %83 = vector.shape_cast %82 : vector<1x2x384xf32> to vector<2x384xf32>
    %84 = arith.index_cast %80 : i32 to index
    %c0_25 = arith.constant 0 : index
    %c0_26 = arith.constant 0 : index
    %85 = vector.load %arg0[%84, %c0_25, %c0_26] : memref<8x2x384xf32, #tpu.memory_space<vmem>>, vector<1x2x384xf32>
    %86 = vector.shape_cast %85 : vector<1x2x384xf32> to vector<2x384xf32>
    %87 = vector.extract_strided_slice %83 {offsets = [0, 0], sizes = [2, 192], strides = [1, 1]} : vector<2x384xf32> to vector<2x192xf32>
    %cst_27 = arith.constant dense<0.000000e+00> : vector<2x192xf32>
    %88 = tpu.matmul %41, %0, %cst_27 {dimension_numbers = #tpu.dot_dimension_numbers<[1], [0], [0], [1], [0, 0, 1, 1], [], []>} : vector<2x64xf32>, vector<64x192xf32>, vector<2x192xf32> -> vector<2x192xf32>
    %89 = vector.extract_strided_slice %87 {offsets = [0, 0], sizes = [2, 64], strides = [1, 1]} : vector<2x192xf32> to vector<2x64xf32>
    %90 = vector.extract_strided_slice %88 {offsets = [0, 0], sizes = [2, 64], strides = [1, 1]} : vector<2x192xf32> to vector<2x64xf32>
    %91 = arith.addf %89, %90 : vector<2x64xf32>
    %92 = arith.negf %91 : vector<2x64xf32>
    %93 = math.exp %92 : vector<2x64xf32>
    %cst_28 = arith.constant 1.000000e+00 : f32
    %94 = vector.broadcast %cst_28 : f32 to vector<2x64xf32>
    %95 = arith.addf %94, %93 : vector<2x64xf32>
    %96 = arith.divf %94, %95 : vector<2x64xf32>
    %97 = vector.extract_strided_slice %87 {offsets = [0, 64], sizes = [2, 64], strides = [1, 1]} : vector<2x192xf32> to vector<2x64xf32>
    %98 = vector.extract_strided_slice %88 {offsets = [0, 64], sizes = [2, 64], strides = [1, 1]} : vector<2x192xf32> to vector<2x64xf32>
    %99 = arith.addf %97, %98 : vector<2x64xf32>
    %100 = arith.negf %99 : vector<2x64xf32>
    %101 = math.exp %100 : vector<2x64xf32>
    %cst_29 = arith.constant 1.000000e+00 : f32
    %102 = vector.broadcast %cst_29 : f32 to vector<2x64xf32>
    %103 = arith.addf %102, %101 : vector<2x64xf32>
    %104 = arith.divf %102, %103 : vector<2x64xf32>
    %105 = vector.extract_strided_slice %87 {offsets = [0, 128], sizes = [2, 64], strides = [1, 1]} : vector<2x192xf32> to vector<2x64xf32>
    %106 = vector.extract_strided_slice %88 {offsets = [0, 128], sizes = [2, 64], strides = [1, 1]} : vector<2x192xf32> to vector<2x64xf32>
    %107 = vector.broadcast %2 : vector<1x64xf32> to vector<2x64xf32>
    %108 = arith.addf %106, %107 : vector<2x64xf32>
    %109 = arith.mulf %96, %108 : vector<2x64xf32>
    %110 = arith.addf %105, %109 : vector<2x64xf32>
    %111 = math.tanh %110 : vector<2x64xf32>
    %cst_30 = arith.constant 1.000000e+00 : f32
    %112 = vector.broadcast %cst_30 : f32 to vector<2x64xf32>
    %113 = arith.subf %112, %104 : vector<2x64xf32>
    %114 = arith.mulf %113, %111 : vector<2x64xf32>
    %115 = arith.mulf %104, %41 : vector<2x64xf32>
    %116 = arith.addf %114, %115 : vector<2x64xf32>
    %117 = vector.extract_strided_slice %86 {offsets = [0, 192], sizes = [2, 192], strides = [1, 1]} : vector<2x384xf32> to vector<2x192xf32>
    %cst_31 = arith.constant dense<0.000000e+00> : vector<2x192xf32>
    %118 = tpu.matmul %71, %1, %cst_31 {dimension_numbers = #tpu.dot_dimension_numbers<[1], [0], [0], [1], [0, 0, 1, 1], [], []>} : vector<2x64xf32>, vector<64x192xf32>, vector<2x192xf32> -> vector<2x192xf32>
    %119 = vector.extract_strided_slice %117 {offsets = [0, 0], sizes = [2, 64], strides = [1, 1]} : vector<2x192xf32> to vector<2x64xf32>
    %120 = vector.extract_strided_slice %118 {offsets = [0, 0], sizes = [2, 64], strides = [1, 1]} : vector<2x192xf32> to vector<2x64xf32>
    %121 = arith.addf %119, %120 : vector<2x64xf32>
    %122 = arith.negf %121 : vector<2x64xf32>
    %123 = math.exp %122 : vector<2x64xf32>
    %cst_32 = arith.constant 1.000000e+00 : f32
    %124 = vector.broadcast %cst_32 : f32 to vector<2x64xf32>
    %125 = arith.addf %124, %123 : vector<2x64xf32>
    %126 = arith.divf %124, %125 : vector<2x64xf32>
    %127 = vector.extract_strided_slice %117 {offsets = [0, 64], sizes = [2, 64], strides = [1, 1]} : vector<2x192xf32> to vector<2x64xf32>
    %128 = vector.extract_strided_slice %118 {offsets = [0, 64], sizes = [2, 64], strides = [1, 1]} : vector<2x192xf32> to vector<2x64xf32>
    %129 = arith.addf %127, %128 : vector<2x64xf32>
    %130 = arith.negf %129 : vector<2x64xf32>
    %131 = math.exp %130 : vector<2x64xf32>
    %cst_33 = arith.constant 1.000000e+00 : f32
    %132 = vector.broadcast %cst_33 : f32 to vector<2x64xf32>
    %133 = arith.addf %132, %131 : vector<2x64xf32>
    %134 = arith.divf %132, %133 : vector<2x64xf32>
    %135 = vector.extract_strided_slice %117 {offsets = [0, 128], sizes = [2, 64], strides = [1, 1]} : vector<2x192xf32> to vector<2x64xf32>
    %136 = vector.extract_strided_slice %118 {offsets = [0, 128], sizes = [2, 64], strides = [1, 1]} : vector<2x192xf32> to vector<2x64xf32>
    %137 = vector.broadcast %3 : vector<1x64xf32> to vector<2x64xf32>
    %138 = arith.addf %136, %137 : vector<2x64xf32>
    %139 = arith.mulf %126, %138 : vector<2x64xf32>
    %140 = arith.addf %135, %139 : vector<2x64xf32>
    %141 = math.tanh %140 : vector<2x64xf32>
    %cst_34 = arith.constant 1.000000e+00 : f32
    %142 = vector.broadcast %cst_34 : f32 to vector<2x64xf32>
    %143 = arith.subf %142, %134 : vector<2x64xf32>
    %144 = arith.mulf %143, %141 : vector<2x64xf32>
    %145 = arith.mulf %134, %71 : vector<2x64xf32>
    %146 = arith.addf %144, %145 : vector<2x64xf32>
    %147 = arith.index_cast %c1_i32 : i32 to index
    %c0_35 = arith.constant 0 : index
    %c0_36 = arith.constant 0 : index
    %148 = vector.load %arg7[%147, %c0_35, %c0_36] : memref<8x2x128xf32, #tpu.memory_space<vmem>>, vector<1x2x64xf32>
    %149 = vector.shape_cast %148 : vector<1x2x64xf32> to vector<2x64xf32>
    %150 = vector.shape_cast %116 : vector<2x64xf32> to vector<1x2x64xf32>
    tpu.vector_store %arg7[%147, %c0_35, %c0_36], %150 {strides = array<i32>} : memref<8x2x128xf32, #tpu.memory_space<vmem>>, vector<1x2x64xf32>,
    %151 = arith.index_cast %80 : i32 to index
    %c0_37 = arith.constant 0 : index
    %c64_38 = arith.constant 64 : index
    %152 = vector.load %arg7[%151, %c0_37, %c64_38] : memref<8x2x128xf32, #tpu.memory_space<vmem>>, vector<1x2x64xf32>
    %153 = vector.shape_cast %152 : vector<1x2x64xf32> to vector<2x64xf32>
    %154 = vector.shape_cast %146 : vector<2x64xf32> to vector<1x2x64xf32>
    tpu.vector_store %arg7[%151, %c0_37, %c64_38], %154 {strides = array<i32>} : memref<8x2x128xf32, #tpu.memory_space<vmem>>, vector<1x2x64xf32>,
    %c2_i32 = arith.constant 2 : i32
    %c7_i32_39 = arith.constant 7 : i32
    %155 = arith.subi %c7_i32_39, %c2_i32 : i32
    %156 = arith.index_cast %c2_i32 : i32 to index
    %c0_40 = arith.constant 0 : index
    %c0_41 = arith.constant 0 : index
    %157 = vector.load %arg0[%156, %c0_40, %c0_41] : memref<8x2x384xf32, #tpu.memory_space<vmem>>, vector<1x2x384xf32>
    %158 = vector.shape_cast %157 : vector<1x2x384xf32> to vector<2x384xf32>
    %159 = arith.index_cast %155 : i32 to index
    %c0_42 = arith.constant 0 : index
    %c0_43 = arith.constant 0 : index
    %160 = vector.load %arg0[%159, %c0_42, %c0_43] : memref<8x2x384xf32, #tpu.memory_space<vmem>>, vector<1x2x384xf32>
    %161 = vector.shape_cast %160 : vector<1x2x384xf32> to vector<2x384xf32>
    %162 = vector.extract_strided_slice %158 {offsets = [0, 0], sizes = [2, 192], strides = [1, 1]} : vector<2x384xf32> to vector<2x192xf32>
    %cst_44 = arith.constant dense<0.000000e+00> : vector<2x192xf32>
    %163 = tpu.matmul %116, %0, %cst_44 {dimension_numbers = #tpu.dot_dimension_numbers<[1], [0], [0], [1], [0, 0, 1, 1], [], []>} : vector<2x64xf32>, vector<64x192xf32>, vector<2x192xf32> -> vector<2x192xf32>
    %164 = vector.extract_strided_slice %162 {offsets = [0, 0], sizes = [2, 64], strides = [1, 1]} : vector<2x192xf32> to vector<2x64xf32>
    %165 = vector.extract_strided_slice %163 {offsets = [0, 0], sizes = [2, 64], strides = [1, 1]} : vector<2x192xf32> to vector<2x64xf32>
    %166 = arith.addf %164, %165 : vector<2x64xf32>
    %167 = arith.negf %166 : vector<2x64xf32>
    %168 = math.exp %167 : vector<2x64xf32>
    %cst_45 = arith.constant 1.000000e+00 : f32
    %169 = vector.broadcast %cst_45 : f32 to vector<2x64xf32>
    %170 = arith.addf %169, %168 : vector<2x64xf32>
    %171 = arith.divf %169, %170 : vector<2x64xf32>
    %172 = vector.extract_strided_slice %162 {offsets = [0, 64], sizes = [2, 64], strides = [1, 1]} : vector<2x192xf32> to vector<2x64xf32>
    %173 = vector.extract_strided_slice %163 {offsets = [0, 64], sizes = [2, 64], strides = [1, 1]} : vector<2x192xf32> to vector<2x64xf32>
    %174 = arith.addf %172, %173 : vector<2x64xf32>
    %175 = arith.negf %174 : vector<2x64xf32>
    %176 = math.exp %175 : vector<2x64xf32>
    %cst_46 = arith.constant 1.000000e+00 : f32
    %177 = vector.broadcast %cst_46 : f32 to vector<2x64xf32>
    %178 = arith.addf %177, %176 : vector<2x64xf32>
    %179 = arith.divf %177, %178 : vector<2x64xf32>
    %180 = vector.extract_strided_slice %162 {offsets = [0, 128], sizes = [2, 64], strides = [1, 1]} : vector<2x192xf32> to vector<2x64xf32>
    %181 = vector.extract_strided_slice %163 {offsets = [0, 128], sizes = [2, 64], strides = [1, 1]} : vector<2x192xf32> to vector<2x64xf32>
    %182 = vector.broadcast %2 : vector<1x64xf32> to vector<2x64xf32>
    %183 = arith.addf %181, %182 : vector<2x64xf32>
    %184 = arith.mulf %171, %183 : vector<2x64xf32>
    %185 = arith.addf %180, %184 : vector<2x64xf32>
    %186 = math.tanh %185 : vector<2x64xf32>
    %cst_47 = arith.constant 1.000000e+00 : f32
    %187 = vector.broadcast %cst_47 : f32 to vector<2x64xf32>
    %188 = arith.subf %187, %179 : vector<2x64xf32>
    %189 = arith.mulf %188, %186 : vector<2x64xf32>
    %190 = arith.mulf %179, %116 : vector<2x64xf32>
    %191 = arith.addf %189, %190 : vector<2x64xf32>
    %192 = vector.extract_strided_slice %161 {offsets = [0, 192], sizes = [2, 192], strides = [1, 1]} : vector<2x384xf32> to vector<2x192xf32>
    %cst_48 = arith.constant dense<0.000000e+00> : vector<2x192xf32>
    %193 = tpu.matmul %146, %1, %cst_48 {dimension_numbers = #tpu.dot_dimension_numbers<[1], [0], [0], [1], [0, 0, 1, 1], [], []>} : vector<2x64xf32>, vector<64x192xf32>, vector<2x192xf32> -> vector<2x192xf32>
    %194 = vector.extract_strided_slice %192 {offsets = [0, 0], sizes = [2, 64], strides = [1, 1]} : vector<2x192xf32> to vector<2x64xf32>
    %195 = vector.extract_strided_slice %193 {offsets = [0, 0], sizes = [2, 64], strides = [1, 1]} : vector<2x192xf32> to vector<2x64xf32>
    %196 = arith.addf %194, %195 : vector<2x64xf32>
    %197 = arith.negf %196 : vector<2x64xf32>
    %198 = math.exp %197 : vector<2x64xf32>
    %cst_49 = arith.constant 1.000000e+00 : f32
    %199 = vector.broadcast %cst_49 : f32 to vector<2x64xf32>
    %200 = arith.addf %199, %198 : vector<2x64xf32>
    %201 = arith.divf %199, %200 : vector<2x64xf32>
    %202 = vector.extract_strided_slice %192 {offsets = [0, 64], sizes = [2, 64], strides = [1, 1]} : vector<2x192xf32> to vector<2x64xf32>
    %203 = vector.extract_strided_slice %193 {offsets = [0, 64], sizes = [2, 64], strides = [1, 1]} : vector<2x192xf32> to vector<2x64xf32>
    %204 = arith.addf %202, %203 : vector<2x64xf32>
    %205 = arith.negf %204 : vector<2x64xf32>
    %206 = math.exp %205 : vector<2x64xf32>
    %cst_50 = arith.constant 1.000000e+00 : f32
    %207 = vector.broadcast %cst_50 : f32 to vector<2x64xf32>
    %208 = arith.addf %207, %206 : vector<2x64xf32>
    %209 = arith.divf %207, %208 : vector<2x64xf32>
    %210 = vector.extract_strided_slice %192 {offsets = [0, 128], sizes = [2, 64], strides = [1, 1]} : vector<2x192xf32> to vector<2x64xf32>
    %211 = vector.extract_strided_slice %193 {offsets = [0, 128], sizes = [2, 64], strides = [1, 1]} : vector<2x192xf32> to vector<2x64xf32>
    %212 = vector.broadcast %3 : vector<1x64xf32> to vector<2x64xf32>
    %213 = arith.addf %211, %212 : vector<2x64xf32>
    %214 = arith.mulf %201, %213 : vector<2x64xf32>
    %215 = arith.addf %210, %214 : vector<2x64xf32>
    %216 = math.tanh %215 : vector<2x64xf32>
    %cst_51 = arith.constant 1.000000e+00 : f32
    %217 = vector.broadcast %cst_51 : f32 to vector<2x64xf32>
    %218 = arith.subf %217, %209 : vector<2x64xf32>
    %219 = arith.mulf %218, %216 : vector<2x64xf32>
    %220 = arith.mulf %209, %146 : vector<2x64xf32>
    %221 = arith.addf %219, %220 : vector<2x64xf32>
    %222 = arith.index_cast %c2_i32 : i32 to index
    %c0_52 = arith.constant 0 : index
    %c0_53 = arith.constant 0 : index
    %223 = vector.load %arg7[%222, %c0_52, %c0_53] : memref<8x2x128xf32, #tpu.memory_space<vmem>>, vector<1x2x64xf32>
    %224 = vector.shape_cast %223 : vector<1x2x64xf32> to vector<2x64xf32>
    %225 = vector.shape_cast %191 : vector<2x64xf32> to vector<1x2x64xf32>
    tpu.vector_store %arg7[%222, %c0_52, %c0_53], %225 {strides = array<i32>} : memref<8x2x128xf32, #tpu.memory_space<vmem>>, vector<1x2x64xf32>,
    %226 = arith.index_cast %155 : i32 to index
    %c0_54 = arith.constant 0 : index
    %c64_55 = arith.constant 64 : index
    %227 = vector.load %arg7[%226, %c0_54, %c64_55] : memref<8x2x128xf32, #tpu.memory_space<vmem>>, vector<1x2x64xf32>
    %228 = vector.shape_cast %227 : vector<1x2x64xf32> to vector<2x64xf32>
    %229 = vector.shape_cast %221 : vector<2x64xf32> to vector<1x2x64xf32>
    tpu.vector_store %arg7[%226, %c0_54, %c64_55], %229 {strides = array<i32>} : memref<8x2x128xf32, #tpu.memory_space<vmem>>, vector<1x2x64xf32>,
    %c3_i32 = arith.constant 3 : i32
    %c7_i32_56 = arith.constant 7 : i32
    %230 = arith.subi %c7_i32_56, %c3_i32 : i32
    %231 = arith.index_cast %c3_i32 : i32 to index
    %c0_57 = arith.constant 0 : index
    %c0_58 = arith.constant 0 : index
    %232 = vector.load %arg0[%231, %c0_57, %c0_58] : memref<8x2x384xf32, #tpu.memory_space<vmem>>, vector<1x2x384xf32>
    %233 = vector.shape_cast %232 : vector<1x2x384xf32> to vector<2x384xf32>
    %234 = arith.index_cast %230 : i32 to index
    %c0_59 = arith.constant 0 : index
    %c0_60 = arith.constant 0 : index
    %235 = vector.load %arg0[%234, %c0_59, %c0_60] : memref<8x2x384xf32, #tpu.memory_space<vmem>>, vector<1x2x384xf32>
    %236 = vector.shape_cast %235 : vector<1x2x384xf32> to vector<2x384xf32>
    %237 = vector.extract_strided_slice %233 {offsets = [0, 0], sizes = [2, 192], strides = [1, 1]} : vector<2x384xf32> to vector<2x192xf32>
    %cst_61 = arith.constant dense<0.000000e+00> : vector<2x192xf32>
    %238 = tpu.matmul %191, %0, %cst_61 {dimension_numbers = #tpu.dot_dimension_numbers<[1], [0], [0], [1], [0, 0, 1, 1], [], []>} : vector<2x64xf32>, vector<64x192xf32>, vector<2x192xf32> -> vector<2x192xf32>
    %239 = vector.extract_strided_slice %237 {offsets = [0, 0], sizes = [2, 64], strides = [1, 1]} : vector<2x192xf32> to vector<2x64xf32>
    %240 = vector.extract_strided_slice %238 {offsets = [0, 0], sizes = [2, 64], strides = [1, 1]} : vector<2x192xf32> to vector<2x64xf32>
    %241 = arith.addf %239, %240 : vector<2x64xf32>
    %242 = arith.negf %241 : vector<2x64xf32>
    %243 = math.exp %242 : vector<2x64xf32>
    %cst_62 = arith.constant 1.000000e+00 : f32
    %244 = vector.broadcast %cst_62 : f32 to vector<2x64xf32>
    %245 = arith.addf %244, %243 : vector<2x64xf32>
    %246 = arith.divf %244, %245 : vector<2x64xf32>
    %247 = vector.extract_strided_slice %237 {offsets = [0, 64], sizes = [2, 64], strides = [1, 1]} : vector<2x192xf32> to vector<2x64xf32>
    %248 = vector.extract_strided_slice %238 {offsets = [0, 64], sizes = [2, 64], strides = [1, 1]} : vector<2x192xf32> to vector<2x64xf32>
    %249 = arith.addf %247, %248 : vector<2x64xf32>
    %250 = arith.negf %249 : vector<2x64xf32>
    %251 = math.exp %250 : vector<2x64xf32>
    %cst_63 = arith.constant 1.000000e+00 : f32
    %252 = vector.broadcast %cst_63 : f32 to vector<2x64xf32>
    %253 = arith.addf %252, %251 : vector<2x64xf32>
    %254 = arith.divf %252, %253 : vector<2x64xf32>
    %255 = vector.extract_strided_slice %237 {offsets = [0, 128], sizes = [2, 64], strides = [1, 1]} : vector<2x192xf32> to vector<2x64xf32>
    %256 = vector.extract_strided_slice %238 {offsets = [0, 128], sizes = [2, 64], strides = [1, 1]} : vector<2x192xf32> to vector<2x64xf32>
    %257 = vector.broadcast %2 : vector<1x64xf32> to vector<2x64xf32>
    %258 = arith.addf %256, %257 : vector<2x64xf32>
    %259 = arith.mulf %246, %258 : vector<2x64xf32>
    %260 = arith.addf %255, %259 : vector<2x64xf32>
    %261 = math.tanh %260 : vector<2x64xf32>
    %cst_64 = arith.constant 1.000000e+00 : f32
    %262 = vector.broadcast %cst_64 : f32 to vector<2x64xf32>
    %263 = arith.subf %262, %254 : vector<2x64xf32>
    %264 = arith.mulf %263, %261 : vector<2x64xf32>
    %265 = arith.mulf %254, %191 : vector<2x64xf32>
    %266 = arith.addf %264, %265 : vector<2x64xf32>
    %267 = vector.extract_strided_slice %236 {offsets = [0, 192], sizes = [2, 192], strides = [1, 1]} : vector<2x384xf32> to vector<2x192xf32>
    %cst_65 = arith.constant dense<0.000000e+00> : vector<2x192xf32>
    %268 = tpu.matmul %221, %1, %cst_65 {dimension_numbers = #tpu.dot_dimension_numbers<[1], [0], [0], [1], [0, 0, 1, 1], [], []>} : vector<2x64xf32>, vector<64x192xf32>, vector<2x192xf32> -> vector<2x192xf32>
    %269 = vector.extract_strided_slice %267 {offsets = [0, 0], sizes = [2, 64], strides = [1, 1]} : vector<2x192xf32> to vector<2x64xf32>
    %270 = vector.extract_strided_slice %268 {offsets = [0, 0], sizes = [2, 64], strides = [1, 1]} : vector<2x192xf32> to vector<2x64xf32>
    %271 = arith.addf %269, %270 : vector<2x64xf32>
    %272 = arith.negf %271 : vector<2x64xf32>
    %273 = math.exp %272 : vector<2x64xf32>
    %cst_66 = arith.constant 1.000000e+00 : f32
    %274 = vector.broadcast %cst_66 : f32 to vector<2x64xf32>
    %275 = arith.addf %274, %273 : vector<2x64xf32>
    %276 = arith.divf %274, %275 : vector<2x64xf32>
    %277 = vector.extract_strided_slice %267 {offsets = [0, 64], sizes = [2, 64], strides = [1, 1]} : vector<2x192xf32> to vector<2x64xf32>
    %278 = vector.extract_strided_slice %268 {offsets = [0, 64], sizes = [2, 64], strides = [1, 1]} : vector<2x192xf32> to vector<2x64xf32>
    %279 = arith.addf %277, %278 : vector<2x64xf32>
    %280 = arith.negf %279 : vector<2x64xf32>
    %281 = math.exp %280 : vector<2x64xf32>
    %cst_67 = arith.constant 1.000000e+00 : f32
    %282 = vector.broadcast %cst_67 : f32 to vector<2x64xf32>
    %283 = arith.addf %282, %281 : vector<2x64xf32>
    %284 = arith.divf %282, %283 : vector<2x64xf32>
    %285 = vector.extract_strided_slice %267 {offsets = [0, 128], sizes = [2, 64], strides = [1, 1]} : vector<2x192xf32> to vector<2x64xf32>
    %286 = vector.extract_strided_slice %268 {offsets = [0, 128], sizes = [2, 64], strides = [1, 1]} : vector<2x192xf32> to vector<2x64xf32>
    %287 = vector.broadcast %3 : vector<1x64xf32> to vector<2x64xf32>
    %288 = arith.addf %286, %287 : vector<2x64xf32>
    %289 = arith.mulf %276, %288 : vector<2x64xf32>
    %290 = arith.addf %285, %289 : vector<2x64xf32>
    %291 = math.tanh %290 : vector<2x64xf32>
    %cst_68 = arith.constant 1.000000e+00 : f32
    %292 = vector.broadcast %cst_68 : f32 to vector<2x64xf32>
    %293 = arith.subf %292, %284 : vector<2x64xf32>
    %294 = arith.mulf %293, %291 : vector<2x64xf32>
    %295 = arith.mulf %284, %221 : vector<2x64xf32>
    %296 = arith.addf %294, %295 : vector<2x64xf32>
    %297 = arith.index_cast %c3_i32 : i32 to index
    %c0_69 = arith.constant 0 : index
    %c0_70 = arith.constant 0 : index
    %298 = vector.load %arg7[%297, %c0_69, %c0_70] : memref<8x2x128xf32, #tpu.memory_space<vmem>>, vector<1x2x64xf32>
    %299 = vector.shape_cast %298 : vector<1x2x64xf32> to vector<2x64xf32>
    %300 = vector.shape_cast %266 : vector<2x64xf32> to vector<1x2x64xf32>
    tpu.vector_store %arg7[%297, %c0_69, %c0_70], %300 {strides = array<i32>} : memref<8x2x128xf32, #tpu.memory_space<vmem>>, vector<1x2x64xf32>,
    %301 = arith.index_cast %230 : i32 to index
    %c0_71 = arith.constant 0 : index
    %c64_72 = arith.constant 64 : index
    %302 = vector.load %arg7[%301, %c0_71, %c64_72] : memref<8x2x128xf32, #tpu.memory_space<vmem>>, vector<1x2x64xf32>
    %303 = vector.shape_cast %302 : vector<1x2x64xf32> to vector<2x64xf32>
    %304 = vector.shape_cast %296 : vector<2x64xf32> to vector<1x2x64xf32>
    tpu.vector_store %arg7[%301, %c0_71, %c64_72], %304 {strides = array<i32>} : memref<8x2x128xf32, #tpu.memory_space<vmem>>, vector<1x2x64xf32>,
    %c4_i32 = arith.constant 4 : i32
    %c7_i32_73 = arith.constant 7 : i32
    %305 = arith.subi %c7_i32_73, %c4_i32 : i32
    %306 = arith.index_cast %c4_i32 : i32 to index
    %c0_74 = arith.constant 0 : index
    %c0_75 = arith.constant 0 : index
    %307 = vector.load %arg0[%306, %c0_74, %c0_75] : memref<8x2x384xf32, #tpu.memory_space<vmem>>, vector<1x2x384xf32>
    %308 = vector.shape_cast %307 : vector<1x2x384xf32> to vector<2x384xf32>
    %309 = arith.index_cast %305 : i32 to index
    %c0_76 = arith.constant 0 : index
    %c0_77 = arith.constant 0 : index
    %310 = vector.load %arg0[%309, %c0_76, %c0_77] : memref<8x2x384xf32, #tpu.memory_space<vmem>>, vector<1x2x384xf32>
    %311 = vector.shape_cast %310 : vector<1x2x384xf32> to vector<2x384xf32>
    %312 = vector.extract_strided_slice %308 {offsets = [0, 0], sizes = [2, 192], strides = [1, 1]} : vector<2x384xf32> to vector<2x192xf32>
    %cst_78 = arith.constant dense<0.000000e+00> : vector<2x192xf32>
    %313 = tpu.matmul %266, %0, %cst_78 {dimension_numbers = #tpu.dot_dimension_numbers<[1], [0], [0], [1], [0, 0, 1, 1], [], []>} : vector<2x64xf32>, vector<64x192xf32>, vector<2x192xf32> -> vector<2x192xf32>
    %314 = vector.extract_strided_slice %312 {offsets = [0, 0], sizes = [2, 64], strides = [1, 1]} : vector<2x192xf32> to vector<2x64xf32>
    %315 = vector.extract_strided_slice %313 {offsets = [0, 0], sizes = [2, 64], strides = [1, 1]} : vector<2x192xf32> to vector<2x64xf32>
    %316 = arith.addf %314, %315 : vector<2x64xf32>
    %317 = arith.negf %316 : vector<2x64xf32>
    %318 = math.exp %317 : vector<2x64xf32>
    %cst_79 = arith.constant 1.000000e+00 : f32
    %319 = vector.broadcast %cst_79 : f32 to vector<2x64xf32>
    %320 = arith.addf %319, %318 : vector<2x64xf32>
    %321 = arith.divf %319, %320 : vector<2x64xf32>
    %322 = vector.extract_strided_slice %312 {offsets = [0, 64], sizes = [2, 64], strides = [1, 1]} : vector<2x192xf32> to vector<2x64xf32>
    %323 = vector.extract_strided_slice %313 {offsets = [0, 64], sizes = [2, 64], strides = [1, 1]} : vector<2x192xf32> to vector<2x64xf32>
    %324 = arith.addf %322, %323 : vector<2x64xf32>
    %325 = arith.negf %324 : vector<2x64xf32>
    %326 = math.exp %325 : vector<2x64xf32>
    %cst_80 = arith.constant 1.000000e+00 : f32
    %327 = vector.broadcast %cst_80 : f32 to vector<2x64xf32>
    %328 = arith.addf %327, %326 : vector<2x64xf32>
    %329 = arith.divf %327, %328 : vector<2x64xf32>
    %330 = vector.extract_strided_slice %312 {offsets = [0, 128], sizes = [2, 64], strides = [1, 1]} : vector<2x192xf32> to vector<2x64xf32>
    %331 = vector.extract_strided_slice %313 {offsets = [0, 128], sizes = [2, 64], strides = [1, 1]} : vector<2x192xf32> to vector<2x64xf32>
    %332 = vector.broadcast %2 : vector<1x64xf32> to vector<2x64xf32>
    %333 = arith.addf %331, %332 : vector<2x64xf32>
    %334 = arith.mulf %321, %333 : vector<2x64xf32>
    %335 = arith.addf %330, %334 : vector<2x64xf32>
    %336 = math.tanh %335 : vector<2x64xf32>
    %cst_81 = arith.constant 1.000000e+00 : f32
    %337 = vector.broadcast %cst_81 : f32 to vector<2x64xf32>
    %338 = arith.subf %337, %329 : vector<2x64xf32>
    %339 = arith.mulf %338, %336 : vector<2x64xf32>
    %340 = arith.mulf %329, %266 : vector<2x64xf32>
    %341 = arith.addf %339, %340 : vector<2x64xf32>
    %342 = vector.extract_strided_slice %311 {offsets = [0, 192], sizes = [2, 192], strides = [1, 1]} : vector<2x384xf32> to vector<2x192xf32>
    %cst_82 = arith.constant dense<0.000000e+00> : vector<2x192xf32>
    %343 = tpu.matmul %296, %1, %cst_82 {dimension_numbers = #tpu.dot_dimension_numbers<[1], [0], [0], [1], [0, 0, 1, 1], [], []>} : vector<2x64xf32>, vector<64x192xf32>, vector<2x192xf32> -> vector<2x192xf32>
    %344 = vector.extract_strided_slice %342 {offsets = [0, 0], sizes = [2, 64], strides = [1, 1]} : vector<2x192xf32> to vector<2x64xf32>
    %345 = vector.extract_strided_slice %343 {offsets = [0, 0], sizes = [2, 64], strides = [1, 1]} : vector<2x192xf32> to vector<2x64xf32>
    %346 = arith.addf %344, %345 : vector<2x64xf32>
    %347 = arith.negf %346 : vector<2x64xf32>
    %348 = math.exp %347 : vector<2x64xf32>
    %cst_83 = arith.constant 1.000000e+00 : f32
    %349 = vector.broadcast %cst_83 : f32 to vector<2x64xf32>
    %350 = arith.addf %349, %348 : vector<2x64xf32>
    %351 = arith.divf %349, %350 : vector<2x64xf32>
    %352 = vector.extract_strided_slice %342 {offsets = [0, 64], sizes = [2, 64], strides = [1, 1]} : vector<2x192xf32> to vector<2x64xf32>
    %353 = vector.extract_strided_slice %343 {offsets = [0, 64], sizes = [2, 64], strides = [1, 1]} : vector<2x192xf32> to vector<2x64xf32>
    %354 = arith.addf %352, %353 : vector<2x64xf32>
    %355 = arith.negf %354 : vector<2x64xf32>
    %356 = math.exp %355 : vector<2x64xf32>
    %cst_84 = arith.constant 1.000000e+00 : f32
    %357 = vector.broadcast %cst_84 : f32 to vector<2x64xf32>
    %358 = arith.addf %357, %356 : vector<2x64xf32>
    %359 = arith.divf %357, %358 : vector<2x64xf32>
    %360 = vector.extract_strided_slice %342 {offsets = [0, 128], sizes = [2, 64], strides = [1, 1]} : vector<2x192xf32> to vector<2x64xf32>
    %361 = vector.extract_strided_slice %343 {offsets = [0, 128], sizes = [2, 64], strides = [1, 1]} : vector<2x192xf32> to vector<2x64xf32>
    %362 = vector.broadcast %3 : vector<1x64xf32> to vector<2x64xf32>
    %363 = arith.addf %361, %362 : vector<2x64xf32>
    %364 = arith.mulf %351, %363 : vector<2x64xf32>
    %365 = arith.addf %360, %364 : vector<2x64xf32>
    %366 = math.tanh %365 : vector<2x64xf32>
    %cst_85 = arith.constant 1.000000e+00 : f32
    %367 = vector.broadcast %cst_85 : f32 to vector<2x64xf32>
    %368 = arith.subf %367, %359 : vector<2x64xf32>
    %369 = arith.mulf %368, %366 : vector<2x64xf32>
    %370 = arith.mulf %359, %296 : vector<2x64xf32>
    %371 = arith.addf %369, %370 : vector<2x64xf32>
    %372 = arith.index_cast %c4_i32 : i32 to index
    %c0_86 = arith.constant 0 : index
    %c0_87 = arith.constant 0 : index
    %373 = vector.load %arg7[%372, %c0_86, %c0_87] : memref<8x2x128xf32, #tpu.memory_space<vmem>>, vector<1x2x64xf32>
    %374 = vector.shape_cast %373 : vector<1x2x64xf32> to vector<2x64xf32>
    %375 = vector.shape_cast %341 : vector<2x64xf32> to vector<1x2x64xf32>
    tpu.vector_store %arg7[%372, %c0_86, %c0_87], %375 {strides = array<i32>} : memref<8x2x128xf32, #tpu.memory_space<vmem>>, vector<1x2x64xf32>,
    %376 = arith.index_cast %305 : i32 to index
    %c0_88 = arith.constant 0 : index
    %c64_89 = arith.constant 64 : index
    %377 = vector.load %arg7[%376, %c0_88, %c64_89] : memref<8x2x128xf32, #tpu.memory_space<vmem>>, vector<1x2x64xf32>
    %378 = vector.shape_cast %377 : vector<1x2x64xf32> to vector<2x64xf32>
    %379 = vector.shape_cast %371 : vector<2x64xf32> to vector<1x2x64xf32>
    tpu.vector_store %arg7[%376, %c0_88, %c64_89], %379 {strides = array<i32>} : memref<8x2x128xf32, #tpu.memory_space<vmem>>, vector<1x2x64xf32>,
    %c5_i32 = arith.constant 5 : i32
    %c7_i32_90 = arith.constant 7 : i32
    %380 = arith.subi %c7_i32_90, %c5_i32 : i32
    %381 = arith.index_cast %c5_i32 : i32 to index
    %c0_91 = arith.constant 0 : index
    %c0_92 = arith.constant 0 : index
    %382 = vector.load %arg0[%381, %c0_91, %c0_92] : memref<8x2x384xf32, #tpu.memory_space<vmem>>, vector<1x2x384xf32>
    %383 = vector.shape_cast %382 : vector<1x2x384xf32> to vector<2x384xf32>
    %384 = arith.index_cast %380 : i32 to index
    %c0_93 = arith.constant 0 : index
    %c0_94 = arith.constant 0 : index
    %385 = vector.load %arg0[%384, %c0_93, %c0_94] : memref<8x2x384xf32, #tpu.memory_space<vmem>>, vector<1x2x384xf32>
    %386 = vector.shape_cast %385 : vector<1x2x384xf32> to vector<2x384xf32>
    %387 = vector.extract_strided_slice %383 {offsets = [0, 0], sizes = [2, 192], strides = [1, 1]} : vector<2x384xf32> to vector<2x192xf32>
    %cst_95 = arith.constant dense<0.000000e+00> : vector<2x192xf32>
    %388 = tpu.matmul %341, %0, %cst_95 {dimension_numbers = #tpu.dot_dimension_numbers<[1], [0], [0], [1], [0, 0, 1, 1], [], []>} : vector<2x64xf32>, vector<64x192xf32>, vector<2x192xf32> -> vector<2x192xf32>
    %389 = vector.extract_strided_slice %387 {offsets = [0, 0], sizes = [2, 64], strides = [1, 1]} : vector<2x192xf32> to vector<2x64xf32>
    %390 = vector.extract_strided_slice %388 {offsets = [0, 0], sizes = [2, 64], strides = [1, 1]} : vector<2x192xf32> to vector<2x64xf32>
    %391 = arith.addf %389, %390 : vector<2x64xf32>
    %392 = arith.negf %391 : vector<2x64xf32>
    %393 = math.exp %392 : vector<2x64xf32>
    %cst_96 = arith.constant 1.000000e+00 : f32
    %394 = vector.broadcast %cst_96 : f32 to vector<2x64xf32>
    %395 = arith.addf %394, %393 : vector<2x64xf32>
    %396 = arith.divf %394, %395 : vector<2x64xf32>
    %397 = vector.extract_strided_slice %387 {offsets = [0, 64], sizes = [2, 64], strides = [1, 1]} : vector<2x192xf32> to vector<2x64xf32>
    %398 = vector.extract_strided_slice %388 {offsets = [0, 64], sizes = [2, 64], strides = [1, 1]} : vector<2x192xf32> to vector<2x64xf32>
    %399 = arith.addf %397, %398 : vector<2x64xf32>
    %400 = arith.negf %399 : vector<2x64xf32>
    %401 = math.exp %400 : vector<2x64xf32>
    %cst_97 = arith.constant 1.000000e+00 : f32
    %402 = vector.broadcast %cst_97 : f32 to vector<2x64xf32>
    %403 = arith.addf %402, %401 : vector<2x64xf32>
    %404 = arith.divf %402, %403 : vector<2x64xf32>
    %405 = vector.extract_strided_slice %387 {offsets = [0, 128], sizes = [2, 64], strides = [1, 1]} : vector<2x192xf32> to vector<2x64xf32>
    %406 = vector.extract_strided_slice %388 {offsets = [0, 128], sizes = [2, 64], strides = [1, 1]} : vector<2x192xf32> to vector<2x64xf32>
    %407 = vector.broadcast %2 : vector<1x64xf32> to vector<2x64xf32>
    %408 = arith.addf %406, %407 : vector<2x64xf32>
    %409 = arith.mulf %396, %408 : vector<2x64xf32>
    %410 = arith.addf %405, %409 : vector<2x64xf32>
    %411 = math.tanh %410 : vector<2x64xf32>
    %cst_98 = arith.constant 1.000000e+00 : f32
    %412 = vector.broadcast %cst_98 : f32 to vector<2x64xf32>
    %413 = arith.subf %412, %404 : vector<2x64xf32>
    %414 = arith.mulf %413, %411 : vector<2x64xf32>
    %415 = arith.mulf %404, %341 : vector<2x64xf32>
    %416 = arith.addf %414, %415 : vector<2x64xf32>
    %417 = vector.extract_strided_slice %386 {offsets = [0, 192], sizes = [2, 192], strides = [1, 1]} : vector<2x384xf32> to vector<2x192xf32>
    %cst_99 = arith.constant dense<0.000000e+00> : vector<2x192xf32>
    %418 = tpu.matmul %371, %1, %cst_99 {dimension_numbers = #tpu.dot_dimension_numbers<[1], [0], [0], [1], [0, 0, 1, 1], [], []>} : vector<2x64xf32>, vector<64x192xf32>, vector<2x192xf32> -> vector<2x192xf32>
    %419 = vector.extract_strided_slice %417 {offsets = [0, 0], sizes = [2, 64], strides = [1, 1]} : vector<2x192xf32> to vector<2x64xf32>
    %420 = vector.extract_strided_slice %418 {offsets = [0, 0], sizes = [2, 64], strides = [1, 1]} : vector<2x192xf32> to vector<2x64xf32>
    %421 = arith.addf %419, %420 : vector<2x64xf32>
    %422 = arith.negf %421 : vector<2x64xf32>
    %423 = math.exp %422 : vector<2x64xf32>
    %cst_100 = arith.constant 1.000000e+00 : f32
    %424 = vector.broadcast %cst_100 : f32 to vector<2x64xf32>
    %425 = arith.addf %424, %423 : vector<2x64xf32>
    %426 = arith.divf %424, %425 : vector<2x64xf32>
    %427 = vector.extract_strided_slice %417 {offsets = [0, 64], sizes = [2, 64], strides = [1, 1]} : vector<2x192xf32> to vector<2x64xf32>
    %428 = vector.extract_strided_slice %418 {offsets = [0, 64], sizes = [2, 64], strides = [1, 1]} : vector<2x192xf32> to vector<2x64xf32>
    %429 = arith.addf %427, %428 : vector<2x64xf32>
    %430 = arith.negf %429 : vector<2x64xf32>
    %431 = math.exp %430 : vector<2x64xf32>
    %cst_101 = arith.constant 1.000000e+00 : f32
    %432 = vector.broadcast %cst_101 : f32 to vector<2x64xf32>
    %433 = arith.addf %432, %431 : vector<2x64xf32>
    %434 = arith.divf %432, %433 : vector<2x64xf32>
    %435 = vector.extract_strided_slice %417 {offsets = [0, 128], sizes = [2, 64], strides = [1, 1]} : vector<2x192xf32> to vector<2x64xf32>
    %436 = vector.extract_strided_slice %418 {offsets = [0, 128], sizes = [2, 64], strides = [1, 1]} : vector<2x192xf32> to vector<2x64xf32>
    %437 = vector.broadcast %3 : vector<1x64xf32> to vector<2x64xf32>
    %438 = arith.addf %436, %437 : vector<2x64xf32>
    %439 = arith.mulf %426, %438 : vector<2x64xf32>
    %440 = arith.addf %435, %439 : vector<2x64xf32>
    %441 = math.tanh %440 : vector<2x64xf32>
    %cst_102 = arith.constant 1.000000e+00 : f32
    %442 = vector.broadcast %cst_102 : f32 to vector<2x64xf32>
    %443 = arith.subf %442, %434 : vector<2x64xf32>
    %444 = arith.mulf %443, %441 : vector<2x64xf32>
    %445 = arith.mulf %434, %371 : vector<2x64xf32>
    %446 = arith.addf %444, %445 : vector<2x64xf32>
    %447 = arith.index_cast %c5_i32 : i32 to index
    %c0_103 = arith.constant 0 : index
    %c0_104 = arith.constant 0 : index
    %448 = vector.load %arg7[%447, %c0_103, %c0_104] : memref<8x2x128xf32, #tpu.memory_space<vmem>>, vector<1x2x64xf32>
    %449 = vector.shape_cast %448 : vector<1x2x64xf32> to vector<2x64xf32>
    %450 = vector.shape_cast %416 : vector<2x64xf32> to vector<1x2x64xf32>
    tpu.vector_store %arg7[%447, %c0_103, %c0_104], %450 {strides = array<i32>} : memref<8x2x128xf32, #tpu.memory_space<vmem>>, vector<1x2x64xf32>,
    %451 = arith.index_cast %380 : i32 to index
    %c0_105 = arith.constant 0 : index
    %c64_106 = arith.constant 64 : index
    %452 = vector.load %arg7[%451, %c0_105, %c64_106] : memref<8x2x128xf32, #tpu.memory_space<vmem>>, vector<1x2x64xf32>
    %453 = vector.shape_cast %452 : vector<1x2x64xf32> to vector<2x64xf32>
    %454 = vector.shape_cast %446 : vector<2x64xf32> to vector<1x2x64xf32>
    tpu.vector_store %arg7[%451, %c0_105, %c64_106], %454 {strides = array<i32>} : memref<8x2x128xf32, #tpu.memory_space<vmem>>, vector<1x2x64xf32>,
    %c6_i32 = arith.constant 6 : i32
    %c7_i32_107 = arith.constant 7 : i32
    %455 = arith.subi %c7_i32_107, %c6_i32 : i32
    %456 = arith.index_cast %c6_i32 : i32 to index
    %c0_108 = arith.constant 0 : index
    %c0_109 = arith.constant 0 : index
    %457 = vector.load %arg0[%456, %c0_108, %c0_109] : memref<8x2x384xf32, #tpu.memory_space<vmem>>, vector<1x2x384xf32>
    %458 = vector.shape_cast %457 : vector<1x2x384xf32> to vector<2x384xf32>
    %459 = arith.index_cast %455 : i32 to index
    %c0_110 = arith.constant 0 : index
    %c0_111 = arith.constant 0 : index
    %460 = vector.load %arg0[%459, %c0_110, %c0_111] : memref<8x2x384xf32, #tpu.memory_space<vmem>>, vector<1x2x384xf32>
    %461 = vector.shape_cast %460 : vector<1x2x384xf32> to vector<2x384xf32>
    %462 = vector.extract_strided_slice %458 {offsets = [0, 0], sizes = [2, 192], strides = [1, 1]} : vector<2x384xf32> to vector<2x192xf32>
    %cst_112 = arith.constant dense<0.000000e+00> : vector<2x192xf32>
    %463 = tpu.matmul %416, %0, %cst_112 {dimension_numbers = #tpu.dot_dimension_numbers<[1], [0], [0], [1], [0, 0, 1, 1], [], []>} : vector<2x64xf32>, vector<64x192xf32>, vector<2x192xf32> -> vector<2x192xf32>
    %464 = vector.extract_strided_slice %462 {offsets = [0, 0], sizes = [2, 64], strides = [1, 1]} : vector<2x192xf32> to vector<2x64xf32>
    %465 = vector.extract_strided_slice %463 {offsets = [0, 0], sizes = [2, 64], strides = [1, 1]} : vector<2x192xf32> to vector<2x64xf32>
    %466 = arith.addf %464, %465 : vector<2x64xf32>
    %467 = arith.negf %466 : vector<2x64xf32>
    %468 = math.exp %467 : vector<2x64xf32>
    %cst_113 = arith.constant 1.000000e+00 : f32
    %469 = vector.broadcast %cst_113 : f32 to vector<2x64xf32>
    %470 = arith.addf %469, %468 : vector<2x64xf32>
    %471 = arith.divf %469, %470 : vector<2x64xf32>
    %472 = vector.extract_strided_slice %462 {offsets = [0, 64], sizes = [2, 64], strides = [1, 1]} : vector<2x192xf32> to vector<2x64xf32>
    %473 = vector.extract_strided_slice %463 {offsets = [0, 64], sizes = [2, 64], strides = [1, 1]} : vector<2x192xf32> to vector<2x64xf32>
    %474 = arith.addf %472, %473 : vector<2x64xf32>
    %475 = arith.negf %474 : vector<2x64xf32>
    %476 = math.exp %475 : vector<2x64xf32>
    %cst_114 = arith.constant 1.000000e+00 : f32
    %477 = vector.broadcast %cst_114 : f32 to vector<2x64xf32>
    %478 = arith.addf %477, %476 : vector<2x64xf32>
    %479 = arith.divf %477, %478 : vector<2x64xf32>
    %480 = vector.extract_strided_slice %462 {offsets = [0, 128], sizes = [2, 64], strides = [1, 1]} : vector<2x192xf32> to vector<2x64xf32>
    %481 = vector.extract_strided_slice %463 {offsets = [0, 128], sizes = [2, 64], strides = [1, 1]} : vector<2x192xf32> to vector<2x64xf32>
    %482 = vector.broadcast %2 : vector<1x64xf32> to vector<2x64xf32>
    %483 = arith.addf %481, %482 : vector<2x64xf32>
    %484 = arith.mulf %471, %483 : vector<2x64xf32>
    %485 = arith.addf %480, %484 : vector<2x64xf32>
    %486 = math.tanh %485 : vector<2x64xf32>
    %cst_115 = arith.constant 1.000000e+00 : f32
    %487 = vector.broadcast %cst_115 : f32 to vector<2x64xf32>
    %488 = arith.subf %487, %479 : vector<2x64xf32>
    %489 = arith.mulf %488, %486 : vector<2x64xf32>
    %490 = arith.mulf %479, %416 : vector<2x64xf32>
    %491 = arith.addf %489, %490 : vector<2x64xf32>
    %492 = vector.extract_strided_slice %461 {offsets = [0, 192], sizes = [2, 192], strides = [1, 1]} : vector<2x384xf32> to vector<2x192xf32>
    %cst_116 = arith.constant dense<0.000000e+00> : vector<2x192xf32>
    %493 = tpu.matmul %446, %1, %cst_116 {dimension_numbers = #tpu.dot_dimension_numbers<[1], [0], [0], [1], [0, 0, 1, 1], [], []>} : vector<2x64xf32>, vector<64x192xf32>, vector<2x192xf32> -> vector<2x192xf32>
    %494 = vector.extract_strided_slice %492 {offsets = [0, 0], sizes = [2, 64], strides = [1, 1]} : vector<2x192xf32> to vector<2x64xf32>
    %495 = vector.extract_strided_slice %493 {offsets = [0, 0], sizes = [2, 64], strides = [1, 1]} : vector<2x192xf32> to vector<2x64xf32>
    %496 = arith.addf %494, %495 : vector<2x64xf32>
    %497 = arith.negf %496 : vector<2x64xf32>
    %498 = math.exp %497 : vector<2x64xf32>
    %cst_117 = arith.constant 1.000000e+00 : f32
    %499 = vector.broadcast %cst_117 : f32 to vector<2x64xf32>
    %500 = arith.addf %499, %498 : vector<2x64xf32>
    %501 = arith.divf %499, %500 : vector<2x64xf32>
    %502 = vector.extract_strided_slice %492 {offsets = [0, 64], sizes = [2, 64], strides = [1, 1]} : vector<2x192xf32> to vector<2x64xf32>
    %503 = vector.extract_strided_slice %493 {offsets = [0, 64], sizes = [2, 64], strides = [1, 1]} : vector<2x192xf32> to vector<2x64xf32>
    %504 = arith.addf %502, %503 : vector<2x64xf32>
    %505 = arith.negf %504 : vector<2x64xf32>
    %506 = math.exp %505 : vector<2x64xf32>
    %cst_118 = arith.constant 1.000000e+00 : f32
    %507 = vector.broadcast %cst_118 : f32 to vector<2x64xf32>
    %508 = arith.addf %507, %506 : vector<2x64xf32>
    %509 = arith.divf %507, %508 : vector<2x64xf32>
    %510 = vector.extract_strided_slice %492 {offsets = [0, 128], sizes = [2, 64], strides = [1, 1]} : vector<2x192xf32> to vector<2x64xf32>
    %511 = vector.extract_strided_slice %493 {offsets = [0, 128], sizes = [2, 64], strides = [1, 1]} : vector<2x192xf32> to vector<2x64xf32>
    %512 = vector.broadcast %3 : vector<1x64xf32> to vector<2x64xf32>
    %513 = arith.addf %511, %512 : vector<2x64xf32>
    %514 = arith.mulf %501, %513 : vector<2x64xf32>
    %515 = arith.addf %510, %514 : vector<2x64xf32>
    %516 = math.tanh %515 : vector<2x64xf32>
    %cst_119 = arith.constant 1.000000e+00 : f32
    %517 = vector.broadcast %cst_119 : f32 to vector<2x64xf32>
    %518 = arith.subf %517, %509 : vector<2x64xf32>
    %519 = arith.mulf %518, %516 : vector<2x64xf32>
    %520 = arith.mulf %509, %446 : vector<2x64xf32>
    %521 = arith.addf %519, %520 : vector<2x64xf32>
    %522 = arith.index_cast %c6_i32 : i32 to index
    %c0_120 = arith.constant 0 : index
    %c0_121 = arith.constant 0 : index
    %523 = vector.load %arg7[%522, %c0_120, %c0_121] : memref<8x2x128xf32, #tpu.memory_space<vmem>>, vector<1x2x64xf32>
    %524 = vector.shape_cast %523 : vector<1x2x64xf32> to vector<2x64xf32>
    %525 = vector.shape_cast %491 : vector<2x64xf32> to vector<1x2x64xf32>
    tpu.vector_store %arg7[%522, %c0_120, %c0_121], %525 {strides = array<i32>} : memref<8x2x128xf32, #tpu.memory_space<vmem>>, vector<1x2x64xf32>,
    %526 = arith.index_cast %455 : i32 to index
    %c0_122 = arith.constant 0 : index
    %c64_123 = arith.constant 64 : index
    %527 = vector.load %arg7[%526, %c0_122, %c64_123] : memref<8x2x128xf32, #tpu.memory_space<vmem>>, vector<1x2x64xf32>
    %528 = vector.shape_cast %527 : vector<1x2x64xf32> to vector<2x64xf32>
    %529 = vector.shape_cast %521 : vector<2x64xf32> to vector<1x2x64xf32>
    tpu.vector_store %arg7[%526, %c0_122, %c64_123], %529 {strides = array<i32>} : memref<8x2x128xf32, #tpu.memory_space<vmem>>, vector<1x2x64xf32>,
    %c7_i32_124 = arith.constant 7 : i32
    %c7_i32_125 = arith.constant 7 : i32
    %530 = arith.subi %c7_i32_125, %c7_i32_124 : i32
    %531 = arith.index_cast %c7_i32_124 : i32 to index
    %c0_126 = arith.constant 0 : index
    %c0_127 = arith.constant 0 : index
    %532 = vector.load %arg0[%531, %c0_126, %c0_127] : memref<8x2x384xf32, #tpu.memory_space<vmem>>, vector<1x2x384xf32>
    %533 = vector.shape_cast %532 : vector<1x2x384xf32> to vector<2x384xf32>
    %534 = arith.index_cast %530 : i32 to index
    %c0_128 = arith.constant 0 : index
    %c0_129 = arith.constant 0 : index
    %535 = vector.load %arg0[%534, %c0_128, %c0_129] : memref<8x2x384xf32, #tpu.memory_space<vmem>>, vector<1x2x384xf32>
    %536 = vector.shape_cast %535 : vector<1x2x384xf32> to vector<2x384xf32>
    %537 = vector.extract_strided_slice %533 {offsets = [0, 0], sizes = [2, 192], strides = [1, 1]} : vector<2x384xf32> to vector<2x192xf32>
    %cst_130 = arith.constant dense<0.000000e+00> : vector<2x192xf32>
    %538 = tpu.matmul %491, %0, %cst_130 {dimension_numbers = #tpu.dot_dimension_numbers<[1], [0], [0], [1], [0, 0, 1, 1], [], []>} : vector<2x64xf32>, vector<64x192xf32>, vector<2x192xf32> -> vector<2x192xf32>
    %539 = vector.extract_strided_slice %537 {offsets = [0, 0], sizes = [2, 64], strides = [1, 1]} : vector<2x192xf32> to vector<2x64xf32>
    %540 = vector.extract_strided_slice %538 {offsets = [0, 0], sizes = [2, 64], strides = [1, 1]} : vector<2x192xf32> to vector<2x64xf32>
    %541 = arith.addf %539, %540 : vector<2x64xf32>
    %542 = arith.negf %541 : vector<2x64xf32>
    %543 = math.exp %542 : vector<2x64xf32>
    %cst_131 = arith.constant 1.000000e+00 : f32
    %544 = vector.broadcast %cst_131 : f32 to vector<2x64xf32>
    %545 = arith.addf %544, %543 : vector<2x64xf32>
    %546 = arith.divf %544, %545 : vector<2x64xf32>
    %547 = vector.extract_strided_slice %537 {offsets = [0, 64], sizes = [2, 64], strides = [1, 1]} : vector<2x192xf32> to vector<2x64xf32>
    %548 = vector.extract_strided_slice %538 {offsets = [0, 64], sizes = [2, 64], strides = [1, 1]} : vector<2x192xf32> to vector<2x64xf32>
    %549 = arith.addf %547, %548 : vector<2x64xf32>
    %550 = arith.negf %549 : vector<2x64xf32>
    %551 = math.exp %550 : vector<2x64xf32>
    %cst_132 = arith.constant 1.000000e+00 : f32
    %552 = vector.broadcast %cst_132 : f32 to vector<2x64xf32>
    %553 = arith.addf %552, %551 : vector<2x64xf32>
    %554 = arith.divf %552, %553 : vector<2x64xf32>
    %555 = vector.extract_strided_slice %537 {offsets = [0, 128], sizes = [2, 64], strides = [1, 1]} : vector<2x192xf32> to vector<2x64xf32>
    %556 = vector.extract_strided_slice %538 {offsets = [0, 128], sizes = [2, 64], strides = [1, 1]} : vector<2x192xf32> to vector<2x64xf32>
    %557 = vector.broadcast %2 : vector<1x64xf32> to vector<2x64xf32>
    %558 = arith.addf %556, %557 : vector<2x64xf32>
    %559 = arith.mulf %546, %558 : vector<2x64xf32>
    %560 = arith.addf %555, %559 : vector<2x64xf32>
    %561 = math.tanh %560 : vector<2x64xf32>
    %cst_133 = arith.constant 1.000000e+00 : f32
    %562 = vector.broadcast %cst_133 : f32 to vector<2x64xf32>
    %563 = arith.subf %562, %554 : vector<2x64xf32>
    %564 = arith.mulf %563, %561 : vector<2x64xf32>
    %565 = arith.mulf %554, %491 : vector<2x64xf32>
    %566 = arith.addf %564, %565 : vector<2x64xf32>
    %567 = vector.extract_strided_slice %536 {offsets = [0, 192], sizes = [2, 192], strides = [1, 1]} : vector<2x384xf32> to vector<2x192xf32>
    %cst_134 = arith.constant dense<0.000000e+00> : vector<2x192xf32>
    %568 = tpu.matmul %521, %1, %cst_134 {dimension_numbers = #tpu.dot_dimension_numbers<[1], [0], [0], [1], [0, 0, 1, 1], [], []>} : vector<2x64xf32>, vector<64x192xf32>, vector<2x192xf32> -> vector<2x192xf32>
    %569 = vector.extract_strided_slice %567 {offsets = [0, 0], sizes = [2, 64], strides = [1, 1]} : vector<2x192xf32> to vector<2x64xf32>
    %570 = vector.extract_strided_slice %568 {offsets = [0, 0], sizes = [2, 64], strides = [1, 1]} : vector<2x192xf32> to vector<2x64xf32>
    %571 = arith.addf %569, %570 : vector<2x64xf32>
    %572 = arith.negf %571 : vector<2x64xf32>
    %573 = math.exp %572 : vector<2x64xf32>
    %cst_135 = arith.constant 1.000000e+00 : f32
    %574 = vector.broadcast %cst_135 : f32 to vector<2x64xf32>
    %575 = arith.addf %574, %573 : vector<2x64xf32>
    %576 = arith.divf %574, %575 : vector<2x64xf32>
    %577 = vector.extract_strided_slice %567 {offsets = [0, 64], sizes = [2, 64], strides = [1, 1]} : vector<2x192xf32> to vector<2x64xf32>
    %578 = vector.extract_strided_slice %568 {offsets = [0, 64], sizes = [2, 64], strides = [1, 1]} : vector<2x192xf32> to vector<2x64xf32>
    %579 = arith.addf %577, %578 : vector<2x64xf32>
    %580 = arith.negf %579 : vector<2x64xf32>
    %581 = math.exp %580 : vector<2x64xf32>
    %cst_136 = arith.constant 1.000000e+00 : f32
    %582 = vector.broadcast %cst_136 : f32 to vector<2x64xf32>
    %583 = arith.addf %582, %581 : vector<2x64xf32>
    %584 = arith.divf %582, %583 : vector<2x64xf32>
    %585 = vector.extract_strided_slice %567 {offsets = [0, 128], sizes = [2, 64], strides = [1, 1]} : vector<2x192xf32> to vector<2x64xf32>
    %586 = vector.extract_strided_slice %568 {offsets = [0, 128], sizes = [2, 64], strides = [1, 1]} : vector<2x192xf32> to vector<2x64xf32>
    %587 = vector.broadcast %3 : vector<1x64xf32> to vector<2x64xf32>
    %588 = arith.addf %586, %587 : vector<2x64xf32>
    %589 = arith.mulf %576, %588 : vector<2x64xf32>
    %590 = arith.addf %585, %589 : vector<2x64xf32>
    %591 = math.tanh %590 : vector<2x64xf32>
    %cst_137 = arith.constant 1.000000e+00 : f32
    %592 = vector.broadcast %cst_137 : f32 to vector<2x64xf32>
    %593 = arith.subf %592, %584 : vector<2x64xf32>
    %594 = arith.mulf %593, %591 : vector<2x64xf32>
    %595 = arith.mulf %584, %521 : vector<2x64xf32>
    %596 = arith.addf %594, %595 : vector<2x64xf32>
    %597 = arith.index_cast %c7_i32_124 : i32 to index
    %c0_138 = arith.constant 0 : index
    %c0_139 = arith.constant 0 : index
    %598 = vector.load %arg7[%597, %c0_138, %c0_139] : memref<8x2x128xf32, #tpu.memory_space<vmem>>, vector<1x2x64xf32>
    %599 = vector.shape_cast %598 : vector<1x2x64xf32> to vector<2x64xf32>
    %600 = vector.shape_cast %566 : vector<2x64xf32> to vector<1x2x64xf32>
    tpu.vector_store %arg7[%597, %c0_138, %c0_139], %600 {strides = array<i32>} : memref<8x2x128xf32, #tpu.memory_space<vmem>>, vector<1x2x64xf32>,
    %601 = arith.index_cast %530 : i32 to index
    %c0_140 = arith.constant 0 : index
    %c64_141 = arith.constant 64 : index
    %602 = vector.load %arg7[%601, %c0_140, %c64_141] : memref<8x2x128xf32, #tpu.memory_space<vmem>>, vector<1x2x64xf32>
    %603 = vector.shape_cast %602 : vector<1x2x64xf32> to vector<2x64xf32>
    %604 = vector.shape_cast %596 : vector<2x64xf32> to vector<1x2x64xf32>
    tpu.vector_store %arg7[%601, %c0_140, %c64_141], %604 {strides = array<i32>} : memref<8x2x128xf32, #tpu.memory_space<vmem>>, vector<1x2x64xf32>,
    %c8_i32 = arith.constant 8 : i32
    %c0_142 = arith.constant 0 : index
    %c0_143 = arith.constant 0 : index
    %605 = vector.load %arg5[%c0_142, %c0_143] : memref<128x128xf32, #tpu.memory_space<vmem>>, vector<128x128xf32>
    %c0_i32_144 = arith.constant 0 : i32
    %606 = arith.index_cast %c0_i32_144 : i32 to index
    %c0_145 = arith.constant 0 : index
    %c0_146 = arith.constant 0 : index
    %607 = vector.load %arg7[%606, %c0_145, %c0_146] : memref<8x2x128xf32, #tpu.memory_space<vmem>>, vector<1x2x128xf32>
    %608 = vector.shape_cast %607 : vector<1x2x128xf32> to vector<2x128xf32>
    %cst_147 = arith.constant dense<0.000000e+00> : vector<2x128xf32>
    %609 = tpu.matmul %608, %605, %cst_147 {dimension_numbers = #tpu.dot_dimension_numbers<[1], [0], [0], [1], [0, 0, 1, 1], [], []>} : vector<2x128xf32>, vector<128x128xf32>, vector<2x128xf32> -> vector<2x128xf32>
    %610 = arith.negf %609 : vector<2x128xf32>
    %611 = math.exp %610 : vector<2x128xf32>
    %cst_148 = arith.constant 1.000000e+00 : f32
    %612 = vector.broadcast %cst_148 : f32 to vector<2x128xf32>
    %613 = arith.addf %612, %611 : vector<2x128xf32>
    %614 = arith.divf %612, %613 : vector<2x128xf32>
    %615 = arith.index_cast %c0_i32_144 : i32 to index
    %c0_149 = arith.constant 0 : index
    %c0_150 = arith.constant 0 : index
    %616 = vector.load %arg8[%615, %c0_149, %c0_150] : memref<8x2x128xf32, #tpu.memory_space<vmem>>, vector<1x2x128xf32>
    %617 = vector.shape_cast %616 : vector<1x2x128xf32> to vector<2x128xf32>
    %618 = vector.shape_cast %614 : vector<2x128xf32> to vector<1x2x128xf32>
    tpu.vector_store %arg8[%615, %c0_149, %c0_150], %618 {strides = array<i32>} : memref<8x2x128xf32, #tpu.memory_space<vmem>>, vector<1x2x128xf32>,
    %c1_i32_151 = arith.constant 1 : i32
    %619 = arith.index_cast %c1_i32_151 : i32 to index
    %c0_152 = arith.constant 0 : index
    %c0_153 = arith.constant 0 : index
    %620 = vector.load %arg7[%619, %c0_152, %c0_153] : memref<8x2x128xf32, #tpu.memory_space<vmem>>, vector<1x2x128xf32>
    %621 = vector.shape_cast %620 : vector<1x2x128xf32> to vector<2x128xf32>
    %cst_154 = arith.constant dense<0.000000e+00> : vector<2x128xf32>
    %622 = tpu.matmul %621, %605, %cst_154 {dimension_numbers = #tpu.dot_dimension_numbers<[1], [0], [0], [1], [0, 0, 1, 1], [], []>} : vector<2x128xf32>, vector<128x128xf32>, vector<2x128xf32> -> vector<2x128xf32>
    %623 = arith.negf %622 : vector<2x128xf32>
    %624 = math.exp %623 : vector<2x128xf32>
    %cst_155 = arith.constant 1.000000e+00 : f32
    %625 = vector.broadcast %cst_155 : f32 to vector<2x128xf32>
    %626 = arith.addf %625, %624 : vector<2x128xf32>
    %627 = arith.divf %625, %626 : vector<2x128xf32>
    %628 = arith.index_cast %c1_i32_151 : i32 to index
    %c0_156 = arith.constant 0 : index
    %c0_157 = arith.constant 0 : index
    %629 = vector.load %arg8[%628, %c0_156, %c0_157] : memref<8x2x128xf32, #tpu.memory_space<vmem>>, vector<1x2x128xf32>
    %630 = vector.shape_cast %629 : vector<1x2x128xf32> to vector<2x128xf32>
    %631 = vector.shape_cast %627 : vector<2x128xf32> to vector<1x2x128xf32>
    tpu.vector_store %arg8[%628, %c0_156, %c0_157], %631 {strides = array<i32>} : memref<8x2x128xf32, #tpu.memory_space<vmem>>, vector<1x2x128xf32>,
    %c2_i32_158 = arith.constant 2 : i32
    %632 = arith.index_cast %c2_i32_158 : i32 to index
    %c0_159 = arith.constant 0 : index
    %c0_160 = arith.constant 0 : index
    %633 = vector.load %arg7[%632, %c0_159, %c0_160] : memref<8x2x128xf32, #tpu.memory_space<vmem>>, vector<1x2x128xf32>
    %634 = vector.shape_cast %633 : vector<1x2x128xf32> to vector<2x128xf32>
    %cst_161 = arith.constant dense<0.000000e+00> : vector<2x128xf32>
    %635 = tpu.matmul %634, %605, %cst_161 {dimension_numbers = #tpu.dot_dimension_numbers<[1], [0], [0], [1], [0, 0, 1, 1], [], []>} : vector<2x128xf32>, vector<128x128xf32>, vector<2x128xf32> -> vector<2x128xf32>
    %636 = arith.negf %635 : vector<2x128xf32>
    %637 = math.exp %636 : vector<2x128xf32>
    %cst_162 = arith.constant 1.000000e+00 : f32
    %638 = vector.broadcast %cst_162 : f32 to vector<2x128xf32>
    %639 = arith.addf %638, %637 : vector<2x128xf32>
    %640 = arith.divf %638, %639 : vector<2x128xf32>
    %641 = arith.index_cast %c2_i32_158 : i32 to index
    %c0_163 = arith.constant 0 : index
    %c0_164 = arith.constant 0 : index
    %642 = vector.load %arg8[%641, %c0_163, %c0_164] : memref<8x2x128xf32, #tpu.memory_space<vmem>>, vector<1x2x128xf32>
    %643 = vector.shape_cast %642 : vector<1x2x128xf32> to vector<2x128xf32>
    %644 = vector.shape_cast %640 : vector<2x128xf32> to vector<1x2x128xf32>
    tpu.vector_store %arg8[%641, %c0_163, %c0_164], %644 {strides = array<i32>} : memref<8x2x128xf32, #tpu.memory_space<vmem>>, vector<1x2x128xf32>,
    %c3_i32_165 = arith.constant 3 : i32
    %645 = arith.index_cast %c3_i32_165 : i32 to index
    %c0_166 = arith.constant 0 : index
    %c0_167 = arith.constant 0 : index
    %646 = vector.load %arg7[%645, %c0_166, %c0_167] : memref<8x2x128xf32, #tpu.memory_space<vmem>>, vector<1x2x128xf32>
    %647 = vector.shape_cast %646 : vector<1x2x128xf32> to vector<2x128xf32>
    %cst_168 = arith.constant dense<0.000000e+00> : vector<2x128xf32>
    %648 = tpu.matmul %647, %605, %cst_168 {dimension_numbers = #tpu.dot_dimension_numbers<[1], [0], [0], [1], [0, 0, 1, 1], [], []>} : vector<2x128xf32>, vector<128x128xf32>, vector<2x128xf32> -> vector<2x128xf32>
    %649 = arith.negf %648 : vector<2x128xf32>
    %650 = math.exp %649 : vector<2x128xf32>
    %cst_169 = arith.constant 1.000000e+00 : f32
    %651 = vector.broadcast %cst_169 : f32 to vector<2x128xf32>
    %652 = arith.addf %651, %650 : vector<2x128xf32>
    %653 = arith.divf %651, %652 : vector<2x128xf32>
    %654 = arith.index_cast %c3_i32_165 : i32 to index
    %c0_170 = arith.constant 0 : index
    %c0_171 = arith.constant 0 : index
    %655 = vector.load %arg8[%654, %c0_170, %c0_171] : memref<8x2x128xf32, #tpu.memory_space<vmem>>, vector<1x2x128xf32>
    %656 = vector.shape_cast %655 : vector<1x2x128xf32> to vector<2x128xf32>
    %657 = vector.shape_cast %653 : vector<2x128xf32> to vector<1x2x128xf32>
    tpu.vector_store %arg8[%654, %c0_170, %c0_171], %657 {strides = array<i32>} : memref<8x2x128xf32, #tpu.memory_space<vmem>>, vector<1x2x128xf32>,
    %c4_i32_172 = arith.constant 4 : i32
    %658 = arith.index_cast %c4_i32_172 : i32 to index
    %c0_173 = arith.constant 0 : index
    %c0_174 = arith.constant 0 : index
    %659 = vector.load %arg7[%658, %c0_173, %c0_174] : memref<8x2x128xf32, #tpu.memory_space<vmem>>, vector<1x2x128xf32>
    %660 = vector.shape_cast %659 : vector<1x2x128xf32> to vector<2x128xf32>
    %cst_175 = arith.constant dense<0.000000e+00> : vector<2x128xf32>
    %661 = tpu.matmul %660, %605, %cst_175 {dimension_numbers = #tpu.dot_dimension_numbers<[1], [0], [0], [1], [0, 0, 1, 1], [], []>} : vector<2x128xf32>, vector<128x128xf32>, vector<2x128xf32> -> vector<2x128xf32>
    %662 = arith.negf %661 : vector<2x128xf32>
    %663 = math.exp %662 : vector<2x128xf32>
    %cst_176 = arith.constant 1.000000e+00 : f32
    %664 = vector.broadcast %cst_176 : f32 to vector<2x128xf32>
    %665 = arith.addf %664, %663 : vector<2x128xf32>
    %666 = arith.divf %664, %665 : vector<2x128xf32>
    %667 = arith.index_cast %c4_i32_172 : i32 to index
    %c0_177 = arith.constant 0 : index
    %c0_178 = arith.constant 0 : index
    %668 = vector.load %arg8[%667, %c0_177, %c0_178] : memref<8x2x128xf32, #tpu.memory_space<vmem>>, vector<1x2x128xf32>
    %669 = vector.shape_cast %668 : vector<1x2x128xf32> to vector<2x128xf32>
    %670 = vector.shape_cast %666 : vector<2x128xf32> to vector<1x2x128xf32>
    tpu.vector_store %arg8[%667, %c0_177, %c0_178], %670 {strides = array<i32>} : memref<8x2x128xf32, #tpu.memory_space<vmem>>, vector<1x2x128xf32>,
    %c5_i32_179 = arith.constant 5 : i32
    %671 = arith.index_cast %c5_i32_179 : i32 to index
    %c0_180 = arith.constant 0 : index
    %c0_181 = arith.constant 0 : index
    %672 = vector.load %arg7[%671, %c0_180, %c0_181] : memref<8x2x128xf32, #tpu.memory_space<vmem>>, vector<1x2x128xf32>
    %673 = vector.shape_cast %672 : vector<1x2x128xf32> to vector<2x128xf32>
    %cst_182 = arith.constant dense<0.000000e+00> : vector<2x128xf32>
    %674 = tpu.matmul %673, %605, %cst_182 {dimension_numbers = #tpu.dot_dimension_numbers<[1], [0], [0], [1], [0, 0, 1, 1], [], []>} : vector<2x128xf32>, vector<128x128xf32>, vector<2x128xf32> -> vector<2x128xf32>
    %675 = arith.negf %674 : vector<2x128xf32>
    %676 = math.exp %675 : vector<2x128xf32>
    %cst_183 = arith.constant 1.000000e+00 : f32
    %677 = vector.broadcast %cst_183 : f32 to vector<2x128xf32>
    %678 = arith.addf %677, %676 : vector<2x128xf32>
    %679 = arith.divf %677, %678 : vector<2x128xf32>
    %680 = arith.index_cast %c5_i32_179 : i32 to index
    %c0_184 = arith.constant 0 : index
    %c0_185 = arith.constant 0 : index
    %681 = vector.load %arg8[%680, %c0_184, %c0_185] : memref<8x2x128xf32, #tpu.memory_space<vmem>>, vector<1x2x128xf32>
    %682 = vector.shape_cast %681 : vector<1x2x128xf32> to vector<2x128xf32>
    %683 = vector.shape_cast %679 : vector<2x128xf32> to vector<1x2x128xf32>
    tpu.vector_store %arg8[%680, %c0_184, %c0_185], %683 {strides = array<i32>} : memref<8x2x128xf32, #tpu.memory_space<vmem>>, vector<1x2x128xf32>,
    %c6_i32_186 = arith.constant 6 : i32
    %684 = arith.index_cast %c6_i32_186 : i32 to index
    %c0_187 = arith.constant 0 : index
    %c0_188 = arith.constant 0 : index
    %685 = vector.load %arg7[%684, %c0_187, %c0_188] : memref<8x2x128xf32, #tpu.memory_space<vmem>>, vector<1x2x128xf32>
    %686 = vector.shape_cast %685 : vector<1x2x128xf32> to vector<2x128xf32>
    %cst_189 = arith.constant dense<0.000000e+00> : vector<2x128xf32>
    %687 = tpu.matmul %686, %605, %cst_189 {dimension_numbers = #tpu.dot_dimension_numbers<[1], [0], [0], [1], [0, 0, 1, 1], [], []>} : vector<2x128xf32>, vector<128x128xf32>, vector<2x128xf32> -> vector<2x128xf32>
    %688 = arith.negf %687 : vector<2x128xf32>
    %689 = math.exp %688 : vector<2x128xf32>
    %cst_190 = arith.constant 1.000000e+00 : f32
    %690 = vector.broadcast %cst_190 : f32 to vector<2x128xf32>
    %691 = arith.addf %690, %689 : vector<2x128xf32>
    %692 = arith.divf %690, %691 : vector<2x128xf32>
    %693 = arith.index_cast %c6_i32_186 : i32 to index
    %c0_191 = arith.constant 0 : index
    %c0_192 = arith.constant 0 : index
    %694 = vector.load %arg8[%693, %c0_191, %c0_192] : memref<8x2x128xf32, #tpu.memory_space<vmem>>, vector<1x2x128xf32>
    %695 = vector.shape_cast %694 : vector<1x2x128xf32> to vector<2x128xf32>
    %696 = vector.shape_cast %692 : vector<2x128xf32> to vector<1x2x128xf32>
    tpu.vector_store %arg8[%693, %c0_191, %c0_192], %696 {strides = array<i32>} : memref<8x2x128xf32, #tpu.memory_space<vmem>>, vector<1x2x128xf32>,
    %c7_i32_193 = arith.constant 7 : i32
    %697 = arith.index_cast %c7_i32_193 : i32 to index
    %c0_194 = arith.constant 0 : index
    %c0_195 = arith.constant 0 : index
    %698 = vector.load %arg7[%697, %c0_194, %c0_195] : memref<8x2x128xf32, #tpu.memory_space<vmem>>, vector<1x2x128xf32>
    %699 = vector.shape_cast %698 : vector<1x2x128xf32> to vector<2x128xf32>
    %cst_196 = arith.constant dense<0.000000e+00> : vector<2x128xf32>
    %700 = tpu.matmul %699, %605, %cst_196 {dimension_numbers = #tpu.dot_dimension_numbers<[1], [0], [0], [1], [0, 0, 1, 1], [], []>} : vector<2x128xf32>, vector<128x128xf32>, vector<2x128xf32> -> vector<2x128xf32>
    %701 = arith.negf %700 : vector<2x128xf32>
    %702 = math.exp %701 : vector<2x128xf32>
    %cst_197 = arith.constant 1.000000e+00 : f32
    %703 = vector.broadcast %cst_197 : f32 to vector<2x128xf32>
    %704 = arith.addf %703, %702 : vector<2x128xf32>
    %705 = arith.divf %703, %704 : vector<2x128xf32>
    %706 = arith.index_cast %c7_i32_193 : i32 to index
    %c0_198 = arith.constant 0 : index
    %c0_199 = arith.constant 0 : index
    %707 = vector.load %arg8[%706, %c0_198, %c0_199] : memref<8x2x128xf32, #tpu.memory_space<vmem>>, vector<1x2x128xf32>
    %708 = vector.shape_cast %707 : vector<1x2x128xf32> to vector<2x128xf32>
    %709 = vector.shape_cast %705 : vector<2x128xf32> to vector<1x2x128xf32>
    tpu.vector_store %arg8[%706, %c0_198, %c0_199], %709 {strides = array<i32>} : memref<8x2x128xf32, #tpu.memory_space<vmem>>, vector<1x2x128xf32>,
    %c8_i32_200 = arith.constant 8 : i32
    %c0_201 = arith.constant 0 : index
    %c0_202 = arith.constant 0 : index
    %c0_203 = arith.constant 0 : index
    %710 = vector.load %arg7[%c0_201, %c0_202, %c0_203] : memref<8x2x128xf32, #tpu.memory_space<vmem>>, vector<1x2x128xf32>
    %711 = vector.shape_cast %710 : vector<1x2x128xf32> to vector<2x128xf32>
    %c0_204 = arith.constant 0 : index
    %c0_205 = arith.constant 0 : index
    %c0_206 = arith.constant 0 : index
    %712 = vector.load %arg6[%c0_204, %c0_205, %c0_206] : memref<8x2x128xf32, #tpu.memory_space<vmem>>, vector<1x2x128xf32>
    %713 = vector.shape_cast %712 : vector<1x2x128xf32> to vector<2x128xf32>
    %714 = vector.shape_cast %711 : vector<2x128xf32> to vector<1x2x128xf32>
    tpu.vector_store %arg6[%c0_204, %c0_205, %c0_206], %714 {strides = array<i32>} : memref<8x2x128xf32, #tpu.memory_space<vmem>>, vector<1x2x128xf32>,
    %c1_i32_207 = arith.constant 1 : i32
    %715 = arith.index_cast %c1_i32_207 : i32 to index
    %c0_208 = arith.constant 0 : index
    %c0_209 = arith.constant 0 : index
    %716 = vector.load %arg7[%715, %c0_208, %c0_209] : memref<8x2x128xf32, #tpu.memory_space<vmem>>, vector<1x2x128xf32>
    %717 = vector.shape_cast %716 : vector<1x2x128xf32> to vector<2x128xf32>
    %718 = arith.index_cast %c1_i32_207 : i32 to index
    %c0_210 = arith.constant 0 : index
    %c0_211 = arith.constant 0 : index
    %719 = vector.load %arg8[%718, %c0_210, %c0_211] : memref<8x2x128xf32, #tpu.memory_space<vmem>>, vector<1x2x128xf32>
    %720 = vector.shape_cast %719 : vector<1x2x128xf32> to vector<2x128xf32>
    %721 = arith.mulf %720, %717 : vector<2x128xf32>
    %cst_212 = arith.constant 1.000000e+00 : f32
    %722 = vector.broadcast %cst_212 : f32 to vector<2x128xf32>
    %723 = arith.subf %722, %720 : vector<2x128xf32>
    %724 = arith.mulf %723, %711 : vector<2x128xf32>
    %725 = arith.addf %721, %724 : vector<2x128xf32>
    %726 = arith.index_cast %c1_i32_207 : i32 to index
    %c0_213 = arith.constant 0 : index
    %c0_214 = arith.constant 0 : index
    %727 = vector.load %arg6[%726, %c0_213, %c0_214] : memref<8x2x128xf32, #tpu.memory_space<vmem>>, vector<1x2x128xf32>
    %728 = vector.shape_cast %727 : vector<1x2x128xf32> to vector<2x128xf32>
    %729 = vector.shape_cast %725 : vector<2x128xf32> to vector<1x2x128xf32>
    tpu.vector_store %arg6[%726, %c0_213, %c0_214], %729 {strides = array<i32>} : memref<8x2x128xf32, #tpu.memory_space<vmem>>, vector<1x2x128xf32>,
    %c2_i32_215 = arith.constant 2 : i32
    %730 = arith.index_cast %c2_i32_215 : i32 to index
    %c0_216 = arith.constant 0 : index
    %c0_217 = arith.constant 0 : index
    %731 = vector.load %arg7[%730, %c0_216, %c0_217] : memref<8x2x128xf32, #tpu.memory_space<vmem>>, vector<1x2x128xf32>
    %732 = vector.shape_cast %731 : vector<1x2x128xf32> to vector<2x128xf32>
    %733 = arith.index_cast %c2_i32_215 : i32 to index
    %c0_218 = arith.constant 0 : index
    %c0_219 = arith.constant 0 : index
    %734 = vector.load %arg8[%733, %c0_218, %c0_219] : memref<8x2x128xf32, #tpu.memory_space<vmem>>, vector<1x2x128xf32>
    %735 = vector.shape_cast %734 : vector<1x2x128xf32> to vector<2x128xf32>
    %736 = arith.mulf %735, %732 : vector<2x128xf32>
    %cst_220 = arith.constant 1.000000e+00 : f32
    %737 = vector.broadcast %cst_220 : f32 to vector<2x128xf32>
    %738 = arith.subf %737, %735 : vector<2x128xf32>
    %739 = arith.mulf %738, %725 : vector<2x128xf32>
    %740 = arith.addf %736, %739 : vector<2x128xf32>
    %741 = arith.index_cast %c2_i32_215 : i32 to index
    %c0_221 = arith.constant 0 : index
    %c0_222 = arith.constant 0 : index
    %742 = vector.load %arg6[%741, %c0_221, %c0_222] : memref<8x2x128xf32, #tpu.memory_space<vmem>>, vector<1x2x128xf32>
    %743 = vector.shape_cast %742 : vector<1x2x128xf32> to vector<2x128xf32>
    %744 = vector.shape_cast %740 : vector<2x128xf32> to vector<1x2x128xf32>
    tpu.vector_store %arg6[%741, %c0_221, %c0_222], %744 {strides = array<i32>} : memref<8x2x128xf32, #tpu.memory_space<vmem>>, vector<1x2x128xf32>,
    %c3_i32_223 = arith.constant 3 : i32
    %745 = arith.index_cast %c3_i32_223 : i32 to index
    %c0_224 = arith.constant 0 : index
    %c0_225 = arith.constant 0 : index
    %746 = vector.load %arg7[%745, %c0_224, %c0_225] : memref<8x2x128xf32, #tpu.memory_space<vmem>>, vector<1x2x128xf32>
    %747 = vector.shape_cast %746 : vector<1x2x128xf32> to vector<2x128xf32>
    %748 = arith.index_cast %c3_i32_223 : i32 to index
    %c0_226 = arith.constant 0 : index
    %c0_227 = arith.constant 0 : index
    %749 = vector.load %arg8[%748, %c0_226, %c0_227] : memref<8x2x128xf32, #tpu.memory_space<vmem>>, vector<1x2x128xf32>
    %750 = vector.shape_cast %749 : vector<1x2x128xf32> to vector<2x128xf32>
    %751 = arith.mulf %750, %747 : vector<2x128xf32>
    %cst_228 = arith.constant 1.000000e+00 : f32
    %752 = vector.broadcast %cst_228 : f32 to vector<2x128xf32>
    %753 = arith.subf %752, %750 : vector<2x128xf32>
    %754 = arith.mulf %753, %740 : vector<2x128xf32>
    %755 = arith.addf %751, %754 : vector<2x128xf32>
    %756 = arith.index_cast %c3_i32_223 : i32 to index
    %c0_229 = arith.constant 0 : index
    %c0_230 = arith.constant 0 : index
    %757 = vector.load %arg6[%756, %c0_229, %c0_230] : memref<8x2x128xf32, #tpu.memory_space<vmem>>, vector<1x2x128xf32>
    %758 = vector.shape_cast %757 : vector<1x2x128xf32> to vector<2x128xf32>
    %759 = vector.shape_cast %755 : vector<2x128xf32> to vector<1x2x128xf32>
    tpu.vector_store %arg6[%756, %c0_229, %c0_230], %759 {strides = array<i32>} : memref<8x2x128xf32, #tpu.memory_space<vmem>>, vector<1x2x128xf32>,
    %c4_i32_231 = arith.constant 4 : i32
    %760 = arith.index_cast %c4_i32_231 : i32 to index
    %c0_232 = arith.constant 0 : index
    %c0_233 = arith.constant 0 : index
    %761 = vector.load %arg7[%760, %c0_232, %c0_233] : memref<8x2x128xf32, #tpu.memory_space<vmem>>, vector<1x2x128xf32>
    %762 = vector.shape_cast %761 : vector<1x2x128xf32> to vector<2x128xf32>
    %763 = arith.index_cast %c4_i32_231 : i32 to index
    %c0_234 = arith.constant 0 : index
    %c0_235 = arith.constant 0 : index
    %764 = vector.load %arg8[%763, %c0_234, %c0_235] : memref<8x2x128xf32, #tpu.memory_space<vmem>>, vector<1x2x128xf32>
    %765 = vector.shape_cast %764 : vector<1x2x128xf32> to vector<2x128xf32>
    %766 = arith.mulf %765, %762 : vector<2x128xf32>
    %cst_236 = arith.constant 1.000000e+00 : f32
    %767 = vector.broadcast %cst_236 : f32 to vector<2x128xf32>
    %768 = arith.subf %767, %765 : vector<2x128xf32>
    %769 = arith.mulf %768, %755 : vector<2x128xf32>
    %770 = arith.addf %766, %769 : vector<2x128xf32>
    %771 = arith.index_cast %c4_i32_231 : i32 to index
    %c0_237 = arith.constant 0 : index
    %c0_238 = arith.constant 0 : index
    %772 = vector.load %arg6[%771, %c0_237, %c0_238] : memref<8x2x128xf32, #tpu.memory_space<vmem>>, vector<1x2x128xf32>
    %773 = vector.shape_cast %772 : vector<1x2x128xf32> to vector<2x128xf32>
    %774 = vector.shape_cast %770 : vector<2x128xf32> to vector<1x2x128xf32>
    tpu.vector_store %arg6[%771, %c0_237, %c0_238], %774 {strides = array<i32>} : memref<8x2x128xf32, #tpu.memory_space<vmem>>, vector<1x2x128xf32>,
    %c5_i32_239 = arith.constant 5 : i32
    %775 = arith.index_cast %c5_i32_239 : i32 to index
    %c0_240 = arith.constant 0 : index
    %c0_241 = arith.constant 0 : index
    %776 = vector.load %arg7[%775, %c0_240, %c0_241] : memref<8x2x128xf32, #tpu.memory_space<vmem>>, vector<1x2x128xf32>
    %777 = vector.shape_cast %776 : vector<1x2x128xf32> to vector<2x128xf32>
    %778 = arith.index_cast %c5_i32_239 : i32 to index
    %c0_242 = arith.constant 0 : index
    %c0_243 = arith.constant 0 : index
    %779 = vector.load %arg8[%778, %c0_242, %c0_243] : memref<8x2x128xf32, #tpu.memory_space<vmem>>, vector<1x2x128xf32>
    %780 = vector.shape_cast %779 : vector<1x2x128xf32> to vector<2x128xf32>
    %781 = arith.mulf %780, %777 : vector<2x128xf32>
    %cst_244 = arith.constant 1.000000e+00 : f32
    %782 = vector.broadcast %cst_244 : f32 to vector<2x128xf32>
    %783 = arith.subf %782, %780 : vector<2x128xf32>
    %784 = arith.mulf %783, %770 : vector<2x128xf32>
    %785 = arith.addf %781, %784 : vector<2x128xf32>
    %786 = arith.index_cast %c5_i32_239 : i32 to index
    %c0_245 = arith.constant 0 : index
    %c0_246 = arith.constant 0 : index
    %787 = vector.load %arg6[%786, %c0_245, %c0_246] : memref<8x2x128xf32, #tpu.memory_space<vmem>>, vector<1x2x128xf32>
    %788 = vector.shape_cast %787 : vector<1x2x128xf32> to vector<2x128xf32>
    %789 = vector.shape_cast %785 : vector<2x128xf32> to vector<1x2x128xf32>
    tpu.vector_store %arg6[%786, %c0_245, %c0_246], %789 {strides = array<i32>} : memref<8x2x128xf32, #tpu.memory_space<vmem>>, vector<1x2x128xf32>,
    %c6_i32_247 = arith.constant 6 : i32
    %790 = arith.index_cast %c6_i32_247 : i32 to index
    %c0_248 = arith.constant 0 : index
    %c0_249 = arith.constant 0 : index
    %791 = vector.load %arg7[%790, %c0_248, %c0_249] : memref<8x2x128xf32, #tpu.memory_space<vmem>>, vector<1x2x128xf32>
    %792 = vector.shape_cast %791 : vector<1x2x128xf32> to vector<2x128xf32>
    %793 = arith.index_cast %c6_i32_247 : i32 to index
    %c0_250 = arith.constant 0 : index
    %c0_251 = arith.constant 0 : index
    %794 = vector.load %arg8[%793, %c0_250, %c0_251] : memref<8x2x128xf32, #tpu.memory_space<vmem>>, vector<1x2x128xf32>
    %795 = vector.shape_cast %794 : vector<1x2x128xf32> to vector<2x128xf32>
    %796 = arith.mulf %795, %792 : vector<2x128xf32>
    %cst_252 = arith.constant 1.000000e+00 : f32
    %797 = vector.broadcast %cst_252 : f32 to vector<2x128xf32>
    %798 = arith.subf %797, %795 : vector<2x128xf32>
    %799 = arith.mulf %798, %785 : vector<2x128xf32>
    %800 = arith.addf %796, %799 : vector<2x128xf32>
    %801 = arith.index_cast %c6_i32_247 : i32 to index
    %c0_253 = arith.constant 0 : index
    %c0_254 = arith.constant 0 : index
    %802 = vector.load %arg6[%801, %c0_253, %c0_254] : memref<8x2x128xf32, #tpu.memory_space<vmem>>, vector<1x2x128xf32>
    %803 = vector.shape_cast %802 : vector<1x2x128xf32> to vector<2x128xf32>
    %804 = vector.shape_cast %800 : vector<2x128xf32> to vector<1x2x128xf32>
    tpu.vector_store %arg6[%801, %c0_253, %c0_254], %804 {strides = array<i32>} : memref<8x2x128xf32, #tpu.memory_space<vmem>>, vector<1x2x128xf32>,
    %c7_i32_255 = arith.constant 7 : i32
    %805 = arith.index_cast %c7_i32_255 : i32 to index
    %c0_256 = arith.constant 0 : index
    %c0_257 = arith.constant 0 : index
    %806 = vector.load %arg7[%805, %c0_256, %c0_257] : memref<8x2x128xf32, #tpu.memory_space<vmem>>, vector<1x2x128xf32>
    %807 = vector.shape_cast %806 : vector<1x2x128xf32> to vector<2x128xf32>
    %808 = arith.index_cast %c7_i32_255 : i32 to index
    %c0_258 = arith.constant 0 : index
    %c0_259 = arith.constant 0 : index
    %809 = vector.load %arg8[%808, %c0_258, %c0_259] : memref<8x2x128xf32, #tpu.memory_space<vmem>>, vector<1x2x128xf32>
    %810 = vector.shape_cast %809 : vector<1x2x128xf32> to vector<2x128xf32>
    %811 = arith.mulf %810, %807 : vector<2x128xf32>
    %cst_260 = arith.constant 1.000000e+00 : f32
    %812 = vector.broadcast %cst_260 : f32 to vector<2x128xf32>
    %813 = arith.subf %812, %810 : vector<2x128xf32>
    %814 = arith.mulf %813, %800 : vector<2x128xf32>
    %815 = arith.addf %811, %814 : vector<2x128xf32>
    %816 = arith.index_cast %c7_i32_255 : i32 to index
    %c0_261 = arith.constant 0 : index
    %c0_262 = arith.constant 0 : index
    %817 = vector.load %arg6[%816, %c0_261, %c0_262] : memref<8x2x128xf32, #tpu.memory_space<vmem>>, vector<1x2x128xf32>
    %818 = vector.shape_cast %817 : vector<1x2x128xf32> to vector<2x128xf32>
    %819 = vector.shape_cast %815 : vector<2x128xf32> to vector<1x2x128xf32>
    tpu.vector_store %arg6[%816, %c0_261, %c0_262], %819 {strides = array<i32>} : memref<8x2x128xf32, #tpu.memory_space<vmem>>, vector<1x2x128xf32>,
    %c7_i32_263 = arith.constant 7 : i32
    return
  }
}

module attributes {stable_mosaic.version = 11 : i64} {
  func.func @_tail_kernel(%arg0: i32, %arg1: memref<16x128xf32, #tpu.memory_space<vmem>>, %arg2: memref<16x128xf32, #tpu.memory_space<vmem>>, %arg3: memref<128x128xf32, #tpu.memory_space<vmem>>, %arg4: memref<1x128xf32, #tpu.memory_space<vmem>>, %arg5: memref<128x4xf32, #tpu.memory_space<vmem>>, %arg6: memref<1x4xf32, #tpu.memory_space<vmem>>, %arg7: memref<128x7xf32, #tpu.memory_space<vmem>>, %arg8: memref<1x7xf32, #tpu.memory_space<vmem>>, %arg9: memref<4x7xf32, #tpu.memory_space<vmem>>, %arg10: memref<16x4xf32, #tpu.memory_space<vmem>>, %arg11: memref<16x7xf32, #tpu.memory_space<vmem>>) attributes {dimension_semantics = [#tpu.dimension_semantics<parallel>], iteration_bounds = array<i64: 1>, scalar_prefetch = 0 : i64, scratch_operands = 0 : i64, tpu.core_type = #tpu.core_type<tc>, window_params = [{transform_indices = @transform_0, window_bounds = array<i64: 16, 128>}, {transform_indices = @transform_1, window_bounds = array<i64: 16, 128>}, {pipeline_mode = #tpu.pipeline_mode<synchronous>, transform_indices = @transform_2, window_bounds = array<i64: 128, 128>}, {pipeline_mode = #tpu.pipeline_mode<synchronous>, transform_indices = @transform_3, window_bounds = array<i64: 1, 128>}, {pipeline_mode = #tpu.pipeline_mode<synchronous>, transform_indices = @transform_4, window_bounds = array<i64: 128, 4>}, {pipeline_mode = #tpu.pipeline_mode<synchronous>, transform_indices = @transform_5, window_bounds = array<i64: 1, 4>}, {pipeline_mode = #tpu.pipeline_mode<synchronous>, transform_indices = @transform_6, window_bounds = array<i64: 128, 7>}, {pipeline_mode = #tpu.pipeline_mode<synchronous>, transform_indices = @transform_7, window_bounds = array<i64: 1, 7>}, {pipeline_mode = #tpu.pipeline_mode<synchronous>, transform_indices = @transform_8, window_bounds = array<i64: 4, 7>}, {transform_indices = @transform_9, window_bounds = array<i64: 16, 4>}, {transform_indices = @transform_10, window_bounds = array<i64: 16, 7>}]} {
    %c0 = arith.constant 0 : index
    %c0_0 = arith.constant 0 : index
    %0 = vector.load %arg2[%c0, %c0_0] : memref<16x128xf32, #tpu.memory_space<vmem>>, vector<16x128xf32>
    %c0_1 = arith.constant 0 : index
    %c0_2 = arith.constant 0 : index
    %1 = vector.load %arg3[%c0_1, %c0_2] : memref<128x128xf32, #tpu.memory_space<vmem>>, vector<128x128xf32>
    %cst = arith.constant dense<0.000000e+00> : vector<16x128xf32>
    %2 = tpu.matmul %0, %1, %cst {dimension_numbers = #tpu.dot_dimension_numbers<[1], [0], [0], [1], [0, 0, 1, 1], [], []>} : vector<16x128xf32>, vector<128x128xf32>, vector<16x128xf32> -> vector<16x128xf32>
    %c0_3 = arith.constant 0 : index
    %c0_4 = arith.constant 0 : index
    %3 = vector.load %arg4[%c0_3, %c0_4] : memref<1x128xf32, #tpu.memory_space<vmem>>, vector<1x128xf32>
    %4 = vector.broadcast %3 : vector<1x128xf32> to vector<16x128xf32>
    %5 = arith.addf %2, %4 : vector<16x128xf32>
    %c0_5 = arith.constant 0 : index
    %c0_6 = arith.constant 0 : index
    %6 = vector.load %arg1[%c0_5, %c0_6] : memref<16x128xf32, #tpu.memory_space<vmem>>, vector<16x128xf32>
    %c0_7 = arith.constant 0 : index
    %c0_8 = arith.constant 0 : index
    %7 = vector.load %arg5[%c0_7, %c0_8] : memref<128x4xf32, #tpu.memory_space<vmem>>, vector<128x4xf32>
    %cst_9 = arith.constant dense<0.000000e+00> : vector<16x4xf32>
    %8 = tpu.matmul %6, %7, %cst_9 {dimension_numbers = #tpu.dot_dimension_numbers<[1], [0], [0], [1], [0, 0, 1, 1], [], []>} : vector<16x128xf32>, vector<128x4xf32>, vector<16x4xf32> -> vector<16x4xf32>
    %c0_10 = arith.constant 0 : index
    %c0_11 = arith.constant 0 : index
    %9 = vector.load %arg6[%c0_10, %c0_11] : memref<1x4xf32, #tpu.memory_space<vmem>>, vector<1x4xf32>
    %10 = vector.broadcast %9 : vector<1x4xf32> to vector<16x4xf32>
    %11 = arith.addf %8, %10 : vector<16x4xf32>
    %c0_12 = arith.constant 0 : index
    %c0_13 = arith.constant 0 : index
    %12 = vector.load %arg7[%c0_12, %c0_13] : memref<128x7xf32, #tpu.memory_space<vmem>>, vector<128x7xf32>
    %cst_14 = arith.constant dense<0.000000e+00> : vector<16x7xf32>
    %13 = tpu.matmul %5, %12, %cst_14 {dimension_numbers = #tpu.dot_dimension_numbers<[1], [0], [0], [1], [0, 0, 1, 1], [], []>} : vector<16x128xf32>, vector<128x7xf32>, vector<16x7xf32> -> vector<16x7xf32>
    %c0_15 = arith.constant 0 : index
    %c0_16 = arith.constant 0 : index
    %14 = vector.load %arg8[%c0_15, %c0_16] : memref<1x7xf32, #tpu.memory_space<vmem>>, vector<1x7xf32>
    %15 = vector.broadcast %14 : vector<1x7xf32> to vector<16x7xf32>
    %16 = arith.addf %13, %15 : vector<16x7xf32>
    %cst_17 = arith.constant dense<0xFF800000> : vector<16xf32>
    %17 = vector.multi_reduction <maximumf>, %11, %cst_17 [1] : vector<16x4xf32> to vector<16xf32>
    %18 = vector.shape_cast %17 : vector<16xf32> to vector<16x1xf32>
    %19 = vector.broadcast %18 : vector<16x1xf32> to vector<16x4xf32>
    %20 = arith.subf %11, %19 : vector<16x4xf32>
    %21 = math.exp %20 : vector<16x4xf32>
    %cst_18 = arith.constant dense<0.000000e+00> : vector<16xf32>
    %22 = vector.multi_reduction <add>, %21, %cst_18 [1] : vector<16x4xf32> to vector<16xf32>
    %23 = vector.shape_cast %22 : vector<16xf32> to vector<16x1xf32>
    %24 = tpu.reciprocal %23 {approx = true} : vector<16x1xf32> -> vector<16x1xf32>
    %25 = vector.broadcast %24 : vector<16x1xf32> to vector<16x4xf32>
    %26 = arith.mulf %21, %25 : vector<16x4xf32>
    %cst_19 = arith.constant dense<0xFF800000> : vector<16xf32>
    %27 = vector.multi_reduction <maximumf>, %16, %cst_19 [1] : vector<16x7xf32> to vector<16xf32>
    %28 = vector.shape_cast %27 : vector<16xf32> to vector<16x1xf32>
    %29 = vector.broadcast %28 : vector<16x1xf32> to vector<16x7xf32>
    %30 = arith.subf %16, %29 : vector<16x7xf32>
    %31 = math.exp %30 : vector<16x7xf32>
    %cst_20 = arith.constant dense<0.000000e+00> : vector<16xf32>
    %32 = vector.multi_reduction <add>, %31, %cst_20 [1] : vector<16x7xf32> to vector<16xf32>
    %33 = vector.shape_cast %32 : vector<16xf32> to vector<16x1xf32>
    %34 = tpu.reciprocal %33 {approx = true} : vector<16x1xf32> -> vector<16x1xf32>
    %35 = vector.broadcast %34 : vector<16x1xf32> to vector<16x7xf32>
    %36 = arith.mulf %31, %35 : vector<16x7xf32>
    %37 = arith.mulf %26, %26 : vector<16x4xf32>
    %cst_21 = arith.constant dense<0.000000e+00> : vector<16xf32>
    %38 = vector.multi_reduction <add>, %37, %cst_21 [1] : vector<16x4xf32> to vector<16xf32>
    %39 = vector.shape_cast %38 : vector<16xf32> to vector<16x1xf32>
    %cst_22 = arith.constant 1.000000e+00 : f32
    %40 = vector.broadcast %cst_22 : f32 to vector<16x1xf32>
    %41 = arith.subf %40, %39 : vector<16x1xf32>
    %cst_23 = arith.constant 5.000000e-01 : f32
    %42 = vector.broadcast %cst_23 : f32 to vector<16x1xf32>
    %43 = arith.mulf %41, %42 : vector<16x1xf32>
    %c0_24 = arith.constant 0 : index
    %c0_25 = arith.constant 0 : index
    %44 = vector.load %arg9[%c0_24, %c0_25] : memref<4x7xf32, #tpu.memory_space<vmem>>, vector<4x7xf32>
    %cst_26 = arith.constant 0.000000e+00 : f32
    %45 = vector.broadcast %cst_26 : f32 to vector<16x7xf32>
    %46 = vector.extract_strided_slice %11 {offsets = [0, 0], sizes = [16, 1], strides = [1, 1]} : vector<16x4xf32> to vector<16x1xf32>
    %47 = vector.extract_strided_slice %44 {offsets = [0, 0], sizes = [1, 7], strides = [1, 1]} : vector<4x7xf32> to vector<1x7xf32>
    %48 = vector.broadcast %46 : vector<16x1xf32> to vector<16x7xf32>
    %49 = vector.broadcast %47 : vector<1x7xf32> to vector<16x7xf32>
    %50 = arith.mulf %48, %49 : vector<16x7xf32>
    %51 = arith.addf %45, %50 : vector<16x7xf32>
    %52 = vector.extract_strided_slice %11 {offsets = [0, 1], sizes = [16, 1], strides = [1, 1]} : vector<16x4xf32> to vector<16x1xf32>
    %53 = vector.extract_strided_slice %44 {offsets = [1, 0], sizes = [1, 7], strides = [1, 1]} : vector<4x7xf32> to vector<1x7xf32>
    %54 = vector.broadcast %52 : vector<16x1xf32> to vector<16x7xf32>
    %55 = vector.broadcast %53 : vector<1x7xf32> to vector<16x7xf32>
    %56 = arith.mulf %54, %55 : vector<16x7xf32>
    %57 = arith.addf %51, %56 : vector<16x7xf32>
    %58 = vector.extract_strided_slice %11 {offsets = [0, 2], sizes = [16, 1], strides = [1, 1]} : vector<16x4xf32> to vector<16x1xf32>
    %59 = vector.extract_strided_slice %44 {offsets = [2, 0], sizes = [1, 7], strides = [1, 1]} : vector<4x7xf32> to vector<1x7xf32>
    %60 = vector.broadcast %58 : vector<16x1xf32> to vector<16x7xf32>
    %61 = vector.broadcast %59 : vector<1x7xf32> to vector<16x7xf32>
    %62 = arith.mulf %60, %61 : vector<16x7xf32>
    %63 = arith.addf %57, %62 : vector<16x7xf32>
    %64 = vector.extract_strided_slice %11 {offsets = [0, 3], sizes = [16, 1], strides = [1, 1]} : vector<16x4xf32> to vector<16x1xf32>
    %65 = vector.extract_strided_slice %44 {offsets = [3, 0], sizes = [1, 7], strides = [1, 1]} : vector<4x7xf32> to vector<1x7xf32>
    %66 = vector.broadcast %64 : vector<16x1xf32> to vector<16x7xf32>
    %67 = vector.broadcast %65 : vector<1x7xf32> to vector<16x7xf32>
    %68 = arith.mulf %66, %67 : vector<16x7xf32>
    %69 = arith.addf %63, %68 : vector<16x7xf32>
    %c0_27 = arith.constant 0 : index
    %c0_28 = arith.constant 0 : index
    %70 = vector.load %arg10[%c0_27, %c0_28] : memref<16x4xf32, #tpu.memory_space<vmem>>, vector<16x4xf32>
    tpu.vector_store %arg10[%c0_27, %c0_28], %11 {strides = array<i32>} : memref<16x4xf32, #tpu.memory_space<vmem>>, vector<16x4xf32>,
    %71 = vector.broadcast %43 : vector<16x1xf32> to vector<16x7xf32>
    %72 = arith.mulf %71, %69 : vector<16x7xf32>
    %cst_29 = arith.constant 1.000000e+00 : f32
    %73 = vector.broadcast %cst_29 : f32 to vector<16x1xf32>
    %74 = arith.subf %73, %43 : vector<16x1xf32>
    %75 = vector.broadcast %74 : vector<16x1xf32> to vector<16x7xf32>
    %76 = arith.mulf %75, %36 : vector<16x7xf32>
    %77 = arith.addf %72, %76 : vector<16x7xf32>
    %c0_30 = arith.constant 0 : index
    %c0_31 = arith.constant 0 : index
    %78 = vector.load %arg11[%c0_30, %c0_31] : memref<16x7xf32, #tpu.memory_space<vmem>>, vector<16x7xf32>
    tpu.vector_store %arg11[%c0_30, %c0_31], %77 {strides = array<i32>} : memref<16x7xf32, #tpu.memory_space<vmem>>, vector<16x7xf32>,
    return
  }
  func.func @transform_0(%arg0: i32) -> (i32, i32) {
    %c0_i32 = arith.constant 0 : i32
    %c0_i32_0 = arith.constant 0 : i32
    return %arg0, %c0_i32 : i32, i32
  }
  func.func @transform_1(%arg0: i32) -> (i32, i32) {
    %c0_i32 = arith.constant 0 : i32
    %c0_i32_0 = arith.constant 0 : i32
    return %arg0, %c0_i32 : i32, i32
  }
  func.func @transform_2(%arg0: i32) -> (i32, i32) {
    %c0_i32 = arith.constant 0 : i32
    %c0_i32_0 = arith.constant 0 : i32
    %c0_i32_1 = arith.constant 0 : i32
    return %c0_i32, %c0_i32_0 : i32, i32
  }
  func.func @transform_3(%arg0: i32) -> (i32, i32) {
    %c0_i32 = arith.constant 0 : i32
    %c0_i32_0 = arith.constant 0 : i32
    %c0_i32_1 = arith.constant 0 : i32
    return %c0_i32, %c0_i32_0 : i32, i32
  }
  func.func @transform_4(%arg0: i32) -> (i32, i32) {
    %c0_i32 = arith.constant 0 : i32
    %c0_i32_0 = arith.constant 0 : i32
    %c0_i32_1 = arith.constant 0 : i32
    return %c0_i32, %c0_i32_0 : i32, i32
  }
  func.func @transform_5(%arg0: i32) -> (i32, i32) {
    %c0_i32 = arith.constant 0 : i32
    %c0_i32_0 = arith.constant 0 : i32
    %c0_i32_1 = arith.constant 0 : i32
    return %c0_i32, %c0_i32_0 : i32, i32
  }
  func.func @transform_6(%arg0: i32) -> (i32, i32) {
    %c0_i32 = arith.constant 0 : i32
    %c0_i32_0 = arith.constant 0 : i32
    %c0_i32_1 = arith.constant 0 : i32
    return %c0_i32, %c0_i32_0 : i32, i32
  }
  func.func @transform_7(%arg0: i32) -> (i32, i32) {
    %c0_i32 = arith.constant 0 : i32
    %c0_i32_0 = arith.constant 0 : i32
    %c0_i32_1 = arith.constant 0 : i32
    return %c0_i32, %c0_i32_0 : i32, i32
  }
  func.func @transform_8(%arg0: i32) -> (i32, i32) {
    %c0_i32 = arith.constant 0 : i32
    %c0_i32_0 = arith.constant 0 : i32
    %c0_i32_1 = arith.constant 0 : i32
    return %c0_i32, %c0_i32_0 : i32, i32
  }
  func.func @transform_9(%arg0: i32) -> (i32, i32) {
    %c0_i32 = arith.constant 0 : i32
    %c0_i32_0 = arith.constant 0 : i32
    return %arg0, %c0_i32 : i32, i32
  }
  func.func @transform_10(%arg0: i32) -> (i32, i32) {
    %c0_i32 = arith.constant 0 : i32
    %c0_i32_0 = arith.constant 0 : i32
    return %arg0, %c0_i32 : i32, i32
  }
}

</mosaic_0001>

<llo_original>
// kernel: token_indicator_forward.7
$region0: #{token_indicator_forward.7}
  #allocation0 [shape = 'u32[]', space=smem, size = 0x4, offset = 0x4, fixed_abs, tag = 'smem constant byte address 0x4 - core index']
  #allocation1 [shape = 'u32[144,128]{1,0:T(1,128)}', space=vmem, size = 0x12000, scoped, tag = 'internal scratch']
  %s0 = inlined_call_operand.vmem [shape: f32[16,128], index: 0, kind: input, shape index: {}]
  %s1 = inlined_call_operand.vmem [shape: f32[128,512], index: 1, kind: input, shape index: {}]
  %s2 = inlined_call_operand.vmem [shape: f32[1,512], index: 2, kind: input, shape index: {}]
  %s3 = inlined_call_operand.vmem [shape: f32[16,384], index: 3, kind: output, shape index: {0}]
  %s4 = inlined_call_operand.vmem [shape: f32[16,128], index: 4, kind: output, shape index: {1}]
  %5 = xla_tuple %s3, %s4
  %s6 = sld [smem:[#allocation0]]
  $region30: #{token_indicator_forward.7} parent=0
    _
  %s8 = ssub.s32 1, %s6
  %s9 = scalar_select 0, %s8, %s6
  // Predicated region
  $region2: #{token_indicator_forward.7} parent=0 // pred_check
    _
  $region3: #{token_indicator_forward.7} parent=0 // pred_check_branch
    %11 = sbr.rel (0) target = $region5
  $region4: #{token_indicator_forward.7} parent=0 // pred_region
    _
  $region5: #{token_indicator_forward.7} parent=0 // pred_fallthru
    _
  // Predicated region
  $region6: #{token_indicator_forward.7} parent=0 // pred_check
    _
  $region7: #{token_indicator_forward.7} parent=0 // pred_check_branch
    %13 = sbr.rel (0) target = $region9
  $region8: #{token_indicator_forward.7} parent=0 // pred_region
    _
  $region9: #{token_indicator_forward.7} parent=0 // pred_fallthru
    _
  // Predicated region
  $region10: #{token_indicator_forward.7} parent=0 // pred_check
    _
  $region11: #{token_indicator_forward.7} parent=0 // pred_check_branch
    %15 = sbr.rel (0) target = $region13
  $region12: #{token_indicator_forward.7} parent=0 // pred_region
    _
  $region13: #{token_indicator_forward.7} parent=0 // pred_fallthru
    _
  %v16 = vld [vmem:[%s0] sm:$0xff]
  %v17 = vld [vmem:[%s0 + $0x8] sm:$0xff]
  %v18 = vld [vmem:[%s1] sm:$0xff]
  %v19 = vld [vmem:[%s1 + $0x8] sm:$0xff]
  %v20 = vld [vmem:[%s1 + $0x10] sm:$0xff]
  %v21 = vld [vmem:[%s1 + $0x18] sm:$0xff]
  %v22 = vld [vmem:[%s1 + $0x20] sm:$0xff]
  %v23 = vld [vmem:[%s1 + $0x28] sm:$0xff]
  %v24 = vld [vmem:[%s1 + $0x30] sm:$0xff]
  %v25 = vld [vmem:[%s1 + $0x38] sm:$0xff]
  %v26 = vld [vmem:[%s1 + $0x40] sm:$0xff]
  %v27 = vld [vmem:[%s1 + $0x48] sm:$0xff]
  %v28 = vld [vmem:[%s1 + $0x50] sm:$0xff]
  %v29 = vld [vmem:[%s1 + $0x58] sm:$0xff]
  %v30 = vld [vmem:[%s1 + $0x60] sm:$0xff]
  %v31 = vld [vmem:[%s1 + $0x68] sm:$0xff]
  %v32 = vld [vmem:[%s1 + $0x70] sm:$0xff]
  %v33 = vld [vmem:[%s1 + $0x78] sm:$0xff]
  %v34 = vld [vmem:[%s1 + $0x80] sm:$0xff]
  %v35 = vld [vmem:[%s1 + $0x88] sm:$0xff]
  %v36 = vld [vmem:[%s1 + $0x90] sm:$0xff]
  %v37 = vld [vmem:[%s1 + $0x98] sm:$0xff]
  %v38 = vld [vmem:[%s1 + $0xa0] sm:$0xff]
  %v39 = vld [vmem:[%s1 + $0xa8] sm:$0xff]
  %v40 = vld [vmem:[%s1 + $0xb0] sm:$0xff]
  %v41 = vld [vmem:[%s1 + $0xb8] sm:$0xff]
  %v42 = vld [vmem:[%s1 + $0xc0] sm:$0xff]
  %v43 = vld [vmem:[%s1 + $0xc8] sm:$0xff]
  %v44 = vld [vmem:[%s1 + $0xd0] sm:$0xff]
  %v45 = vld [vmem:[%s1 + $0xd8] sm:$0xff]
  %v46 = vld [vmem:[%s1 + $0xe0] sm:$0xff]
  %v47 = vld [vmem:[%s1 + $0xe8] sm:$0xff]
  %v48 = vld [vmem:[%s1 + $0xf0] sm:$0xff]
  %v49 = vld [vmem:[%s1 + $0xf8] sm:$0xff]
  %v50 = vld [vmem:[%s1 + $0x100] sm:$0xff]
  %v51 = vld [vmem:[%s1 + $0x108] sm:$0xff]
  %v52 = vld [vmem:[%s1 + $0x110] sm:$0xff]
  %v53 = vld [vmem:[%s1 + $0x118] sm:$0xff]
  %v54 = vld [vmem:[%s1 + $0x120] sm:$0xff]
  %v55 = vld [vmem:[%s1 + $0x128] sm:$0xff]
  %v56 = vld [vmem:[%s1 + $0x130] sm:$0xff]
  %v57 = vld [vmem:[%s1 + $0x138] sm:$0xff]
  %v58 = vld [vmem:[%s1 + $0x140] sm:$0xff]
  %v59 = vld [vmem:[%s1 + $0x148] sm:$0xff]
  %v60 = vld [vmem:[%s1 + $0x150] sm:$0xff]
  %v61 = vld [vmem:[%s1 + $0x158] sm:$0xff]
  %v62 = vld [vmem:[%s1 + $0x160] sm:$0xff]
  %v63 = vld [vmem:[%s1 + $0x168] sm:$0xff]
  %v64 = vld [vmem:[%s1 + $0x170] sm:$0xff]
  %v65 = vld [vmem:[%s1 + $0x178] sm:$0xff]
  %v66 = vld [vmem:[%s1 + $0x180] sm:$0xff]
  %v67 = vld [vmem:[%s1 + $0x188] sm:$0xff]
  %v68 = vld [vmem:[%s1 + $0x190] sm:$0xff]
  %v69 = vld [vmem:[%s1 + $0x198] sm:$0xff]
  %v70 = vld [vmem:[%s1 + $0x1a0] sm:$0xff]
  %v71 = vld [vmem:[%s1 + $0x1a8] sm:$0xff]
  %v72 = vld [vmem:[%s1 + $0x1b0] sm:$0xff]
  %v73 = vld [vmem:[%s1 + $0x1b8] sm:$0xff]
  %v74 = vld [vmem:[%s1 + $0x1c0] sm:$0xff]
  %v75 = vld [vmem:[%s1 + $0x1c8] sm:$0xff]
  %v76 = vld [vmem:[%s1 + $0x1d0] sm:$0xff]
  %v77 = vld [vmem:[%s1 + $0x1d8] sm:$0xff]
  %v78 = vld [vmem:[%s1 + $0x1e0] sm:$0xff]
  %v79 = vld [vmem:[%s1 + $0x1e8] sm:$0xff]
  %v80 = vld [vmem:[%s1 + $0x1f0] sm:$0xff]
  %v81 = vld [vmem:[%s1 + $0x1f8] sm:$0xff]
  %v82 = vld [vmem:[%s2] sm:$0xf]
  %v84 = vlaneseq
  %v85 = vshrl.u32 %v84, 7
  %v86 = vsub.s32 0, %v85
  %v87 = vrot.slane %v82, %v86
  %v88 = vlaneseq
  %v89 = vshrl.u32 %v88, 7
  %v90 = vsub.s32 1, %v89
  %v91 = vrot.slane %v82, %v90
  %v92 = vlaneseq
  %v93 = vshrl.u32 %v92, 7
  %v94 = vsub.s32 2, %v93
  %v95 = vrot.slane %v82, %v94
  %v96 = vlaneseq
  %v97 = vshrl.u32 %v96, 7
  %v98 = vsub.s32 3, %v97
  %v99 = vrot.slane %v82, %v98
  %104 = vmatprep.subr.mxu0 %v19
  %105 = vmatpush1.msra.mxu0 %v18
  %106 = vmatprep.subr.mxu0 %v23
  %107 = vmatpush1.msra.mxu0 %v22
  %108 = vmatprep.subr.mxu0 %v27
  %109 = vmatpush1.msra.mxu0 %v26
  %110 = vmatprep.subr.mxu0 %v31
  %111 = vmatpush1.msra.mxu0 %v30
  %112 = vmatprep.subr.mxu0 %v35
  %113 = vmatpush1.msra.mxu0 %v34
  %114 = vmatprep.subr.mxu0 %v39
  %115 = vmatpush1.msra.mxu0 %v38
  %116 = vmatprep.subr.mxu0 %v43
  %117 = vmatpush1.msra.mxu0 %v42
  %118 = vmatprep.subr.mxu0 %v47
  %119 = vmatpush1.msra.mxu0 %v46
  %120 = vmatprep.subr.mxu0 %v51
  %121 = vmatpush1.msra.mxu0 %v50
  %122 = vmatprep.subr.mxu0 %v55
  %123 = vmatpush1.msra.mxu0 %v54
  %124 = vmatprep.subr.mxu0 %v59
  %125 = vmatpush1.msra.mxu0 %v58
  %126 = vmatprep.subr.mxu0 %v63
  %127 = vmatpush1.msra.mxu0 %v62
  %128 = vmatprep.subr.mxu0 %v67
  %129 = vmatpush1.msra.mxu0 %v66
  %130 = vmatprep.subr.mxu0 %v71
  %131 = vmatpush1.msra.mxu0 %v70
  %132 = vmatprep.subr.mxu0 %v75
  %133 = vmatpush1.msra.mxu0 %v74
  %134 = vmatprep.subr.mxu0 %v79
  %135 = vmatpush1.msra.mxu0 %v78
  %136 = vmatprep.subr.mxu0 0.0
  %137 = vmatpush1.msra.mxu0 0.0
  %138 = vmatprep.subr.mxu0 0.0
  %139 = vmatpush1.msra.mxu0 0.0
  %140 = vmatprep.subr.mxu0 0.0
  %141 = vmatpush1.msra.mxu0 0.0
  %142 = vmatprep.subr.mxu0 0.0
  %143 = vmatpush1.msra.mxu0 0.0
  %144 = vmatprep.subr.mxu0 0.0
  %145 = vmatpush1.msra.mxu0 0.0
  %146 = vmatprep.subr.mxu0 0.0
  %147 = vmatpush1.msra.mxu0 0.0
  %148 = vmatprep.subr.mxu0 0.0
  %149 = vmatpush1.msra.mxu0 0.0
  %150 = vmatprep.subr.mxu0 0.0
  %151 = vmatpush1.msra.mxu0 0.0
  %152 = vmatprep.subr.mxu0 0.0
  %153 = vmatpush1.msra.mxu0 0.0
  %154 = vmatprep.subr.mxu0 0.0
  %155 = vmatpush1.msra.mxu0 0.0
  %156 = vmatprep.subr.mxu0 0.0
  %157 = vmatpush1.msra.mxu0 0.0
  %158 = vmatprep.subr.mxu0 0.0
  %159 = vmatpush1.msra.mxu0 0.0
  %160 = vmatprep.subr.mxu0 0.0
  %161 = vmatpush1.msra.mxu0 0.0
  %162 = vmatprep.subr.mxu0 0.0
  %163 = vmatpush1.msra.mxu0 0.0
  %164 = vmatprep.subr.mxu0 0.0
  %165 = vmatpush1.msra.mxu0 0.0
  %166 = vmatprep.subr.mxu0 0.0
  %167 = vmatpush1.msra.mxu0 0.0
  %168 = vmatprep.mubr.f32.mxu0 0.0
  %169 = vmatmul.mubr.f32.gmra.mrb[0].mxu0 %v16
  %v170 = vpop.f32.mrb[0].mxu0
  %v171 = vadd.f32 %v87, %v170
  %v172 = vpop.f32.mrb[0].mxu0
  %v173 = vadd.f32 %v91, %v172
  %174 = vmatprep.mubr.f32.mxu0 0.0
  %175 = vmatmul.mubr.f32.gmra.mrb[0].mxu0 %v17
  %v176 = vpop.f32.mrb[0].mxu0
  %v177 = vadd.f32 %v87, %v176
  %v178 = vpop.f32.mrb[0].mxu0
  %v179 = vadd.f32 %v91, %v178
  %180 = vdwg.mxu0
  %181 = vmatprep.subr.mxu0 %v21
  %182 = vmatpush1.msra.mxu0 %v20
  %183 = vmatprep.subr.mxu0 %v25
  %184 = vmatpush1.msra.mxu0 %v24
  %185 = vmatprep.subr.mxu0 %v29
  %186 = vmatpush1.msra.mxu0 %v28
  %187 = vmatprep.subr.mxu0 %v33
  %188 = vmatpush1.msra.mxu0 %v32
  %189 = vmatprep.subr.mxu0 %v37
  %190 = vmatpush1.msra.mxu0 %v36
  %191 = vmatprep.subr.mxu0 %v41
  %192 = vmatpush1.msra.mxu0 %v40
  %193 = vmatprep.subr.mxu0 %v45
  %194 = vmatpush1.msra.mxu0 %v44
  %195 = vmatprep.subr.mxu0 %v49
  %196 = vmatpush1.msra.mxu0 %v48
  %197 = vmatprep.subr.mxu0 %v53
  %198 = vmatpush1.msra.mxu0 %v52
  %199 = vmatprep.subr.mxu0 %v57
  %200 = vmatpush1.msra.mxu0 %v56
  %201 = vmatprep.subr.mxu0 %v61
  %202 = vmatpush1.msra.mxu0 %v60
  %203 = vmatprep.subr.mxu0 %v65
  %204 = vmatpush1.msra.mxu0 %v64
  %205 = vmatprep.subr.mxu0 %v69
  %206 = vmatpush1.msra.mxu0 %v68
  %207 = vmatprep.subr.mxu0 %v73
  %208 = vmatpush1.msra.mxu0 %v72
  %209 = vmatprep.subr.mxu0 %v77
  %210 = vmatpush1.msra.mxu0 %v76
  %211 = vmatprep.subr.mxu0 %v81
  %212 = vmatpush1.msra.mxu0 %v80
  %213 = vmatprep.subr.mxu0 0.0
  %214 = vmatpush1.msra.mxu0 0.0
  %215 = vmatprep.subr.mxu0 0.0
  %216 = vmatpush1.msra.mxu0 0.0
  %217 = vmatprep.subr.mxu0 0.0
  %218 = vmatpush1.msra.mxu0 0.0
  %219 = vmatprep.subr.mxu0 0.0
  %220 = vmatpush1.msra.mxu0 0.0
  %221 = vmatprep.subr.mxu0 0.0
  %222 = vmatpush1.msra.mxu0 0.0
  %223 = vmatprep.subr.mxu0 0.0
  %224 = vmatpush1.msra.mxu0 0.0
  %225 = vmatprep.subr.mxu0 0.0
  %226 = vmatpush1.msra.mxu0 0.0
  %227 = vmatprep.subr.mxu0 0.0
  %228 = vmatpush1.msra.mxu0 0.0
  %229 = vmatprep.subr.mxu0 0.0
  %230 = vmatpush1.msra.mxu0 0.0
  %231 = vmatprep.subr.mxu0 0.0
  %232 = vmatpush1.msra.mxu0 0.0
  %233 = vmatprep.subr.mxu0 0.0
  %234 = vmatpush1.msra.mxu0 0.0
  %235 = vmatprep.subr.mxu0 0.0
  %236 = vmatpush1.msra.mxu0 0.0
  %237 = vmatprep.subr.mxu0 0.0
  %238 = vmatpush1.msra.mxu0 0.0
  %239 = vmatprep.subr.mxu0 0.0
  %240 = vmatpush1.msra.mxu0 0.0
  %241 = vmatprep.subr.mxu0 0.0
  %242 = vmatpush1.msra.mxu0 0.0
  %243 = vmatprep.subr.mxu0 0.0
  %244 = vmatpush1.msra.mxu0 0.0
  %245 = vmatprep.mubr.f32.mxu0 0.0
  %246 = vmatmul.mubr.f32.gmra.mrb[0].mxu0 %v16
  %v247 = vpop.f32.mrb[0].mxu0
  %v248 = vadd.f32 %v95, %v247
  %v249 = vpop.f32.mrb[0].mxu0
  %v250 = vadd.f32 %v99, %v249
  %251 = vmatprep.mubr.f32.mxu0 0.0
  %252 = vmatmul.mubr.f32.gmra.mrb[0].mxu0 %v17
  %v253 = vpop.f32.mrb[0].mxu0
  %v254 = vadd.f32 %v95, %v253
  %v255 = vpop.f32.mrb[0].mxu0
  %v256 = vadd.f32 %v99, %v255
  %257 = vdwg.mxu0
  %258 = vst [vmem:[%s3] sm:$0xff] %v171
  %259 = vst [vmem:[%s3 + $0x8] sm:$0xff] %v173
  %260 = vst [vmem:[%s3 + $0x10] sm:$0xff] %v248
  %261 = vst [vmem:[%s3 + $0x18] sm:$0xff] %v177
  %262 = vst [vmem:[%s3 + $0x20] sm:$0xff] %v179
  %263 = vst [vmem:[%s3 + $0x28] sm:$0xff] %v254
  %264 = vst [vmem:[%s4] sm:$0xff] %v250
  %265 = vst [vmem:[%s4 + $0x8] sm:$0xff] %v256
  // Predicated region
  $region14: #{token_indicator_forward.7} parent=0 // pred_check
    _
  $region15: #{token_indicator_forward.7} parent=0 // pred_check_branch
    %267 = sbr.rel (0) target = $region17
  $region16: #{token_indicator_forward.7} parent=0 // pred_region
    _
  $region17: #{token_indicator_forward.7} parent=0 // pred_fallthru
    _
  // Predicated region
  $region18: #{token_indicator_forward.7} parent=0 // pred_check
    _
  $region19: #{token_indicator_forward.7} parent=0 // pred_check_branch
    %269 = sbr.rel (0) target = $region21
  $region20: #{token_indicator_forward.7} parent=0 // pred_region
    _
  $region21: #{token_indicator_forward.7} parent=0 // pred_fallthru
    _
  // Predicated region
  $region22: #{token_indicator_forward.7} parent=0 // pred_check
    _
  $region23: #{token_indicator_forward.7} parent=0 // pred_check_branch
    %271 = sbr.rel (0) target = $region25
  $region24: #{token_indicator_forward.7} parent=0 // pred_region
    _
  $region25: #{token_indicator_forward.7} parent=0 // pred_fallthru
    _
  // Predicated region
  $region26: #{token_indicator_forward.7} parent=0 // pred_check
    _
  $region27: #{token_indicator_forward.7} parent=0 // pred_check_branch
    %273 = sbr.rel (0) target = $region29
  $region28: #{token_indicator_forward.7} parent=0 // pred_region
    _
  $region29: #{token_indicator_forward.7} parent=0 // pred_fallthru
    _

// kernel: token_indicator_forward.5
$region0: #{token_indicator_forward.5}
  #allocation0 [shape = 'u32[]', space=smem, size = 0x4, offset = 0x4, fixed_abs, tag = 'smem constant byte address 0x4 - core index']
  #allocation1 [shape = 'u32[144,128]{1,0:T(1,128)}', space=vmem, size = 0x12000, scoped, tag = 'internal scratch']
  %s0 = inlined_call_operand.hbm [shape: f32[16,768], index: 0, kind: input, shape index: {}]
  %s1 = inlined_call_operand.hbm [shape: f32[768,384], index: 1, kind: input, shape index: {}]
  %s2 = inlined_call_operand.hbm [shape: f32[1,384], index: 2, kind: input, shape index: {}]
  %s3 = inlined_call_operand.vmem [shape: f32[16,384], index: 3, kind: output, shape index: {}]
  %s4 = sld [smem:[#allocation0]]
  $region34: #{token_indicator_forward.5} parent=0
    _
  %s6 = ssub.s32 1, %s4
  %s7 = scalar_select 0, %s6, %s4
  $region1: #{token_indicator_forward.5} parent=0
    #allocation2 [shape = 'u8[49152]{0}', space=vmem, size = 0xc000, scoped, tag = 'input window, operand 0, single buffered']
    #allocation3 [shape = 's32[1]{0}', space=sflag, size = 0x4, scoped, tag = 'scoped memory for token_indicator_forward.5']
    #allocation4 [shape = 'u8[1179648]{0}', space=vmem, size = 0x120000, scoped, tag = 'input window, operand 1, single buffered']
    #allocation5 [shape = 's32[1]{0}', space=sflag, size = 0x4, scoped, tag = 'scoped memory for token_indicator_forward.5']
    #allocation6 [shape = 'u8[1536]{0}', space=vmem, size = 0x800, scoped, tag = 'input window, operand 2, single buffered']
    %8 = vsyncpa [#allocation3], 0
    %9 = vsyncpa [#allocation5], 0
    // Predicated region
    $region2: #{token_indicator_forward.5} parent=1 // pred_check
      _
    $region3: #{token_indicator_forward.5} parent=1 // pred_check_branch
      %11 = sbr.rel (0) target = $region5
    $region4: #{token_indicator_forward.5} parent=1 // pred_region
      %s13 = ssub.s32 1536, 1536
      %14 = vsyncadd [#allocation3], %s13
      %s15 = sshll.u32 [#allocation2], 4
      %s16 = int_to_ptr.vmem [resolvable:$true] %s15
      %21 = dma.hbm_to_vmem [thread:$0]  %s0, 1536, %s16, [#allocation3], 768, 768, 48
    $region5: #{token_indicator_forward.5} parent=1 // pred_fallthru
      _
    // Predicated region
    $region6: #{token_indicator_forward.5} parent=1 // pred_check
      _
    $region7: #{token_indicator_forward.5} parent=1 // pred_check_branch
      %23 = sbr.rel (0) target = $region9
    $region8: #{token_indicator_forward.5} parent=1 // pred_region
      %s25 = ssub.s32 36864, 36864
      %26 = vsyncadd [#allocation5], %s25
      %s27 = sshll.u32 [#allocation4], 4
      %s28 = int_to_ptr.vmem [resolvable:$true] %s27
      %33 = dma.hbm_to_vmem [thread:$0]  %s1, 36864, %s28, [#allocation5], 384, 384, 24
    $region9: #{token_indicator_forward.5} parent=1 // pred_fallthru
      _
    // Predicated region
    $region10: #{token_indicator_forward.5} parent=1 // pred_check
      _
    $region11: #{token_indicator_forward.5} parent=1 // pred_check_branch
      %35 = sbr.rel (0) target = $region13
    $region12: #{token_indicator_forward.5} parent=1 // pred_region
      %s37 = ssub.s32 48, 48
      %38 = vsyncadd [#allocation5], %s37
      %s40 = sshll.u32 [#allocation6], 4
      %s41 = int_to_ptr.vmem [resolvable:$true] %s40
      %43 = dma.hbm_to_vmem [thread:$0]  %s2, 48, %s41, [#allocation5]
    $region13: #{token_indicator_forward.5} parent=1 // pred_fallthru
      _
    // Predicated region
    $region14: #{token_indicator_forward.5} parent=1 // pred_check
      _
    $region15: #{token_indicator_forward.5} parent=1 // pred_check_branch
      %45 = sbr.rel (0) target = $region17
    $region16: #{token_indicator_forward.5} parent=1 // pred_region
      %46 = dma.done [#allocation3], 1536
    $region17: #{token_indicator_forward.5} parent=1 // pred_fallthru
      _
    // Predicated region
    $region18: #{token_indicator_forward.5} parent=1 // pred_check
      _
    $region19: #{token_indicator_forward.5} parent=1 // pred_check_branch
      %48 = sbr.rel (0) target = $region21
    $region20: #{token_indicator_forward.5} parent=1 // pred_region
      %49 = dma.done [#allocation5], 36864
    $region21: #{token_indicator_forward.5} parent=1 // pred_fallthru
      _
    // Predicated region
    $region22: #{token_indicator_forward.5} parent=1 // pred_check
      _
    $region23: #{token_indicator_forward.5} parent=1 // pred_check_branch
      %51 = sbr.rel (0) target = $region25
    $region24: #{token_indicator_forward.5} parent=1 // pred_region
      %52 = dma.done [#allocation5], 48
    $region25: #{token_indicator_forward.5} parent=1 // pred_fallthru
      _
    %v53 = vld [vmem:[#allocation2] sm:$0xff]
    %v54 = vld [vmem:[#allocation2 + $0x8] sm:$0xff]
    %v55 = vld [vmem:[#allocation2 + $0x10] sm:$0xff]
    %v56 = vld [vmem:[#allocation2 + $0x18] sm:$0xff]
    %v57 = vld [vmem:[#allocation2 + $0x20] sm:$0xff]
    %v58 = vld [vmem:[#allocation2 + $0x28] sm:$0xff]
    %v59 = vld [vmem:[#allocation2 + $0x30] sm:$0xff]
    %v60 = vld [vmem:[#allocation2 + $0x38] sm:$0xff]
    %v61 = vld [vmem:[#allocation2 + $0x40] sm:$0xff]
    %v62 = vld [vmem:[#allocation2 + $0x48] sm:$0xff]
    %v63 = vld [vmem:[#allocation2 + $0x50] sm:$0xff]
    %v64 = vld [vmem:[#allocation2 + $0x58] sm:$0xff]
    %v65 = vld [vmem:[#allocation4] sm:$0xff]
    %v66 = vld [vmem:[#allocation4 + $0x8] sm:$0xff]
    %v67 = vld [vmem:[#allocation4 + $0x10] sm:$0xff]
    %v68 = vld [vmem:[#allocation4 + $0x18] sm:$0xff]
    %v69 = vld [vmem:[#allocation4 + $0x20] sm:$0xff]
    %v70 = vld [vmem:[#allocation4 + $0x28] sm:$0xff]
    %v71 = vld [vmem:[#allocation4 + $0x30] sm:$0xff]
    %v72 = vld [vmem:[#allocation4 + $0x38] sm:$0xff]
    %v73 = vld [vmem:[#allocation4 + $0x40] sm:$0xff]
    %v74 = vld [vmem:[#allocation4 + $0x48] sm:$0xff]
    %v75 = vld [vmem:[#allocation4 + $0x50] sm:$0xff]
    %v76 = vld [vmem:[#allocation4 + $0x58] sm:$0xff]
    %v77 = vld [vmem:[#allocation4 + $0x60] sm:$0xff]
    %v78 = vld [vmem:[#allocation4 + $0x68] sm:$0xff]
    %v79 = vld [vmem:[#allocation4 + $0x70] sm:$0xff]
    %v80 = vld [vmem:[#allocation4 + $0x78] sm:$0xff]
    %v81 = vld [vmem:[#allocation4 + $0x80] sm:$0xff]
    %v82 = vld [vmem:[#allocation4 + $0x88] sm:$0xff]
    %v83 = vld [vmem:[#allocation4 + $0x90] sm:$0xff]
    %v84 = vld [vmem:[#allocation4 + $0x98] sm:$0xff]
    %v85 = vld [vmem:[#allocation4 + $0xa0] sm:$0xff]
    %v86 = vld [vmem:[#allocation4 + $0xa8] sm:$0xff]
    %v87 = vld [vmem:[#allocation4 + $0xb0] sm:$0xff]
    %v88 = vld [vmem:[#allocation4 + $0xb8] sm:$0xff]
    %v89 = vld [vmem:[#allocation4 + $0xc0] sm:$0xff]
    %v90 = vld [vmem:[#allocation4 + $0xc8] sm:$0xff]
    %v91 = vld [vmem:[#allocation4 + $0xd0] sm:$0xff]
    %v92 = vld [vmem:[#allocation4 + $0xd8] sm:$0xff]
    %v93 = vld [vmem:[#allocation4 + $0xe0] sm:$0xff]
    %v94 = vld [vmem:[#allocation4 + $0xe8] sm:$0xff]
    %v95 = vld [vmem:[#allocation4 + $0xf0] sm:$0xff]
    %v96 = vld [vmem:[#allocation4 + $0xf8] sm:$0xff]
    %v97 = vld [vmem:[#allocation4 + $0x100] sm:$0xff]
    %v98 = vld [vmem:[#allocation4 + $0x108] sm:$0xff]
    %v99 = vld [vmem:[#allocation4 + $0x110] sm:$0xff]
    %v100 = vld [vmem:[#allocation4 + $0x118] sm:$0xff]
    %v101 = vld [vmem:[#allocation4 + $0x120] sm:$0xff]
    %v102 = vld [vmem:[#allocation4 + $0x128] sm:$0xff]
    %v103 = vld [vmem:[#allocation4 + $0x130] sm:$0xff]
    %v104 = vld [vmem:[#allocation4 + $0x138] sm:$0xff]
    %v105 = vld [vmem:[#allocation4 + $0x140] sm:$0xff]
    %v106 = vld [vmem:[#allocation4 + $0x148] sm:$0xff]
    %v107 = vld [vmem:[#allocation4 + $0x150] sm:$0xff]
    %v108 = vld [vmem:[#allocation4 + $0x158] sm:$0xff]
    %v109 = vld [vmem:[#allocation4 + $0x160] sm:$0xff]
    %v110 = vld [vmem:[#allocation4 + $0x168] sm:$0xff]
    %v111 = vld [vmem:[#allocation4 + $0x170] sm:$0xff]
    %v112 = vld [vmem:[#allocation4 + $0x178] sm:$0xff]
    %v113 = vld [vmem:[#allocation4 + $0x180] sm:$0xff]
    %v114 = vld [vmem:[#allocation4 + $0x188] sm:$0xff]
    %v115 = vld [vmem:[#allocation4 + $0x190] sm:$0xff]
    %v116 = vld [vmem:[#allocation4 + $0x198] sm:$0xff]
    %v117 = vld [vmem:[#allocation4 + $0x1a0] sm:$0xff]
    %v118 = vld [vmem:[#allocation4 + $0x1a8] sm:$0xff]
    %v119 = vld [vmem:[#allocation4 + $0x1b0] sm:$0xff]
    %v120 = vld [vmem:[#allocation4 + $0x1b8] sm:$0xff]
    %v121 = vld [vmem:[#allocation4 + $0x1c0] sm:$0xff]
    %v122 = vld [vmem:[#allocation4 + $0x1c8] sm:$0xff]
    %v123 = vld [vmem:[#allocation4 + $0x1d0] sm:$0xff]
    %v124 = vld [vmem:[#allocation4 + $0x1d8] sm:$0xff]
    %v125 = vld [vmem:[#allocation4 + $0x1e0] sm:$0xff]
    %v126 = vld [vmem:[#allocation4 + $0x1e8] sm:$0xff]
    %v127 = vld [vmem:[#allocation4 + $0x1f0] sm:$0xff]
    %v128 = vld [vmem:[#allocation4 + $0x1f8] sm:$0xff]
    %v129 = vld [vmem:[#allocation4 + $0x200] sm:$0xff]
    %v130 = vld [vmem:[#allocation4 + $0x208] sm:$0xff]
    %v131 = vld [vmem:[#allocation4 + $0x210] sm:$0xff]
    %v132 = vld [vmem:[#allocation4 + $0x218] sm:$0xff]
    %v133 = vld [vmem:[#allocation4 + $0x220] sm:$0xff]
    %v134 = vld [vmem:[#allocation4 + $0x228] sm:$0xff]
    %v135 = vld [vmem:[#allocation4 + $0x230] sm:$0xff]
    %v136 = vld [vmem:[#allocation4 + $0x238] sm:$0xff]
    %v137 = vld [vmem:[#allocation4 + $0x240] sm:$0xff]
    %v138 = vld [vmem:[#allocation4 + $0x248] sm:$0xff]
    %v139 = vld [vmem:[#allocation4 + $0x250] sm:$0xff]
    %v140 = vld [vmem:[#allocation4 + $0x258] sm:$0xff]
    %v141 = vld [vmem:[#allocation4 + $0x260] sm:$0xff]
    %v142 = vld [vmem:[#allocation4 + $0x268] sm:$0xff]
    %v143 = vld [vmem:[#allocation4 + $0x270] sm:$0xff]
    %v144 = vld [vmem:[#allocation4 + $0x278] sm:$0xff]
    %v145 = vld [vmem:[#allocation4 + $0x280] sm:$0xff]
    %v146 = vld [vmem:[#allocation4 + $0x288] sm:$0xff]
    %v147 = vld [vmem:[#allocation4 + $0x290] sm:$0xff]
    %v148 = vld [vmem:[#allocation4 + $0x298] sm:$0xff]
    %v149 = vld [vmem:[#allocation4 + $0x2a0] sm:$0xff]
    %v150 = vld [vmem:[#allocation4 + $0x2a8] sm:$0xff]
    %v151 = vld [vmem:[#allocation4 + $0x2b0] sm:$0xff]
    %v152 = vld [vmem:[#allocation4 + $0x2b8] sm:$0xff]
    %v153 = vld [vmem:[#allocation4 + $0x2c0] sm:$0xff]
    %v154 = vld [vmem:[#allocation4 + $0x2c8] sm:$0xff]
    %v155 = vld [vmem:[#allocation4 + $0x2d0] sm:$0xff]
    %v156 = vld [vmem:[#allocation4 + $0x2d8] sm:$0xff]
    %v157 = vld [vmem:[#allocation4 + $0x2e0] sm:$0xff]
    %v158 = vld [vmem:[#allocation4 + $0x2e8] sm:$0xff]
    %v159 = vld [vmem:[#allocation4 + $0x2f0] sm:$0xff]
    %v160 = vld [vmem:[#allocation4 + $0x2f8] sm:$0xff]
    %v161 = vld [vmem:[#allocation4 + $0x300] sm:$0xff]
    %v162 = vld [vmem:[#allocation4 + $0x308] sm:$0xff]
    %v163 = vld [vmem:[#allocation4 + $0x310] sm:$0xff]
    %v164 = vld [vmem:[#allocation4 + $0x318] sm:$0xff]
    %v165 = vld [vmem:[#allocation4 + $0x320] sm:$0xff]
    %v166 = vld [vmem:[#allocation4 + $0x328] sm:$0xff]
    %v167 = vld [vmem:[#allocation4 + $0x330] sm:$0xff]
    %v168 = vld [vmem:[#allocation4 + $0x338] sm:$0xff]
    %v169 = vld [vmem:[#allocation4 + $0x340] sm:$0xff]
    %v170 = vld [vmem:[#allocation4 + $0x348] sm:$0xff]
    %v171 = vld [vmem:[#allocation4 + $0x350] sm:$0xff]
    %v172 = vld [vmem:[#allocation4 + $0x358] sm:$0xff]
    %v173 = vld [vmem:[#allocation4 + $0x360] sm:$0xff]
    %v174 = vld [vmem:[#allocation4 + $0x368] sm:$0xff]
    %v175 = vld [vmem:[#allocation4 + $0x370] sm:$0xff]
    %v176 = vld [vmem:[#allocation4 + $0x378] sm:$0xff]
    %v177 = vld [vmem:[#allocation4 + $0x380] sm:$0xff]
    %v178 = vld [vmem:[#allocation4 + $0x388] sm:$0xff]
    %v179 = vld [vmem:[#allocation4 + $0x390] sm:$0xff]
    %v180 = vld [vmem:[#allocation4 + $0x398] sm:$0xff]
    %v181 = vld [vmem:[#allocation4 + $0x3a0] sm:$0xff]
    %v182 = vld [vmem:[#allocation4 + $0x3a8] sm:$0xff]
    %v183 = vld [vmem:[#allocation4 + $0x3b0] sm:$0xff]
    %v184 = vld [vmem:[#allocation4 + $0x3b8] sm:$0xff]
    %v185 = vld [vmem:[#allocation4 + $0x3c0] sm:$0xff]
    %v186 = vld [vmem:[#allocation4 + $0x3c8] sm:$0xff]
    %v187 = vld [vmem:[#allocation4 + $0x3d0] sm:$0xff]
    %v188 = vld [vmem:[#allocation4 + $0x3d8] sm:$0xff]
    %v189 = vld [vmem:[#allocation4 + $0x3e0] sm:$0xff]
    %v190 = vld [vmem:[#allocation4 + $0x3e8] sm:$0xff]
    %v191 = vld [vmem:[#allocation4 + $0x3f0] sm:$0xff]
    %v192 = vld [vmem:[#allocation4 + $0x3f8] sm:$0xff]
    %v193 = vld [vmem:[#allocation4 + $0x400] sm:$0xff]
    %v194 = vld [vmem:[#allocation4 + $0x408] sm:$0xff]
    %v195 = vld [vmem:[#allocation4 + $0x410] sm:$0xff]
    %v196 = vld [vmem:[#allocation4 + $0x418] sm:$0xff]
    %v197 = vld [vmem:[#allocation4 + $0x420] sm:$0xff]
    %v198 = vld [vmem:[#allocation4 + $0x428] sm:$0xff]
    %v199 = vld [vmem:[#allocation4 + $0x430] sm:$0xff]
    %v200 = vld [vmem:[#allocation4 + $0x438] sm:$0xff]
    %v201 = vld [vmem:[#allocation4 + $0x440] sm:$0xff]
    %v202 = vld [vmem:[#allocation4 + $0x448] sm:$0xff]
    %v203 = vld [vmem:[#allocation4 + $0x450] sm:$0xff]
    %v204 = vld [vmem:[#allocation4 + $0x458] sm:$0xff]
    %v205 = vld [vmem:[#allocation4 + $0x460] sm:$0xff]
    %v206 = vld [vmem:[#allocation4 + $0x468] sm:$0xff]
    %v207 = vld [vmem:[#allocation4 + $0x470] sm:$0xff]
    %v208 = vld [vmem:[#allocation4 + $0x478] sm:$0xff]
    %v209 = vld [vmem:[#allocation4 + $0x480] sm:$0xff]
    %v210 = vld [vmem:[#allocation4 + $0x488] sm:$0xff]
    %v211 = vld [vmem:[#allocation4 + $0x490] sm:$0xff]
    %v212 = vld [vmem:[#allocation4 + $0x498] sm:$0xff]
    %v213 = vld [vmem:[#allocation4 + $0x4a0] sm:$0xff]
    %v214 = vld [vmem:[#allocation4 + $0x4a8] sm:$0xff]
    %v215 = vld [vmem:[#allocation4 + $0x4b0] sm:$0xff]
    %v216 = vld [vmem:[#allocation4 + $0x4b8] sm:$0xff]
    %v217 = vld [vmem:[#allocation4 + $0x4c0] sm:$0xff]
    %v218 = vld [vmem:[#allocation4 + $0x4c8] sm:$0xff]
    %v219 = vld [vmem:[#allocation4 + $0x4d0] sm:$0xff]
    %v220 = vld [vmem:[#allocation4 + $0x4d8] sm:$0xff]
    %v221 = vld [vmem:[#allocation4 + $0x4e0] sm:$0xff]
    %v222 = vld [vmem:[#allocation4 + $0x4e8] sm:$0xff]
    %v223 = vld [vmem:[#allocation4 + $0x4f0] sm:$0xff]
    %v224 = vld [vmem:[#allocation4 + $0x4f8] sm:$0xff]
    %v225 = vld [vmem:[#allocation4 + $0x500] sm:$0xff]
    %v226 = vld [vmem:[#allocation4 + $0x508] sm:$0xff]
    %v227 = vld [vmem:[#allocation4 + $0x510] sm:$0xff]
    %v228 = vld [vmem:[#allocation4 + $0x518] sm:$0xff]
    %v229 = vld [vmem:[#allocation4 + $0x520] sm:$0xff]
    %v230 = vld [vmem:[#allocation4 + $0x528] sm:$0xff]
    %v231 = vld [vmem:[#allocation4 + $0x530] sm:$0xff]
    %v232 = vld [vmem:[#allocation4 + $0x538] sm:$0xff]
    %v233 = vld [vmem:[#allocation4 + $0x540] sm:$0xff]
    %v234 = vld [vmem:[#allocation4 + $0x548] sm:$0xff]
    %v235 = vld [vmem:[#allocation4 + $0x550] sm:$0xff]
    %v236 = vld [vmem:[#allocation4 + $0x558] sm:$0xff]
    %v237 = vld [vmem:[#allocation4 + $0x560] sm:$0xff]
    %v238 = vld [vmem:[#allocation4 + $0x568] sm:$0xff]
    %v239 = vld [vmem:[#allocation4 + $0x570] sm:$0xff]
    %v240 = vld [vmem:[#allocation4 + $0x578] sm:$0xff]
    %v241 = vld [vmem:[#allocation4 + $0x580] sm:$0xff]
    %v242 = vld [vmem:[#allocation4 + $0x588] sm:$0xff]
    %v243 = vld [vmem:[#allocation4 + $0x590] sm:$0xff]
    %v244 = vld [vmem:[#allocation4 + $0x598] sm:$0xff]
    %v245 = vld [vmem:[#allocation4 + $0x5a0] sm:$0xff]
    %v246 = vld [vmem:[#allocation4 + $0x5a8] sm:$0xff]
    %v247 = vld [vmem:[#allocation4 + $0x5b0] sm:$0xff]
    %v248 = vld [vmem:[#allocation4 + $0x5b8] sm:$0xff]
    %v249 = vld [vmem:[#allocation4 + $0x5c0] sm:$0xff]
    %v250 = vld [vmem:[#allocation4 + $0x5c8] sm:$0xff]
    %v251 = vld [vmem:[#allocation4 + $0x5d0] sm:$0xff]
    %v252 = vld [vmem:[#allocation4 + $0x5d8] sm:$0xff]
    %v253 = vld [vmem:[#allocation4 + $0x5e0] sm:$0xff]
    %v254 = vld [vmem:[#allocation4 + $0x5e8] sm:$0xff]
    %v255 = vld [vmem:[#allocation4 + $0x5f0] sm:$0xff]
    %v256 = vld [vmem:[#allocation4 + $0x5f8] sm:$0xff]
    %v257 = vld [vmem:[#allocation4 + $0x600] sm:$0xff]
    %v258 = vld [vmem:[#allocation4 + $0x608] sm:$0xff]
    %v259 = vld [vmem:[#allocation4 + $0x610] sm:$0xff]
    %v260 = vld [vmem:[#allocation4 + $0x618] sm:$0xff]
    %v261 = vld [vmem:[#allocation4 + $0x620] sm:$0xff]
    %v262 = vld [vmem:[#allocation4 + $0x628] sm:$0xff]
    %v263 = vld [vmem:[#allocation4 + $0x630] sm:$0xff]
    %v264 = vld [vmem:[#allocation4 + $0x638] sm:$0xff]
    %v265 = vld [vmem:[#allocation4 + $0x640] sm:$0xff]
    %v266 = vld [vmem:[#allocation4 + $0x648] sm:$0xff]
    %v267 = vld [vmem:[#allocation4 + $0x650] sm:$0xff]
    %v268 = vld [vmem:[#allocation4 + $0x658] sm:$0xff]
    %v269 = vld [vmem:[#allocation4 + $0x660] sm:$0xff]
    %v270 = vld [vmem:[#allocation4 + $0x668] sm:$0xff]
    %v271 = vld [vmem:[#allocation4 + $0x670] sm:$0xff]
    %v272 = vld [vmem:[#allocation4 + $0x678] sm:$0xff]
    %v273 = vld [vmem:[#allocation4 + $0x680] sm:$0xff]
    %v274 = vld [vmem:[#allocation4 + $0x688] sm:$0xff]
    %v275 = vld [vmem:[#allocation4 + $0x690] sm:$0xff]
    %v276 = vld [vmem:[#allocation4 + $0x698] sm:$0xff]
    %v277 = vld [vmem:[#allocation4 + $0x6a0] sm:$0xff]
    %v278 = vld [vmem:[#allocation4 + $0x6a8] sm:$0xff]
    %v279 = vld [vmem:[#allocation4 + $0x6b0] sm:$0xff]
    %v280 = vld [vmem:[#allocation4 + $0x6b8] sm:$0xff]
    %v281 = vld [vmem:[#allocation4 + $0x6c0] sm:$0xff]
    %v282 = vld [vmem:[#allocation4 + $0x6c8] sm:$0xff]
    %v283 = vld [vmem:[#allocation4 + $0x6d0] sm:$0xff]
    %v284 = vld [vmem:[#allocation4 + $0x6d8] sm:$0xff]
    %v285 = vld [vmem:[#allocation4 + $0x6e0] sm:$0xff]
    %v286 = vld [vmem:[#allocation4 + $0x6e8] sm:$0xff]
    %v287 = vld [vmem:[#allocation4 + $0x6f0] sm:$0xff]
    %v288 = vld [vmem:[#allocation4 + $0x6f8] sm:$0xff]
    %v289 = vld [vmem:[#allocation4 + $0x700] sm:$0xff]
    %v290 = vld [vmem:[#allocation4 + $0x708] sm:$0xff]
    %v291 = vld [vmem:[#allocation4 + $0x710] sm:$0xff]
    %v292 = vld [vmem:[#allocation4 + $0x718] sm:$0xff]
    %v293 = vld [vmem:[#allocation4 + $0x720] sm:$0xff]
    %v294 = vld [vmem:[#allocation4 + $0x728] sm:$0xff]
    %v295 = vld [vmem:[#allocation4 + $0x730] sm:$0xff]
    %v296 = vld [vmem:[#allocation4 + $0x738] sm:$0xff]
    %v297 = vld [vmem:[#allocation4 + $0x740] sm:$0xff]
    %v298 = vld [vmem:[#allocation4 + $0x748] sm:$0xff]
    %v299 = vld [vmem:[#allocation4 + $0x750] sm:$0xff]
    %v300 = vld [vmem:[#allocation4 + $0x758] sm:$0xff]
    %v301 = vld [vmem:[#allocation4 + $0x760] sm:$0xff]
    %v302 = vld [vmem:[#allocation4 + $0x768] sm:$0xff]
    %v303 = vld [vmem:[#allocation4 + $0x770] sm:$0xff]
    %v304 = vld [vmem:[#allocation4 + $0x778] sm:$0xff]
    %v305 = vld [vmem:[#allocation4 + $0x780] sm:$0xff]
    %v306 = vld [vmem:[#allocation4 + $0x788] sm:$0xff]
    %v307 = vld [vmem:[#allocation4 + $0x790] sm:$0xff]
    %v308 = vld [vmem:[#allocation4 + $0x798] sm:$0xff]
    %v309 = vld [vmem:[#allocation4 + $0x7a0] sm:$0xff]
    %v310 = vld [vmem:[#allocation4 + $0x7a8] sm:$0xff]
    %v311 = vld [vmem:[#allocation4 + $0x7b0] sm:$0xff]
    %v312 = vld [vmem:[#allocation4 + $0x7b8] sm:$0xff]
    %v313 = vld [vmem:[#allocation4 + $0x7c0] sm:$0xff]
    %v314 = vld [vmem:[#allocation4 + $0x7c8] sm:$0xff]
    %v315 = vld [vmem:[#allocation4 + $0x7d0] sm:$0xff]
    %v316 = vld [vmem:[#allocation4 + $0x7d8] sm:$0xff]
    %v317 = vld [vmem:[#allocation4 + $0x7e0] sm:$0xff]
    %v318 = vld [vmem:[#allocation4 + $0x7e8] sm:$0xff]
    %v319 = vld [vmem:[#allocation4 + $0x7f0] sm:$0xff]
    %v320 = vld [vmem:[#allocation4 + $0x7f8] sm:$0xff]
    %v321 = vld [vmem:[#allocation4 + $0x800] sm:$0xff]
    %v322 = vld [vmem:[#allocation4 + $0x808] sm:$0xff]
    %v323 = vld [vmem:[#allocation4 + $0x810] sm:$0xff]
    %v324 = vld [vmem:[#allocation4 + $0x818] sm:$0xff]
    %v325 = vld [vmem:[#allocation4 + $0x820] sm:$0xff]
    %v326 = vld [vmem:[#allocation4 + $0x828] sm:$0xff]
    %v327 = vld [vmem:[#allocation4 + $0x830] sm:$0xff]
    %v328 = vld [vmem:[#allocation4 + $0x838] sm:$0xff]
    %v329 = vld [vmem:[#allocation4 + $0x840] sm:$0xff]
    %v330 = vld [vmem:[#allocation4 + $0x848] sm:$0xff]
    %v331 = vld [vmem:[#allocation4 + $0x850] sm:$0xff]
    %v332 = vld [vmem:[#allocation4 + $0x858] sm:$0xff]
    %v333 = vld [vmem:[#allocation4 + $0x860] sm:$0xff]
    %v334 = vld [vmem:[#allocation4 + $0x868] sm:$0xff]
    %v335 = vld [vmem:[#allocation4 + $0x870] sm:$0xff]
    %v336 = vld [vmem:[#allocation4 + $0x878] sm:$0xff]
    %v337 = vld [vmem:[#allocation4 + $0x880] sm:$0xff]
    %v338 = vld [vmem:[#allocation4 + $0x888] sm:$0xff]
    %v339 = vld [vmem:[#allocation4 + $0x890] sm:$0xff]
    %v340 = vld [vmem:[#allocation4 + $0x898] sm:$0xff]
    %v341 = vld [vmem:[#allocation4 + $0x8a0] sm:$0xff]
    %v342 = vld [vmem:[#allocation4 + $0x8a8] sm:$0xff]
    %v343 = vld [vmem:[#allocation4 + $0x8b0] sm:$0xff]
    %v344 = vld [vmem:[#allocation4 + $0x8b8] sm:$0xff]
    %v345 = vld [vmem:[#allocation4 + $0x8c0] sm:$0xff]
    %v346 = vld [vmem:[#allocation4 + $0x8c8] sm:$0xff]
    %v347 = vld [vmem:[#allocation4 + $0x8d0] sm:$0xff]
    %v348 = vld [vmem:[#allocation4 + $0x8d8] sm:$0xff]
    %v349 = vld [vmem:[#allocation4 + $0x8e0] sm:$0xff]
    %v350 = vld [vmem:[#allocation4 + $0x8e8] sm:$0xff]
    %v351 = vld [vmem:[#allocation4 + $0x8f0] sm:$0xff]
    %v352 = vld [vmem:[#allocation4 + $0x8f8] sm:$0xff]
    %v353 = vld [vmem:[#allocation6] sm:$0x7]
    %v355 = vlaneseq
    %v356 = vshrl.u32 %v355, 7
    %v357 = vsub.s32 0, %v356
    %v358 = vrot.slane %v353, %v357
    %v359 = vlaneseq
    %v360 = vshrl.u32 %v359, 7
    %v361 = vsub.s32 1, %v360
    %v362 = vrot.slane %v353, %v361
    %v363 = vlaneseq
    %v364 = vshrl.u32 %v363, 7
    %v365 = vsub.s32 2, %v364
    %v366 = vrot.slane %v353, %v365
    %370 = vmatprep.subr.mxu0 %v66
    %371 = vmatpush1.msra.mxu0 %v65
    %372 = vmatprep.subr.mxu0 %v69
    %373 = vmatpush1.msra.mxu0 %v68
    %374 = vmatprep.subr.mxu0 %v72
    %375 = vmatpush1.msra.mxu0 %v71
    %376 = vmatprep.subr.mxu0 %v75
    %377 = vmatpush1.msra.mxu0 %v74
    %378 = vmatprep.subr.mxu0 %v78
    %379 = vmatpush1.msra.mxu0 %v77
    %380 = vmatprep.subr.mxu0 %v81
    %381 = vmatpush1.msra.mxu0 %v80
    %382 = vmatprep.subr.mxu0 %v84
    %383 = vmatpush1.msra.mxu0 %v83
    %384 = vmatprep.subr.mxu0 %v87
    %385 = vmatpush1.msra.mxu0 %v86
    %386 = vmatprep.subr.mxu0 %v90
    %387 = vmatpush1.msra.mxu0 %v89
    %388 = vmatprep.subr.mxu0 %v93
    %389 = vmatpush1.msra.mxu0 %v92
    %390 = vmatprep.subr.mxu0 %v96
    %391 = vmatpush1.msra.mxu0 %v95
    %392 = vmatprep.subr.mxu0 %v99
    %393 = vmatpush1.msra.mxu0 %v98
    %394 = vmatprep.subr.mxu0 %v102
    %395 = vmatpush1.msra.mxu0 %v101
    %396 = vmatprep.subr.mxu0 %v105
    %397 = vmatpush1.msra.mxu0 %v104
    %398 = vmatprep.subr.mxu0 %v108
    %399 = vmatpush1.msra.mxu0 %v107
    %400 = vmatprep.subr.mxu0 %v111
    %401 = vmatpush1.msra.mxu0 %v110
    %402 = vmatprep.subr.mxu0 %v114
    %403 = vmatpush1.msra.mxu0 %v113
    %404 = vmatprep.subr.mxu0 %v117
    %405 = vmatpush1.msra.mxu0 %v116
    %406 = vmatprep.subr.mxu0 %v120
    %407 = vmatpush1.msra.mxu0 %v119
    %408 = vmatprep.subr.mxu0 %v123
    %409 = vmatpush1.msra.mxu0 %v122
    %410 = vmatprep.subr.mxu0 %v126
    %411 = vmatpush1.msra.mxu0 %v125
    %412 = vmatprep.subr.mxu0 %v129
    %413 = vmatpush1.msra.mxu0 %v128
    %414 = vmatprep.subr.mxu0 %v132
    %415 = vmatpush1.msra.mxu0 %v131
    %416 = vmatprep.subr.mxu0 %v135
    %417 = vmatpush1.msra.mxu0 %v134
    %418 = vmatprep.subr.mxu0 %v138
    %419 = vmatpush1.msra.mxu0 %v137
    %420 = vmatprep.subr.mxu0 %v141
    %421 = vmatpush1.msra.mxu0 %v140
    %422 = vmatprep.subr.mxu0 %v144
    %423 = vmatpush1.msra.mxu0 %v143
    %424 = vmatprep.subr.mxu0 %v147
    %425 = vmatpush1.msra.mxu0 %v146
    %426 = vmatprep.subr.mxu0 %v150
    %427 = vmatpush1.msra.mxu0 %v149
    %428 = vmatprep.subr.mxu0 %v153
    %429 = vmatpush1.msra.mxu0 %v152
    %430 = vmatprep.subr.mxu0 %v156
    %431 = vmatpush1.msra.mxu0 %v155
    %432 = vmatprep.subr.mxu0 %v159
    %433 = vmatpush1.msra.mxu0 %v158
    %434 = vmatprep.mubr.f32.mxu0 %v54
    %435 = vmatmul.mubr.f32.gmra.mrb[0].mxu0 %v53
    %v436 = vpop.f32.mrb[0].mxu0
    %v437 = vadd.f32 %v358, %v436
    %v438 = vpop.f32.mrb[0].mxu0
    %v439 = vadd.f32 %v362, %v438
    %440 = vmatprep.mubr.f32.mxu0 %v60
    %441 = vmatmul.mubr.f32.gmra.mrb[0].mxu0 %v59
    %v442 = vpop.f32.mrb[0].mxu0
    %v443 = vadd.f32 %v358, %v442
    %v444 = vpop.f32.mrb[0].mxu0
    %v445 = vadd.f32 %v362, %v444
    %446 = vdwg.mxu0
    %447 = vmatprep.subr.mxu0 %v162
    %448 = vmatpush1.msra.mxu0 %v161
    %449 = vmatprep.subr.mxu0 %v165
    %450 = vmatpush1.msra.mxu0 %v164
    %451 = vmatprep.subr.mxu0 %v168
    %452 = vmatpush1.msra.mxu0 %v167
    %453 = vmatprep.subr.mxu0 %v171
    %454 = vmatpush1.msra.mxu0 %v170
    %455 = vmatprep.subr.mxu0 %v174
    %456 = vmatpush1.msra.mxu0 %v173
    %457 = vmatprep.subr.mxu0 %v177
    %458 = vmatpush1.msra.mxu0 %v176
    %459 = vmatprep.subr.mxu0 %v180
    %460 = vmatpush1.msra.mxu0 %v179
    %461 = vmatprep.subr.mxu0 %v183
    %462 = vmatpush1.msra.mxu0 %v182
    %463 = vmatprep.subr.mxu0 %v186
    %464 = vmatpush1.msra.mxu0 %v185
    %465 = vmatprep.subr.mxu0 %v189
    %466 = vmatpush1.msra.mxu0 %v188
    %467 = vmatprep.subr.mxu0 %v192
    %468 = vmatpush1.msra.mxu0 %v191
    %469 = vmatprep.subr.mxu0 %v195
    %470 = vmatpush1.msra.mxu0 %v194
    %471 = vmatprep.subr.mxu0 %v198
    %472 = vmatpush1.msra.mxu0 %v197
    %473 = vmatprep.subr.mxu0 %v201
    %474 = vmatpush1.msra.mxu0 %v200
    %475 = vmatprep.subr.mxu0 %v204
    %476 = vmatpush1.msra.mxu0 %v203
    %477 = vmatprep.subr.mxu0 %v207
    %478 = vmatpush1.msra.mxu0 %v206
    %479 = vmatprep.subr.mxu0 %v210
    %480 = vmatpush1.msra.mxu0 %v209
    %481 = vmatprep.subr.mxu0 %v213
    %482 = vmatpush1.msra.mxu0 %v212
    %483 = vmatprep.subr.mxu0 %v216
    %484 = vmatpush1.msra.mxu0 %v215
    %485 = vmatprep.subr.mxu0 %v219
    %486 = vmatpush1.msra.mxu0 %v218
    %487 = vmatprep.subr.mxu0 %v222
    %488 = vmatpush1.msra.mxu0 %v221
    %489 = vmatprep.subr.mxu0 %v225
    %490 = vmatpush1.msra.mxu0 %v224
    %491 = vmatprep.subr.mxu0 %v228
    %492 = vmatpush1.msra.mxu0 %v227
    %493 = vmatprep.subr.mxu0 %v231
    %494 = vmatpush1.msra.mxu0 %v230
    %495 = vmatprep.subr.mxu0 %v234
    %496 = vmatpush1.msra.mxu0 %v233
    %497 = vmatprep.subr.mxu0 %v237
    %498 = vmatpush1.msra.mxu0 %v236
    %499 = vmatprep.subr.mxu0 %v240
    %500 = vmatpush1.msra.mxu0 %v239
    %501 = vmatprep.subr.mxu0 %v243
    %502 = vmatpush1.msra.mxu0 %v242
    %503 = vmatprep.subr.mxu0 %v246
    %504 = vmatpush1.msra.mxu0 %v245
    %505 = vmatprep.subr.mxu0 %v249
    %506 = vmatpush1.msra.mxu0 %v248
    %507 = vmatprep.subr.mxu0 %v252
    %508 = vmatpush1.msra.mxu0 %v251
    %509 = vmatprep.subr.mxu0 %v255
    %510 = vmatpush1.msra.mxu0 %v254
    %511 = vmatprep.mubr.f32.mxu0 %v56
    %512 = vmatmul.mubr.f32.gmra.mrb[0].mxu0 %v55
    %v513 = vpop.f32.mrb[0].mxu0
    %v514 = vadd.f32 %v437, %v513
    %v515 = vpop.f32.mrb[0].mxu0
    %v516 = vadd.f32 %v439, %v515
    %517 = vmatprep.mubr.f32.mxu0 %v62
    %518 = vmatmul.mubr.f32.gmra.mrb[0].mxu0 %v61
    %v519 = vpop.f32.mrb[0].mxu0
    %v520 = vadd.f32 %v443, %v519
    %v521 = vpop.f32.mrb[0].mxu0
    %v522 = vadd.f32 %v445, %v521
    %523 = vdwg.mxu0
    %524 = vmatprep.subr.mxu0 %v258
    %525 = vmatpush1.msra.mxu0 %v257
    %526 = vmatprep.subr.mxu0 %v261
    %527 = vmatpush1.msra.mxu0 %v260
    %528 = vmatprep.subr.mxu0 %v264
    %529 = vmatpush1.msra.mxu0 %v263
    %530 = vmatprep.subr.mxu0 %v267
    %531 = vmatpush1.msra.mxu0 %v266
    %532 = vmatprep.subr.mxu0 %v270
    %533 = vmatpush1.msra.mxu0 %v269
    %534 = vmatprep.subr.mxu0 %v273
    %535 = vmatpush1.msra.mxu0 %v272
    %536 = vmatprep.subr.mxu0 %v276
    %537 = vmatpush1.msra.mxu0 %v275
    %538 = vmatprep.subr.mxu0 %v279
    %539 = vmatpush1.msra.mxu0 %v278
    %540 = vmatprep.subr.mxu0 %v282
    %541 = vmatpush1.msra.mxu0 %v281
    %542 = vmatprep.subr.mxu0 %v285
    %543 = vmatpush1.msra.mxu0 %v284
    %544 = vmatprep.subr.mxu0 %v288
    %545 = vmatpush1.msra.mxu0 %v287
    %546 = vmatprep.subr.mxu0 %v291
    %547 = vmatpush1.msra.mxu0 %v290
    %548 = vmatprep.subr.mxu0 %v294
    %549 = vmatpush1.msra.mxu0 %v293
    %550 = vmatprep.subr.mxu0 %v297
    %551 = vmatpush1.msra.mxu0 %v296
    %552 = vmatprep.subr.mxu0 %v300
    %553 = vmatpush1.msra.mxu0 %v299
    %554 = vmatprep.subr.mxu0 %v303
    %555 = vmatpush1.msra.mxu0 %v302
    %556 = vmatprep.subr.mxu0 %v306
    %557 = vmatpush1.msra.mxu0 %v305
    %558 = vmatprep.subr.mxu0 %v309
    %559 = vmatpush1.msra.mxu0 %v308
    %560 = vmatprep.subr.mxu0 %v312
    %561 = vmatpush1.msra.mxu0 %v311
    %562 = vmatprep.subr.mxu0 %v315
    %563 = vmatpush1.msra.mxu0 %v314
    %564 = vmatprep.subr.mxu0 %v318
    %565 = vmatpush1.msra.mxu0 %v317
    %566 = vmatprep.subr.mxu0 %v321
    %567 = vmatpush1.msra.mxu0 %v320
    %568 = vmatprep.subr.mxu0 %v324
    %569 = vmatpush1.msra.mxu0 %v323
    %570 = vmatprep.subr.mxu0 %v327
    %571 = vmatpush1.msra.mxu0 %v326
    %572 = vmatprep.subr.mxu0 %v330
    %573 = vmatpush1.msra.mxu0 %v329
    %574 = vmatprep.subr.mxu0 %v333
    %575 = vmatpush1.msra.mxu0 %v332
    %576 = vmatprep.subr.mxu0 %v336
    %577 = vmatpush1.msra.mxu0 %v335
    %578 = vmatprep.subr.mxu0 %v339
    %579 = vmatpush1.msra.mxu0 %v338
    %580 = vmatprep.subr.mxu0 %v342
    %581 = vmatpush1.msra.mxu0 %v341
    %582 = vmatprep.subr.mxu0 %v345
    %583 = vmatpush1.msra.mxu0 %v344
    %584 = vmatprep.subr.mxu0 %v348
    %585 = vmatpush1.msra.mxu0 %v347
    %586 = vmatprep.subr.mxu0 %v351
    %587 = vmatpush1.msra.mxu0 %v350
    %588 = vmatprep.mubr.f32.mxu0 %v58
    %589 = vmatmul.mubr.f32.gmra.mrb[0].mxu0 %v57
    %v590 = vpop.f32.mrb[0].mxu0
    %v591 = vadd.f32 %v514, %v590
    %v592 = vpop.f32.mrb[0].mxu0
    %v593 = vadd.f32 %v516, %v592
    %594 = vmatprep.mubr.f32.mxu0 %v64
    %595 = vmatmul.mubr.f32.gmra.mrb[0].mxu0 %v63
    %v596 = vpop.f32.mrb[0].mxu0
    %v597 = vadd.f32 %v520, %v596
    %v598 = vpop.f32.mrb[0].mxu0
    %v599 = vadd.f32 %v522, %v598
    %600 = vdwg.mxu0
    %601 = vmatprep.subr.mxu0 0.0
    %602 = vmatpush1.msra.mxu0 %v67
    %603 = vmatprep.subr.mxu0 0.0
    %604 = vmatpush1.msra.mxu0 %v70
    %605 = vmatprep.subr.mxu0 0.0
    %606 = vmatpush1.msra.mxu0 %v73
    %607 = vmatprep.subr.mxu0 0.0
    %608 = vmatpush1.msra.mxu0 %v76
    %609 = vmatprep.subr.mxu0 0.0
    %610 = vmatpush1.msra.mxu0 %v79
    %611 = vmatprep.subr.mxu0 0.0
    %612 = vmatpush1.msra.mxu0 %v82
    %613 = vmatprep.subr.mxu0 0.0
    %614 = vmatpush1.msra.mxu0 %v85
    %615 = vmatprep.subr.mxu0 0.0
    %616 = vmatpush1.msra.mxu0 %v88
    %617 = vmatprep.subr.mxu0 0.0
    %618 = vmatpush1.msra.mxu0 %v91
    %619 = vmatprep.subr.mxu0 0.0
    %620 = vmatpush1.msra.mxu0 %v94
    %621 = vmatprep.subr.mxu0 0.0
    %622 = vmatpush1.msra.mxu0 %v97
    %623 = vmatprep.subr.mxu0 0.0
    %624 = vmatpush1.msra.mxu0 %v100
    %625 = vmatprep.subr.mxu0 0.0
    %626 = vmatpush1.msra.mxu0 %v103
    %627 = vmatprep.subr.mxu0 0.0
    %628 = vmatpush1.msra.mxu0 %v106
    %629 = vmatprep.subr.mxu0 0.0
    %630 = vmatpush1.msra.mxu0 %v109
    %631 = vmatprep.subr.mxu0 0.0
    %632 = vmatpush1.msra.mxu0 %v112
    %633 = vmatprep.subr.mxu0 0.0
    %634 = vmatpush1.msra.mxu0 %v115
    %635 = vmatprep.subr.mxu0 0.0
    %636 = vmatpush1.msra.mxu0 %v118
    %637 = vmatprep.subr.mxu0 0.0
    %638 = vmatpush1.msra.mxu0 %v121
    %639 = vmatprep.subr.mxu0 0.0
    %640 = vmatpush1.msra.mxu0 %v124
    %641 = vmatprep.subr.mxu0 0.0
    %642 = vmatpush1.msra.mxu0 %v127
    %643 = vmatprep.subr.mxu0 0.0
    %644 = vmatpush1.msra.mxu0 %v130
    %645 = vmatprep.subr.mxu0 0.0
    %646 = vmatpush1.msra.mxu0 %v133
    %647 = vmatprep.subr.mxu0 0.0
    %648 = vmatpush1.msra.mxu0 %v136
    %649 = vmatprep.subr.mxu0 0.0
    %650 = vmatpush1.msra.mxu0 %v139
    %651 = vmatprep.subr.mxu0 0.0
    %652 = vmatpush1.msra.mxu0 %v142
    %653 = vmatprep.subr.mxu0 0.0
    %654 = vmatpush1.msra.mxu0 %v145
    %655 = vmatprep.subr.mxu0 0.0
    %656 = vmatpush1.msra.mxu0 %v148
    %657 = vmatprep.subr.mxu0 0.0
    %658 = vmatpush1.msra.mxu0 %v151
    %659 = vmatprep.subr.mxu0 0.0
    %660 = vmatpush1.msra.mxu0 %v154
    %661 = vmatprep.subr.mxu0 0.0
    %662 = vmatpush1.msra.mxu0 %v157
    %663 = vmatprep.subr.mxu0 0.0
    %664 = vmatpush1.msra.mxu0 %v160
    %665 = vmatprep.mubr.f32.mxu0 %v54
    %666 = vmatmul.mubr.f32.gmra.mrb[0].mxu0 %v53
    %v667 = vpop.f32.mrb[0].mxu0
    %v668 = vadd.f32 %v366, %v667
    %v669 = vpop.f32.mrb[0].mxu0
    %670 = vmatprep.mubr.f32.mxu0 %v60
    %671 = vmatmul.mubr.f32.gmra.mrb[0].mxu0 %v59
    %v672 = vpop.f32.mrb[0].mxu0
    %v673 = vadd.f32 %v366, %v672
    %v674 = vpop.f32.mrb[0].mxu0
    %675 = vdwg.mxu0
    %676 = vmatprep.subr.mxu0 0.0
    %677 = vmatpush1.msra.mxu0 %v163
    %678 = vmatprep.subr.mxu0 0.0
    %679 = vmatpush1.msra.mxu0 %v166
    %680 = vmatprep.subr.mxu0 0.0
    %681 = vmatpush1.msra.mxu0 %v169
    %682 = vmatprep.subr.mxu0 0.0
    %683 = vmatpush1.msra.mxu0 %v172
    %684 = vmatprep.subr.mxu0 0.0
    %685 = vmatpush1.msra.mxu0 %v175
    %686 = vmatprep.subr.mxu0 0.0
    %687 = vmatpush1.msra.mxu0 %v178
    %688 = vmatprep.subr.mxu0 0.0
    %689 = vmatpush1.msra.mxu0 %v181
    %690 = vmatprep.subr.mxu0 0.0
    %691 = vmatpush1.msra.mxu0 %v184
    %692 = vmatprep.subr.mxu0 0.0
    %693 = vmatpush1.msra.mxu0 %v187
    %694 = vmatprep.subr.mxu0 0.0
    %695 = vmatpush1.msra.mxu0 %v190
    %696 = vmatprep.subr.mxu0 0.0
    %697 = vmatpush1.msra.mxu0 %v193
    %698 = vmatprep.subr.mxu0 0.0
    %699 = vmatpush1.msra.mxu0 %v196
    %700 = vmatprep.subr.mxu0 0.0
    %701 = vmatpush1.msra.mxu0 %v199
    %702 = vmatprep.subr.mxu0 0.0
    %703 = vmatpush1.msra.mxu0 %v202
    %704 = vmatprep.subr.mxu0 0.0
    %705 = vmatpush1.msra.mxu0 %v205
    %706 = vmatprep.subr.mxu0 0.0
    %707 = vmatpush1.msra.mxu0 %v208
    %708 = vmatprep.subr.mxu0 0.0
    %709 = vmatpush1.msra.mxu0 %v211
    %710 = vmatprep.subr.mxu0 0.0
    %711 = vmatpush1.msra.mxu0 %v214
    %712 = vmatprep.subr.mxu0 0.0
    %713 = vmatpush1.msra.mxu0 %v217
    %714 = vmatprep.subr.mxu0 0.0
    %715 = vmatpush1.msra.mxu0 %v220
    %716 = vmatprep.subr.mxu0 0.0
    %717 = vmatpush1.msra.mxu0 %v223
    %718 = vmatprep.subr.mxu0 0.0
    %719 = vmatpush1.msra.mxu0 %v226
    %720 = vmatprep.subr.mxu0 0.0
    %721 = vmatpush1.msra.mxu0 %v229
    %722 = vmatprep.subr.mxu0 0.0
    %723 = vmatpush1.msra.mxu0 %v232
    %724 = vmatprep.subr.mxu0 0.0
    %725 = vmatpush1.msra.mxu0 %v235
    %726 = vmatprep.subr.mxu0 0.0
    %727 = vmatpush1.msra.mxu0 %v238
    %728 = vmatprep.subr.mxu0 0.0
    %729 = vmatpush1.msra.mxu0 %v241
    %730 = vmatprep.subr.mxu0 0.0
    %731 = vmatpush1.msra.mxu0 %v244
    %732 = vmatprep.subr.mxu0 0.0
    %733 = vmatpush1.msra.mxu0 %v247
    %734 = vmatprep.subr.mxu0 0.0
    %735 = vmatpush1.msra.mxu0 %v250
    %736 = vmatprep.subr.mxu0 0.0
    %737 = vmatpush1.msra.mxu0 %v253
    %738 = vmatprep.subr.mxu0 0.0
    %739 = vmatpush1.msra.mxu0 %v256
    %740 = vmatprep.mubr.f32.mxu0 %v56
    %741 = vmatmul.mubr.f32.gmra.mrb[0].mxu0 %v55
    %v742 = vpop.f32.mrb[0].mxu0
    %v743 = vadd.f32 %v668, %v742
    %v744 = vpop.f32.mrb[0].mxu0
    %745 = vmatprep.mubr.f32.mxu0 %v62
    %746 = vmatmul.mubr.f32.gmra.mrb[0].mxu0 %v61
    %v747 = vpop.f32.mrb[0].mxu0
    %v748 = vadd.f32 %v673, %v747
    %v749 = vpop.f32.mrb[0].mxu0
    %750 = vdwg.mxu0
    %751 = vmatprep.subr.mxu0 0.0
    %752 = vmatpush1.msra.mxu0 %v259
    %753 = vmatprep.subr.mxu0 0.0
    %754 = vmatpush1.msra.mxu0 %v262
    %755 = vmatprep.subr.mxu0 0.0
    %756 = vmatpush1.msra.mxu0 %v265
    %757 = vmatprep.subr.mxu0 0.0
    %758 = vmatpush1.msra.mxu0 %v268
    %759 = vmatprep.subr.mxu0 0.0
    %760 = vmatpush1.msra.mxu0 %v271
    %761 = vmatprep.subr.mxu0 0.0
    %762 = vmatpush1.msra.mxu0 %v274
    %763 = vmatprep.subr.mxu0 0.0
    %764 = vmatpush1.msra.mxu0 %v277
    %765 = vmatprep.subr.mxu0 0.0
    %766 = vmatpush1.msra.mxu0 %v280
    %767 = vmatprep.subr.mxu0 0.0
    %768 = vmatpush1.msra.mxu0 %v283
    %769 = vmatprep.subr.mxu0 0.0
    %770 = vmatpush1.msra.mxu0 %v286
    %771 = vmatprep.subr.mxu0 0.0
    %772 = vmatpush1.msra.mxu0 %v289
    %773 = vmatprep.subr.mxu0 0.0
    %774 = vmatpush1.msra.mxu0 %v292
    %775 = vmatprep.subr.mxu0 0.0
    %776 = vmatpush1.msra.mxu0 %v295
    %777 = vmatprep.subr.mxu0 0.0
    %778 = vmatpush1.msra.mxu0 %v298
    %779 = vmatprep.subr.mxu0 0.0
    %780 = vmatpush1.msra.mxu0 %v301
    %781 = vmatprep.subr.mxu0 0.0
    %782 = vmatpush1.msra.mxu0 %v304
    %783 = vmatprep.subr.mxu0 0.0
    %784 = vmatpush1.msra.mxu0 %v307
    %785 = vmatprep.subr.mxu0 0.0
    %786 = vmatpush1.msra.mxu0 %v310
    %787 = vmatprep.subr.mxu0 0.0
    %788 = vmatpush1.msra.mxu0 %v313
    %789 = vmatprep.subr.mxu0 0.0
    %790 = vmatpush1.msra.mxu0 %v316
    %791 = vmatprep.subr.mxu0 0.0
    %792 = vmatpush1.msra.mxu0 %v319
    %793 = vmatprep.subr.mxu0 0.0
    %794 = vmatpush1.msra.mxu0 %v322
    %795 = vmatprep.subr.mxu0 0.0
    %796 = vmatpush1.msra.mxu0 %v325
    %797 = vmatprep.subr.mxu0 0.0
    %798 = vmatpush1.msra.mxu0 %v328
    %799 = vmatprep.subr.mxu0 0.0
    %800 = vmatpush1.msra.mxu0 %v331
    %801 = vmatprep.subr.mxu0 0.0
    %802 = vmatpush1.msra.mxu0 %v334
    %803 = vmatprep.subr.mxu0 0.0
    %804 = vmatpush1.msra.mxu0 %v337
    %805 = vmatprep.subr.mxu0 0.0
    %806 = vmatpush1.msra.mxu0 %v340
    %807 = vmatprep.subr.mxu0 0.0
    %808 = vmatpush1.msra.mxu0 %v343
    %809 = vmatprep.subr.mxu0 0.0
    %810 = vmatpush1.msra.mxu0 %v346
    %811 = vmatprep.subr.mxu0 0.0
    %812 = vmatpush1.msra.mxu0 %v349
    %813 = vmatprep.subr.mxu0 0.0
    %814 = vmatpush1.msra.mxu0 %v352
    %815 = vmatprep.mubr.f32.mxu0 %v58
    %816 = vmatmul.mubr.f32.gmra.mrb[0].mxu0 %v57
    %v817 = vpop.f32.mrb[0].mxu0
    %v818 = vadd.f32 %v743, %v817
    %v819 = vpop.f32.mrb[0].mxu0
    %820 = vmatprep.mubr.f32.mxu0 %v64
    %821 = vmatmul.mubr.f32.gmra.mrb[0].mxu0 %v63
    %v822 = vpop.f32.mrb[0].mxu0
    %v823 = vadd.f32 %v748, %v822
    %v824 = vpop.f32.mrb[0].mxu0
    %825 = vdwg.mxu0
    %826 = vst [vmem:[%s3] sm:$0xff] %v591
    %827 = vst [vmem:[%s3 + $0x8] sm:$0xff] %v593
    %828 = vst [vmem:[%s3 + $0x10] sm:$0xff] %v818
    %829 = vst [vmem:[%s3 + $0x18] sm:$0xff] %v597
    %830 = vst [vmem:[%s3 + $0x20] sm:$0xff] %v599
    %831 = vst [vmem:[%s3 + $0x28] sm:$0xff] %v823
    // Predicated region
    $region26: #{token_indicator_forward.5} parent=1 // pred_check
      _
    $region27: #{token_indicator_forward.5} parent=1 // pred_check_branch
      %833 = sbr.rel (0) target = $region29
    $region28: #{token_indicator_forward.5} parent=1 // pred_region
      _
    $region29: #{token_indicator_forward.5} parent=1 // pred_fallthru
      _
    // Predicated region
    $region30: #{token_indicator_forward.5} parent=1 // pred_check
      _
    $region31: #{token_indicator_forward.5} parent=1 // pred_check_branch
      %835 = sbr.rel (0) target = $region33
    $region32: #{token_indicator_forward.5} parent=1 // pred_region
      _
    $region33: #{token_indicator_forward.5} parent=1 // pred_fallthru
      _
    %836 = vsyncpa [#allocation3], 1
    %837 = vsyncpa [#allocation5], 1

// kernel: token_indicator_forward.6
$region0: #{token_indicator_forward.6}
  #allocation0 [shape = 'u32[]', space=smem, size = 0x4, offset = 0x4, fixed_abs, tag = 'smem constant byte address 0x4 - core index']
  #allocation1 [shape = 'u32[144,128]{1,0:T(1,128)}', space=vmem, size = 0x12000, scoped, tag = 'internal scratch']
  %s0 = inlined_call_operand.vmem [shape: f32[8,2,384], index: 0, kind: input, shape index: {}]
  %s1 = inlined_call_operand.vmem [shape: f32[64,192], index: 1, kind: input, shape index: {}]
  %s2 = inlined_call_operand.vmem [shape: f32[64,192], index: 2, kind: input, shape index: {}]
  %s3 = inlined_call_operand.vmem [shape: f32[1,64], index: 3, kind: input, shape index: {}]
  %s4 = inlined_call_operand.vmem [shape: f32[1,64], index: 4, kind: input, shape index: {}]
  %s5 = inlined_call_operand.vmem [shape: f32[8,2,128], index: 5, kind: output, shape index: {}]
  %s6 = sld [smem:[#allocation0]]
  $region30: #{token_indicator_forward.6} parent=0
    _
  %s8 = ssub.s32 1, %s6
  %s9 = scalar_select 0, %s8, %s6
  // Predicated region
  $region2: #{token_indicator_forward.6} parent=0 // pred_check
    _
  $region3: #{token_indicator_forward.6} parent=0 // pred_check_branch
    %11 = sbr.rel (0) target = $region5
  $region4: #{token_indicator_forward.6} parent=0 // pred_region
    _
  $region5: #{token_indicator_forward.6} parent=0 // pred_fallthru
    _
  // Predicated region
  $region6: #{token_indicator_forward.6} parent=0 // pred_check
    _
  $region7: #{token_indicator_forward.6} parent=0 // pred_check_branch
    %13 = sbr.rel (0) target = $region9
  $region8: #{token_indicator_forward.6} parent=0 // pred_region
    _
  $region9: #{token_indicator_forward.6} parent=0 // pred_fallthru
    _
  // Predicated region
  $region10: #{token_indicator_forward.6} parent=0 // pred_check
    _
  $region11: #{token_indicator_forward.6} parent=0 // pred_check_branch
    %15 = sbr.rel (0) target = $region13
  $region12: #{token_indicator_forward.6} parent=0 // pred_region
    _
  $region13: #{token_indicator_forward.6} parent=0 // pred_fallthru
    _
  // Predicated region
  $region14: #{token_indicator_forward.6} parent=0 // pred_check
    _
  $region15: #{token_indicator_forward.6} parent=0 // pred_check_branch
    %17 = sbr.rel (0) target = $region17
  $region16: #{token_indicator_forward.6} parent=0 // pred_region
    _
  $region17: #{token_indicator_forward.6} parent=0 // pred_fallthru
    _
  // Predicated region
  $region18: #{token_indicator_forward.6} parent=0 // pred_check
    _
  $region19: #{token_indicator_forward.6} parent=0 // pred_check_branch
    %19 = sbr.rel (0) target = $region21
  $region20: #{token_indicator_forward.6} parent=0 // pred_region
    _
  $region21: #{token_indicator_forward.6} parent=0 // pred_fallthru
    _
  %v20 = vld [vmem:[%s1] sm:$0xff]
  %v21 = vld [vmem:[%s1 + $0x8] sm:$0xff]
  %v22 = vld [vmem:[%s1 + $0x10] sm:$0xff]
  %v23 = vld [vmem:[%s1 + $0x18] sm:$0xff]
  %v24 = vld [vmem:[%s1 + $0x20] sm:$0xff]
  %v25 = vld [vmem:[%s1 + $0x28] sm:$0xff]
  %v26 = vld [vmem:[%s1 + $0x30] sm:$0xff]
  %v27 = vld [vmem:[%s1 + $0x38] sm:$0xff]
  %v28 = vld [vmem:[%s1 + $0x40] sm:$0xff]
  %v29 = vld [vmem:[%s1 + $0x48] sm:$0xff]
  %v30 = vld [vmem:[%s1 + $0x50] sm:$0xff]
  %v31 = vld [vmem:[%s1 + $0x58] sm:$0xff]
  %v32 = vld [vmem:[%s1 + $0x60] sm:$0xff]
  %v33 = vld [vmem:[%s1 + $0x68] sm:$0xff]
  %v34 = vld [vmem:[%s1 + $0x70] sm:$0xff]
  %v35 = vld [vmem:[%s1 + $0x78] sm:$0xff]
  %v36 = vld [vmem:[%s2] sm:$0xff]
  %v37 = vld [vmem:[%s2 + $0x8] sm:$0xff]
  %v38 = vld [vmem:[%s2 + $0x10] sm:$0xff]
  %v39 = vld [vmem:[%s2 + $0x18] sm:$0xff]
  %v40 = vld [vmem:[%s2 + $0x20] sm:$0xff]
  %v41 = vld [vmem:[%s2 + $0x28] sm:$0xff]
  %v42 = vld [vmem:[%s2 + $0x30] sm:$0xff]
  %v43 = vld [vmem:[%s2 + $0x38] sm:$0xff]
  %v44 = vld [vmem:[%s2 + $0x40] sm:$0xff]
  %v45 = vld [vmem:[%s2 + $0x48] sm:$0xff]
  %v46 = vld [vmem:[%s2 + $0x50] sm:$0xff]
  %v47 = vld [vmem:[%s2 + $0x58] sm:$0xff]
  %v48 = vld [vmem:[%s2 + $0x60] sm:$0xff]
  %v49 = vld [vmem:[%s2 + $0x68] sm:$0xff]
  %v50 = vld [vmem:[%s2 + $0x70] sm:$0xff]
  %v51 = vld [vmem:[%s2 + $0x78] sm:$0xff]
  %v52 = vld [vmem:[%s3] sm:$0x1]
  %v53 = vld [vmem:[%s4] sm:$0x1]
  %v54 = vld [vmem:[%s0] sm:$0x3f]
  %s55 = scalar_lea.vmem %s0, 42
  %v56 = vld [vmem:[%s55] sm:$0x3f]
  %vm57 = vcmask 523264
  %v59 = vsel %vm57, 0.0, 0
  %61 = vmatprep.subr.mxu0 %v21
  %62 = vmatpush1.msra.mxu0 %v20
  %63 = vmatprep.subr.mxu0 %v23
  %64 = vmatpush1.msra.mxu0 %v22
  %65 = vmatprep.subr.mxu0 %v25
  %66 = vmatpush1.msra.mxu0 %v24
  %67 = vmatprep.subr.mxu0 %v27
  %68 = vmatpush1.msra.mxu0 %v26
  %69 = vmatprep.subr.mxu0 %v29
  %70 = vmatpush1.msra.mxu0 %v28
  %71 = vmatprep.subr.mxu0 %v31
  %72 = vmatpush1.msra.mxu0 %v30
  %73 = vmatprep.subr.mxu0 %v33
  %74 = vmatpush1.msra.mxu0 %v32
  %75 = vmatprep.subr.mxu0 %v35
  %76 = vmatpush1.msra.mxu0 %v34
  %77 = vmatprep.subr.mxu0 0.0
  %78 = vmatpush1.msra.mxu0 0.0
  %79 = vmatprep.subr.mxu0 0.0
  %80 = vmatpush1.msra.mxu0 0.0
  %81 = vmatprep.subr.mxu0 0.0
  %82 = vmatpush1.msra.mxu0 0.0
  %83 = vmatprep.subr.mxu0 0.0
  %84 = vmatpush1.msra.mxu0 0.0
  %85 = vmatprep.subr.mxu0 0.0
  %86 = vmatpush1.msra.mxu0 0.0
  %87 = vmatprep.subr.mxu0 0.0
  %88 = vmatpush1.msra.mxu0 0.0
  %89 = vmatprep.subr.mxu0 0.0
  %90 = vmatpush1.msra.mxu0 0.0
  %91 = vmatprep.subr.mxu0 0.0
  %92 = vmatpush1.msra.mxu0 0.0
  %93 = vmatprep.subr.mxu0 0.0
  %94 = vmatpush1.msra.mxu0 0.0
  %95 = vmatprep.subr.mxu0 0.0
  %96 = vmatpush1.msra.mxu0 0.0
  %97 = vmatprep.subr.mxu0 0.0
  %98 = vmatpush1.msra.mxu0 0.0
  %99 = vmatprep.subr.mxu0 0.0
  %100 = vmatpush1.msra.mxu0 0.0
  %101 = vmatprep.subr.mxu0 0.0
  %102 = vmatpush1.msra.mxu0 0.0
  %103 = vmatprep.subr.mxu0 0.0
  %104 = vmatpush1.msra.mxu0 0.0
  %105 = vmatprep.subr.mxu0 0.0
  %106 = vmatpush1.msra.mxu0 0.0
  %107 = vmatprep.subr.mxu0 0.0
  %108 = vmatpush1.msra.mxu0 0.0
  %109 = vmatprep.subr.mxu0 0.0
  %110 = vmatpush1.msra.mxu0 0.0
  %111 = vmatprep.subr.mxu0 0.0
  %112 = vmatpush1.msra.mxu0 0.0
  %113 = vmatprep.subr.mxu0 0.0
  %114 = vmatpush1.msra.mxu0 0.0
  %115 = vmatprep.subr.mxu0 0.0
  %116 = vmatpush1.msra.mxu0 0.0
  %117 = vmatprep.subr.mxu0 0.0
  %118 = vmatpush1.msra.mxu0 0.0
  %119 = vmatprep.subr.mxu0 0.0
  %120 = vmatpush1.msra.mxu0 0.0
  %121 = vmatprep.subr.mxu0 0.0
  %122 = vmatpush1.msra.mxu0 0.0
  %123 = vmatprep.subr.mxu0 0.0
  %124 = vmatpush1.msra.mxu0 0.0
  %125 = vmatprep.mubr.f32.mxu0 0.0
  %126 = vmatmul.mubr.f32.gmra.mrb[0].mxu0 %v59
  %v127 = vpop.f32.mrb[0].mxu0
  %v128 = vadd.f32 0.0, %v127
  %v129 = vpop.f32.mrb[0].mxu0
  %v130 = vadd.f32 0.0, %v129
  %131 = vdwg.mxu0
  %v132 = vadd.f32 %v54, %v128
  %v133 = vxor.u32 %v132, 2147483648
  %v134 = vmul.f32 %v133, 1.442695
  %v135 = vpow.pop %v134
  %v136 = vadd.f32 %v135, 1.0
  %v137 = vrcp.pop %v136
  %v138 = vmul.f32 1.0, %v137
  %v140 = vlaneseq
  %v141 = vshrl.u32 %v140, 7
  %v142 = vsub.s32 0, %v141
  %v143 = vrot.slane %v52, %v142
  %v145 = vadd.f32 %v130, %v143
  %v146 = vmul.f32 %v138, %v145
  %v148 = vrot.slane %v54, 2
  %v150 = vadd.f32 %v148, %v146
  %v151 = vtanh.pop %v150
  %v152 = vsub.f32 1.0, %v138
  %154 = vrot.lane.b32.xlu0 %v151, 64
  %v155 = vpop.permute.xlu0 %154
  %v157 = vmul.f32 %v152, %v155
  %v158 = vmul.f32 %v138, 0.0
  %v159 = vadd.f32 %v157, %v158
  %160 = vmatprep.subr.mxu0 %v37
  %161 = vmatpush1.msra.mxu0 %v36
  %162 = vmatprep.subr.mxu0 %v39
  %163 = vmatpush1.msra.mxu0 %v38
  %164 = vmatprep.subr.mxu0 %v41
  %165 = vmatpush1.msra.mxu0 %v40
  %166 = vmatprep.subr.mxu0 %v43
  %167 = vmatpush1.msra.mxu0 %v42
  %168 = vmatprep.subr.mxu0 %v45
  %169 = vmatpush1.msra.mxu0 %v44
  %170 = vmatprep.subr.mxu0 %v47
  %171 = vmatpush1.msra.mxu0 %v46
  %172 = vmatprep.subr.mxu0 %v49
  %173 = vmatpush1.msra.mxu0 %v48
  %174 = vmatprep.subr.mxu0 %v51
  %175 = vmatpush1.msra.mxu0 %v50
  %176 = vmatprep.subr.mxu0 0.0
  %177 = vmatpush1.msra.mxu0 0.0
  %178 = vmatprep.subr.mxu0 0.0
  %179 = vmatpush1.msra.mxu0 0.0
  %180 = vmatprep.subr.mxu0 0.0
  %181 = vmatpush1.msra.mxu0 0.0
  %182 = vmatprep.subr.mxu0 0.0
  %183 = vmatpush1.msra.mxu0 0.0
  %184 = vmatprep.subr.mxu0 0.0
  %185 = vmatpush1.msra.mxu0 0.0
  %186 = vmatprep.subr.mxu0 0.0
  %187 = vmatpush1.msra.mxu0 0.0
  %188 = vmatprep.subr.mxu0 0.0
  %189 = vmatpush1.msra.mxu0 0.0
  %190 = vmatprep.subr.mxu0 0.0
  %191 = vmatpush1.msra.mxu0 0.0
  %192 = vmatprep.subr.mxu0 0.0
  %193 = vmatpush1.msra.mxu0 0.0
  %194 = vmatprep.subr.mxu0 0.0
  %195 = vmatpush1.msra.mxu0 0.0
  %196 = vmatprep.subr.mxu0 0.0
  %197 = vmatpush1.msra.mxu0 0.0
  %198 = vmatprep.subr.mxu0 0.0
  %199 = vmatpush1.msra.mxu0 0.0
  %200 = vmatprep.subr.mxu0 0.0
  %201 = vmatpush1.msra.mxu0 0.0
  %202 = vmatprep.subr.mxu0 0.0
  %203 = vmatpush1.msra.mxu0 0.0
  %204 = vmatprep.subr.mxu0 0.0
  %205 = vmatpush1.msra.mxu0 0.0
  %206 = vmatprep.subr.mxu0 0.0
  %207 = vmatpush1.msra.mxu0 0.0
  %208 = vmatprep.subr.mxu0 0.0
  %209 = vmatpush1.msra.mxu0 0.0
  %210 = vmatprep.subr.mxu0 0.0
  %211 = vmatpush1.msra.mxu0 0.0
  %212 = vmatprep.subr.mxu0 0.0
  %213 = vmatpush1.msra.mxu0 0.0
  %214 = vmatprep.subr.mxu0 0.0
  %215 = vmatpush1.msra.mxu0 0.0
  %216 = vmatprep.subr.mxu0 0.0
  %217 = vmatpush1.msra.mxu0 0.0
  %218 = vmatprep.subr.mxu0 0.0
  %219 = vmatpush1.msra.mxu0 0.0
  %220 = vmatprep.subr.mxu0 0.0
  %221 = vmatpush1.msra.mxu0 0.0
  %222 = vmatprep.subr.mxu0 0.0
  %223 = vmatpush1.msra.mxu0 0.0
  %224 = vmatprep.mubr.f32.mxu0 0.0
  %225 = vmatmul.mubr.f32.gmra.mrb[0].mxu0 %v59
  %v226 = vpop.f32.mrb[0].mxu0
  %v227 = vadd.f32 0.0, %v226
  %v228 = vpop.f32.mrb[0].mxu0
  %v229 = vadd.f32 0.0, %v228
  %230 = vdwg.mxu0
  %232 = vrot.lane.b32.xlu0 %v56, 64
  %v233 = vpop.permute.xlu0 %232
  %v234 = vrot.slane %v233, 2
  %v236 = vadd.f32 %v234, %v227
  %v237 = vxor.u32 %v236, 2147483648
  %v238 = vmul.f32 %v237, 1.442695
  %v239 = vpow.pop %v238
  %v240 = vadd.f32 %v239, 1.0
  %v241 = vrcp.pop %v240
  %v242 = vmul.f32 1.0, %v241
  %v243 = vrot.slane %v56, 4
  %v247 = vunpack.c.l.s4 1983009808
  %v248 = vunpack.c.0.s8 %v247
  %v249 = vlaneseq
  %v250 = vshrl.u32 %v249, 7
  %v251 = vsub.s32 %v248, %v250
  %v252 = vrot.slane %v227, %v251
  %253 = vrot.lane.b32.xlu0 %v252, 64
  %v254 = vpop.permute.xlu0 %253
  %v256 = vadd.f32 %v243, %v254
  %v257 = vxor.u32 %v256, 2147483648
  %v258 = vmul.f32 %v257, 1.442695
  %v259 = vpow.pop %v258
  %v260 = vadd.f32 %v259, 1.0
  %v261 = vrcp.pop %v260
  %v262 = vmul.f32 1.0, %v261
  %v264 = vlaneseq
  %v265 = vshrl.u32 %v264, 7
  %v266 = vsub.s32 0, %v265
  %v267 = vrot.slane %v53, %v266
  %v269 = vadd.f32 %v229, %v267
  %v270 = vmul.f32 %v242, %v269
  %v271 = vrot.slane %v233, 4
  %v273 = vadd.f32 %v271, %v270
  %v274 = vtanh.pop %v273
  %v275 = vsub.f32 1.0, %v262
  %v276 = vmul.f32 %v275, %v274
  %v277 = vmul.f32 %v262, 0.0
  %v278 = vadd.f32 %v276, %v277
  %v281 = vunpack.c.l.s4 1983009808
  %v282 = vunpack.c.0.s8 %v281
  %v283 = vlaneseq
  %v284 = vshrl.u32 %v283, 7
  %v285 = vsub.s32 %v282, %v284
  %v286 = vrot.slane %v159, %v285
  %287 = vrot.lane.b32.xlu0 %v286, 64
  %v288 = vpop.permute.xlu0 %287
  %vm290 = vcmask 517120
  %291 = vst.msk [vmem:[%s5] sm:$0x3] %vm290, %v288
  %v294 = vunpack.c.l.s4 1983009808
  %v295 = vunpack.c.0.s8 %v294
  %v296 = vlaneseq
  %v297 = vshrl.u32 %v296, 7
  %v298 = vsub.s32 %v295, %v297
  %v299 = vrot.slane %v278, %v298
  %300 = vrot.lane.b32.xlu0 %v299, 64
  %v301 = vpop.permute.xlu0 %300
  %s303 = scalar_lea.vmem %s5, 14
  %vm304 = vcmask 1041920
  %305 = vst.msk [vmem:[%s303] sm:$0x3] %vm304, %v301
  %s306 = scalar_lea.vmem %s0, 6
  %v307 = vld [vmem:[%s306] sm:$0x3f]
  %s308 = scalar_lea.vmem %s0, 36
  %v309 = vld [vmem:[%s308] sm:$0x3f]
  %v310 = vsel %vm57, %v288, 0
  %312 = vmatprep.subr.mxu0 %v21
  %313 = vmatpush1.msra.mxu0 %v20
  %314 = vmatprep.subr.mxu0 %v23
  %315 = vmatpush1.msra.mxu0 %v22
  %316 = vmatprep.subr.mxu0 %v25
  %317 = vmatpush1.msra.mxu0 %v24
  %318 = vmatprep.subr.mxu0 %v27
  %319 = vmatpush1.msra.mxu0 %v26
  %320 = vmatprep.subr.mxu0 %v29
  %321 = vmatpush1.msra.mxu0 %v28
  %322 = vmatprep.subr.mxu0 %v31
  %323 = vmatpush1.msra.mxu0 %v30
  %324 = vmatprep.subr.mxu0 %v33
  %325 = vmatpush1.msra.mxu0 %v32
  %326 = vmatprep.subr.mxu0 %v35
  %327 = vmatpush1.msra.mxu0 %v34
  %328 = vmatprep.subr.mxu0 0.0
  %329 = vmatpush1.msra.mxu0 0.0
  %330 = vmatprep.subr.mxu0 0.0
  %331 = vmatpush1.msra.mxu0 0.0
  %332 = vmatprep.subr.mxu0 0.0
  %333 = vmatpush1.msra.mxu0 0.0
  %334 = vmatprep.subr.mxu0 0.0
  %335 = vmatpush1.msra.mxu0 0.0
  %336 = vmatprep.subr.mxu0 0.0
  %337 = vmatpush1.msra.mxu0 0.0
  %338 = vmatprep.subr.mxu0 0.0
  %339 = vmatpush1.msra.mxu0 0.0
  %340 = vmatprep.subr.mxu0 0.0
  %341 = vmatpush1.msra.mxu0 0.0
  %342 = vmatprep.subr.mxu0 0.0
  %343 = vmatpush1.msra.mxu0 0.0
  %344 = vmatprep.subr.mxu0 0.0
  %345 = vmatpush1.msra.mxu0 0.0
  %346 = vmatprep.subr.mxu0 0.0
  %347 = vmatpush1.msra.mxu0 0.0
  %348 = vmatprep.subr.mxu0 0.0
  %349 = vmatpush1.msra.mxu0 0.0
  %350 = vmatprep.subr.mxu0 0.0
  %351 = vmatpush1.msra.mxu0 0.0
  %352 = vmatprep.subr.mxu0 0.0
  %353 = vmatpush1.msra.mxu0 0.0
  %354 = vmatprep.subr.mxu0 0.0
  %355 = vmatpush1.msra.mxu0 0.0
  %356 = vmatprep.subr.mxu0 0.0
  %357 = vmatpush1.msra.mxu0 0.0
  %358 = vmatprep.subr.mxu0 0.0
  %359 = vmatpush1.msra.mxu0 0.0
  %360 = vmatprep.subr.mxu0 0.0
  %361 = vmatpush1.msra.mxu0 0.0
  %362 = vmatprep.subr.mxu0 0.0
  %363 = vmatpush1.msra.mxu0 0.0
  %364 = vmatprep.subr.mxu0 0.0
  %365 = vmatpush1.msra.mxu0 0.0
  %366 = vmatprep.subr.mxu0 0.0
  %367 = vmatpush1.msra.mxu0 0.0
  %368 = vmatprep.subr.mxu0 0.0
  %369 = vmatpush1.msra.mxu0 0.0
  %370 = vmatprep.subr.mxu0 0.0
  %371 = vmatpush1.msra.mxu0 0.0
  %372 = vmatprep.subr.mxu0 0.0
  %373 = vmatpush1.msra.mxu0 0.0
  %374 = vmatprep.subr.mxu0 0.0
  %375 = vmatpush1.msra.mxu0 0.0
  %376 = vmatprep.mubr.f32.mxu0 0.0
  %377 = vmatmul.mubr.f32.gmra.mrb[0].mxu0 %v310
  %v378 = vpop.f32.mrb[0].mxu0
  %v379 = vadd.f32 0.0, %v378
  %v380 = vpop.f32.mrb[0].mxu0
  %v381 = vadd.f32 0.0, %v380
  %382 = vdwg.mxu0
  %v383 = vadd.f32 %v307, %v379
  %v384 = vxor.u32 %v383, 2147483648
  %v385 = vmul.f32 %v384, 1.442695
  %v386 = vpow.pop %v385
  %v387 = vadd.f32 %v386, 1.0
  %v388 = vrcp.pop %v387
  %v389 = vmul.f32 1.0, %v388
  %v390 = vadd.f32 %v381, %v143
  %v391 = vmul.f32 %v389, %v390
  %v393 = vrot.slane %v307, 2
  %v395 = vadd.f32 %v393, %v391
  %v396 = vtanh.pop %v395
  %v397 = vsub.f32 1.0, %v389
  %399 = vrot.lane.b32.xlu0 %v396, 64
  %v400 = vpop.permute.xlu0 %399
  %v402 = vmul.f32 %v397, %v400
  %v403 = vmul.f32 %v389, %v159
  %v404 = vadd.f32 %v402, %v403
  %v405 = vsel %vm57, %v278, 0
  %407 = vmatprep.subr.mxu0 %v37
  %408 = vmatpush1.msra.mxu0 %v36
  %409 = vmatprep.subr.mxu0 %v39
  %410 = vmatpush1.msra.mxu0 %v38
  %411 = vmatprep.subr.mxu0 %v41
  %412 = vmatpush1.msra.mxu0 %v40
  %413 = vmatprep.subr.mxu0 %v43
  %414 = vmatpush1.msra.mxu0 %v42
  %415 = vmatprep.subr.mxu0 %v45
  %416 = vmatpush1.msra.mxu0 %v44
  %417 = vmatprep.subr.mxu0 %v47
  %418 = vmatpush1.msra.mxu0 %v46
  %419 = vmatprep.subr.mxu0 %v49
  %420 = vmatpush1.msra.mxu0 %v48
  %421 = vmatprep.subr.mxu0 %v51
  %422 = vmatpush1.msra.mxu0 %v50
  %423 = vmatprep.subr.mxu0 0.0
  %424 = vmatpush1.msra.mxu0 0.0
  %425 = vmatprep.subr.mxu0 0.0
  %426 = vmatpush1.msra.mxu0 0.0
  %427 = vmatprep.subr.mxu0 0.0
  %428 = vmatpush1.msra.mxu0 0.0
  %429 = vmatprep.subr.mxu0 0.0
  %430 = vmatpush1.msra.mxu0 0.0
  %431 = vmatprep.subr.mxu0 0.0
  %432 = vmatpush1.msra.mxu0 0.0
  %433 = vmatprep.subr.mxu0 0.0
  %434 = vmatpush1.msra.mxu0 0.0
  %435 = vmatprep.subr.mxu0 0.0
  %436 = vmatpush1.msra.mxu0 0.0
  %437 = vmatprep.subr.mxu0 0.0
  %438 = vmatpush1.msra.mxu0 0.0
  %439 = vmatprep.subr.mxu0 0.0
  %440 = vmatpush1.msra.mxu0 0.0
  %441 = vmatprep.subr.mxu0 0.0
  %442 = vmatpush1.msra.mxu0 0.0
  %443 = vmatprep.subr.mxu0 0.0
  %444 = vmatpush1.msra.mxu0 0.0
  %445 = vmatprep.subr.mxu0 0.0
  %446 = vmatpush1.msra.mxu0 0.0
  %447 = vmatprep.subr.mxu0 0.0
  %448 = vmatpush1.msra.mxu0 0.0
  %449 = vmatprep.subr.mxu0 0.0
  %450 = vmatpush1.msra.mxu0 0.0
  %451 = vmatprep.subr.mxu0 0.0
  %452 = vmatpush1.msra.mxu0 0.0
  %453 = vmatprep.subr.mxu0 0.0
  %454 = vmatpush1.msra.mxu0 0.0
  %455 = vmatprep.subr.mxu0 0.0
  %456 = vmatpush1.msra.mxu0 0.0
  %457 = vmatprep.subr.mxu0 0.0
  %458 = vmatpush1.msra.mxu0 0.0
  %459 = vmatprep.subr.mxu0 0.0
  %460 = vmatpush1.msra.mxu0 0.0
  %461 = vmatprep.subr.mxu0 0.0
  %462 = vmatpush1.msra.mxu0 0.0
  %463 = vmatprep.subr.mxu0 0.0
  %464 = vmatpush1.msra.mxu0 0.0
  %465 = vmatprep.subr.mxu0 0.0
  %466 = vmatpush1.msra.mxu0 0.0
  %467 = vmatprep.subr.mxu0 0.0
  %468 = vmatpush1.msra.mxu0 0.0
  %469 = vmatprep.subr.mxu0 0.0
  %470 = vmatpush1.msra.mxu0 0.0
  %471 = vmatprep.mubr.f32.mxu0 0.0
  %472 = vmatmul.mubr.f32.gmra.mrb[0].mxu0 %v405
  %v473 = vpop.f32.mrb[0].mxu0
  %v474 = vadd.f32 0.0, %v473
  %v475 = vpop.f32.mrb[0].mxu0
  %v476 = vadd.f32 0.0, %v475
  %477 = vdwg.mxu0
  %479 = vrot.lane.b32.xlu0 %v309, 64
  %v480 = vpop.permute.xlu0 %479
  %v481 = vrot.slane %v480, 2
  %v483 = vadd.f32 %v481, %v474
  %v484 = vxor.u32 %v483, 2147483648
  %v485 = vmul.f32 %v484, 1.442695
  %v486 = vpow.pop %v485
  %v487 = vadd.f32 %v486, 1.0
  %v488 = vrcp.pop %v487
  %v489 = vmul.f32 1.0, %v488
  %v490 = vrot.slane %v309, 4
  %v494 = vunpack.c.l.s4 1983009808
  %v495 = vunpack.c.0.s8 %v494
  %v496 = vlaneseq
  %v497 = vshrl.u32 %v496, 7
  %v498 = vsub.s32 %v495, %v497
  %v499 = vrot.slane %v474, %v498
  %500 = vrot.lane.b32.xlu0 %v499, 64
  %v501 = vpop.permute.xlu0 %500
  %v503 = vadd.f32 %v490, %v501
  %v504 = vxor.u32 %v503, 2147483648
  %v505 = vmul.f32 %v504, 1.442695
  %v506 = vpow.pop %v505
  %v507 = vadd.f32 %v506, 1.0
  %v508 = vrcp.pop %v507
  %v509 = vmul.f32 1.0, %v508
  %v510 = vadd.f32 %v476, %v267
  %v511 = vmul.f32 %v489, %v510
  %v512 = vrot.slane %v480, 4
  %v514 = vadd.f32 %v512, %v511
  %v515 = vtanh.pop %v514
  %v516 = vsub.f32 1.0, %v509
  %v517 = vmul.f32 %v516, %v515
  %v518 = vmul.f32 %v509, %v278
  %v519 = vadd.f32 %v517, %v518
  %v522 = vunpack.c.l.s4 1983009808
  %v523 = vunpack.c.0.s8 %v522
  %v524 = vlaneseq
  %v525 = vshrl.u32 %v524, 7
  %v526 = vsub.s32 %v523, %v525
  %v527 = vrot.slane %v404, %v526
  %528 = vrot.lane.b32.xlu0 %v527, 64
  %v529 = vpop.permute.xlu0 %528
  %s531 = scalar_lea.vmem %s5, 2
  %532 = vst.msk [vmem:[%s531] sm:$0x3] %vm290, %v529
  %v535 = vunpack.c.l.s4 1983009808
  %v536 = vunpack.c.0.s8 %v535
  %v537 = vlaneseq
  %v538 = vshrl.u32 %v537, 7
  %v539 = vsub.s32 %v536, %v538
  %v540 = vrot.slane %v519, %v539
  %541 = vrot.lane.b32.xlu0 %v540, 64
  %v542 = vpop.permute.xlu0 %541
  %s544 = scalar_lea.vmem %s5, 12
  %545 = vst.msk [vmem:[%s544] sm:$0x3] %vm304, %v542
  %s546 = scalar_lea.vmem %s0, 12
  %v547 = vld [vmem:[%s546] sm:$0x3f]
  %s548 = scalar_lea.vmem %s0, 30
  %v549 = vld [vmem:[%s548] sm:$0x3f]
  %v550 = vsel %vm57, %v529, 0
  %552 = vmatprep.subr.mxu0 %v21
  %553 = vmatpush1.msra.mxu0 %v20
  %554 = vmatprep.subr.mxu0 %v23
  %555 = vmatpush1.msra.mxu0 %v22
  %556 = vmatprep.subr.mxu0 %v25
  %557 = vmatpush1.msra.mxu0 %v24
  %558 = vmatprep.subr.mxu0 %v27
  %559 = vmatpush1.msra.mxu0 %v26
  %560 = vmatprep.subr.mxu0 %v29
  %561 = vmatpush1.msra.mxu0 %v28
  %562 = vmatprep.subr.mxu0 %v31
  %563 = vmatpush1.msra.mxu0 %v30
  %564 = vmatprep.subr.mxu0 %v33
  %565 = vmatpush1.msra.mxu0 %v32
  %566 = vmatprep.subr.mxu0 %v35
  %567 = vmatpush1.msra.mxu0 %v34
  %568 = vmatprep.subr.mxu0 0.0
  %569 = vmatpush1.msra.mxu0 0.0
  %570 = vmatprep.subr.mxu0 0.0
  %571 = vmatpush1.msra.mxu0 0.0
  %572 = vmatprep.subr.mxu0 0.0
  %573 = vmatpush1.msra.mxu0 0.0
  %574 = vmatprep.subr.mxu0 0.0
  %575 = vmatpush1.msra.mxu0 0.0
  %576 = vmatprep.subr.mxu0 0.0
  %577 = vmatpush1.msra.mxu0 0.0
  %578 = vmatprep.subr.mxu0 0.0
  %579 = vmatpush1.msra.mxu0 0.0
  %580 = vmatprep.subr.mxu0 0.0
  %581 = vmatpush1.msra.mxu0 0.0
  %582 = vmatprep.subr.mxu0 0.0
  %583 = vmatpush1.msra.mxu0 0.0
  %584 = vmatprep.subr.mxu0 0.0
  %585 = vmatpush1.msra.mxu0 0.0
  %586 = vmatprep.subr.mxu0 0.0
  %587 = vmatpush1.msra.mxu0 0.0
  %588 = vmatprep.subr.mxu0 0.0
  %589 = vmatpush1.msra.mxu0 0.0
  %590 = vmatprep.subr.mxu0 0.0
  %591 = vmatpush1.msra.mxu0 0.0
  %592 = vmatprep.subr.mxu0 0.0
  %593 = vmatpush1.msra.mxu0 0.0
  %594 = vmatprep.subr.mxu0 0.0
  %595 = vmatpush1.msra.mxu0 0.0
  %596 = vmatprep.subr.mxu0 0.0
  %597 = vmatpush1.msra.mxu0 0.0
  %598 = vmatprep.subr.mxu0 0.0
  %599 = vmatpush1.msra.mxu0 0.0
  %600 = vmatprep.subr.mxu0 0.0
  %601 = vmatpush1.msra.mxu0 0.0
  %602 = vmatprep.subr.mxu0 0.0
  %603 = vmatpush1.msra.mxu0 0.0
  %604 = vmatprep.subr.mxu0 0.0
  %605 = vmatpush1.msra.mxu0 0.0
  %606 = vmatprep.subr.mxu0 0.0
  %607 = vmatpush1.msra.mxu0 0.0
  %608 = vmatprep.subr.mxu0 0.0
  %609 = vmatpush1.msra.mxu0 0.0
  %610 = vmatprep.subr.mxu0 0.0
  %611 = vmatpush1.msra.mxu0 0.0
  %612 = vmatprep.subr.mxu0 0.0
  %613 = vmatpush1.msra.mxu0 0.0
  %614 = vmatprep.subr.mxu0 0.0
  %615 = vmatpush1.msra.mxu0 0.0
  %616 = vmatprep.mubr.f32.mxu0 0.0
  %617 = vmatmul.mubr.f32.gmra.mrb[0].mxu0 %v550
  %v618 = vpop.f32.mrb[0].mxu0
  %v619 = vadd.f32 0.0, %v618
  %v620 = vpop.f32.mrb[0].mxu0
  %v621 = vadd.f32 0.0, %v620
  %622 = vdwg.mxu0
  %v623 = vadd.f32 %v547, %v619
  %v624 = vxor.u32 %v623, 2147483648
  %v625 = vmul.f32 %v624, 1.442695
  %v626 = vpow.pop %v625
  %v627 = vadd.f32 %v626, 1.0
  %v628 = vrcp.pop %v627
  %v629 = vmul.f32 1.0, %v628
  %v630 = vadd.f32 %v621, %v143
  %v631 = vmul.f32 %v629, %v630
  %v633 = vrot.slane %v547, 2
  %v635 = vadd.f32 %v633, %v631
  %v636 = vtanh.pop %v635
  %v637 = vsub.f32 1.0, %v629
  %639 = vrot.lane.b32.xlu0 %v636, 64
  %v640 = vpop.permute.xlu0 %639
  %v642 = vmul.f32 %v637, %v640
  %v643 = vmul.f32 %v629, %v404
  %v644 = vadd.f32 %v642, %v643
  %v645 = vsel %vm57, %v519, 0
  %647 = vmatprep.subr.mxu0 %v37
  %648 = vmatpush1.msra.mxu0 %v36
  %649 = vmatprep.subr.mxu0 %v39
  %650 = vmatpush1.msra.mxu0 %v38
  %651 = vmatprep.subr.mxu0 %v41
  %652 = vmatpush1.msra.mxu0 %v40
  %653 = vmatprep.subr.mxu0 %v43
  %654 = vmatpush1.msra.mxu0 %v42
  %655 = vmatprep.subr.mxu0 %v45
  %656 = vmatpush1.msra.mxu0 %v44
  %657 = vmatprep.subr.mxu0 %v47
  %658 = vmatpush1.msra.mxu0 %v46
  %659 = vmatprep.subr.mxu0 %v49
  %660 = vmatpush1.msra.mxu0 %v48
  %661 = vmatprep.subr.mxu0 %v51
  %662 = vmatpush1.msra.mxu0 %v50
  %663 = vmatprep.subr.mxu0 0.0
  %664 = vmatpush1.msra.mxu0 0.0
  %665 = vmatprep.subr.mxu0 0.0
  %666 = vmatpush1.msra.mxu0 0.0
  %667 = vmatprep.subr.mxu0 0.0
  %668 = vmatpush1.msra.mxu0 0.0
  %669 = vmatprep.subr.mxu0 0.0
  %670 = vmatpush1.msra.mxu0 0.0
  %671 = vmatprep.subr.mxu0 0.0
  %672 = vmatpush1.msra.mxu0 0.0
  %673 = vmatprep.subr.mxu0 0.0
  %674 = vmatpush1.msra.mxu0 0.0
  %675 = vmatprep.subr.mxu0 0.0
  %676 = vmatpush1.msra.mxu0 0.0
  %677 = vmatprep.subr.mxu0 0.0
  %678 = vmatpush1.msra.mxu0 0.0
  %679 = vmatprep.subr.mxu0 0.0
  %680 = vmatpush1.msra.mxu0 0.0
  %681 = vmatprep.subr.mxu0 0.0
  %682 = vmatpush1.msra.mxu0 0.0
  %683 = vmatprep.subr.mxu0 0.0
  %684 = vmatpush1.msra.mxu0 0.0
  %685 = vmatprep.subr.mxu0 0.0
  %686 = vmatpush1.msra.mxu0 0.0
  %687 = vmatprep.subr.mxu0 0.0
  %688 = vmatpush1.msra.mxu0 0.0
  %689 = vmatprep.subr.mxu0 0.0
  %690 = vmatpush1.msra.mxu0 0.0
  %691 = vmatprep.subr.mxu0 0.0
  %692 = vmatpush1.msra.mxu0 0.0
  %693 = vmatprep.subr.mxu0 0.0
  %694 = vmatpush1.msra.mxu0 0.0
  %695 = vmatprep.subr.mxu0 0.0
  %696 = vmatpush1.msra.mxu0 0.0
  %697 = vmatprep.subr.mxu0 0.0
  %698 = vmatpush1.msra.mxu0 0.0
  %699 = vmatprep.subr.mxu0 0.0
  %700 = vmatpush1.msra.mxu0 0.0
  %701 = vmatprep.subr.mxu0 0.0
  %702 = vmatpush1.msra.mxu0 0.0
  %703 = vmatprep.subr.mxu0 0.0
  %704 = vmatpush1.msra.mxu0 0.0
  %705 = vmatprep.subr.mxu0 0.0
  %706 = vmatpush1.msra.mxu0 0.0
  %707 = vmatprep.subr.mxu0 0.0
  %708 = vmatpush1.msra.mxu0 0.0
  %709 = vmatprep.subr.mxu0 0.0
  %710 = vmatpush1.msra.mxu0 0.0
  %711 = vmatprep.mubr.f32.mxu0 0.0
  %712 = vmatmul.mubr.f32.gmra.mrb[0].mxu0 %v645
  %v713 = vpop.f32.mrb[0].mxu0
  %v714 = vadd.f32 0.0, %v713
  %v715 = vpop.f32.mrb[0].mxu0
  %v716 = vadd.f32 0.0, %v715
  %717 = vdwg.mxu0
  %719 = vrot.lane.b32.xlu0 %v549, 64
  %v720 = vpop.permute.xlu0 %719
  %v721 = vrot.slane %v720, 2
  %v723 = vadd.f32 %v721, %v714
  %v724 = vxor.u32 %v723, 2147483648
  %v725 = vmul.f32 %v724, 1.442695
  %v726 = vpow.pop %v725
  %v727 = vadd.f32 %v726, 1.0
  %v728 = vrcp.pop %v727
  %v729 = vmul.f32 1.0, %v728
  %v730 = vrot.slane %v549, 4
  %v734 = vunpack.c.l.s4 1983009808
  %v735 = vunpack.c.0.s8 %v734
  %v736 = vlaneseq
  %v737 = vshrl.u32 %v736, 7
  %v738 = vsub.s32 %v735, %v737
  %v739 = vrot.slane %v714, %v738
  %740 = vrot.lane.b32.xlu0 %v739, 64
  %v741 = vpop.permute.xlu0 %740
  %v743 = vadd.f32 %v730, %v741
  %v744 = vxor.u32 %v743, 2147483648
  %v745 = vmul.f32 %v744, 1.442695
  %v746 = vpow.pop %v745
  %v747 = vadd.f32 %v746, 1.0
  %v748 = vrcp.pop %v747
  %v749 = vmul.f32 1.0, %v748
  %v750 = vadd.f32 %v716, %v267
  %v751 = vmul.f32 %v729, %v750
  %v752 = vrot.slane %v720, 4
  %v754 = vadd.f32 %v752, %v751
  %v755 = vtanh.pop %v754
  %v756 = vsub.f32 1.0, %v749
  %v757 = vmul.f32 %v756, %v755
  %v758 = vmul.f32 %v749, %v519
  %v759 = vadd.f32 %v757, %v758
  %v762 = vunpack.c.l.s4 1983009808
  %v763 = vunpack.c.0.s8 %v762
  %v764 = vlaneseq
  %v765 = vshrl.u32 %v764, 7
  %v766 = vsub.s32 %v763, %v765
  %v767 = vrot.slane %v644, %v766
  %768 = vrot.lane.b32.xlu0 %v767, 64
  %v769 = vpop.permute.xlu0 %768
  %s771 = scalar_lea.vmem %s5, 4
  %772 = vst.msk [vmem:[%s771] sm:$0x3] %vm290, %v769
  %v775 = vunpack.c.l.s4 1983009808
  %v776 = vunpack.c.0.s8 %v775
  %v777 = vlaneseq
  %v778 = vshrl.u32 %v777, 7
  %v779 = vsub.s32 %v776, %v778
  %v780 = vrot.slane %v759, %v779
  %781 = vrot.lane.b32.xlu0 %v780, 64
  %v782 = vpop.permute.xlu0 %781
  %s784 = scalar_lea.vmem %s5, 10
  %785 = vst.msk [vmem:[%s784] sm:$0x3] %vm304, %v782
  %s786 = scalar_lea.vmem %s0, 18
  %v787 = vld [vmem:[%s786] sm:$0x3f]
  %s788 = scalar_lea.vmem %s0, 24
  %v789 = vld [vmem:[%s788] sm:$0x3f]
  %v790 = vsel %vm57, %v769, 0
  %792 = vmatprep.subr.mxu0 %v21
  %793 = vmatpush1.msra.mxu0 %v20
  %794 = vmatprep.subr.mxu0 %v23
  %795 = vmatpush1.msra.mxu0 %v22
  %796 = vmatprep.subr.mxu0 %v25
  %797 = vmatpush1.msra.mxu0 %v24
  %798 = vmatprep.subr.mxu0 %v27
  %799 = vmatpush1.msra.mxu0 %v26
  %800 = vmatprep.subr.mxu0 %v29
  %801 = vmatpush1.msra.mxu0 %v28
  %802 = vmatprep.subr.mxu0 %v31
  %803 = vmatpush1.msra.mxu0 %v30
  %804 = vmatprep.subr.mxu0 %v33
  %805 = vmatpush1.msra.mxu0 %v32
  %806 = vmatprep.subr.mxu0 %v35
  %807 = vmatpush1.msra.mxu0 %v34
  %808 = vmatprep.subr.mxu0 0.0
  %809 = vmatpush1.msra.mxu0 0.0
  %810 = vmatprep.subr.mxu0 0.0
  %811 = vmatpush1.msra.mxu0 0.0
  %812 = vmatprep.subr.mxu0 0.0
  %813 = vmatpush1.msra.mxu0 0.0
  %814 = vmatprep.subr.mxu0 0.0
  %815 = vmatpush1.msra.mxu0 0.0
  %816 = vmatprep.subr.mxu0 0.0
  %817 = vmatpush1.msra.mxu0 0.0
  %818 = vmatprep.subr.mxu0 0.0
  %819 = vmatpush1.msra.mxu0 0.0
  %820 = vmatprep.subr.mxu0 0.0
  %821 = vmatpush1.msra.mxu0 0.0
  %822 = vmatprep.subr.mxu0 0.0
  %823 = vmatpush1.msra.mxu0 0.0
  %824 = vmatprep.subr.mxu0 0.0
  %825 = vmatpush1.msra.mxu0 0.0
  %826 = vmatprep.subr.mxu0 0.0
  %827 = vmatpush1.msra.mxu0 0.0
  %828 = vmatprep.subr.mxu0 0.0
  %829 = vmatpush1.msra.mxu0 0.0
  %830 = vmatprep.subr.mxu0 0.0
  %831 = vmatpush1.msra.mxu0 0.0
  %832 = vmatprep.subr.mxu0 0.0
  %833 = vmatpush1.msra.mxu0 0.0
  %834 = vmatprep.subr.mxu0 0.0
  %835 = vmatpush1.msra.mxu0 0.0
  %836 = vmatprep.subr.mxu0 0.0
  %837 = vmatpush1.msra.mxu0 0.0
  %838 = vmatprep.subr.mxu0 0.0
  %839 = vmatpush1.msra.mxu0 0.0
  %840 = vmatprep.subr.mxu0 0.0
  %841 = vmatpush1.msra.mxu0 0.0
  %842 = vmatprep.subr.mxu0 0.0
  %843 = vmatpush1.msra.mxu0 0.0
  %844 = vmatprep.subr.mxu0 0.0
  %845 = vmatpush1.msra.mxu0 0.0
  %846 = vmatprep.subr.mxu0 0.0
  %847 = vmatpush1.msra.mxu0 0.0
  %848 = vmatprep.subr.mxu0 0.0
  %849 = vmatpush1.msra.mxu0 0.0
  %850 = vmatprep.subr.mxu0 0.0
  %851 = vmatpush1.msra.mxu0 0.0
  %852 = vmatprep.subr.mxu0 0.0
  %853 = vmatpush1.msra.mxu0 0.0
  %854 = vmatprep.subr.mxu0 0.0
  %855 = vmatpush1.msra.mxu0 0.0
  %856 = vmatprep.mubr.f32.mxu0 0.0
  %857 = vmatmul.mubr.f32.gmra.mrb[0].mxu0 %v790
  %v858 = vpop.f32.mrb[0].mxu0
  %v859 = vadd.f32 0.0, %v858
  %v860 = vpop.f32.mrb[0].mxu0
  %v861 = vadd.f32 0.0, %v860
  %862 = vdwg.mxu0
  %v863 = vadd.f32 %v787, %v859
  %v864 = vxor.u32 %v863, 2147483648
  %v865 = vmul.f32 %v864, 1.442695
  %v866 = vpow.pop %v865
  %v867 = vadd.f32 %v866, 1.0
  %v868 = vrcp.pop %v867
  %v869 = vmul.f32 1.0, %v868
  %v870 = vadd.f32 %v861, %v143
  %v871 = vmul.f32 %v869, %v870
  %v873 = vrot.slane %v787, 2
  %v875 = vadd.f32 %v873, %v871
  %v876 = vtanh.pop %v875
  %v877 = vsub.f32 1.0, %v869
  %879 = vrot.lane.b32.xlu0 %v876, 64
  %v880 = vpop.permute.xlu0 %879
  %v882 = vmul.f32 %v877, %v880
  %v883 = vmul.f32 %v869, %v644
  %v884 = vadd.f32 %v882, %v883
  %v885 = vsel %vm57, %v759, 0
  %887 = vmatprep.subr.mxu0 %v37
  %888 = vmatpush1.msra.mxu0 %v36
  %889 = vmatprep.subr.mxu0 %v39
  %890 = vmatpush1.msra.mxu0 %v38
  %891 = vmatprep.subr.mxu0 %v41
  %892 = vmatpush1.msra.mxu0 %v40
  %893 = vmatprep.subr.mxu0 %v43
  %894 = vmatpush1.msra.mxu0 %v42
  %895 = vmatprep.subr.mxu0 %v45
  %896 = vmatpush1.msra.mxu0 %v44
  %897 = vmatprep.subr.mxu0 %v47
  %898 = vmatpush1.msra.mxu0 %v46
  %899 = vmatprep.subr.mxu0 %v49
  %900 = vmatpush1.msra.mxu0 %v48
  %901 = vmatprep.subr.mxu0 %v51
  %902 = vmatpush1.msra.mxu0 %v50
  %903 = vmatprep.subr.mxu0 0.0
  %904 = vmatpush1.msra.mxu0 0.0
  %905 = vmatprep.subr.mxu0 0.0
  %906 = vmatpush1.msra.mxu0 0.0
  %907 = vmatprep.subr.mxu0 0.0
  %908 = vmatpush1.msra.mxu0 0.0
  %909 = vmatprep.subr.mxu0 0.0
  %910 = vmatpush1.msra.mxu0 0.0
  %911 = vmatprep.subr.mxu0 0.0
  %912 = vmatpush1.msra.mxu0 0.0
  %913 = vmatprep.subr.mxu0 0.0
  %914 = vmatpush1.msra.mxu0 0.0
  %915 = vmatprep.subr.mxu0 0.0
  %916 = vmatpush1.msra.mxu0 0.0
  %917 = vmatprep.subr.mxu0 0.0
  %918 = vmatpush1.msra.mxu0 0.0
  %919 = vmatprep.subr.mxu0 0.0
  %920 = vmatpush1.msra.mxu0 0.0
  %921 = vmatprep.subr.mxu0 0.0
  %922 = vmatpush1.msra.mxu0 0.0
  %923 = vmatprep.subr.mxu0 0.0
  %924 = vmatpush1.msra.mxu0 0.0
  %925 = vmatprep.subr.mxu0 0.0
  %926 = vmatpush1.msra.mxu0 0.0
  %927 = vmatprep.subr.mxu0 0.0
  %928 = vmatpush1.msra.mxu0 0.0
  %929 = vmatprep.subr.mxu0 0.0
  %930 = vmatpush1.msra.mxu0 0.0
  %931 = vmatprep.subr.mxu0 0.0
  %932 = vmatpush1.msra.mxu0 0.0
  %933 = vmatprep.subr.mxu0 0.0
  %934 = vmatpush1.msra.mxu0 0.0
  %935 = vmatprep.subr.mxu0 0.0
  %936 = vmatpush1.msra.mxu0 0.0
  %937 = vmatprep.subr.mxu0 0.0
  %938 = vmatpush1.msra.mxu0 0.0
  %939 = vmatprep.subr.mxu0 0.0
  %940 = vmatpush1.msra.mxu0 0.0
  %941 = vmatprep.subr.mxu0 0.0
  %942 = vmatpush1.msra.mxu0 0.0
  %943 = vmatprep.subr.mxu0 0.0
  %944 = vmatpush1.msra.mxu0 0.0
  %945 = vmatprep.subr.mxu0 0.0
  %946 = vmatpush1.msra.mxu0 0.0
  %947 = vmatprep.subr.mxu0 0.0
  %948 = vmatpush1.msra.mxu0 0.0
  %949 = vmatprep.subr.mxu0 0.0
  %950 = vmatpush1.msra.mxu0 0.0
  %951 = vmatprep.mubr.f32.mxu0 0.0
  %952 = vmatmul.mubr.f32.gmra.mrb[0].mxu0 %v885
  %v953 = vpop.f32.mrb[0].mxu0
  %v954 = vadd.f32 0.0, %v953
  %v955 = vpop.f32.mrb[0].mxu0
  %v956 = vadd.f32 0.0, %v955
  %957 = vdwg.mxu0
  %959 = vrot.lane.b32.xlu0 %v789, 64
  %v960 = vpop.permute.xlu0 %959
  %v961 = vrot.slane %v960, 2
  %v963 = vadd.f32 %v961, %v954
  %v964 = vxor.u32 %v963, 2147483648
  %v965 = vmul.f32 %v964, 1.442695
  %v966 = vpow.pop %v965
  %v967 = vadd.f32 %v966, 1.0
  %v968 = vrcp.pop %v967
  %v969 = vmul.f32 1.0, %v968
  %v970 = vrot.slane %v789, 4
  %v974 = vunpack.c.l.s4 1983009808
  %v975 = vunpack.c.0.s8 %v974
  %v976 = vlaneseq
  %v977 = vshrl.u32 %v976, 7
  %v978 = vsub.s32 %v975, %v977
  %v979 = vrot.slane %v954, %v978
  %980 = vrot.lane.b32.xlu0 %v979, 64
  %v981 = vpop.permute.xlu0 %980
  %v983 = vadd.f32 %v970, %v981
  %v984 = vxor.u32 %v983, 2147483648
  %v985 = vmul.f32 %v984, 1.442695
  %v986 = vpow.pop %v985
  %v987 = vadd.f32 %v986, 1.0
  %v988 = vrcp.pop %v987
  %v989 = vmul.f32 1.0, %v988
  %v990 = vadd.f32 %v956, %v267
  %v991 = vmul.f32 %v969, %v990
  %v992 = vrot.slane %v960, 4
  %v994 = vadd.f32 %v992, %v991
  %v995 = vtanh.pop %v994
  %v996 = vsub.f32 1.0, %v989
  %v997 = vmul.f32 %v996, %v995
  %v998 = vmul.f32 %v989, %v759
  %v999 = vadd.f32 %v997, %v998
  %v1002 = vunpack.c.l.s4 1983009808
  %v1003 = vunpack.c.0.s8 %v1002
  %v1004 = vlaneseq
  %v1005 = vshrl.u32 %v1004, 7
  %v1006 = vsub.s32 %v1003, %v1005
  %v1007 = vrot.slane %v884, %v1006
  %1008 = vrot.lane.b32.xlu0 %v1007, 64
  %v1009 = vpop.permute.xlu0 %1008
  %s1011 = scalar_lea.vmem %s5, 6
  %1012 = vst.msk [vmem:[%s1011] sm:$0x3] %vm290, %v1009
  %v1015 = vunpack.c.l.s4 1983009808
  %v1016 = vunpack.c.0.s8 %v1015
  %v1017 = vlaneseq
  %v1018 = vshrl.u32 %v1017, 7
  %v1019 = vsub.s32 %v1016, %v1018
  %v1020 = vrot.slane %v999, %v1019
  %1021 = vrot.lane.b32.xlu0 %v1020, 64
  %v1022 = vpop.permute.xlu0 %1021
  %s1024 = scalar_lea.vmem %s5, 8
  %1025 = vst.msk [vmem:[%s1024] sm:$0x3] %vm304, %v1022
  %v1026 = vld [vmem:[%s788] sm:$0x3f]
  %v1027 = vld [vmem:[%s786] sm:$0x3f]
  %v1028 = vsel %vm57, %v1009, 0
  %1030 = vmatprep.subr.mxu0 %v21
  %1031 = vmatpush1.msra.mxu0 %v20
  %1032 = vmatprep.subr.mxu0 %v23
  %1033 = vmatpush1.msra.mxu0 %v22
  %1034 = vmatprep.subr.mxu0 %v25
  %1035 = vmatpush1.msra.mxu0 %v24
  %1036 = vmatprep.subr.mxu0 %v27
  %1037 = vmatpush1.msra.mxu0 %v26
  %1038 = vmatprep.subr.mxu0 %v29
  %1039 = vmatpush1.msra.mxu0 %v28
  %1040 = vmatprep.subr.mxu0 %v31
  %1041 = vmatpush1.msra.mxu0 %v30
  %1042 = vmatprep.subr.mxu0 %v33
  %1043 = vmatpush1.msra.mxu0 %v32
  %1044 = vmatprep.subr.mxu0 %v35
  %1045 = vmatpush1.msra.mxu0 %v34
  %1046 = vmatprep.subr.mxu0 0.0
  %1047 = vmatpush1.msra.mxu0 0.0
  %1048 = vmatprep.subr.mxu0 0.0
  %1049 = vmatpush1.msra.mxu0 0.0
  %1050 = vmatprep.subr.mxu0 0.0
  %1051 = vmatpush1.msra.mxu0 0.0
  %1052 = vmatprep.subr.mxu0 0.0
  %1053 = vmatpush1.msra.mxu0 0.0
  %1054 = vmatprep.subr.mxu0 0.0
  %1055 = vmatpush1.msra.mxu0 0.0
  %1056 = vmatprep.subr.mxu0 0.0
  %1057 = vmatpush1.msra.mxu0 0.0
  %1058 = vmatprep.subr.mxu0 0.0
  %1059 = vmatpush1.msra.mxu0 0.0
  %1060 = vmatprep.subr.mxu0 0.0
  %1061 = vmatpush1.msra.mxu0 0.0
  %1062 = vmatprep.subr.mxu0 0.0
  %1063 = vmatpush1.msra.mxu0 0.0
  %1064 = vmatprep.subr.mxu0 0.0
  %1065 = vmatpush1.msra.mxu0 0.0
  %1066 = vmatprep.subr.mxu0 0.0
  %1067 = vmatpush1.msra.mxu0 0.0
  %1068 = vmatprep.subr.mxu0 0.0
  %1069 = vmatpush1.msra.mxu0 0.0
  %1070 = vmatprep.subr.mxu0 0.0
  %1071 = vmatpush1.msra.mxu0 0.0
  %1072 = vmatprep.subr.mxu0 0.0
  %1073 = vmatpush1.msra.mxu0 0.0
  %1074 = vmatprep.subr.mxu0 0.0
  %1075 = vmatpush1.msra.mxu0 0.0
  %1076 = vmatprep.subr.mxu0 0.0
  %1077 = vmatpush1.msra.mxu0 0.0
  %1078 = vmatprep.subr.mxu0 0.0
  %1079 = vmatpush1.msra.mxu0 0.0
  %1080 = vmatprep.subr.mxu0 0.0
  %1081 = vmatpush1.msra.mxu0 0.0
  %1082 = vmatprep.subr.mxu0 0.0
  %1083 = vmatpush1.msra.mxu0 0.0
  %1084 = vmatprep.subr.mxu0 0.0
  %1085 = vmatpush1.msra.mxu0 0.0
  %1086 = vmatprep.subr.mxu0 0.0
  %1087 = vmatpush1.msra.mxu0 0.0
  %1088 = vmatprep.subr.mxu0 0.0
  %1089 = vmatpush1.msra.mxu0 0.0
  %1090 = vmatprep.subr.mxu0 0.0
  %1091 = vmatpush1.msra.mxu0 0.0
  %1092 = vmatprep.subr.mxu0 0.0
  %1093 = vmatpush1.msra.mxu0 0.0
  %1094 = vmatprep.mubr.f32.mxu0 0.0
  %1095 = vmatmul.mubr.f32.gmra.mrb[0].mxu0 %v1028
  %v1096 = vpop.f32.mrb[0].mxu0
  %v1097 = vadd.f32 0.0, %v1096
  %v1098 = vpop.f32.mrb[0].mxu0
  %v1099 = vadd.f32 0.0, %v1098
  %1100 = vdwg.mxu0
  %v1101 = vadd.f32 %v1026, %v1097
  %v1102 = vxor.u32 %v1101, 2147483648
  %v1103 = vmul.f32 %v1102, 1.442695
  %v1104 = vpow.pop %v1103
  %v1105 = vadd.f32 %v1104, 1.0
  %v1106 = vrcp.pop %v1105
  %v1107 = vmul.f32 1.0, %v1106
  %v1108 = vadd.f32 %v1099, %v143
  %v1109 = vmul.f32 %v1107, %v1108
  %v1111 = vrot.slane %v1026, 2
  %v1113 = vadd.f32 %v1111, %v1109
  %v1114 = vtanh.pop %v1113
  %v1115 = vsub.f32 1.0, %v1107
  %1117 = vrot.lane.b32.xlu0 %v1114, 64
  %v1118 = vpop.permute.xlu0 %1117
  %v1120 = vmul.f32 %v1115, %v1118
  %v1121 = vmul.f32 %v1107, %v884
  %v1122 = vadd.f32 %v1120, %v1121
  %v1123 = vsel %vm57, %v999, 0
  %1125 = vmatprep.subr.mxu0 %v37
  %1126 = vmatpush1.msra.mxu0 %v36
  %1127 = vmatprep.subr.mxu0 %v39
  %1128 = vmatpush1.msra.mxu0 %v38
  %1129 = vmatprep.subr.mxu0 %v41
  %1130 = vmatpush1.msra.mxu0 %v40
  %1131 = vmatprep.subr.mxu0 %v43
  %1132 = vmatpush1.msra.mxu0 %v42
  %1133 = vmatprep.subr.mxu0 %v45
  %1134 = vmatpush1.msra.mxu0 %v44
  %1135 = vmatprep.subr.mxu0 %v47
  %1136 = vmatpush1.msra.mxu0 %v46
  %1137 = vmatprep.subr.mxu0 %v49
  %1138 = vmatpush1.msra.mxu0 %v48
  %1139 = vmatprep.subr.mxu0 %v51
  %1140 = vmatpush1.msra.mxu0 %v50
  %1141 = vmatprep.subr.mxu0 0.0
  %1142 = vmatpush1.msra.mxu0 0.0
  %1143 = vmatprep.subr.mxu0 0.0
  %1144 = vmatpush1.msra.mxu0 0.0
  %1145 = vmatprep.subr.mxu0 0.0
  %1146 = vmatpush1.msra.mxu0 0.0
  %1147 = vmatprep.subr.mxu0 0.0
  %1148 = vmatpush1.msra.mxu0 0.0
  %1149 = vmatprep.subr.mxu0 0.0
  %1150 = vmatpush1.msra.mxu0 0.0
  %1151 = vmatprep.subr.mxu0 0.0
  %1152 = vmatpush1.msra.mxu0 0.0
  %1153 = vmatprep.subr.mxu0 0.0
  %1154 = vmatpush1.msra.mxu0 0.0
  %1155 = vmatprep.subr.mxu0 0.0
  %1156 = vmatpush1.msra.mxu0 0.0
  %1157 = vmatprep.subr.mxu0 0.0
  %1158 = vmatpush1.msra.mxu0 0.0
  %1159 = vmatprep.subr.mxu0 0.0
  %1160 = vmatpush1.msra.mxu0 0.0
  %1161 = vmatprep.subr.mxu0 0.0
  %1162 = vmatpush1.msra.mxu0 0.0
  %1163 = vmatprep.subr.mxu0 0.0
  %1164 = vmatpush1.msra.mxu0 0.0
  %1165 = vmatprep.subr.mxu0 0.0
  %1166 = vmatpush1.msra.mxu0 0.0
  %1167 = vmatprep.subr.mxu0 0.0
  %1168 = vmatpush1.msra.mxu0 0.0
  %1169 = vmatprep.subr.mxu0 0.0
  %1170 = vmatpush1.msra.mxu0 0.0
  %1171 = vmatprep.subr.mxu0 0.0
  %1172 = vmatpush1.msra.mxu0 0.0
  %1173 = vmatprep.subr.mxu0 0.0
  %1174 = vmatpush1.msra.mxu0 0.0
  %1175 = vmatprep.subr.mxu0 0.0
  %1176 = vmatpush1.msra.mxu0 0.0
  %1177 = vmatprep.subr.mxu0 0.0
  %1178 = vmatpush1.msra.mxu0 0.0
  %1179 = vmatprep.subr.mxu0 0.0
  %1180 = vmatpush1.msra.mxu0 0.0
  %1181 = vmatprep.subr.mxu0 0.0
  %1182 = vmatpush1.msra.mxu0 0.0
  %1183 = vmatprep.subr.mxu0 0.0
  %1184 = vmatpush1.msra.mxu0 0.0
  %1185 = vmatprep.subr.mxu0 0.0
  %1186 = vmatpush1.msra.mxu0 0.0
  %1187 = vmatprep.subr.mxu0 0.0
  %1188 = vmatpush1.msra.mxu0 0.0
  %1189 = vmatprep.mubr.f32.mxu0 0.0
  %1190 = vmatmul.mubr.f32.gmra.mrb[0].mxu0 %v1123
  %v1191 = vpop.f32.mrb[0].mxu0
  %v1192 = vadd.f32 0.0, %v1191
  %v1193 = vpop.f32.mrb[0].mxu0
  %v1194 = vadd.f32 0.0, %v1193
  %1195 = vdwg.mxu0
  %1197 = vrot.lane.b32.xlu0 %v1027, 64
  %v1198 = vpop.permute.xlu0 %1197
  %v1199 = vrot.slane %v1198, 2
  %v1201 = vadd.f32 %v1199, %v1192
  %v1202 = vxor.u32 %v1201, 2147483648
  %v1203 = vmul.f32 %v1202, 1.442695
  %v1204 = vpow.pop %v1203
  %v1205 = vadd.f32 %v1204, 1.0
  %v1206 = vrcp.pop %v1205
  %v1207 = vmul.f32 1.0, %v1206
  %v1208 = vrot.slane %v1027, 4
  %v1212 = vunpack.c.l.s4 1983009808
  %v1213 = vunpack.c.0.s8 %v1212
  %v1214 = vlaneseq
  %v1215 = vshrl.u32 %v1214, 7
  %v1216 = vsub.s32 %v1213, %v1215
  %v1217 = vrot.slane %v1192, %v1216
  %1218 = vrot.lane.b32.xlu0 %v1217, 64
  %v1219 = vpop.permute.xlu0 %1218
  %v1221 = vadd.f32 %v1208, %v1219
  %v1222 = vxor.u32 %v1221, 2147483648
  %v1223 = vmul.f32 %v1222, 1.442695
  %v1224 = vpow.pop %v1223
  %v1225 = vadd.f32 %v1224, 1.0
  %v1226 = vrcp.pop %v1225
  %v1227 = vmul.f32 1.0, %v1226
  %v1228 = vadd.f32 %v1194, %v267
  %v1229 = vmul.f32 %v1207, %v1228
  %v1230 = vrot.slane %v1198, 4
  %v1232 = vadd.f32 %v1230, %v1229
  %v1233 = vtanh.pop %v1232
  %v1234 = vsub.f32 1.0, %v1227
  %v1235 = vmul.f32 %v1234, %v1233
  %v1236 = vmul.f32 %v1227, %v999
  %v1237 = vadd.f32 %v1235, %v1236
  %v1240 = vunpack.c.l.s4 1983009808
  %v1241 = vunpack.c.0.s8 %v1240
  %v1242 = vlaneseq
  %v1243 = vshrl.u32 %v1242, 7
  %v1244 = vsub.s32 %v1241, %v1243
  %v1245 = vrot.slane %v1122, %v1244
  %1246 = vrot.lane.b32.xlu0 %v1245, 64
  %v1247 = vpop.permute.xlu0 %1246
  %1249 = vst.msk [vmem:[%s1024] sm:$0x3] %vm290, %v1247
  %v1252 = vunpack.c.l.s4 1983009808
  %v1253 = vunpack.c.0.s8 %v1252
  %v1254 = vlaneseq
  %v1255 = vshrl.u32 %v1254, 7
  %v1256 = vsub.s32 %v1253, %v1255
  %v1257 = vrot.slane %v1237, %v1256
  %1258 = vrot.lane.b32.xlu0 %v1257, 64
  %v1259 = vpop.permute.xlu0 %1258
  %1261 = vst.msk [vmem:[%s1011] sm:$0x3] %vm304, %v1259
  %v1262 = vld [vmem:[%s548] sm:$0x3f]
  %v1263 = vld [vmem:[%s546] sm:$0x3f]
  %v1264 = vsel %vm57, %v1247, 0
  %1266 = vmatprep.subr.mxu0 %v21
  %1267 = vmatpush1.msra.mxu0 %v20
  %1268 = vmatprep.subr.mxu0 %v23
  %1269 = vmatpush1.msra.mxu0 %v22
  %1270 = vmatprep.subr.mxu0 %v25
  %1271 = vmatpush1.msra.mxu0 %v24
  %1272 = vmatprep.subr.mxu0 %v27
  %1273 = vmatpush1.msra.mxu0 %v26
  %1274 = vmatprep.subr.mxu0 %v29
  %1275 = vmatpush1.msra.mxu0 %v28
  %1276 = vmatprep.subr.mxu0 %v31
  %1277 = vmatpush1.msra.mxu0 %v30
  %1278 = vmatprep.subr.mxu0 %v33
  %1279 = vmatpush1.msra.mxu0 %v32
  %1280 = vmatprep.subr.mxu0 %v35
  %1281 = vmatpush1.msra.mxu0 %v34
  %1282 = vmatprep.subr.mxu0 0.0
  %1283 = vmatpush1.msra.mxu0 0.0
  %1284 = vmatprep.subr.mxu0 0.0
  %1285 = vmatpush1.msra.mxu0 0.0
  %1286 = vmatprep.subr.mxu0 0.0
  %1287 = vmatpush1.msra.mxu0 0.0
  %1288 = vmatprep.subr.mxu0 0.0
  %1289 = vmatpush1.msra.mxu0 0.0
  %1290 = vmatprep.subr.mxu0 0.0
  %1291 = vmatpush1.msra.mxu0 0.0
  %1292 = vmatprep.subr.mxu0 0.0
  %1293 = vmatpush1.msra.mxu0 0.0
  %1294 = vmatprep.subr.mxu0 0.0
  %1295 = vmatpush1.msra.mxu0 0.0
  %1296 = vmatprep.subr.mxu0 0.0
  %1297 = vmatpush1.msra.mxu0 0.0
  %1298 = vmatprep.subr.mxu0 0.0
  %1299 = vmatpush1.msra.mxu0 0.0
  %1300 = vmatprep.subr.mxu0 0.0
  %1301 = vmatpush1.msra.mxu0 0.0
  %1302 = vmatprep.subr.mxu0 0.0
  %1303 = vmatpush1.msra.mxu0 0.0
  %1304 = vmatprep.subr.mxu0 0.0
  %1305 = vmatpush1.msra.mxu0 0.0
  %1306 = vmatprep.subr.mxu0 0.0
  %1307 = vmatpush1.msra.mxu0 0.0
  %1308 = vmatprep.subr.mxu0 0.0
  %1309 = vmatpush1.msra.mxu0 0.0
  %1310 = vmatprep.subr.mxu0 0.0
  %1311 = vmatpush1.msra.mxu0 0.0
  %1312 = vmatprep.subr.mxu0 0.0
  %1313 = vmatpush1.msra.mxu0 0.0
  %1314 = vmatprep.subr.mxu0 0.0
  %1315 = vmatpush1.msra.mxu0 0.0
  %1316 = vmatprep.subr.mxu0 0.0
  %1317 = vmatpush1.msra.mxu0 0.0
  %1318 = vmatprep.subr.mxu0 0.0
  %1319 = vmatpush1.msra.mxu0 0.0
  %1320 = vmatprep.subr.mxu0 0.0
  %1321 = vmatpush1.msra.mxu0 0.0
  %1322 = vmatprep.subr.mxu0 0.0
  %1323 = vmatpush1.msra.mxu0 0.0
  %1324 = vmatprep.subr.mxu0 0.0
  %1325 = vmatpush1.msra.mxu0 0.0
  %1326 = vmatprep.subr.mxu0 0.0
  %1327 = vmatpush1.msra.mxu0 0.0
  %1328 = vmatprep.subr.mxu0 0.0
  %1329 = vmatpush1.msra.mxu0 0.0
  %1330 = vmatprep.mubr.f32.mxu0 0.0
  %1331 = vmatmul.mubr.f32.gmra.mrb[0].mxu0 %v1264
  %v1332 = vpop.f32.mrb[0].mxu0
  %v1333 = vadd.f32 0.0, %v1332
  %v1334 = vpop.f32.mrb[0].mxu0
  %v1335 = vadd.f32 0.0, %v1334
  %1336 = vdwg.mxu0
  %v1337 = vadd.f32 %v1262, %v1333
  %v1338 = vxor.u32 %v1337, 2147483648
  %v1339 = vmul.f32 %v1338, 1.442695
  %v1340 = vpow.pop %v1339
  %v1341 = vadd.f32 %v1340, 1.0
  %v1342 = vrcp.pop %v1341
  %v1343 = vmul.f32 1.0, %v1342
  %v1344 = vadd.f32 %v1335, %v143
  %v1345 = vmul.f32 %v1343, %v1344
  %v1347 = vrot.slane %v1262, 2
  %v1349 = vadd.f32 %v1347, %v1345
  %v1350 = vtanh.pop %v1349
  %v1351 = vsub.f32 1.0, %v1343
  %1353 = vrot.lane.b32.xlu0 %v1350, 64
  %v1354 = vpop.permute.xlu0 %1353
  %v1356 = vmul.f32 %v1351, %v1354
  %v1357 = vmul.f32 %v1343, %v1122
  %v1358 = vadd.f32 %v1356, %v1357
  %v1359 = vsel %vm57, %v1237, 0
  %1361 = vmatprep.subr.mxu0 %v37
  %1362 = vmatpush1.msra.mxu0 %v36
  %1363 = vmatprep.subr.mxu0 %v39
  %1364 = vmatpush1.msra.mxu0 %v38
  %1365 = vmatprep.subr.mxu0 %v41
  %1366 = vmatpush1.msra.mxu0 %v40
  %1367 = vmatprep.subr.mxu0 %v43
  %1368 = vmatpush1.msra.mxu0 %v42
  %1369 = vmatprep.subr.mxu0 %v45
  %1370 = vmatpush1.msra.mxu0 %v44
  %1371 = vmatprep.subr.mxu0 %v47
  %1372 = vmatpush1.msra.mxu0 %v46
  %1373 = vmatprep.subr.mxu0 %v49
  %1374 = vmatpush1.msra.mxu0 %v48
  %1375 = vmatprep.subr.mxu0 %v51
  %1376 = vmatpush1.msra.mxu0 %v50
  %1377 = vmatprep.subr.mxu0 0.0
  %1378 = vmatpush1.msra.mxu0 0.0
  %1379 = vmatprep.subr.mxu0 0.0
  %1380 = vmatpush1.msra.mxu0 0.0
  %1381 = vmatprep.subr.mxu0 0.0
  %1382 = vmatpush1.msra.mxu0 0.0
  %1383 = vmatprep.subr.mxu0 0.0
  %1384 = vmatpush1.msra.mxu0 0.0
  %1385 = vmatprep.subr.mxu0 0.0
  %1386 = vmatpush1.msra.mxu0 0.0
  %1387 = vmatprep.subr.mxu0 0.0
  %1388 = vmatpush1.msra.mxu0 0.0
  %1389 = vmatprep.subr.mxu0 0.0
  %1390 = vmatpush1.msra.mxu0 0.0
  %1391 = vmatprep.subr.mxu0 0.0
  %1392 = vmatpush1.msra.mxu0 0.0
  %1393 = vmatprep.subr.mxu0 0.0
  %1394 = vmatpush1.msra.mxu0 0.0
  %1395 = vmatprep.subr.mxu0 0.0
  %1396 = vmatpush1.msra.mxu0 0.0
  %1397 = vmatprep.subr.mxu0 0.0
  %1398 = vmatpush1.msra.mxu0 0.0
  %1399 = vmatprep.subr.mxu0 0.0
  %1400 = vmatpush1.msra.mxu0 0.0
  %1401 = vmatprep.subr.mxu0 0.0
  %1402 = vmatpush1.msra.mxu0 0.0
  %1403 = vmatprep.subr.mxu0 0.0
  %1404 = vmatpush1.msra.mxu0 0.0
  %1405 = vmatprep.subr.mxu0 0.0
  %1406 = vmatpush1.msra.mxu0 0.0
  %1407 = vmatprep.subr.mxu0 0.0
  %1408 = vmatpush1.msra.mxu0 0.0
  %1409 = vmatprep.subr.mxu0 0.0
  %1410 = vmatpush1.msra.mxu0 0.0
  %1411 = vmatprep.subr.mxu0 0.0
  %1412 = vmatpush1.msra.mxu0 0.0
  %1413 = vmatprep.subr.mxu0 0.0
  %1414 = vmatpush1.msra.mxu0 0.0
  %1415 = vmatprep.subr.mxu0 0.0
  %1416 = vmatpush1.msra.mxu0 0.0
  %1417 = vmatprep.subr.mxu0 0.0
  %1418 = vmatpush1.msra.mxu0 0.0
  %1419 = vmatprep.subr.mxu0 0.0
  %1420 = vmatpush1.msra.mxu0 0.0
  %1421 = vmatprep.subr.mxu0 0.0
  %1422 = vmatpush1.msra.mxu0 0.0
  %1423 = vmatprep.subr.mxu0 0.0
  %1424 = vmatpush1.msra.mxu0 0.0
  %1425 = vmatprep.mubr.f32.mxu0 0.0
  %1426 = vmatmul.mubr.f32.gmra.mrb[0].mxu0 %v1359
  %v1427 = vpop.f32.mrb[0].mxu0
  %v1428 = vadd.f32 0.0, %v1427
  %v1429 = vpop.f32.mrb[0].mxu0
  %v1430 = vadd.f32 0.0, %v1429
  %1431 = vdwg.mxu0
  %1433 = vrot.lane.b32.xlu0 %v1263, 64
  %v1434 = vpop.permute.xlu0 %1433
  %v1435 = vrot.slane %v1434, 2
  %v1437 = vadd.f32 %v1435, %v1428
  %v1438 = vxor.u32 %v1437, 2147483648
  %v1439 = vmul.f32 %v1438, 1.442695
  %v1440 = vpow.pop %v1439
  %v1441 = vadd.f32 %v1440, 1.0
  %v1442 = vrcp.pop %v1441
  %v1443 = vmul.f32 1.0, %v1442
  %v1444 = vrot.slane %v1263, 4
  %v1448 = vunpack.c.l.s4 1983009808
  %v1449 = vunpack.c.0.s8 %v1448
  %v1450 = vlaneseq
  %v1451 = vshrl.u32 %v1450, 7
  %v1452 = vsub.s32 %v1449, %v1451
  %v1453 = vrot.slane %v1428, %v1452
  %1454 = vrot.lane.b32.xlu0 %v1453, 64
  %v1455 = vpop.permute.xlu0 %1454
  %v1457 = vadd.f32 %v1444, %v1455
  %v1458 = vxor.u32 %v1457, 2147483648
  %v1459 = vmul.f32 %v1458, 1.442695
  %v1460 = vpow.pop %v1459
  %v1461 = vadd.f32 %v1460, 1.0
  %v1462 = vrcp.pop %v1461
  %v1463 = vmul.f32 1.0, %v1462
  %v1464 = vadd.f32 %v1430, %v267
  %v1465 = vmul.f32 %v1443, %v1464
  %v1466 = vrot.slane %v1434, 4
  %v1468 = vadd.f32 %v1466, %v1465
  %v1469 = vtanh.pop %v1468
  %v1470 = vsub.f32 1.0, %v1463
  %v1471 = vmul.f32 %v1470, %v1469
  %v1472 = vmul.f32 %v1463, %v1237
  %v1473 = vadd.f32 %v1471, %v1472
  %v1476 = vunpack.c.l.s4 1983009808
  %v1477 = vunpack.c.0.s8 %v1476
  %v1478 = vlaneseq
  %v1479 = vshrl.u32 %v1478, 7
  %v1480 = vsub.s32 %v1477, %v1479
  %v1481 = vrot.slane %v1358, %v1480
  %1482 = vrot.lane.b32.xlu0 %v1481, 64
  %v1483 = vpop.permute.xlu0 %1482
  %1485 = vst.msk [vmem:[%s784] sm:$0x3] %vm290, %v1483
  %v1488 = vunpack.c.l.s4 1983009808
  %v1489 = vunpack.c.0.s8 %v1488
  %v1490 = vlaneseq
  %v1491 = vshrl.u32 %v1490, 7
  %v1492 = vsub.s32 %v1489, %v1491
  %v1493 = vrot.slane %v1473, %v1492
  %1494 = vrot.lane.b32.xlu0 %v1493, 64
  %v1495 = vpop.permute.xlu0 %1494
  %1497 = vst.msk [vmem:[%s771] sm:$0x3] %vm304, %v1495
  %v1498 = vld [vmem:[%s308] sm:$0x3f]
  %v1499 = vld [vmem:[%s306] sm:$0x3f]
  %v1500 = vsel %vm57, %v1483, 0
  %1502 = vmatprep.subr.mxu0 %v21
  %1503 = vmatpush1.msra.mxu0 %v20
  %1504 = vmatprep.subr.mxu0 %v23
  %1505 = vmatpush1.msra.mxu0 %v22
  %1506 = vmatprep.subr.mxu0 %v25
  %1507 = vmatpush1.msra.mxu0 %v24
  %1508 = vmatprep.subr.mxu0 %v27
  %1509 = vmatpush1.msra.mxu0 %v26
  %1510 = vmatprep.subr.mxu0 %v29
  %1511 = vmatpush1.msra.mxu0 %v28
  %1512 = vmatprep.subr.mxu0 %v31
  %1513 = vmatpush1.msra.mxu0 %v30
  %1514 = vmatprep.subr.mxu0 %v33
  %1515 = vmatpush1.msra.mxu0 %v32
  %1516 = vmatprep.subr.mxu0 %v35
  %1517 = vmatpush1.msra.mxu0 %v34
  %1518 = vmatprep.subr.mxu0 0.0
  %1519 = vmatpush1.msra.mxu0 0.0
  %1520 = vmatprep.subr.mxu0 0.0
  %1521 = vmatpush1.msra.mxu0 0.0
  %1522 = vmatprep.subr.mxu0 0.0
  %1523 = vmatpush1.msra.mxu0 0.0
  %1524 = vmatprep.subr.mxu0 0.0
  %1525 = vmatpush1.msra.mxu0 0.0
  %1526 = vmatprep.subr.mxu0 0.0
  %1527 = vmatpush1.msra.mxu0 0.0
  %1528 = vmatprep.subr.mxu0 0.0
  %1529 = vmatpush1.msra.mxu0 0.0
  %1530 = vmatprep.subr.mxu0 0.0
  %1531 = vmatpush1.msra.mxu0 0.0
  %1532 = vmatprep.subr.mxu0 0.0
  %1533 = vmatpush1.msra.mxu0 0.0
  %1534 = vmatprep.subr.mxu0 0.0
  %1535 = vmatpush1.msra.mxu0 0.0
  %1536 = vmatprep.subr.mxu0 0.0
  %1537 = vmatpush1.msra.mxu0 0.0
  %1538 = vmatprep.subr.mxu0 0.0
  %1539 = vmatpush1.msra.mxu0 0.0
  %1540 = vmatprep.subr.mxu0 0.0
  %1541 = vmatpush1.msra.mxu0 0.0
  %1542 = vmatprep.subr.mxu0 0.0
  %1543 = vmatpush1.msra.mxu0 0.0
  %1544 = vmatprep.subr.mxu0 0.0
  %1545 = vmatpush1.msra.mxu0 0.0
  %1546 = vmatprep.subr.mxu0 0.0
  %1547 = vmatpush1.msra.mxu0 0.0
  %1548 = vmatprep.subr.mxu0 0.0
  %1549 = vmatpush1.msra.mxu0 0.0
  %1550 = vmatprep.subr.mxu0 0.0
  %1551 = vmatpush1.msra.mxu0 0.0
  %1552 = vmatprep.subr.mxu0 0.0
  %1553 = vmatpush1.msra.mxu0 0.0
  %1554 = vmatprep.subr.mxu0 0.0
  %1555 = vmatpush1.msra.mxu0 0.0
  %1556 = vmatprep.subr.mxu0 0.0
  %1557 = vmatpush1.msra.mxu0 0.0
  %1558 = vmatprep.subr.mxu0 0.0
  %1559 = vmatpush1.msra.mxu0 0.0
  %1560 = vmatprep.subr.mxu0 0.0
  %1561 = vmatpush1.msra.mxu0 0.0
  %1562 = vmatprep.subr.mxu0 0.0
  %1563 = vmatpush1.msra.mxu0 0.0
  %1564 = vmatprep.subr.mxu0 0.0
  %1565 = vmatpush1.msra.mxu0 0.0
  %1566 = vmatprep.mubr.f32.mxu0 0.0
  %1567 = vmatmul.mubr.f32.gmra.mrb[0].mxu0 %v1500
  %v1568 = vpop.f32.mrb[0].mxu0
  %v1569 = vadd.f32 0.0, %v1568
  %v1570 = vpop.f32.mrb[0].mxu0
  %v1571 = vadd.f32 0.0, %v1570
  %1572 = vdwg.mxu0
  %v1573 = vadd.f32 %v1498, %v1569
  %v1574 = vxor.u32 %v1573, 2147483648
  %v1575 = vmul.f32 %v1574, 1.442695
  %v1576 = vpow.pop %v1575
  %v1577 = vadd.f32 %v1576, 1.0
  %v1578 = vrcp.pop %v1577
  %v1579 = vmul.f32 1.0, %v1578
  %v1580 = vadd.f32 %v1571, %v143
  %v1581 = vmul.f32 %v1579, %v1580
  %v1583 = vrot.slane %v1498, 2
  %v1585 = vadd.f32 %v1583, %v1581
  %v1586 = vtanh.pop %v1585
  %v1587 = vsub.f32 1.0, %v1579
  %1589 = vrot.lane.b32.xlu0 %v1586, 64
  %v1590 = vpop.permute.xlu0 %1589
  %v1592 = vmul.f32 %v1587, %v1590
  %v1593 = vmul.f32 %v1579, %v1358
  %v1594 = vadd.f32 %v1592, %v1593
  %v1595 = vsel %vm57, %v1473, 0
  %1597 = vmatprep.subr.mxu0 %v37
  %1598 = vmatpush1.msra.mxu0 %v36
  %1599 = vmatprep.subr.mxu0 %v39
  %1600 = vmatpush1.msra.mxu0 %v38
  %1601 = vmatprep.subr.mxu0 %v41
  %1602 = vmatpush1.msra.mxu0 %v40
  %1603 = vmatprep.subr.mxu0 %v43
  %1604 = vmatpush1.msra.mxu0 %v42
  %1605 = vmatprep.subr.mxu0 %v45
  %1606 = vmatpush1.msra.mxu0 %v44
  %1607 = vmatprep.subr.mxu0 %v47
  %1608 = vmatpush1.msra.mxu0 %v46
  %1609 = vmatprep.subr.mxu0 %v49
  %1610 = vmatpush1.msra.mxu0 %v48
  %1611 = vmatprep.subr.mxu0 %v51
  %1612 = vmatpush1.msra.mxu0 %v50
  %1613 = vmatprep.subr.mxu0 0.0
  %1614 = vmatpush1.msra.mxu0 0.0
  %1615 = vmatprep.subr.mxu0 0.0
  %1616 = vmatpush1.msra.mxu0 0.0
  %1617 = vmatprep.subr.mxu0 0.0
  %1618 = vmatpush1.msra.mxu0 0.0
  %1619 = vmatprep.subr.mxu0 0.0
  %1620 = vmatpush1.msra.mxu0 0.0
  %1621 = vmatprep.subr.mxu0 0.0
  %1622 = vmatpush1.msra.mxu0 0.0
  %1623 = vmatprep.subr.mxu0 0.0
  %1624 = vmatpush1.msra.mxu0 0.0
  %1625 = vmatprep.subr.mxu0 0.0
  %1626 = vmatpush1.msra.mxu0 0.0
  %1627 = vmatprep.subr.mxu0 0.0
  %1628 = vmatpush1.msra.mxu0 0.0
  %1629 = vmatprep.subr.mxu0 0.0
  %1630 = vmatpush1.msra.mxu0 0.0
  %1631 = vmatprep.subr.mxu0 0.0
  %1632 = vmatpush1.msra.mxu0 0.0
  %1633 = vmatprep.subr.mxu0 0.0
  %1634 = vmatpush1.msra.mxu0 0.0
  %1635 = vmatprep.subr.mxu0 0.0
  %1636 = vmatpush1.msra.mxu0 0.0
  %1637 = vmatprep.subr.mxu0 0.0
  %1638 = vmatpush1.msra.mxu0 0.0
  %1639 = vmatprep.subr.mxu0 0.0
  %1640 = vmatpush1.msra.mxu0 0.0
  %1641 = vmatprep.subr.mxu0 0.0
  %1642 = vmatpush1.msra.mxu0 0.0
  %1643 = vmatprep.subr.mxu0 0.0
  %1644 = vmatpush1.msra.mxu0 0.0
  %1645 = vmatprep.subr.mxu0 0.0
  %1646 = vmatpush1.msra.mxu0 0.0
  %1647 = vmatprep.subr.mxu0 0.0
  %1648 = vmatpush1.msra.mxu0 0.0
  %1649 = vmatprep.subr.mxu0 0.0
  %1650 = vmatpush1.msra.mxu0 0.0
  %1651 = vmatprep.subr.mxu0 0.0
  %1652 = vmatpush1.msra.mxu0 0.0
  %1653 = vmatprep.subr.mxu0 0.0
  %1654 = vmatpush1.msra.mxu0 0.0
  %1655 = vmatprep.subr.mxu0 0.0
  %1656 = vmatpush1.msra.mxu0 0.0
  %1657 = vmatprep.subr.mxu0 0.0
  %1658 = vmatpush1.msra.mxu0 0.0
  %1659 = vmatprep.subr.mxu0 0.0
  %1660 = vmatpush1.msra.mxu0 0.0
  %1661 = vmatprep.mubr.f32.mxu0 0.0
  %1662 = vmatmul.mubr.f32.gmra.mrb[0].mxu0 %v1595
  %v1663 = vpop.f32.mrb[0].mxu0
  %v1664 = vadd.f32 0.0, %v1663
  %v1665 = vpop.f32.mrb[0].mxu0
  %v1666 = vadd.f32 0.0, %v1665
  %1667 = vdwg.mxu0
  %1669 = vrot.lane.b32.xlu0 %v1499, 64
  %v1670 = vpop.permute.xlu0 %1669
  %v1671 = vrot.slane %v1670, 2
  %v1673 = vadd.f32 %v1671, %v1664
  %v1674 = vxor.u32 %v1673, 2147483648
  %v1675 = vmul.f32 %v1674, 1.442695
  %v1676 = vpow.pop %v1675
  %v1677 = vadd.f32 %v1676, 1.0
  %v1678 = vrcp.pop %v1677
  %v1679 = vmul.f32 1.0, %v1678
  %v1680 = vrot.slane %v1499, 4
  %v1684 = vunpack.c.l.s4 1983009808
  %v1685 = vunpack.c.0.s8 %v1684
  %v1686 = vlaneseq
  %v1687 = vshrl.u32 %v1686, 7
  %v1688 = vsub.s32 %v1685, %v1687
  %v1689 = vrot.slane %v1664, %v1688
  %1690 = vrot.lane.b32.xlu0 %v1689, 64
  %v1691 = vpop.permute.xlu0 %1690
  %v1693 = vadd.f32 %v1680, %v1691
  %v1694 = vxor.u32 %v1693, 2147483648
  %v1695 = vmul.f32 %v1694, 1.442695
  %v1696 = vpow.pop %v1695
  %v1697 = vadd.f32 %v1696, 1.0
  %v1698 = vrcp.pop %v1697
  %v1699 = vmul.f32 1.0, %v1698
  %v1700 = vadd.f32 %v1666, %v267
  %v1701 = vmul.f32 %v1679, %v1700
  %v1702 = vrot.slane %v1670, 4
  %v1704 = vadd.f32 %v1702, %v1701
  %v1705 = vtanh.pop %v1704
  %v1706 = vsub.f32 1.0, %v1699
  %v1707 = vmul.f32 %v1706, %v1705
  %v1708 = vmul.f32 %v1699, %v1473
  %v1709 = vadd.f32 %v1707, %v1708
  %v1712 = vunpack.c.l.s4 1983009808
  %v1713 = vunpack.c.0.s8 %v1712
  %v1714 = vlaneseq
  %v1715 = vshrl.u32 %v1714, 7
  %v1716 = vsub.s32 %v1713, %v1715
  %v1717 = vrot.slane %v1594, %v1716
  %1718 = vrot.lane.b32.xlu0 %v1717, 64
  %v1719 = vpop.permute.xlu0 %1718
  %1721 = vst.msk [vmem:[%s544] sm:$0x3] %vm290, %v1719
  %v1724 = vunpack.c.l.s4 1983009808
  %v1725 = vunpack.c.0.s8 %v1724
  %v1726 = vlaneseq
  %v1727 = vshrl.u32 %v1726, 7
  %v1728 = vsub.s32 %v1725, %v1727
  %v1729 = vrot.slane %v1709, %v1728
  %1730 = vrot.lane.b32.xlu0 %v1729, 64
  %v1731 = vpop.permute.xlu0 %1730
  %1733 = vst.msk [vmem:[%s531] sm:$0x3] %vm304, %v1731
  %v1734 = vld [vmem:[%s55] sm:$0x3f]
  %v1735 = vld [vmem:[%s0] sm:$0x3f]
  %v1736 = vsel %vm57, %v1719, 0
  %1738 = vmatprep.subr.mxu0 %v21
  %1739 = vmatpush1.msra.mxu0 %v20
  %1740 = vmatprep.subr.mxu0 %v23
  %1741 = vmatpush1.msra.mxu0 %v22
  %1742 = vmatprep.subr.mxu0 %v25
  %1743 = vmatpush1.msra.mxu0 %v24
  %1744 = vmatprep.subr.mxu0 %v27
  %1745 = vmatpush1.msra.mxu0 %v26
  %1746 = vmatprep.subr.mxu0 %v29
  %1747 = vmatpush1.msra.mxu0 %v28
  %1748 = vmatprep.subr.mxu0 %v31
  %1749 = vmatpush1.msra.mxu0 %v30
  %1750 = vmatprep.subr.mxu0 %v33
  %1751 = vmatpush1.msra.mxu0 %v32
  %1752 = vmatprep.subr.mxu0 %v35
  %1753 = vmatpush1.msra.mxu0 %v34
  %1754 = vmatprep.subr.mxu0 0.0
  %1755 = vmatpush1.msra.mxu0 0.0
  %1756 = vmatprep.subr.mxu0 0.0
  %1757 = vmatpush1.msra.mxu0 0.0
  %1758 = vmatprep.subr.mxu0 0.0
  %1759 = vmatpush1.msra.mxu0 0.0
  %1760 = vmatprep.subr.mxu0 0.0
  %1761 = vmatpush1.msra.mxu0 0.0
  %1762 = vmatprep.subr.mxu0 0.0
  %1763 = vmatpush1.msra.mxu0 0.0
  %1764 = vmatprep.subr.mxu0 0.0
  %1765 = vmatpush1.msra.mxu0 0.0
  %1766 = vmatprep.subr.mxu0 0.0
  %1767 = vmatpush1.msra.mxu0 0.0
  %1768 = vmatprep.subr.mxu0 0.0
  %1769 = vmatpush1.msra.mxu0 0.0
  %1770 = vmatprep.subr.mxu0 0.0
  %1771 = vmatpush1.msra.mxu0 0.0
  %1772 = vmatprep.subr.mxu0 0.0
  %1773 = vmatpush1.msra.mxu0 0.0
  %1774 = vmatprep.subr.mxu0 0.0
  %1775 = vmatpush1.msra.mxu0 0.0
  %1776 = vmatprep.subr.mxu0 0.0
  %1777 = vmatpush1.msra.mxu0 0.0
  %1778 = vmatprep.subr.mxu0 0.0
  %1779 = vmatpush1.msra.mxu0 0.0
  %1780 = vmatprep.subr.mxu0 0.0
  %1781 = vmatpush1.msra.mxu0 0.0
  %1782 = vmatprep.subr.mxu0 0.0
  %1783 = vmatpush1.msra.mxu0 0.0
  %1784 = vmatprep.subr.mxu0 0.0
  %1785 = vmatpush1.msra.mxu0 0.0
  %1786 = vmatprep.subr.mxu0 0.0
  %1787 = vmatpush1.msra.mxu0 0.0
  %1788 = vmatprep.subr.mxu0 0.0
  %1789 = vmatpush1.msra.mxu0 0.0
  %1790 = vmatprep.subr.mxu0 0.0
  %1791 = vmatpush1.msra.mxu0 0.0
  %1792 = vmatprep.subr.mxu0 0.0
  %1793 = vmatpush1.msra.mxu0 0.0
  %1794 = vmatprep.subr.mxu0 0.0
  %1795 = vmatpush1.msra.mxu0 0.0
  %1796 = vmatprep.subr.mxu0 0.0
  %1797 = vmatpush1.msra.mxu0 0.0
  %1798 = vmatprep.subr.mxu0 0.0
  %1799 = vmatpush1.msra.mxu0 0.0
  %1800 = vmatprep.subr.mxu0 0.0
  %1801 = vmatpush1.msra.mxu0 0.0
  %1802 = vmatprep.mubr.f32.mxu0 0.0
  %1803 = vmatmul.mubr.f32.gmra.mrb[0].mxu0 %v1736
  %v1804 = vpop.f32.mrb[0].mxu0
  %v1805 = vadd.f32 0.0, %v1804
  %v1806 = vpop.f32.mrb[0].mxu0
  %v1807 = vadd.f32 0.0, %v1806
  %1808 = vdwg.mxu0
  %v1809 = vadd.f32 %v1734, %v1805
  %v1810 = vxor.u32 %v1809, 2147483648
  %v1811 = vmul.f32 %v1810, 1.442695
  %v1812 = vpow.pop %v1811
  %v1813 = vadd.f32 %v1812, 1.0
  %v1814 = vrcp.pop %v1813
  %v1815 = vmul.f32 1.0, %v1814
  %v1816 = vadd.f32 %v1807, %v143
  %v1817 = vmul.f32 %v1815, %v1816
  %v1819 = vrot.slane %v1734, 2
  %v1821 = vadd.f32 %v1819, %v1817
  %v1822 = vtanh.pop %v1821
  %v1823 = vsub.f32 1.0, %v1815
  %1825 = vrot.lane.b32.xlu0 %v1822, 64
  %v1826 = vpop.permute.xlu0 %1825
  %v1828 = vmul.f32 %v1823, %v1826
  %v1829 = vmul.f32 %v1815, %v1594
  %v1830 = vadd.f32 %v1828, %v1829
  %v1831 = vsel %vm57, %v1709, 0
  %1833 = vmatprep.subr.mxu0 %v37
  %1834 = vmatpush1.msra.mxu0 %v36
  %1835 = vmatprep.subr.mxu0 %v39
  %1836 = vmatpush1.msra.mxu0 %v38
  %1837 = vmatprep.subr.mxu0 %v41
  %1838 = vmatpush1.msra.mxu0 %v40
  %1839 = vmatprep.subr.mxu0 %v43
  %1840 = vmatpush1.msra.mxu0 %v42
  %1841 = vmatprep.subr.mxu0 %v45
  %1842 = vmatpush1.msra.mxu0 %v44
  %1843 = vmatprep.subr.mxu0 %v47
  %1844 = vmatpush1.msra.mxu0 %v46
  %1845 = vmatprep.subr.mxu0 %v49
  %1846 = vmatpush1.msra.mxu0 %v48
  %1847 = vmatprep.subr.mxu0 %v51
  %1848 = vmatpush1.msra.mxu0 %v50
  %1849 = vmatprep.subr.mxu0 0.0
  %1850 = vmatpush1.msra.mxu0 0.0
  %1851 = vmatprep.subr.mxu0 0.0
  %1852 = vmatpush1.msra.mxu0 0.0
  %1853 = vmatprep.subr.mxu0 0.0
  %1854 = vmatpush1.msra.mxu0 0.0
  %1855 = vmatprep.subr.mxu0 0.0
  %1856 = vmatpush1.msra.mxu0 0.0
  %1857 = vmatprep.subr.mxu0 0.0
  %1858 = vmatpush1.msra.mxu0 0.0
  %1859 = vmatprep.subr.mxu0 0.0
  %1860 = vmatpush1.msra.mxu0 0.0
  %1861 = vmatprep.subr.mxu0 0.0
  %1862 = vmatpush1.msra.mxu0 0.0
  %1863 = vmatprep.subr.mxu0 0.0
  %1864 = vmatpush1.msra.mxu0 0.0
  %1865 = vmatprep.subr.mxu0 0.0
  %1866 = vmatpush1.msra.mxu0 0.0
  %1867 = vmatprep.subr.mxu0 0.0
  %1868 = vmatpush1.msra.mxu0 0.0
  %1869 = vmatprep.subr.mxu0 0.0
  %1870 = vmatpush1.msra.mxu0 0.0
  %1871 = vmatprep.subr.mxu0 0.0
  %1872 = vmatpush1.msra.mxu0 0.0
  %1873 = vmatprep.subr.mxu0 0.0
  %1874 = vmatpush1.msra.mxu0 0.0
  %1875 = vmatprep.subr.mxu0 0.0
  %1876 = vmatpush1.msra.mxu0 0.0
  %1877 = vmatprep.subr.mxu0 0.0
  %1878 = vmatpush1.msra.mxu0 0.0
  %1879 = vmatprep.subr.mxu0 0.0
  %1880 = vmatpush1.msra.mxu0 0.0
  %1881 = vmatprep.subr.mxu0 0.0
  %1882 = vmatpush1.msra.mxu0 0.0
  %1883 = vmatprep.subr.mxu0 0.0
  %1884 = vmatpush1.msra.mxu0 0.0
  %1885 = vmatprep.subr.mxu0 0.0
  %1886 = vmatpush1.msra.mxu0 0.0
  %1887 = vmatprep.subr.mxu0 0.0
  %1888 = vmatpush1.msra.mxu0 0.0
  %1889 = vmatprep.subr.mxu0 0.0
  %1890 = vmatpush1.msra.mxu0 0.0
  %1891 = vmatprep.subr.mxu0 0.0
  %1892 = vmatpush1.msra.mxu0 0.0
  %1893 = vmatprep.subr.mxu0 0.0
  %1894 = vmatpush1.msra.mxu0 0.0
  %1895 = vmatprep.subr.mxu0 0.0
  %1896 = vmatpush1.msra.mxu0 0.0
  %1897 = vmatprep.mubr.f32.mxu0 0.0
  %1898 = vmatmul.mubr.f32.gmra.mrb[0].mxu0 %v1831
  %v1899 = vpop.f32.mrb[0].mxu0
  %v1900 = vadd.f32 0.0, %v1899
  %v1901 = vpop.f32.mrb[0].mxu0
  %v1902 = vadd.f32 0.0, %v1901
  %1903 = vdwg.mxu0
  %1905 = vrot.lane.b32.xlu0 %v1735, 64
  %v1906 = vpop.permute.xlu0 %1905
  %v1907 = vrot.slane %v1906, 2
  %v1909 = vadd.f32 %v1907, %v1900
  %v1910 = vxor.u32 %v1909, 2147483648
  %v1911 = vmul.f32 %v1910, 1.442695
  %v1912 = vpow.pop %v1911
  %v1913 = vadd.f32 %v1912, 1.0
  %v1914 = vrcp.pop %v1913
  %v1915 = vmul.f32 1.0, %v1914
  %v1916 = vrot.slane %v1735, 4
  %v1920 = vunpack.c.l.s4 1983009808
  %v1921 = vunpack.c.0.s8 %v1920
  %v1922 = vlaneseq
  %v1923 = vshrl.u32 %v1922, 7
  %v1924 = vsub.s32 %v1921, %v1923
  %v1925 = vrot.slane %v1900, %v1924
  %1926 = vrot.lane.b32.xlu0 %v1925, 64
  %v1927 = vpop.permute.xlu0 %1926
  %v1929 = vadd.f32 %v1916, %v1927
  %v1930 = vxor.u32 %v1929, 2147483648
  %v1931 = vmul.f32 %v1930, 1.442695
  %v1932 = vpow.pop %v1931
  %v1933 = vadd.f32 %v1932, 1.0
  %v1934 = vrcp.pop %v1933
  %v1935 = vmul.f32 1.0, %v1934
  %v1936 = vadd.f32 %v1902, %v267
  %v1937 = vmul.f32 %v1915, %v1936
  %v1938 = vrot.slane %v1906, 4
  %v1940 = vadd.f32 %v1938, %v1937
  %v1941 = vtanh.pop %v1940
  %v1942 = vsub.f32 1.0, %v1935
  %v1943 = vmul.f32 %v1942, %v1941
  %v1944 = vmul.f32 %v1935, %v1709
  %v1945 = vadd.f32 %v1943, %v1944
  %v1948 = vunpack.c.l.s4 1983009808
  %v1949 = vunpack.c.0.s8 %v1948
  %v1950 = vlaneseq
  %v1951 = vshrl.u32 %v1950, 7
  %v1952 = vsub.s32 %v1949, %v1951
  %v1953 = vrot.slane %v1830, %v1952
  %1954 = vrot.lane.b32.xlu0 %v1953, 64
  %v1955 = vpop.permute.xlu0 %1954
  %1957 = vst.msk [vmem:[%s303] sm:$0x3] %vm290, %v1955
  %v1960 = vunpack.c.l.s4 1983009808
  %v1961 = vunpack.c.0.s8 %v1960
  %v1962 = vlaneseq
  %v1963 = vshrl.u32 %v1962, 7
  %v1964 = vsub.s32 %v1961, %v1963
  %v1965 = vrot.slane %v1945, %v1964
  %1966 = vrot.lane.b32.xlu0 %v1965, 64
  %v1967 = vpop.permute.xlu0 %1966
  %1969 = vst.msk [vmem:[%s5] sm:$0x3] %vm304, %v1967
  // Predicated region
  $region22: #{token_indicator_forward.6} parent=0 // pred_check
    _
  $region23: #{token_indicator_forward.6} parent=0 // pred_check_branch
    %1971 = sbr.rel (0) target = $region25
  $region24: #{token_indicator_forward.6} parent=0 // pred_region
    _
  $region25: #{token_indicator_forward.6} parent=0 // pred_fallthru
    _
  // Predicated region
  $region26: #{token_indicator_forward.6} parent=0 // pred_check
    _
  $region27: #{token_indicator_forward.6} parent=0 // pred_check_branch
    %1973 = sbr.rel (0) target = $region29
  $region28: #{token_indicator_forward.6} parent=0 // pred_region
    _
  $region29: #{token_indicator_forward.6} parent=0 // pred_fallthru
    _

// kernel: token_indicator_forward.9
$region0: #{token_indicator_forward.9}
  #allocation0 [shape = 'u32[]', space=smem, size = 0x4, offset = 0x4, fixed_abs, tag = 'smem constant byte address 0x4 - core index']
  #allocation1 [shape = 'u32[144,128]{1,0:T(1,128)}', space=vmem, size = 0x12000, scoped, tag = 'internal scratch']
  %s0 = inlined_call_operand.vmem [shape: f32[16,128], index: 0, kind: input, shape index: {}]
  %s1 = inlined_call_operand.vmem [shape: f32[16,128], index: 1, kind: input, shape index: {}]
  %s2 = inlined_call_operand.vmem [shape: f32[128,128], index: 2, kind: input, shape index: {}]
  %s3 = inlined_call_operand.vmem [shape: f32[1,128], index: 3, kind: input, shape index: {}]
  %s4 = inlined_call_operand.vmem [shape: f32[128,4], index: 4, kind: input, shape index: {}]
  %s5 = inlined_call_operand.vmem [shape: f32[1,4], index: 5, kind: input, shape index: {}]
  %s6 = inlined_call_operand.vmem [shape: f32[128,7], index: 6, kind: input, shape index: {}]
  %s7 = inlined_call_operand.vmem [shape: f32[1,7], index: 7, kind: input, shape index: {}]
  %s8 = inlined_call_operand.vmem [shape: f32[4,7], index: 8, kind: input, shape index: {}]
  %s9 = inlined_call_operand.vmem [shape: f32[16,4], index: 9, kind: output, shape index: {0}]
  %s10 = inlined_call_operand.vmem [shape: f32[16,7], index: 10, kind: output, shape index: {1}]
  %11 = xla_tuple %s9, %s10
  %s12 = sld [smem:[#allocation0]]
  $region54: #{token_indicator_forward.9} parent=0
    _
  %s14 = ssub.s32 1, %s12
  %s15 = scalar_select 0, %s14, %s12
  // Predicated region
  $region2: #{token_indicator_forward.9} parent=0 // pred_check
    _
  $region3: #{token_indicator_forward.9} parent=0 // pred_check_branch
    %17 = sbr.rel (0) target = $region5
  $region4: #{token_indicator_forward.9} parent=0 // pred_region
    _
  $region5: #{token_indicator_forward.9} parent=0 // pred_fallthru
    _
  // Predicated region
  $region6: #{token_indicator_forward.9} parent=0 // pred_check
    _
  $region7: #{token_indicator_forward.9} parent=0 // pred_check_branch
    %19 = sbr.rel (0) target = $region9
  $region8: #{token_indicator_forward.9} parent=0 // pred_region
    _
  $region9: #{token_indicator_forward.9} parent=0 // pred_fallthru
    _
  // Predicated region
  $region10: #{token_indicator_forward.9} parent=0 // pred_check
    _
  $region11: #{token_indicator_forward.9} parent=0 // pred_check_branch
    %21 = sbr.rel (0) target = $region13
  $region12: #{token_indicator_forward.9} parent=0 // pred_region
    _
  $region13: #{token_indicator_forward.9} parent=0 // pred_fallthru
    _
  // Predicated region
  $region14: #{token_indicator_forward.9} parent=0 // pred_check
    _
  $region15: #{token_indicator_forward.9} parent=0 // pred_check_branch
    %23 = sbr.rel (0) target = $region17
  $region16: #{token_indicator_forward.9} parent=0 // pred_region
    _
  $region17: #{token_indicator_forward.9} parent=0 // pred_fallthru
    _
  // Predicated region
  $region18: #{token_indicator_forward.9} parent=0 // pred_check
    _
  $region19: #{token_indicator_forward.9} parent=0 // pred_check_branch
    %25 = sbr.rel (0) target = $region21
  $region20: #{token_indicator_forward.9} parent=0 // pred_region
    _
  $region21: #{token_indicator_forward.9} parent=0 // pred_fallthru
    _
  // Predicated region
  $region22: #{token_indicator_forward.9} parent=0 // pred_check
    _
  $region23: #{token_indicator_forward.9} parent=0 // pred_check_branch
    %27 = sbr.rel (0) target = $region25
  $region24: #{token_indicator_forward.9} parent=0 // pred_region
    _
  $region25: #{token_indicator_forward.9} parent=0 // pred_fallthru
    _
  // Predicated region
  $region26: #{token_indicator_forward.9} parent=0 // pred_check
    _
  $region27: #{token_indicator_forward.9} parent=0 // pred_check_branch
    %29 = sbr.rel (0) target = $region29
  $region28: #{token_indicator_forward.9} parent=0 // pred_region
    _
  $region29: #{token_indicator_forward.9} parent=0 // pred_fallthru
    _
  // Predicated region
  $region30: #{token_indicator_forward.9} parent=0 // pred_check
    _
  $region31: #{token_indicator_forward.9} parent=0 // pred_check_branch
    %31 = sbr.rel (0) target = $region33
  $region32: #{token_indicator_forward.9} parent=0 // pred_region
    _
  $region33: #{token_indicator_forward.9} parent=0 // pred_fallthru
    _
  // Predicated region
  $region34: #{token_indicator_forward.9} parent=0 // pred_check
    _
  $region35: #{token_indicator_forward.9} parent=0 // pred_check_branch
    %33 = sbr.rel (0) target = $region37
  $region36: #{token_indicator_forward.9} parent=0 // pred_region
    _
  $region37: #{token_indicator_forward.9} parent=0 // pred_fallthru
    _
  %v34 = vld [vmem:[%s1] sm:$0xff]
  %v35 = vld [vmem:[%s1 + $0x8] sm:$0xff]
  %v36 = vld [vmem:[%s2] sm:$0xff]
  %v37 = vld [vmem:[%s2 + $0x8] sm:$0xff]
  %v38 = vld [vmem:[%s2 + $0x10] sm:$0xff]
  %v39 = vld [vmem:[%s2 + $0x18] sm:$0xff]
  %v40 = vld [vmem:[%s2 + $0x20] sm:$0xff]
  %v41 = vld [vmem:[%s2 + $0x28] sm:$0xff]
  %v42 = vld [vmem:[%s2 + $0x30] sm:$0xff]
  %v43 = vld [vmem:[%s2 + $0x38] sm:$0xff]
  %v44 = vld [vmem:[%s2 + $0x40] sm:$0xff]
  %v45 = vld [vmem:[%s2 + $0x48] sm:$0xff]
  %v46 = vld [vmem:[%s2 + $0x50] sm:$0xff]
  %v47 = vld [vmem:[%s2 + $0x58] sm:$0xff]
  %v48 = vld [vmem:[%s2 + $0x60] sm:$0xff]
  %v49 = vld [vmem:[%s2 + $0x68] sm:$0xff]
  %v50 = vld [vmem:[%s2 + $0x70] sm:$0xff]
  %v51 = vld [vmem:[%s2 + $0x78] sm:$0xff]
  %v52 = vld [vmem:[%s3] sm:$0x1]
  %v54 = vlaneseq
  %v55 = vshrl.u32 %v54, 7
  %v56 = vsub.s32 0, %v55
  %v57 = vrot.slane %v52, %v56
  %59 = vmatprep.subr.mxu0 0.0
  %60 = vmatpush1.msra.mxu0 %v36
  %61 = vmatprep.subr.mxu0 0.0
  %62 = vmatpush1.msra.mxu0 %v37
  %63 = vmatprep.subr.mxu0 0.0
  %64 = vmatpush1.msra.mxu0 %v38
  %65 = vmatprep.subr.mxu0 0.0
  %66 = vmatpush1.msra.mxu0 %v39
  %67 = vmatprep.subr.mxu0 0.0
  %68 = vmatpush1.msra.mxu0 %v40
  %69 = vmatprep.subr.mxu0 0.0
  %70 = vmatpush1.msra.mxu0 %v41
  %71 = vmatprep.subr.mxu0 0.0
  %72 = vmatpush1.msra.mxu0 %v42
  %73 = vmatprep.subr.mxu0 0.0
  %74 = vmatpush1.msra.mxu0 %v43
  %75 = vmatprep.subr.mxu0 0.0
  %76 = vmatpush1.msra.mxu0 %v44
  %77 = vmatprep.subr.mxu0 0.0
  %78 = vmatpush1.msra.mxu0 %v45
  %79 = vmatprep.subr.mxu0 0.0
  %80 = vmatpush1.msra.mxu0 %v46
  %81 = vmatprep.subr.mxu0 0.0
  %82 = vmatpush1.msra.mxu0 %v47
  %83 = vmatprep.subr.mxu0 0.0
  %84 = vmatpush1.msra.mxu0 %v48
  %85 = vmatprep.subr.mxu0 0.0
  %86 = vmatpush1.msra.mxu0 %v49
  %87 = vmatprep.subr.mxu0 0.0
  %88 = vmatpush1.msra.mxu0 %v50
  %89 = vmatprep.subr.mxu0 0.0
  %90 = vmatpush1.msra.mxu0 %v51
  %91 = vmatprep.subr.mxu0 0.0
  %92 = vmatpush1.msra.mxu0 0.0
  %93 = vmatprep.subr.mxu0 0.0
  %94 = vmatpush1.msra.mxu0 0.0
  %95 = vmatprep.subr.mxu0 0.0
  %96 = vmatpush1.msra.mxu0 0.0
  %97 = vmatprep.subr.mxu0 0.0
  %98 = vmatpush1.msra.mxu0 0.0
  %99 = vmatprep.subr.mxu0 0.0
  %100 = vmatpush1.msra.mxu0 0.0
  %101 = vmatprep.subr.mxu0 0.0
  %102 = vmatpush1.msra.mxu0 0.0
  %103 = vmatprep.subr.mxu0 0.0
  %104 = vmatpush1.msra.mxu0 0.0
  %105 = vmatprep.subr.mxu0 0.0
  %106 = vmatpush1.msra.mxu0 0.0
  %107 = vmatprep.subr.mxu0 0.0
  %108 = vmatpush1.msra.mxu0 0.0
  %109 = vmatprep.subr.mxu0 0.0
  %110 = vmatpush1.msra.mxu0 0.0
  %111 = vmatprep.subr.mxu0 0.0
  %112 = vmatpush1.msra.mxu0 0.0
  %113 = vmatprep.subr.mxu0 0.0
  %114 = vmatpush1.msra.mxu0 0.0
  %115 = vmatprep.subr.mxu0 0.0
  %116 = vmatpush1.msra.mxu0 0.0
  %117 = vmatprep.subr.mxu0 0.0
  %118 = vmatpush1.msra.mxu0 0.0
  %119 = vmatprep.subr.mxu0 0.0
  %120 = vmatpush1.msra.mxu0 0.0
  %121 = vmatprep.subr.mxu0 0.0
  %122 = vmatpush1.msra.mxu0 0.0
  %123 = vmatprep.mubr.f32.mxu0 0.0
  %124 = vmatmul.mubr.f32.gmra.mrb[0].mxu0 %v34
  %v125 = vpop.f32.mrb[0].mxu0
  %v126 = vadd.f32 %v57, %v125
  %v127 = vpop.f32.mrb[0].mxu0
  %128 = vmatprep.mubr.f32.mxu0 0.0
  %129 = vmatmul.mubr.f32.gmra.mrb[0].mxu0 %v35
  %v130 = vpop.f32.mrb[0].mxu0
  %v131 = vadd.f32 %v57, %v130
  %v132 = vpop.f32.mrb[0].mxu0
  %133 = vdwg.mxu0
  %v134 = vld [vmem:[%s0] sm:$0xff]
  %v135 = vld [vmem:[%s0 + $0x8] sm:$0xff]
  %v136 = vld [vmem:[%s4] sm:$0xff]
  %v137 = vld [vmem:[%s4 + $0x8] sm:$0xff]
  %v138 = vld [vmem:[%s4 + $0x10] sm:$0xff]
  %v139 = vld [vmem:[%s4 + $0x18] sm:$0xff]
  %v140 = vld [vmem:[%s4 + $0x20] sm:$0xff]
  %v141 = vld [vmem:[%s4 + $0x28] sm:$0xff]
  %v142 = vld [vmem:[%s4 + $0x30] sm:$0xff]
  %v143 = vld [vmem:[%s4 + $0x38] sm:$0xff]
  %v144 = vld [vmem:[%s4 + $0x40] sm:$0xff]
  %v145 = vld [vmem:[%s4 + $0x48] sm:$0xff]
  %v146 = vld [vmem:[%s4 + $0x50] sm:$0xff]
  %v147 = vld [vmem:[%s4 + $0x58] sm:$0xff]
  %v148 = vld [vmem:[%s4 + $0x60] sm:$0xff]
  %v149 = vld [vmem:[%s4 + $0x68] sm:$0xff]
  %v150 = vld [vmem:[%s4 + $0x70] sm:$0xff]
  %v151 = vld [vmem:[%s4 + $0x78] sm:$0xff]
  %v152 = vld [vmem:[%s5] sm:$0x1]
  %v154 = vlaneseq
  %v155 = vshrl.u32 %v154, 7
  %v156 = vsub.s32 0, %v155
  %v157 = vrot.slane %v152, %v156
  %159 = vmatprep.subr.mxu0 0.0
  %160 = vmatpush1.msra.mxu0 %v136
  %161 = vmatprep.subr.mxu0 0.0
  %162 = vmatpush1.msra.mxu0 %v137
  %163 = vmatprep.subr.mxu0 0.0
  %164 = vmatpush1.msra.mxu0 %v138
  %165 = vmatprep.subr.mxu0 0.0
  %166 = vmatpush1.msra.mxu0 %v139
  %167 = vmatprep.subr.mxu0 0.0
  %168 = vmatpush1.msra.mxu0 %v140
  %169 = vmatprep.subr.mxu0 0.0
  %170 = vmatpush1.msra.mxu0 %v141
  %171 = vmatprep.subr.mxu0 0.0
  %172 = vmatpush1.msra.mxu0 %v142
  %173 = vmatprep.subr.mxu0 0.0
  %174 = vmatpush1.msra.mxu0 %v143
  %175 = vmatprep.subr.mxu0 0.0
  %176 = vmatpush1.msra.mxu0 %v144
  %177 = vmatprep.subr.mxu0 0.0
  %178 = vmatpush1.msra.mxu0 %v145
  %179 = vmatprep.subr.mxu0 0.0
  %180 = vmatpush1.msra.mxu0 %v146
  %181 = vmatprep.subr.mxu0 0.0
  %182 = vmatpush1.msra.mxu0 %v147
  %183 = vmatprep.subr.mxu0 0.0
  %184 = vmatpush1.msra.mxu0 %v148
  %185 = vmatprep.subr.mxu0 0.0
  %186 = vmatpush1.msra.mxu0 %v149
  %187 = vmatprep.subr.mxu0 0.0
  %188 = vmatpush1.msra.mxu0 %v150
  %189 = vmatprep.subr.mxu0 0.0
  %190 = vmatpush1.msra.mxu0 %v151
  %191 = vmatprep.subr.mxu0 0.0
  %192 = vmatpush1.msra.mxu0 0.0
  %193 = vmatprep.subr.mxu0 0.0
  %194 = vmatpush1.msra.mxu0 0.0
  %195 = vmatprep.subr.mxu0 0.0
  %196 = vmatpush1.msra.mxu0 0.0
  %197 = vmatprep.subr.mxu0 0.0
  %198 = vmatpush1.msra.mxu0 0.0
  %199 = vmatprep.subr.mxu0 0.0
  %200 = vmatpush1.msra.mxu0 0.0
  %201 = vmatprep.subr.mxu0 0.0
  %202 = vmatpush1.msra.mxu0 0.0
  %203 = vmatprep.subr.mxu0 0.0
  %204 = vmatpush1.msra.mxu0 0.0
  %205 = vmatprep.subr.mxu0 0.0
  %206 = vmatpush1.msra.mxu0 0.0
  %207 = vmatprep.subr.mxu0 0.0
  %208 = vmatpush1.msra.mxu0 0.0
  %209 = vmatprep.subr.mxu0 0.0
  %210 = vmatpush1.msra.mxu0 0.0
  %211 = vmatprep.subr.mxu0 0.0
  %212 = vmatpush1.msra.mxu0 0.0
  %213 = vmatprep.subr.mxu0 0.0
  %214 = vmatpush1.msra.mxu0 0.0
  %215 = vmatprep.subr.mxu0 0.0
  %216 = vmatpush1.msra.mxu0 0.0
  %217 = vmatprep.subr.mxu0 0.0
  %218 = vmatpush1.msra.mxu0 0.0
  %219 = vmatprep.subr.mxu0 0.0
  %220 = vmatpush1.msra.mxu0 0.0
  %221 = vmatprep.subr.mxu0 0.0
  %222 = vmatpush1.msra.mxu0 0.0
  %223 = vmatprep.mubr.f32.mxu0 0.0
  %224 = vmatmul.mubr.f32.gmra.mrb[0].mxu0 %v134
  %v225 = vpop.f32.mrb[0].mxu0
  %v226 = vadd.f32 %v157, %v225
  %v227 = vpop.f32.mrb[0].mxu0
  %228 = vmatprep.mubr.f32.mxu0 0.0
  %229 = vmatmul.mubr.f32.gmra.mrb[0].mxu0 %v135
  %v230 = vpop.f32.mrb[0].mxu0
  %v231 = vadd.f32 %v157, %v230
  %v232 = vpop.f32.mrb[0].mxu0
  %233 = vdwg.mxu0
  %v234 = vld [vmem:[%s6] sm:$0xff]
  %v235 = vld [vmem:[%s6 + $0x8] sm:$0xff]
  %v236 = vld [vmem:[%s6 + $0x10] sm:$0xff]
  %v237 = vld [vmem:[%s6 + $0x18] sm:$0xff]
  %v238 = vld [vmem:[%s6 + $0x20] sm:$0xff]
  %v239 = vld [vmem:[%s6 + $0x28] sm:$0xff]
  %v240 = vld [vmem:[%s6 + $0x30] sm:$0xff]
  %v241 = vld [vmem:[%s6 + $0x38] sm:$0xff]
  %v242 = vld [vmem:[%s6 + $0x40] sm:$0xff]
  %v243 = vld [vmem:[%s6 + $0x48] sm:$0xff]
  %v244 = vld [vmem:[%s6 + $0x50] sm:$0xff]
  %v245 = vld [vmem:[%s6 + $0x58] sm:$0xff]
  %v246 = vld [vmem:[%s6 + $0x60] sm:$0xff]
  %v247 = vld [vmem:[%s6 + $0x68] sm:$0xff]
  %v248 = vld [vmem:[%s6 + $0x70] sm:$0xff]
  %v249 = vld [vmem:[%s6 + $0x78] sm:$0xff]
  %v250 = vld [vmem:[%s7] sm:$0x1]
  %v252 = vlaneseq
  %v253 = vshrl.u32 %v252, 7
  %v254 = vsub.s32 0, %v253
  %v255 = vrot.slane %v250, %v254
  %257 = vmatprep.subr.mxu0 0.0
  %258 = vmatpush1.msra.mxu0 %v234
  %259 = vmatprep.subr.mxu0 0.0
  %260 = vmatpush1.msra.mxu0 %v235
  %261 = vmatprep.subr.mxu0 0.0
  %262 = vmatpush1.msra.mxu0 %v236
  %263 = vmatprep.subr.mxu0 0.0
  %264 = vmatpush1.msra.mxu0 %v237
  %265 = vmatprep.subr.mxu0 0.0
  %266 = vmatpush1.msra.mxu0 %v238
  %267 = vmatprep.subr.mxu0 0.0
  %268 = vmatpush1.msra.mxu0 %v239
  %269 = vmatprep.subr.mxu0 0.0
  %270 = vmatpush1.msra.mxu0 %v240
  %271 = vmatprep.subr.mxu0 0.0
  %272 = vmatpush1.msra.mxu0 %v241
  %273 = vmatprep.subr.mxu0 0.0
  %274 = vmatpush1.msra.mxu0 %v242
  %275 = vmatprep.subr.mxu0 0.0
  %276 = vmatpush1.msra.mxu0 %v243
  %277 = vmatprep.subr.mxu0 0.0
  %278 = vmatpush1.msra.mxu0 %v244
  %279 = vmatprep.subr.mxu0 0.0
  %280 = vmatpush1.msra.mxu0 %v245
  %281 = vmatprep.subr.mxu0 0.0
  %282 = vmatpush1.msra.mxu0 %v246
  %283 = vmatprep.subr.mxu0 0.0
  %284 = vmatpush1.msra.mxu0 %v247
  %285 = vmatprep.subr.mxu0 0.0
  %286 = vmatpush1.msra.mxu0 %v248
  %287 = vmatprep.subr.mxu0 0.0
  %288 = vmatpush1.msra.mxu0 %v249
  %289 = vmatprep.subr.mxu0 0.0
  %290 = vmatpush1.msra.mxu0 0.0
  %291 = vmatprep.subr.mxu0 0.0
  %292 = vmatpush1.msra.mxu0 0.0
  %293 = vmatprep.subr.mxu0 0.0
  %294 = vmatpush1.msra.mxu0 0.0
  %295 = vmatprep.subr.mxu0 0.0
  %296 = vmatpush1.msra.mxu0 0.0
  %297 = vmatprep.subr.mxu0 0.0
  %298 = vmatpush1.msra.mxu0 0.0
  %299 = vmatprep.subr.mxu0 0.0
  %300 = vmatpush1.msra.mxu0 0.0
  %301 = vmatprep.subr.mxu0 0.0
  %302 = vmatpush1.msra.mxu0 0.0
  %303 = vmatprep.subr.mxu0 0.0
  %304 = vmatpush1.msra.mxu0 0.0
  %305 = vmatprep.subr.mxu0 0.0
  %306 = vmatpush1.msra.mxu0 0.0
  %307 = vmatprep.subr.mxu0 0.0
  %308 = vmatpush1.msra.mxu0 0.0
  %309 = vmatprep.subr.mxu0 0.0
  %310 = vmatpush1.msra.mxu0 0.0
  %311 = vmatprep.subr.mxu0 0.0
  %312 = vmatpush1.msra.mxu0 0.0
  %313 = vmatprep.subr.mxu0 0.0
  %314 = vmatpush1.msra.mxu0 0.0
  %315 = vmatprep.subr.mxu0 0.0
  %316 = vmatpush1.msra.mxu0 0.0
  %317 = vmatprep.subr.mxu0 0.0
  %318 = vmatpush1.msra.mxu0 0.0
  %319 = vmatprep.subr.mxu0 0.0
  %320 = vmatpush1.msra.mxu0 0.0
  %321 = vmatprep.mubr.f32.mxu0 0.0
  %322 = vmatmul.mubr.f32.gmra.mrb[0].mxu0 %v126
  %v323 = vpop.f32.mrb[0].mxu0
  %v324 = vadd.f32 %v255, %v323
  %v325 = vpop.f32.mrb[0].mxu0
  %326 = vmatprep.mubr.f32.mxu0 0.0
  %327 = vmatmul.mubr.f32.gmra.mrb[0].mxu0 %v131
  %v328 = vpop.f32.mrb[0].mxu0
  %v329 = vadd.f32 %v255, %v328
  %v330 = vpop.f32.mrb[0].mxu0
  %331 = vdwg.mxu0
  %vm332 = vcmask 31744
  %v333 = vsel %vm332, %v226, -inf
  %334 = vmax.xlane.f32.xlu0 %v333
  %v335 = vpop.xlane.xlu0 %334
  %v336 = vsel %vm332, %v231, -inf
  %337 = vmax.xlane.f32.xlu0 %v336
  %v338 = vpop.xlane.xlu0 %337
  %v339 = vsub.f32 %v226, %v335
  %v340 = vsub.f32 %v231, %v338
  %v341 = vmul.f32 %v339, 1.442695
  %v342 = vpow.pop %v341
  %v343 = vmul.f32 %v340, 1.442695
  %v344 = vpow.pop %v343
  %v345 = vsel %vm332, %v342, 0.0
  %346 = vadd.xlane.f32.xlu0 %v345
  %v347 = vpop.xlane.xlu0 %346
  %v348 = vsel %vm332, %v344, 0.0
  %349 = vadd.xlane.f32.xlu0 %v348
  %v350 = vpop.xlane.xlu0 %349
  %v351 = vrcp.pop %v347
  %v352 = vrcp.pop %v350
  %v353 = vmul.f32 %v342, %v351
  %v354 = vmul.f32 %v344, %v352
  %vm355 = vcmask 56320
  %v356 = vsel %vm355, %v324, -inf
  %357 = vmax.xlane.f32.xlu0 %v356
  %v358 = vpop.xlane.xlu0 %357
  %v359 = vsel %vm355, %v329, -inf
  %360 = vmax.xlane.f32.xlu0 %v359
  %v361 = vpop.xlane.xlu0 %360
  %v362 = vsub.f32 %v324, %v358
  %v363 = vsub.f32 %v329, %v361
  %v364 = vmul.f32 %v362, 1.442695
  %v365 = vpow.pop %v364
  %v366 = vmul.f32 %v363, 1.442695
  %v367 = vpow.pop %v366
  %v368 = vsel %vm355, %v365, 0.0
  %369 = vadd.xlane.f32.xlu0 %v368
  %v370 = vpop.xlane.xlu0 %369
  %v371 = vsel %vm355, %v367, 0.0
  %372 = vadd.xlane.f32.xlu0 %v371
  %v373 = vpop.xlane.xlu0 %372
  %v374 = vrcp.pop %v370
  %v375 = vrcp.pop %v373
  %v376 = vmul.f32 %v365, %v374
  %v377 = vmul.f32 %v367, %v375
  %v378 = vmul.f32 %v353, %v353
  %v379 = vmul.f32 %v354, %v354
  %v380 = vsel %vm332, %v378, 0.0
  %381 = vadd.xlane.f32.xlu0 %v380
  %v382 = vpop.xlane.xlu0 %381
  %v383 = vsel %vm332, %v379, 0.0
  %384 = vadd.xlane.f32.xlu0 %v383
  %v385 = vpop.xlane.xlu0 %384
  %v386 = vsub.f32 1.0, %v382
  %v387 = vsub.f32 1.0, %v385
  %v388 = vmul.f32 %v386, 0.5
  %v389 = vmul.f32 %v387, 0.5
  %v390 = vld [vmem:[%s8] sm:$0xf]
  %392 = vset.pattern.permute.xlu0 0
  %393 = vperm.xlu0 %392, %v226
  %v394 = vpop.permute.xlu0 %393
  %397 = vset.pattern.permute.xlu0 0
  %398 = vperm.xlu0 %397, %v231
  %v399 = vpop.permute.xlu0 %398
  %v401 = vlaneseq
  %v402 = vshrl.u32 %v401, 7
  %v403 = vsub.s32 0, %v402
  %v404 = vrot.slane %v390, %v403
  %v405 = vmul.f32 %v394, %v404
  %v406 = vmul.f32 %v399, %v404
  %v407 = vadd.f32 %v405, 0.0
  %v408 = vadd.f32 %v406, 0.0
  %409 = vset.pattern.permute.xlu0 1
  %410 = vperm.xlu0 %409, %v226
  %v411 = vpop.permute.xlu0 %410
  %413 = vset.pattern.permute.xlu0 1
  %414 = vperm.xlu0 %413, %v231
  %v415 = vpop.permute.xlu0 %414
  %v417 = vlaneseq
  %v418 = vshrl.u32 %v417, 7
  %v419 = vsub.s32 1, %v418
  %v420 = vrot.slane %v390, %v419
  %v421 = vmul.f32 %v411, %v420
  %v422 = vmul.f32 %v415, %v420
  %v423 = vadd.f32 %v407, %v421
  %v424 = vadd.f32 %v408, %v422
  %425 = vset.pattern.permute.xlu0 2
  %426 = vperm.xlu0 %425, %v226
  %v427 = vpop.permute.xlu0 %426
  %429 = vset.pattern.permute.xlu0 2
  %430 = vperm.xlu0 %429, %v231
  %v431 = vpop.permute.xlu0 %430
  %v433 = vlaneseq
  %v434 = vshrl.u32 %v433, 7
  %v435 = vsub.s32 2, %v434
  %v436 = vrot.slane %v390, %v435
  %v437 = vmul.f32 %v427, %v436
  %v438 = vmul.f32 %v431, %v436
  %v439 = vadd.f32 %v423, %v437
  %v440 = vadd.f32 %v424, %v438
  %441 = vset.pattern.permute.xlu0 3
  %442 = vperm.xlu0 %441, %v226
  %v443 = vpop.permute.xlu0 %442
  %445 = vset.pattern.permute.xlu0 3
  %446 = vperm.xlu0 %445, %v231
  %v447 = vpop.permute.xlu0 %446
  %v449 = vlaneseq
  %v450 = vshrl.u32 %v449, 7
  %v451 = vsub.s32 3, %v450
  %v452 = vrot.slane %v390, %v451
  %v453 = vmul.f32 %v443, %v452
  %v454 = vmul.f32 %v447, %v452
  %v455 = vadd.f32 %v439, %v453
  %v456 = vadd.f32 %v440, %v454
  %457 = vst.msk [vmem:[%s9] sm:$0xff] %vm332, %v226
  %458 = vst.msk [vmem:[%s9 + $0x8] sm:$0xff] %vm332, %v231
  %v459 = vmul.f32 %v388, %v455
  %v460 = vmul.f32 %v389, %v456
  %v461 = vsub.f32 1.0, %v388
  %v462 = vsub.f32 1.0, %v389
  %v463 = vmul.f32 %v461, %v376
  %v464 = vmul.f32 %v462, %v377
  %v465 = vadd.f32 %v459, %v463
  %v466 = vadd.f32 %v460, %v464
  %467 = vst.msk [vmem:[%s10] sm:$0xff] %vm355, %v465
  %468 = vst.msk [vmem:[%s10 + $0x8] sm:$0xff] %vm355, %v466
  // Predicated region
  $region38: #{token_indicator_forward.9} parent=0 // pred_check
    _
  $region39: #{token_indicator_forward.9} parent=0 // pred_check_branch
    %470 = sbr.rel (0) target = $region41
  $region40: #{token_indicator_forward.9} parent=0 // pred_region
    _
  $region41: #{token_indicator_forward.9} parent=0 // pred_fallthru
    _
  // Predicated region
  $region42: #{token_indicator_forward.9} parent=0 // pred_check
    _
  $region43: #{token_indicator_forward.9} parent=0 // pred_check_branch
    %472 = sbr.rel (0) target = $region45
  $region44: #{token_indicator_forward.9} parent=0 // pred_region
    _
  $region45: #{token_indicator_forward.9} parent=0 // pred_fallthru
    _
  // Predicated region
  $region46: #{token_indicator_forward.9} parent=0 // pred_check
    _
  $region47: #{token_indicator_forward.9} parent=0 // pred_check_branch
    %474 = sbr.rel (0) target = $region49
  $region48: #{token_indicator_forward.9} parent=0 // pred_region
    _
  $region49: #{token_indicator_forward.9} parent=0 // pred_fallthru
    _
  // Predicated region
  $region50: #{token_indicator_forward.9} parent=0 // pred_check
    _
  $region51: #{token_indicator_forward.9} parent=0 // pred_check_branch
    %476 = sbr.rel (0) target = $region53
  $region52: #{token_indicator_forward.9} parent=0 // pred_region
    _
  $region53: #{token_indicator_forward.9} parent=0 // pred_fallthru
    _

// kernel: token_indicator_forward.8
$region0: #{token_indicator_forward.8}
  #allocation0 [shape = 'u32[]', space=smem, size = 0x4, offset = 0x4, fixed_abs, tag = 'smem constant byte address 0x4 - core index']
  #allocation1 [shape = 'u32[144,128]{1,0:T(1,128)}', space=vmem, size = 0x12000, scoped, tag = 'internal scratch']
  #allocation2 [shape = 'f32[8,2,128]{2,1,0:T(2,128)}', space=vmem, size = 0x2000, scoped, tag = 'scratch operand']
  #allocation3 [shape = 'f32[8,2,128]{2,1,0:T(2,128)}', space=vmem, size = 0x2000, scoped, tag = 'scratch operand']
  %s0 = inlined_call_operand.vmem [shape: f32[8,2,384], index: 0, kind: input, shape index: {}]
  %s1 = inlined_call_operand.vmem [shape: f32[64,192], index: 1, kind: input, shape index: {}]
  %s2 = inlined_call_operand.vmem [shape: f32[64,192], index: 2, kind: input, shape index: {}]
  %s3 = inlined_call_operand.vmem [shape: f32[1,64], index: 3, kind: input, shape index: {}]
  %s4 = inlined_call_operand.vmem [shape: f32[1,64], index: 4, kind: input, shape index: {}]
  %s5 = inlined_call_operand.vmem [shape: f32[128,128], index: 5, kind: input, shape index: {}]
  %s6 = inlined_call_operand.vmem [shape: f32[8,2,128], index: 6, kind: output, shape index: {}]
  %s7 = sld [smem:[#allocation0]]
  $region34: #{token_indicator_forward.8} parent=0
    _
  %s9 = ssub.s32 1, %s7
  %s10 = scalar_select 0, %s9, %s7
  // Predicated region
  $region2: #{token_indicator_forward.8} parent=0 // pred_check
    _
  $region3: #{token_indicator_forward.8} parent=0 // pred_check_branch
    %12 = sbr.rel (0) target = $region5
  $region4: #{token_indicator_forward.8} parent=0 // pred_region
    _
  $region5: #{token_indicator_forward.8} parent=0 // pred_fallthru
    _
  // Predicated region
  $region6: #{token_indicator_forward.8} parent=0 // pred_check
    _
  $region7: #{token_indicator_forward.8} parent=0 // pred_check_branch
    %14 = sbr.rel (0) target = $region9
  $region8: #{token_indicator_forward.8} parent=0 // pred_region
    _
  $region9: #{token_indicator_forward.8} parent=0 // pred_fallthru
    _
  // Predicated region
  $region10: #{token_indicator_forward.8} parent=0 // pred_check
    _
  $region11: #{token_indicator_forward.8} parent=0 // pred_check_branch
    %16 = sbr.rel (0) target = $region13
  $region12: #{token_indicator_forward.8} parent=0 // pred_region
    _
  $region13: #{token_indicator_forward.8} parent=0 // pred_fallthru
    _
  // Predicated region
  $region14: #{token_indicator_forward.8} parent=0 // pred_check
    _
  $region15: #{token_indicator_forward.8} parent=0 // pred_check_branch
    %18 = sbr.rel (0) target = $region17
  $region16: #{token_indicator_forward.8} parent=0 // pred_region
    _
  $region17: #{token_indicator_forward.8} parent=0 // pred_fallthru
    _
  // Predicated region
  $region18: #{token_indicator_forward.8} parent=0 // pred_check
    _
  $region19: #{token_indicator_forward.8} parent=0 // pred_check_branch
    %20 = sbr.rel (0) target = $region21
  $region20: #{token_indicator_forward.8} parent=0 // pred_region
    _
  $region21: #{token_indicator_forward.8} parent=0 // pred_fallthru
    _
  // Predicated region
  $region22: #{token_indicator_forward.8} parent=0 // pred_check
    _
  $region23: #{token_indicator_forward.8} parent=0 // pred_check_branch
    %22 = sbr.rel (0) target = $region25
  $region24: #{token_indicator_forward.8} parent=0 // pred_region
    _
  $region25: #{token_indicator_forward.8} parent=0 // pred_fallthru
    _
  %v23 = vld [vmem:[%s1] sm:$0xff]
  %v24 = vld [vmem:[%s1 + $0x8] sm:$0xff]
  %v25 = vld [vmem:[%s1 + $0x10] sm:$0xff]
  %v26 = vld [vmem:[%s1 + $0x18] sm:$0xff]
  %v27 = vld [vmem:[%s1 + $0x20] sm:$0xff]
  %v28 = vld [vmem:[%s1 + $0x28] sm:$0xff]
  %v29 = vld [vmem:[%s1 + $0x30] sm:$0xff]
  %v30 = vld [vmem:[%s1 + $0x38] sm:$0xff]
  %v31 = vld [vmem:[%s1 + $0x40] sm:$0xff]
  %v32 = vld [vmem:[%s1 + $0x48] sm:$0xff]
  %v33 = vld [vmem:[%s1 + $0x50] sm:$0xff]
  %v34 = vld [vmem:[%s1 + $0x58] sm:$0xff]
  %v35 = vld [vmem:[%s1 + $0x60] sm:$0xff]
  %v36 = vld [vmem:[%s1 + $0x68] sm:$0xff]
  %v37 = vld [vmem:[%s1 + $0x70] sm:$0xff]
  %v38 = vld [vmem:[%s1 + $0x78] sm:$0xff]
  %v39 = vld [vmem:[%s2] sm:$0xff]
  %v40 = vld [vmem:[%s2 + $0x8] sm:$0xff]
  %v41 = vld [vmem:[%s2 + $0x10] sm:$0xff]
  %v42 = vld [vmem:[%s2 + $0x18] sm:$0xff]
  %v43 = vld [vmem:[%s2 + $0x20] sm:$0xff]
  %v44 = vld [vmem:[%s2 + $0x28] sm:$0xff]
  %v45 = vld [vmem:[%s2 + $0x30] sm:$0xff]
  %v46 = vld [vmem:[%s2 + $0x38] sm:$0xff]
  %v47 = vld [vmem:[%s2 + $0x40] sm:$0xff]
  %v48 = vld [vmem:[%s2 + $0x48] sm:$0xff]
  %v49 = vld [vmem:[%s2 + $0x50] sm:$0xff]
  %v50 = vld [vmem:[%s2 + $0x58] sm:$0xff]
  %v51 = vld [vmem:[%s2 + $0x60] sm:$0xff]
  %v52 = vld [vmem:[%s2 + $0x68] sm:$0xff]
  %v53 = vld [vmem:[%s2 + $0x70] sm:$0xff]
  %v54 = vld [vmem:[%s2 + $0x78] sm:$0xff]
  %v55 = vld [vmem:[%s3] sm:$0x1]
  %v56 = vld [vmem:[%s4] sm:$0x1]
  %v57 = vld [vmem:[%s0] sm:$0x3f]
  %s58 = scalar_lea.vmem %s0, 42
  %v59 = vld [vmem:[%s58] sm:$0x3f]
  %vm60 = vcmask 523264
  %v62 = vsel %vm60, 0.0, 0
  %64 = vmatprep.subr.mxu0 %v24
  %65 = vmatpush1.msra.mxu0 %v23
  %66 = vmatprep.subr.mxu0 %v26
  %67 = vmatpush1.msra.mxu0 %v25
  %68 = vmatprep.subr.mxu0 %v28
  %69 = vmatpush1.msra.mxu0 %v27
  %70 = vmatprep.subr.mxu0 %v30
  %71 = vmatpush1.msra.mxu0 %v29
  %72 = vmatprep.subr.mxu0 %v32
  %73 = vmatpush1.msra.mxu0 %v31
  %74 = vmatprep.subr.mxu0 %v34
  %75 = vmatpush1.msra.mxu0 %v33
  %76 = vmatprep.subr.mxu0 %v36
  %77 = vmatpush1.msra.mxu0 %v35
  %78 = vmatprep.subr.mxu0 %v38
  %79 = vmatpush1.msra.mxu0 %v37
  %80 = vmatprep.subr.mxu0 0.0
  %81 = vmatpush1.msra.mxu0 0.0
  %82 = vmatprep.subr.mxu0 0.0
  %83 = vmatpush1.msra.mxu0 0.0
  %84 = vmatprep.subr.mxu0 0.0
  %85 = vmatpush1.msra.mxu0 0.0
  %86 = vmatprep.subr.mxu0 0.0
  %87 = vmatpush1.msra.mxu0 0.0
  %88 = vmatprep.subr.mxu0 0.0
  %89 = vmatpush1.msra.mxu0 0.0
  %90 = vmatprep.subr.mxu0 0.0
  %91 = vmatpush1.msra.mxu0 0.0
  %92 = vmatprep.subr.mxu0 0.0
  %93 = vmatpush1.msra.mxu0 0.0
  %94 = vmatprep.subr.mxu0 0.0
  %95 = vmatpush1.msra.mxu0 0.0
  %96 = vmatprep.subr.mxu0 0.0
  %97 = vmatpush1.msra.mxu0 0.0
  %98 = vmatprep.subr.mxu0 0.0
  %99 = vmatpush1.msra.mxu0 0.0
  %100 = vmatprep.subr.mxu0 0.0
  %101 = vmatpush1.msra.mxu0 0.0
  %102 = vmatprep.subr.mxu0 0.0
  %103 = vmatpush1.msra.mxu0 0.0
  %104 = vmatprep.subr.mxu0 0.0
  %105 = vmatpush1.msra.mxu0 0.0
  %106 = vmatprep.subr.mxu0 0.0
  %107 = vmatpush1.msra.mxu0 0.0
  %108 = vmatprep.subr.mxu0 0.0
  %109 = vmatpush1.msra.mxu0 0.0
  %110 = vmatprep.subr.mxu0 0.0
  %111 = vmatpush1.msra.mxu0 0.0
  %112 = vmatprep.subr.mxu0 0.0
  %113 = vmatpush1.msra.mxu0 0.0
  %114 = vmatprep.subr.mxu0 0.0
  %115 = vmatpush1.msra.mxu0 0.0
  %116 = vmatprep.subr.mxu0 0.0
  %117 = vmatpush1.msra.mxu0 0.0
  %118 = vmatprep.subr.mxu0 0.0
  %119 = vmatpush1.msra.mxu0 0.0
  %120 = vmatprep.subr.mxu0 0.0
  %121 = vmatpush1.msra.mxu0 0.0
  %122 = vmatprep.subr.mxu0 0.0
  %123 = vmatpush1.msra.mxu0 0.0
  %124 = vmatprep.subr.mxu0 0.0
  %125 = vmatpush1.msra.mxu0 0.0
  %126 = vmatprep.subr.mxu0 0.0
  %127 = vmatpush1.msra.mxu0 0.0
  %128 = vmatprep.mubr.f32.mxu0 0.0
  %129 = vmatmul.mubr.f32.gmra.mrb[0].mxu0 %v62
  %v130 = vpop.f32.mrb[0].mxu0
  %v131 = vadd.f32 0.0, %v130
  %v132 = vpop.f32.mrb[0].mxu0
  %v133 = vadd.f32 0.0, %v132
  %134 = vdwg.mxu0
  %v135 = vadd.f32 %v57, %v131
  %v136 = vxor.u32 %v135, 2147483648
  %v137 = vmul.f32 %v136, 1.442695
  %v138 = vpow.pop %v137
  %v139 = vadd.f32 %v138, 1.0
  %v140 = vrcp.pop %v139
  %v141 = vmul.f32 1.0, %v140
  %v143 = vlaneseq
  %v144 = vshrl.u32 %v143, 7
  %v145 = vsub.s32 0, %v144
  %v146 = vrot.slane %v55, %v145
  %v148 = vadd.f32 %v133, %v146
  %v149 = vmul.f32 %v141, %v148
  %v151 = vrot.slane %v57, 2
  %v153 = vadd.f32 %v151, %v149
  %v154 = vtanh.pop %v153
  %v155 = vsub.f32 1.0, %v141
  %157 = vrot.lane.b32.xlu0 %v154, 64
  %v158 = vpop.permute.xlu0 %157
  %v160 = vmul.f32 %v155, %v158
  %v161 = vmul.f32 %v141, 0.0
  %v162 = vadd.f32 %v160, %v161
  %163 = vmatprep.subr.mxu0 %v40
  %164 = vmatpush1.msra.mxu0 %v39
  %165 = vmatprep.subr.mxu0 %v42
  %166 = vmatpush1.msra.mxu0 %v41
  %167 = vmatprep.subr.mxu0 %v44
  %168 = vmatpush1.msra.mxu0 %v43
  %169 = vmatprep.subr.mxu0 %v46
  %170 = vmatpush1.msra.mxu0 %v45
  %171 = vmatprep.subr.mxu0 %v48
  %172 = vmatpush1.msra.mxu0 %v47
  %173 = vmatprep.subr.mxu0 %v50
  %174 = vmatpush1.msra.mxu0 %v49
  %175 = vmatprep.subr.mxu0 %v52
  %176 = vmatpush1.msra.mxu0 %v51
  %177 = vmatprep.subr.mxu0 %v54
  %178 = vmatpush1.msra.mxu0 %v53
  %179 = vmatprep.subr.mxu0 0.0
  %180 = vmatpush1.msra.mxu0 0.0
  %181 = vmatprep.subr.mxu0 0.0
  %182 = vmatpush1.msra.mxu0 0.0
  %183 = vmatprep.subr.mxu0 0.0
  %184 = vmatpush1.msra.mxu0 0.0
  %185 = vmatprep.subr.mxu0 0.0
  %186 = vmatpush1.msra.mxu0 0.0
  %187 = vmatprep.subr.mxu0 0.0
  %188 = vmatpush1.msra.mxu0 0.0
  %189 = vmatprep.subr.mxu0 0.0
  %190 = vmatpush1.msra.mxu0 0.0
  %191 = vmatprep.subr.mxu0 0.0
  %192 = vmatpush1.msra.mxu0 0.0
  %193 = vmatprep.subr.mxu0 0.0
  %194 = vmatpush1.msra.mxu0 0.0
  %195 = vmatprep.subr.mxu0 0.0
  %196 = vmatpush1.msra.mxu0 0.0
  %197 = vmatprep.subr.mxu0 0.0
  %198 = vmatpush1.msra.mxu0 0.0
  %199 = vmatprep.subr.mxu0 0.0
  %200 = vmatpush1.msra.mxu0 0.0
  %201 = vmatprep.subr.mxu0 0.0
  %202 = vmatpush1.msra.mxu0 0.0
  %203 = vmatprep.subr.mxu0 0.0
  %204 = vmatpush1.msra.mxu0 0.0
  %205 = vmatprep.subr.mxu0 0.0
  %206 = vmatpush1.msra.mxu0 0.0
  %207 = vmatprep.subr.mxu0 0.0
  %208 = vmatpush1.msra.mxu0 0.0
  %209 = vmatprep.subr.mxu0 0.0
  %210 = vmatpush1.msra.mxu0 0.0
  %211 = vmatprep.subr.mxu0 0.0
  %212 = vmatpush1.msra.mxu0 0.0
  %213 = vmatprep.subr.mxu0 0.0
  %214 = vmatpush1.msra.mxu0 0.0
  %215 = vmatprep.subr.mxu0 0.0
  %216 = vmatpush1.msra.mxu0 0.0
  %217 = vmatprep.subr.mxu0 0.0
  %218 = vmatpush1.msra.mxu0 0.0
  %219 = vmatprep.subr.mxu0 0.0
  %220 = vmatpush1.msra.mxu0 0.0
  %221 = vmatprep.subr.mxu0 0.0
  %222 = vmatpush1.msra.mxu0 0.0
  %223 = vmatprep.subr.mxu0 0.0
  %224 = vmatpush1.msra.mxu0 0.0
  %225 = vmatprep.subr.mxu0 0.0
  %226 = vmatpush1.msra.mxu0 0.0
  %227 = vmatprep.mubr.f32.mxu0 0.0
  %228 = vmatmul.mubr.f32.gmra.mrb[0].mxu0 %v62
  %v229 = vpop.f32.mrb[0].mxu0
  %v230 = vadd.f32 0.0, %v229
  %v231 = vpop.f32.mrb[0].mxu0
  %v232 = vadd.f32 0.0, %v231
  %233 = vdwg.mxu0
  %235 = vrot.lane.b32.xlu0 %v59, 64
  %v236 = vpop.permute.xlu0 %235
  %v237 = vrot.slane %v236, 2
  %v239 = vadd.f32 %v237, %v230
  %v240 = vxor.u32 %v239, 2147483648
  %v241 = vmul.f32 %v240, 1.442695
  %v242 = vpow.pop %v241
  %v243 = vadd.f32 %v242, 1.0
  %v244 = vrcp.pop %v243
  %v245 = vmul.f32 1.0, %v244
  %v246 = vrot.slane %v59, 4
  %v250 = vunpack.c.l.s4 1983009808
  %v251 = vunpack.c.0.s8 %v250
  %v252 = vlaneseq
  %v253 = vshrl.u32 %v252, 7
  %v254 = vsub.s32 %v251, %v253
  %v255 = vrot.slane %v230, %v254
  %256 = vrot.lane.b32.xlu0 %v255, 64
  %v257 = vpop.permute.xlu0 %256
  %v259 = vadd.f32 %v246, %v257
  %v260 = vxor.u32 %v259, 2147483648
  %v261 = vmul.f32 %v260, 1.442695
  %v262 = vpow.pop %v261
  %v263 = vadd.f32 %v262, 1.0
  %v264 = vrcp.pop %v263
  %v265 = vmul.f32 1.0, %v264
  %v267 = vlaneseq
  %v268 = vshrl.u32 %v267, 7
  %v269 = vsub.s32 0, %v268
  %v270 = vrot.slane %v56, %v269
  %v272 = vadd.f32 %v232, %v270
  %v273 = vmul.f32 %v245, %v272
  %v274 = vrot.slane %v236, 4
  %v276 = vadd.f32 %v274, %v273
  %v277 = vtanh.pop %v276
  %v278 = vsub.f32 1.0, %v265
  %v279 = vmul.f32 %v278, %v277
  %v280 = vmul.f32 %v265, 0.0
  %v281 = vadd.f32 %v279, %v280
  %v284 = vunpack.c.l.s4 1983009808
  %v285 = vunpack.c.0.s8 %v284
  %v286 = vlaneseq
  %v287 = vshrl.u32 %v286, 7
  %v288 = vsub.s32 %v285, %v287
  %v289 = vrot.slane %v162, %v288
  %290 = vrot.lane.b32.xlu0 %v289, 64
  %v291 = vpop.permute.xlu0 %290
  %vm293 = vcmask 517120
  %294 = vst.msk [vmem:[#allocation2] sm:$0x3] %vm293, %v291
  %v297 = vunpack.c.l.s4 1983009808
  %v298 = vunpack.c.0.s8 %v297
  %v299 = vlaneseq
  %v300 = vshrl.u32 %v299, 7
  %v301 = vsub.s32 %v298, %v300
  %v302 = vrot.slane %v281, %v301
  %303 = vrot.lane.b32.xlu0 %v302, 64
  %v304 = vpop.permute.xlu0 %303
  %s306 = scalar_lea.vmem [#allocation2], 14
  %vm307 = vcmask 1041920
  %308 = vst.msk [vmem:[%s306] sm:$0x3] %vm307, %v304
  %s309 = scalar_lea.vmem %s0, 6
  %v310 = vld [vmem:[%s309] sm:$0x3f]
  %s311 = scalar_lea.vmem %s0, 36
  %v312 = vld [vmem:[%s311] sm:$0x3f]
  %v313 = vsel %vm60, %v291, 0
  %315 = vmatprep.subr.mxu0 %v24
  %316 = vmatpush1.msra.mxu0 %v23
  %317 = vmatprep.subr.mxu0 %v26
  %318 = vmatpush1.msra.mxu0 %v25
  %319 = vmatprep.subr.mxu0 %v28
  %320 = vmatpush1.msra.mxu0 %v27
  %321 = vmatprep.subr.mxu0 %v30
  %322 = vmatpush1.msra.mxu0 %v29
  %323 = vmatprep.subr.mxu0 %v32
  %324 = vmatpush1.msra.mxu0 %v31
  %325 = vmatprep.subr.mxu0 %v34
  %326 = vmatpush1.msra.mxu0 %v33
  %327 = vmatprep.subr.mxu0 %v36
  %328 = vmatpush1.msra.mxu0 %v35
  %329 = vmatprep.subr.mxu0 %v38
  %330 = vmatpush1.msra.mxu0 %v37
  %331 = vmatprep.subr.mxu0 0.0
  %332 = vmatpush1.msra.mxu0 0.0
  %333 = vmatprep.subr.mxu0 0.0
  %334 = vmatpush1.msra.mxu0 0.0
  %335 = vmatprep.subr.mxu0 0.0
  %336 = vmatpush1.msra.mxu0 0.0
  %337 = vmatprep.subr.mxu0 0.0
  %338 = vmatpush1.msra.mxu0 0.0
  %339 = vmatprep.subr.mxu0 0.0
  %340 = vmatpush1.msra.mxu0 0.0
  %341 = vmatprep.subr.mxu0 0.0
  %342 = vmatpush1.msra.mxu0 0.0
  %343 = vmatprep.subr.mxu0 0.0
  %344 = vmatpush1.msra.mxu0 0.0
  %345 = vmatprep.subr.mxu0 0.0
  %346 = vmatpush1.msra.mxu0 0.0
  %347 = vmatprep.subr.mxu0 0.0
  %348 = vmatpush1.msra.mxu0 0.0
  %349 = vmatprep.subr.mxu0 0.0
  %350 = vmatpush1.msra.mxu0 0.0
  %351 = vmatprep.subr.mxu0 0.0
  %352 = vmatpush1.msra.mxu0 0.0
  %353 = vmatprep.subr.mxu0 0.0
  %354 = vmatpush1.msra.mxu0 0.0
  %355 = vmatprep.subr.mxu0 0.0
  %356 = vmatpush1.msra.mxu0 0.0
  %357 = vmatprep.subr.mxu0 0.0
  %358 = vmatpush1.msra.mxu0 0.0
  %359 = vmatprep.subr.mxu0 0.0
  %360 = vmatpush1.msra.mxu0 0.0
  %361 = vmatprep.subr.mxu0 0.0
  %362 = vmatpush1.msra.mxu0 0.0
  %363 = vmatprep.subr.mxu0 0.0
  %364 = vmatpush1.msra.mxu0 0.0
  %365 = vmatprep.subr.mxu0 0.0
  %366 = vmatpush1.msra.mxu0 0.0
  %367 = vmatprep.subr.mxu0 0.0
  %368 = vmatpush1.msra.mxu0 0.0
  %369 = vmatprep.subr.mxu0 0.0
  %370 = vmatpush1.msra.mxu0 0.0
  %371 = vmatprep.subr.mxu0 0.0
  %372 = vmatpush1.msra.mxu0 0.0
  %373 = vmatprep.subr.mxu0 0.0
  %374 = vmatpush1.msra.mxu0 0.0
  %375 = vmatprep.subr.mxu0 0.0
  %376 = vmatpush1.msra.mxu0 0.0
  %377 = vmatprep.subr.mxu0 0.0
  %378 = vmatpush1.msra.mxu0 0.0
  %379 = vmatprep.mubr.f32.mxu0 0.0
  %380 = vmatmul.mubr.f32.gmra.mrb[0].mxu0 %v313
  %v381 = vpop.f32.mrb[0].mxu0
  %v382 = vadd.f32 0.0, %v381
  %v383 = vpop.f32.mrb[0].mxu0
  %v384 = vadd.f32 0.0, %v383
  %385 = vdwg.mxu0
  %v386 = vadd.f32 %v310, %v382
  %v387 = vxor.u32 %v386, 2147483648
  %v388 = vmul.f32 %v387, 1.442695
  %v389 = vpow.pop %v388
  %v390 = vadd.f32 %v389, 1.0
  %v391 = vrcp.pop %v390
  %v392 = vmul.f32 1.0, %v391
  %v393 = vadd.f32 %v384, %v146
  %v394 = vmul.f32 %v392, %v393
  %v396 = vrot.slane %v310, 2
  %v398 = vadd.f32 %v396, %v394
  %v399 = vtanh.pop %v398
  %v400 = vsub.f32 1.0, %v392
  %402 = vrot.lane.b32.xlu0 %v399, 64
  %v403 = vpop.permute.xlu0 %402
  %v405 = vmul.f32 %v400, %v403
  %v406 = vmul.f32 %v392, %v162
  %v407 = vadd.f32 %v405, %v406
  %v408 = vsel %vm60, %v281, 0
  %410 = vmatprep.subr.mxu0 %v40
  %411 = vmatpush1.msra.mxu0 %v39
  %412 = vmatprep.subr.mxu0 %v42
  %413 = vmatpush1.msra.mxu0 %v41
  %414 = vmatprep.subr.mxu0 %v44
  %415 = vmatpush1.msra.mxu0 %v43
  %416 = vmatprep.subr.mxu0 %v46
  %417 = vmatpush1.msra.mxu0 %v45
  %418 = vmatprep.subr.mxu0 %v48
  %419 = vmatpush1.msra.mxu0 %v47
  %420 = vmatprep.subr.mxu0 %v50
  %421 = vmatpush1.msra.mxu0 %v49
  %422 = vmatprep.subr.mxu0 %v52
  %423 = vmatpush1.msra.mxu0 %v51
  %424 = vmatprep.subr.mxu0 %v54
  %425 = vmatpush1.msra.mxu0 %v53
  %426 = vmatprep.subr.mxu0 0.0
  %427 = vmatpush1.msra.mxu0 0.0
  %428 = vmatprep.subr.mxu0 0.0
  %429 = vmatpush1.msra.mxu0 0.0
  %430 = vmatprep.subr.mxu0 0.0
  %431 = vmatpush1.msra.mxu0 0.0
  %432 = vmatprep.subr.mxu0 0.0
  %433 = vmatpush1.msra.mxu0 0.0
  %434 = vmatprep.subr.mxu0 0.0
  %435 = vmatpush1.msra.mxu0 0.0
  %436 = vmatprep.subr.mxu0 0.0
  %437 = vmatpush1.msra.mxu0 0.0
  %438 = vmatprep.subr.mxu0 0.0
  %439 = vmatpush1.msra.mxu0 0.0
  %440 = vmatprep.subr.mxu0 0.0
  %441 = vmatpush1.msra.mxu0 0.0
  %442 = vmatprep.subr.mxu0 0.0
  %443 = vmatpush1.msra.mxu0 0.0
  %444 = vmatprep.subr.mxu0 0.0
  %445 = vmatpush1.msra.mxu0 0.0
  %446 = vmatprep.subr.mxu0 0.0
  %447 = vmatpush1.msra.mxu0 0.0
  %448 = vmatprep.subr.mxu0 0.0
  %449 = vmatpush1.msra.mxu0 0.0
  %450 = vmatprep.subr.mxu0 0.0
  %451 = vmatpush1.msra.mxu0 0.0
  %452 = vmatprep.subr.mxu0 0.0
  %453 = vmatpush1.msra.mxu0 0.0
  %454 = vmatprep.subr.mxu0 0.0
  %455 = vmatpush1.msra.mxu0 0.0
  %456 = vmatprep.subr.mxu0 0.0
  %457 = vmatpush1.msra.mxu0 0.0
  %458 = vmatprep.subr.mxu0 0.0
  %459 = vmatpush1.msra.mxu0 0.0
  %460 = vmatprep.subr.mxu0 0.0
  %461 = vmatpush1.msra.mxu0 0.0
  %462 = vmatprep.subr.mxu0 0.0
  %463 = vmatpush1.msra.mxu0 0.0
  %464 = vmatprep.subr.mxu0 0.0
  %465 = vmatpush1.msra.mxu0 0.0
  %466 = vmatprep.subr.mxu0 0.0
  %467 = vmatpush1.msra.mxu0 0.0
  %468 = vmatprep.subr.mxu0 0.0
  %469 = vmatpush1.msra.mxu0 0.0
  %470 = vmatprep.subr.mxu0 0.0
  %471 = vmatpush1.msra.mxu0 0.0
  %472 = vmatprep.subr.mxu0 0.0
  %473 = vmatpush1.msra.mxu0 0.0
  %474 = vmatprep.mubr.f32.mxu0 0.0
  %475 = vmatmul.mubr.f32.gmra.mrb[0].mxu0 %v408
  %v476 = vpop.f32.mrb[0].mxu0
  %v477 = vadd.f32 0.0, %v476
  %v478 = vpop.f32.mrb[0].mxu0
  %v479 = vadd.f32 0.0, %v478
  %480 = vdwg.mxu0
  %482 = vrot.lane.b32.xlu0 %v312, 64
  %v483 = vpop.permute.xlu0 %482
  %v484 = vrot.slane %v483, 2
  %v486 = vadd.f32 %v484, %v477
  %v487 = vxor.u32 %v486, 2147483648
  %v488 = vmul.f32 %v487, 1.442695
  %v489 = vpow.pop %v488
  %v490 = vadd.f32 %v489, 1.0
  %v491 = vrcp.pop %v490
  %v492 = vmul.f32 1.0, %v491
  %v493 = vrot.slane %v312, 4
  %v497 = vunpack.c.l.s4 1983009808
  %v498 = vunpack.c.0.s8 %v497
  %v499 = vlaneseq
  %v500 = vshrl.u32 %v499, 7
  %v501 = vsub.s32 %v498, %v500
  %v502 = vrot.slane %v477, %v501
  %503 = vrot.lane.b32.xlu0 %v502, 64
  %v504 = vpop.permute.xlu0 %503
  %v506 = vadd.f32 %v493, %v504
  %v507 = vxor.u32 %v506, 2147483648
  %v508 = vmul.f32 %v507, 1.442695
  %v509 = vpow.pop %v508
  %v510 = vadd.f32 %v509, 1.0
  %v511 = vrcp.pop %v510
  %v512 = vmul.f32 1.0, %v511
  %v513 = vadd.f32 %v479, %v270
  %v514 = vmul.f32 %v492, %v513
  %v515 = vrot.slane %v483, 4
  %v517 = vadd.f32 %v515, %v514
  %v518 = vtanh.pop %v517
  %v519 = vsub.f32 1.0, %v512
  %v520 = vmul.f32 %v519, %v518
  %v521 = vmul.f32 %v512, %v281
  %v522 = vadd.f32 %v520, %v521
  %v525 = vunpack.c.l.s4 1983009808
  %v526 = vunpack.c.0.s8 %v525
  %v527 = vlaneseq
  %v528 = vshrl.u32 %v527, 7
  %v529 = vsub.s32 %v526, %v528
  %v530 = vrot.slane %v407, %v529
  %531 = vrot.lane.b32.xlu0 %v530, 64
  %v532 = vpop.permute.xlu0 %531
  %s534 = scalar_lea.vmem [#allocation2], 2
  %535 = vst.msk [vmem:[%s534] sm:$0x3] %vm293, %v532
  %v538 = vunpack.c.l.s4 1983009808
  %v539 = vunpack.c.0.s8 %v538
  %v540 = vlaneseq
  %v541 = vshrl.u32 %v540, 7
  %v542 = vsub.s32 %v539, %v541
  %v543 = vrot.slane %v522, %v542
  %544 = vrot.lane.b32.xlu0 %v543, 64
  %v545 = vpop.permute.xlu0 %544
  %s547 = scalar_lea.vmem [#allocation2], 12
  %548 = vst.msk [vmem:[%s547] sm:$0x3] %vm307, %v545
  %s549 = scalar_lea.vmem %s0, 12
  %v550 = vld [vmem:[%s549] sm:$0x3f]
  %s551 = scalar_lea.vmem %s0, 30
  %v552 = vld [vmem:[%s551] sm:$0x3f]
  %v553 = vsel %vm60, %v532, 0
  %555 = vmatprep.subr.mxu0 %v24
  %556 = vmatpush1.msra.mxu0 %v23
  %557 = vmatprep.subr.mxu0 %v26
  %558 = vmatpush1.msra.mxu0 %v25
  %559 = vmatprep.subr.mxu0 %v28
  %560 = vmatpush1.msra.mxu0 %v27
  %561 = vmatprep.subr.mxu0 %v30
  %562 = vmatpush1.msra.mxu0 %v29
  %563 = vmatprep.subr.mxu0 %v32
  %564 = vmatpush1.msra.mxu0 %v31
  %565 = vmatprep.subr.mxu0 %v34
  %566 = vmatpush1.msra.mxu0 %v33
  %567 = vmatprep.subr.mxu0 %v36
  %568 = vmatpush1.msra.mxu0 %v35
  %569 = vmatprep.subr.mxu0 %v38
  %570 = vmatpush1.msra.mxu0 %v37
  %571 = vmatprep.subr.mxu0 0.0
  %572 = vmatpush1.msra.mxu0 0.0
  %573 = vmatprep.subr.mxu0 0.0
  %574 = vmatpush1.msra.mxu0 0.0
  %575 = vmatprep.subr.mxu0 0.0
  %576 = vmatpush1.msra.mxu0 0.0
  %577 = vmatprep.subr.mxu0 0.0
  %578 = vmatpush1.msra.mxu0 0.0
  %579 = vmatprep.subr.mxu0 0.0
  %580 = vmatpush1.msra.mxu0 0.0
  %581 = vmatprep.subr.mxu0 0.0
  %582 = vmatpush1.msra.mxu0 0.0
  %583 = vmatprep.subr.mxu0 0.0
  %584 = vmatpush1.msra.mxu0 0.0
  %585 = vmatprep.subr.mxu0 0.0
  %586 = vmatpush1.msra.mxu0 0.0
  %587 = vmatprep.subr.mxu0 0.0
  %588 = vmatpush1.msra.mxu0 0.0
  %589 = vmatprep.subr.mxu0 0.0
  %590 = vmatpush1.msra.mxu0 0.0
  %591 = vmatprep.subr.mxu0 0.0
  %592 = vmatpush1.msra.mxu0 0.0
  %593 = vmatprep.subr.mxu0 0.0
  %594 = vmatpush1.msra.mxu0 0.0
  %595 = vmatprep.subr.mxu0 0.0
  %596 = vmatpush1.msra.mxu0 0.0
  %597 = vmatprep.subr.mxu0 0.0
  %598 = vmatpush1.msra.mxu0 0.0
  %599 = vmatprep.subr.mxu0 0.0
  %600 = vmatpush1.msra.mxu0 0.0
  %601 = vmatprep.subr.mxu0 0.0
  %602 = vmatpush1.msra.mxu0 0.0
  %603 = vmatprep.subr.mxu0 0.0
  %604 = vmatpush1.msra.mxu0 0.0
  %605 = vmatprep.subr.mxu0 0.0
  %606 = vmatpush1.msra.mxu0 0.0
  %607 = vmatprep.subr.mxu0 0.0
  %608 = vmatpush1.msra.mxu0 0.0
  %609 = vmatprep.subr.mxu0 0.0
  %610 = vmatpush1.msra.mxu0 0.0
  %611 = vmatprep.subr.mxu0 0.0
  %612 = vmatpush1.msra.mxu0 0.0
  %613 = vmatprep.subr.mxu0 0.0
  %614 = vmatpush1.msra.mxu0 0.0
  %615 = vmatprep.subr.mxu0 0.0
  %616 = vmatpush1.msra.mxu0 0.0
  %617 = vmatprep.subr.mxu0 0.0
  %618 = vmatpush1.msra.mxu0 0.0
  %619 = vmatprep.mubr.f32.mxu0 0.0
  %620 = vmatmul.mubr.f32.gmra.mrb[0].mxu0 %v553
  %v621 = vpop.f32.mrb[0].mxu0
  %v622 = vadd.f32 0.0, %v621
  %v623 = vpop.f32.mrb[0].mxu0
  %v624 = vadd.f32 0.0, %v623
  %625 = vdwg.mxu0
  %v626 = vadd.f32 %v550, %v622
  %v627 = vxor.u32 %v626, 2147483648
  %v628 = vmul.f32 %v627, 1.442695
  %v629 = vpow.pop %v628
  %v630 = vadd.f32 %v629, 1.0
  %v631 = vrcp.pop %v630
  %v632 = vmul.f32 1.0, %v631
  %v633 = vadd.f32 %v624, %v146
  %v634 = vmul.f32 %v632, %v633
  %v636 = vrot.slane %v550, 2
  %v638 = vadd.f32 %v636, %v634
  %v639 = vtanh.pop %v638
  %v640 = vsub.f32 1.0, %v632
  %642 = vrot.lane.b32.xlu0 %v639, 64
  %v643 = vpop.permute.xlu0 %642
  %v645 = vmul.f32 %v640, %v643
  %v646 = vmul.f32 %v632, %v407
  %v647 = vadd.f32 %v645, %v646
  %v648 = vsel %vm60, %v522, 0
  %650 = vmatprep.subr.mxu0 %v40
  %651 = vmatpush1.msra.mxu0 %v39
  %652 = vmatprep.subr.mxu0 %v42
  %653 = vmatpush1.msra.mxu0 %v41
  %654 = vmatprep.subr.mxu0 %v44
  %655 = vmatpush1.msra.mxu0 %v43
  %656 = vmatprep.subr.mxu0 %v46
  %657 = vmatpush1.msra.mxu0 %v45
  %658 = vmatprep.subr.mxu0 %v48
  %659 = vmatpush1.msra.mxu0 %v47
  %660 = vmatprep.subr.mxu0 %v50
  %661 = vmatpush1.msra.mxu0 %v49
  %662 = vmatprep.subr.mxu0 %v52
  %663 = vmatpush1.msra.mxu0 %v51
  %664 = vmatprep.subr.mxu0 %v54
  %665 = vmatpush1.msra.mxu0 %v53
  %666 = vmatprep.subr.mxu0 0.0
  %667 = vmatpush1.msra.mxu0 0.0
  %668 = vmatprep.subr.mxu0 0.0
  %669 = vmatpush1.msra.mxu0 0.0
  %670 = vmatprep.subr.mxu0 0.0
  %671 = vmatpush1.msra.mxu0 0.0
  %672 = vmatprep.subr.mxu0 0.0
  %673 = vmatpush1.msra.mxu0 0.0
  %674 = vmatprep.subr.mxu0 0.0
  %675 = vmatpush1.msra.mxu0 0.0
  %676 = vmatprep.subr.mxu0 0.0
  %677 = vmatpush1.msra.mxu0 0.0
  %678 = vmatprep.subr.mxu0 0.0
  %679 = vmatpush1.msra.mxu0 0.0
  %680 = vmatprep.subr.mxu0 0.0
  %681 = vmatpush1.msra.mxu0 0.0
  %682 = vmatprep.subr.mxu0 0.0
  %683 = vmatpush1.msra.mxu0 0.0
  %684 = vmatprep.subr.mxu0 0.0
  %685 = vmatpush1.msra.mxu0 0.0
  %686 = vmatprep.subr.mxu0 0.0
  %687 = vmatpush1.msra.mxu0 0.0
  %688 = vmatprep.subr.mxu0 0.0
  %689 = vmatpush1.msra.mxu0 0.0
  %690 = vmatprep.subr.mxu0 0.0
  %691 = vmatpush1.msra.mxu0 0.0
  %692 = vmatprep.subr.mxu0 0.0
  %693 = vmatpush1.msra.mxu0 0.0
  %694 = vmatprep.subr.mxu0 0.0
  %695 = vmatpush1.msra.mxu0 0.0
  %696 = vmatprep.subr.mxu0 0.0
  %697 = vmatpush1.msra.mxu0 0.0
  %698 = vmatprep.subr.mxu0 0.0
  %699 = vmatpush1.msra.mxu0 0.0
  %700 = vmatprep.subr.mxu0 0.0
  %701 = vmatpush1.msra.mxu0 0.0
  %702 = vmatprep.subr.mxu0 0.0
  %703 = vmatpush1.msra.mxu0 0.0
  %704 = vmatprep.subr.mxu0 0.0
  %705 = vmatpush1.msra.mxu0 0.0
  %706 = vmatprep.subr.mxu0 0.0
  %707 = vmatpush1.msra.mxu0 0.0
  %708 = vmatprep.subr.mxu0 0.0
  %709 = vmatpush1.msra.mxu0 0.0
  %710 = vmatprep.subr.mxu0 0.0
  %711 = vmatpush1.msra.mxu0 0.0
  %712 = vmatprep.subr.mxu0 0.0
  %713 = vmatpush1.msra.mxu0 0.0
  %714 = vmatprep.mubr.f32.mxu0 0.0
  %715 = vmatmul.mubr.f32.gmra.mrb[0].mxu0 %v648
  %v716 = vpop.f32.mrb[0].mxu0
  %v717 = vadd.f32 0.0, %v716
  %v718 = vpop.f32.mrb[0].mxu0
  %v719 = vadd.f32 0.0, %v718
  %720 = vdwg.mxu0
  %722 = vrot.lane.b32.xlu0 %v552, 64
  %v723 = vpop.permute.xlu0 %722
  %v724 = vrot.slane %v723, 2
  %v726 = vadd.f32 %v724, %v717
  %v727 = vxor.u32 %v726, 2147483648
  %v728 = vmul.f32 %v727, 1.442695
  %v729 = vpow.pop %v728
  %v730 = vadd.f32 %v729, 1.0
  %v731 = vrcp.pop %v730
  %v732 = vmul.f32 1.0, %v731
  %v733 = vrot.slane %v552, 4
  %v737 = vunpack.c.l.s4 1983009808
  %v738 = vunpack.c.0.s8 %v737
  %v739 = vlaneseq
  %v740 = vshrl.u32 %v739, 7
  %v741 = vsub.s32 %v738, %v740
  %v742 = vrot.slane %v717, %v741
  %743 = vrot.lane.b32.xlu0 %v742, 64
  %v744 = vpop.permute.xlu0 %743
  %v746 = vadd.f32 %v733, %v744
  %v747 = vxor.u32 %v746, 2147483648
  %v748 = vmul.f32 %v747, 1.442695
  %v749 = vpow.pop %v748
  %v750 = vadd.f32 %v749, 1.0
  %v751 = vrcp.pop %v750
  %v752 = vmul.f32 1.0, %v751
  %v753 = vadd.f32 %v719, %v270
  %v754 = vmul.f32 %v732, %v753
  %v755 = vrot.slane %v723, 4
  %v757 = vadd.f32 %v755, %v754
  %v758 = vtanh.pop %v757
  %v759 = vsub.f32 1.0, %v752
  %v760 = vmul.f32 %v759, %v758
  %v761 = vmul.f32 %v752, %v522
  %v762 = vadd.f32 %v760, %v761
  %v765 = vunpack.c.l.s4 1983009808
  %v766 = vunpack.c.0.s8 %v765
  %v767 = vlaneseq
  %v768 = vshrl.u32 %v767, 7
  %v769 = vsub.s32 %v766, %v768
  %v770 = vrot.slane %v647, %v769
  %771 = vrot.lane.b32.xlu0 %v770, 64
  %v772 = vpop.permute.xlu0 %771
  %s774 = scalar_lea.vmem [#allocation2], 4
  %775 = vst.msk [vmem:[%s774] sm:$0x3] %vm293, %v772
  %v778 = vunpack.c.l.s4 1983009808
  %v779 = vunpack.c.0.s8 %v778
  %v780 = vlaneseq
  %v781 = vshrl.u32 %v780, 7
  %v782 = vsub.s32 %v779, %v781
  %v783 = vrot.slane %v762, %v782
  %784 = vrot.lane.b32.xlu0 %v783, 64
  %v785 = vpop.permute.xlu0 %784
  %s787 = scalar_lea.vmem [#allocation2], 10
  %788 = vst.msk [vmem:[%s787] sm:$0x3] %vm307, %v785
  %s789 = scalar_lea.vmem %s0, 18
  %v790 = vld [vmem:[%s789] sm:$0x3f]
  %s791 = scalar_lea.vmem %s0, 24
  %v792 = vld [vmem:[%s791] sm:$0x3f]
  %v793 = vsel %vm60, %v772, 0
  %795 = vmatprep.subr.mxu0 %v24
  %796 = vmatpush1.msra.mxu0 %v23
  %797 = vmatprep.subr.mxu0 %v26
  %798 = vmatpush1.msra.mxu0 %v25
  %799 = vmatprep.subr.mxu0 %v28
  %800 = vmatpush1.msra.mxu0 %v27
  %801 = vmatprep.subr.mxu0 %v30
  %802 = vmatpush1.msra.mxu0 %v29
  %803 = vmatprep.subr.mxu0 %v32
  %804 = vmatpush1.msra.mxu0 %v31
  %805 = vmatprep.subr.mxu0 %v34
  %806 = vmatpush1.msra.mxu0 %v33
  %807 = vmatprep.subr.mxu0 %v36
  %808 = vmatpush1.msra.mxu0 %v35
  %809 = vmatprep.subr.mxu0 %v38
  %810 = vmatpush1.msra.mxu0 %v37
  %811 = vmatprep.subr.mxu0 0.0
  %812 = vmatpush1.msra.mxu0 0.0
  %813 = vmatprep.subr.mxu0 0.0
  %814 = vmatpush1.msra.mxu0 0.0
  %815 = vmatprep.subr.mxu0 0.0
  %816 = vmatpush1.msra.mxu0 0.0
  %817 = vmatprep.subr.mxu0 0.0
  %818 = vmatpush1.msra.mxu0 0.0
  %819 = vmatprep.subr.mxu0 0.0
  %820 = vmatpush1.msra.mxu0 0.0
  %821 = vmatprep.subr.mxu0 0.0
  %822 = vmatpush1.msra.mxu0 0.0
  %823 = vmatprep.subr.mxu0 0.0
  %824 = vmatpush1.msra.mxu0 0.0
  %825 = vmatprep.subr.mxu0 0.0
  %826 = vmatpush1.msra.mxu0 0.0
  %827 = vmatprep.subr.mxu0 0.0
  %828 = vmatpush1.msra.mxu0 0.0
  %829 = vmatprep.subr.mxu0 0.0
  %830 = vmatpush1.msra.mxu0 0.0
  %831 = vmatprep.subr.mxu0 0.0
  %832 = vmatpush1.msra.mxu0 0.0
  %833 = vmatprep.subr.mxu0 0.0
  %834 = vmatpush1.msra.mxu0 0.0
  %835 = vmatprep.subr.mxu0 0.0
  %836 = vmatpush1.msra.mxu0 0.0
  %837 = vmatprep.subr.mxu0 0.0
  %838 = vmatpush1.msra.mxu0 0.0
  %839 = vmatprep.subr.mxu0 0.0
  %840 = vmatpush1.msra.mxu0 0.0
  %841 = vmatprep.subr.mxu0 0.0
  %842 = vmatpush1.msra.mxu0 0.0
  %843 = vmatprep.subr.mxu0 0.0
  %844 = vmatpush1.msra.mxu0 0.0
  %845 = vmatprep.subr.mxu0 0.0
  %846 = vmatpush1.msra.mxu0 0.0
  %847 = vmatprep.subr.mxu0 0.0
  %848 = vmatpush1.msra.mxu0 0.0
  %849 = vmatprep.subr.mxu0 0.0
  %850 = vmatpush1.msra.mxu0 0.0
  %851 = vmatprep.subr.mxu0 0.0
  %852 = vmatpush1.msra.mxu0 0.0
  %853 = vmatprep.subr.mxu0 0.0
  %854 = vmatpush1.msra.mxu0 0.0
  %855 = vmatprep.subr.mxu0 0.0
  %856 = vmatpush1.msra.mxu0 0.0
  %857 = vmatprep.subr.mxu0 0.0
  %858 = vmatpush1.msra.mxu0 0.0
  %859 = vmatprep.mubr.f32.mxu0 0.0
  %860 = vmatmul.mubr.f32.gmra.mrb[0].mxu0 %v793
  %v861 = vpop.f32.mrb[0].mxu0
  %v862 = vadd.f32 0.0, %v861
  %v863 = vpop.f32.mrb[0].mxu0
  %v864 = vadd.f32 0.0, %v863
  %865 = vdwg.mxu0
  %v866 = vadd.f32 %v790, %v862
  %v867 = vxor.u32 %v866, 2147483648
  %v868 = vmul.f32 %v867, 1.442695
  %v869 = vpow.pop %v868
  %v870 = vadd.f32 %v869, 1.0
  %v871 = vrcp.pop %v870
  %v872 = vmul.f32 1.0, %v871
  %v873 = vadd.f32 %v864, %v146
  %v874 = vmul.f32 %v872, %v873
  %v876 = vrot.slane %v790, 2
  %v878 = vadd.f32 %v876, %v874
  %v879 = vtanh.pop %v878
  %v880 = vsub.f32 1.0, %v872
  %882 = vrot.lane.b32.xlu0 %v879, 64
  %v883 = vpop.permute.xlu0 %882
  %v885 = vmul.f32 %v880, %v883
  %v886 = vmul.f32 %v872, %v647
  %v887 = vadd.f32 %v885, %v886
  %v888 = vsel %vm60, %v762, 0
  %890 = vmatprep.subr.mxu0 %v40
  %891 = vmatpush1.msra.mxu0 %v39
  %892 = vmatprep.subr.mxu0 %v42
  %893 = vmatpush1.msra.mxu0 %v41
  %894 = vmatprep.subr.mxu0 %v44
  %895 = vmatpush1.msra.mxu0 %v43
  %896 = vmatprep.subr.mxu0 %v46
  %897 = vmatpush1.msra.mxu0 %v45
  %898 = vmatprep.subr.mxu0 %v48
  %899 = vmatpush1.msra.mxu0 %v47
  %900 = vmatprep.subr.mxu0 %v50
  %901 = vmatpush1.msra.mxu0 %v49
  %902 = vmatprep.subr.mxu0 %v52
  %903 = vmatpush1.msra.mxu0 %v51
  %904 = vmatprep.subr.mxu0 %v54
  %905 = vmatpush1.msra.mxu0 %v53
  %906 = vmatprep.subr.mxu0 0.0
  %907 = vmatpush1.msra.mxu0 0.0
  %908 = vmatprep.subr.mxu0 0.0
  %909 = vmatpush1.msra.mxu0 0.0
  %910 = vmatprep.subr.mxu0 0.0
  %911 = vmatpush1.msra.mxu0 0.0
  %912 = vmatprep.subr.mxu0 0.0
  %913 = vmatpush1.msra.mxu0 0.0
  %914 = vmatprep.subr.mxu0 0.0
  %915 = vmatpush1.msra.mxu0 0.0
  %916 = vmatprep.subr.mxu0 0.0
  %917 = vmatpush1.msra.mxu0 0.0
  %918 = vmatprep.subr.mxu0 0.0
  %919 = vmatpush1.msra.mxu0 0.0
  %920 = vmatprep.subr.mxu0 0.0
  %921 = vmatpush1.msra.mxu0 0.0
  %922 = vmatprep.subr.mxu0 0.0
  %923 = vmatpush1.msra.mxu0 0.0
  %924 = vmatprep.subr.mxu0 0.0
  %925 = vmatpush1.msra.mxu0 0.0
  %926 = vmatprep.subr.mxu0 0.0
  %927 = vmatpush1.msra.mxu0 0.0
  %928 = vmatprep.subr.mxu0 0.0
  %929 = vmatpush1.msra.mxu0 0.0
  %930 = vmatprep.subr.mxu0 0.0
  %931 = vmatpush1.msra.mxu0 0.0
  %932 = vmatprep.subr.mxu0 0.0
  %933 = vmatpush1.msra.mxu0 0.0
  %934 = vmatprep.subr.mxu0 0.0
  %935 = vmatpush1.msra.mxu0 0.0
  %936 = vmatprep.subr.mxu0 0.0
  %937 = vmatpush1.msra.mxu0 0.0
  %938 = vmatprep.subr.mxu0 0.0
  %939 = vmatpush1.msra.mxu0 0.0
  %940 = vmatprep.subr.mxu0 0.0
  %941 = vmatpush1.msra.mxu0 0.0
  %942 = vmatprep.subr.mxu0 0.0
  %943 = vmatpush1.msra.mxu0 0.0
  %944 = vmatprep.subr.mxu0 0.0
  %945 = vmatpush1.msra.mxu0 0.0
  %946 = vmatprep.subr.mxu0 0.0
  %947 = vmatpush1.msra.mxu0 0.0
  %948 = vmatprep.subr.mxu0 0.0
  %949 = vmatpush1.msra.mxu0 0.0
  %950 = vmatprep.subr.mxu0 0.0
  %951 = vmatpush1.msra.mxu0 0.0
  %952 = vmatprep.subr.mxu0 0.0
  %953 = vmatpush1.msra.mxu0 0.0
  %954 = vmatprep.mubr.f32.mxu0 0.0
  %955 = vmatmul.mubr.f32.gmra.mrb[0].mxu0 %v888
  %v956 = vpop.f32.mrb[0].mxu0
  %v957 = vadd.f32 0.0, %v956
  %v958 = vpop.f32.mrb[0].mxu0
  %v959 = vadd.f32 0.0, %v958
  %960 = vdwg.mxu0
  %962 = vrot.lane.b32.xlu0 %v792, 64
  %v963 = vpop.permute.xlu0 %962
  %v964 = vrot.slane %v963, 2
  %v966 = vadd.f32 %v964, %v957
  %v967 = vxor.u32 %v966, 2147483648
  %v968 = vmul.f32 %v967, 1.442695
  %v969 = vpow.pop %v968
  %v970 = vadd.f32 %v969, 1.0
  %v971 = vrcp.pop %v970
  %v972 = vmul.f32 1.0, %v971
  %v973 = vrot.slane %v792, 4
  %v977 = vunpack.c.l.s4 1983009808
  %v978 = vunpack.c.0.s8 %v977
  %v979 = vlaneseq
  %v980 = vshrl.u32 %v979, 7
  %v981 = vsub.s32 %v978, %v980
  %v982 = vrot.slane %v957, %v981
  %983 = vrot.lane.b32.xlu0 %v982, 64
  %v984 = vpop.permute.xlu0 %983
  %v986 = vadd.f32 %v973, %v984
  %v987 = vxor.u32 %v986, 2147483648
  %v988 = vmul.f32 %v987, 1.442695
  %v989 = vpow.pop %v988
  %v990 = vadd.f32 %v989, 1.0
  %v991 = vrcp.pop %v990
  %v992 = vmul.f32 1.0, %v991
  %v993 = vadd.f32 %v959, %v270
  %v994 = vmul.f32 %v972, %v993
  %v995 = vrot.slane %v963, 4
  %v997 = vadd.f32 %v995, %v994
  %v998 = vtanh.pop %v997
  %v999 = vsub.f32 1.0, %v992
  %v1000 = vmul.f32 %v999, %v998
  %v1001 = vmul.f32 %v992, %v762
  %v1002 = vadd.f32 %v1000, %v1001
  %v1005 = vunpack.c.l.s4 1983009808
  %v1006 = vunpack.c.0.s8 %v1005
  %v1007 = vlaneseq
  %v1008 = vshrl.u32 %v1007, 7
  %v1009 = vsub.s32 %v1006, %v1008
  %v1010 = vrot.slane %v887, %v1009
  %1011 = vrot.lane.b32.xlu0 %v1010, 64
  %v1012 = vpop.permute.xlu0 %1011
  %s1014 = scalar_lea.vmem [#allocation2], 6
  %1015 = vst.msk [vmem:[%s1014] sm:$0x3] %vm293, %v1012
  %v1018 = vunpack.c.l.s4 1983009808
  %v1019 = vunpack.c.0.s8 %v1018
  %v1020 = vlaneseq
  %v1021 = vshrl.u32 %v1020, 7
  %v1022 = vsub.s32 %v1019, %v1021
  %v1023 = vrot.slane %v1002, %v1022
  %1024 = vrot.lane.b32.xlu0 %v1023, 64
  %v1025 = vpop.permute.xlu0 %1024
  %s1027 = scalar_lea.vmem [#allocation2], 8
  %1028 = vst.msk [vmem:[%s1027] sm:$0x3] %vm307, %v1025
  %v1029 = vld [vmem:[%s791] sm:$0x3f]
  %v1030 = vld [vmem:[%s789] sm:$0x3f]
  %v1031 = vsel %vm60, %v1012, 0
  %1033 = vmatprep.subr.mxu0 %v24
  %1034 = vmatpush1.msra.mxu0 %v23
  %1035 = vmatprep.subr.mxu0 %v26
  %1036 = vmatpush1.msra.mxu0 %v25
  %1037 = vmatprep.subr.mxu0 %v28
  %1038 = vmatpush1.msra.mxu0 %v27
  %1039 = vmatprep.subr.mxu0 %v30
  %1040 = vmatpush1.msra.mxu0 %v29
  %1041 = vmatprep.subr.mxu0 %v32
  %1042 = vmatpush1.msra.mxu0 %v31
  %1043 = vmatprep.subr.mxu0 %v34
  %1044 = vmatpush1.msra.mxu0 %v33
  %1045 = vmatprep.subr.mxu0 %v36
  %1046 = vmatpush1.msra.mxu0 %v35
  %1047 = vmatprep.subr.mxu0 %v38
  %1048 = vmatpush1.msra.mxu0 %v37
  %1049 = vmatprep.subr.mxu0 0.0
  %1050 = vmatpush1.msra.mxu0 0.0
  %1051 = vmatprep.subr.mxu0 0.0
  %1052 = vmatpush1.msra.mxu0 0.0
  %1053 = vmatprep.subr.mxu0 0.0
  %1054 = vmatpush1.msra.mxu0 0.0
  %1055 = vmatprep.subr.mxu0 0.0
  %1056 = vmatpush1.msra.mxu0 0.0
  %1057 = vmatprep.subr.mxu0 0.0
  %1058 = vmatpush1.msra.mxu0 0.0
  %1059 = vmatprep.subr.mxu0 0.0
  %1060 = vmatpush1.msra.mxu0 0.0
  %1061 = vmatprep.subr.mxu0 0.0
  %1062 = vmatpush1.msra.mxu0 0.0
  %1063 = vmatprep.subr.mxu0 0.0
  %1064 = vmatpush1.msra.mxu0 0.0
  %1065 = vmatprep.subr.mxu0 0.0
  %1066 = vmatpush1.msra.mxu0 0.0
  %1067 = vmatprep.subr.mxu0 0.0
  %1068 = vmatpush1.msra.mxu0 0.0
  %1069 = vmatprep.subr.mxu0 0.0
  %1070 = vmatpush1.msra.mxu0 0.0
  %1071 = vmatprep.subr.mxu0 0.0
  %1072 = vmatpush1.msra.mxu0 0.0
  %1073 = vmatprep.subr.mxu0 0.0
  %1074 = vmatpush1.msra.mxu0 0.0
  %1075 = vmatprep.subr.mxu0 0.0
  %1076 = vmatpush1.msra.mxu0 0.0
  %1077 = vmatprep.subr.mxu0 0.0
  %1078 = vmatpush1.msra.mxu0 0.0
  %1079 = vmatprep.subr.mxu0 0.0
  %1080 = vmatpush1.msra.mxu0 0.0
  %1081 = vmatprep.subr.mxu0 0.0
  %1082 = vmatpush1.msra.mxu0 0.0
  %1083 = vmatprep.subr.mxu0 0.0
  %1084 = vmatpush1.msra.mxu0 0.0
  %1085 = vmatprep.subr.mxu0 0.0
  %1086 = vmatpush1.msra.mxu0 0.0
  %1087 = vmatprep.subr.mxu0 0.0
  %1088 = vmatpush1.msra.mxu0 0.0
  %1089 = vmatprep.subr.mxu0 0.0
  %1090 = vmatpush1.msra.mxu0 0.0
  %1091 = vmatprep.subr.mxu0 0.0
  %1092 = vmatpush1.msra.mxu0 0.0
  %1093 = vmatprep.subr.mxu0 0.0
  %1094 = vmatpush1.msra.mxu0 0.0
  %1095 = vmatprep.subr.mxu0 0.0
  %1096 = vmatpush1.msra.mxu0 0.0
  %1097 = vmatprep.mubr.f32.mxu0 0.0
  %1098 = vmatmul.mubr.f32.gmra.mrb[0].mxu0 %v1031
  %v1099 = vpop.f32.mrb[0].mxu0
  %v1100 = vadd.f32 0.0, %v1099
  %v1101 = vpop.f32.mrb[0].mxu0
  %v1102 = vadd.f32 0.0, %v1101
  %1103 = vdwg.mxu0
  %v1104 = vadd.f32 %v1029, %v1100
  %v1105 = vxor.u32 %v1104, 2147483648
  %v1106 = vmul.f32 %v1105, 1.442695
  %v1107 = vpow.pop %v1106
  %v1108 = vadd.f32 %v1107, 1.0
  %v1109 = vrcp.pop %v1108
  %v1110 = vmul.f32 1.0, %v1109
  %v1111 = vadd.f32 %v1102, %v146
  %v1112 = vmul.f32 %v1110, %v1111
  %v1114 = vrot.slane %v1029, 2
  %v1116 = vadd.f32 %v1114, %v1112
  %v1117 = vtanh.pop %v1116
  %v1118 = vsub.f32 1.0, %v1110
  %1120 = vrot.lane.b32.xlu0 %v1117, 64
  %v1121 = vpop.permute.xlu0 %1120
  %v1123 = vmul.f32 %v1118, %v1121
  %v1124 = vmul.f32 %v1110, %v887
  %v1125 = vadd.f32 %v1123, %v1124
  %v1126 = vsel %vm60, %v1002, 0
  %1128 = vmatprep.subr.mxu0 %v40
  %1129 = vmatpush1.msra.mxu0 %v39
  %1130 = vmatprep.subr.mxu0 %v42
  %1131 = vmatpush1.msra.mxu0 %v41
  %1132 = vmatprep.subr.mxu0 %v44
  %1133 = vmatpush1.msra.mxu0 %v43
  %1134 = vmatprep.subr.mxu0 %v46
  %1135 = vmatpush1.msra.mxu0 %v45
  %1136 = vmatprep.subr.mxu0 %v48
  %1137 = vmatpush1.msra.mxu0 %v47
  %1138 = vmatprep.subr.mxu0 %v50
  %1139 = vmatpush1.msra.mxu0 %v49
  %1140 = vmatprep.subr.mxu0 %v52
  %1141 = vmatpush1.msra.mxu0 %v51
  %1142 = vmatprep.subr.mxu0 %v54
  %1143 = vmatpush1.msra.mxu0 %v53
  %1144 = vmatprep.subr.mxu0 0.0
  %1145 = vmatpush1.msra.mxu0 0.0
  %1146 = vmatprep.subr.mxu0 0.0
  %1147 = vmatpush1.msra.mxu0 0.0
  %1148 = vmatprep.subr.mxu0 0.0
  %1149 = vmatpush1.msra.mxu0 0.0
  %1150 = vmatprep.subr.mxu0 0.0
  %1151 = vmatpush1.msra.mxu0 0.0
  %1152 = vmatprep.subr.mxu0 0.0
  %1153 = vmatpush1.msra.mxu0 0.0
  %1154 = vmatprep.subr.mxu0 0.0
  %1155 = vmatpush1.msra.mxu0 0.0
  %1156 = vmatprep.subr.mxu0 0.0
  %1157 = vmatpush1.msra.mxu0 0.0
  %1158 = vmatprep.subr.mxu0 0.0
  %1159 = vmatpush1.msra.mxu0 0.0
  %1160 = vmatprep.subr.mxu0 0.0
  %1161 = vmatpush1.msra.mxu0 0.0
  %1162 = vmatprep.subr.mxu0 0.0
  %1163 = vmatpush1.msra.mxu0 0.0
  %1164 = vmatprep.subr.mxu0 0.0
  %1165 = vmatpush1.msra.mxu0 0.0
  %1166 = vmatprep.subr.mxu0 0.0
  %1167 = vmatpush1.msra.mxu0 0.0
  %1168 = vmatprep.subr.mxu0 0.0
  %1169 = vmatpush1.msra.mxu0 0.0
  %1170 = vmatprep.subr.mxu0 0.0
  %1171 = vmatpush1.msra.mxu0 0.0
  %1172 = vmatprep.subr.mxu0 0.0
  %1173 = vmatpush1.msra.mxu0 0.0
  %1174 = vmatprep.subr.mxu0 0.0
  %1175 = vmatpush1.msra.mxu0 0.0
  %1176 = vmatprep.subr.mxu0 0.0
  %1177 = vmatpush1.msra.mxu0 0.0
  %1178 = vmatprep.subr.mxu0 0.0
  %1179 = vmatpush1.msra.mxu0 0.0
  %1180 = vmatprep.subr.mxu0 0.0
  %1181 = vmatpush1.msra.mxu0 0.0
  %1182 = vmatprep.subr.mxu0 0.0
  %1183 = vmatpush1.msra.mxu0 0.0
  %1184 = vmatprep.subr.mxu0 0.0
  %1185 = vmatpush1.msra.mxu0 0.0
  %1186 = vmatprep.subr.mxu0 0.0
  %1187 = vmatpush1.msra.mxu0 0.0
  %1188 = vmatprep.subr.mxu0 0.0
  %1189 = vmatpush1.msra.mxu0 0.0
  %1190 = vmatprep.subr.mxu0 0.0
  %1191 = vmatpush1.msra.mxu0 0.0
  %1192 = vmatprep.mubr.f32.mxu0 0.0
  %1193 = vmatmul.mubr.f32.gmra.mrb[0].mxu0 %v1126
  %v1194 = vpop.f32.mrb[0].mxu0
  %v1195 = vadd.f32 0.0, %v1194
  %v1196 = vpop.f32.mrb[0].mxu0
  %v1197 = vadd.f32 0.0, %v1196
  %1198 = vdwg.mxu0
  %1200 = vrot.lane.b32.xlu0 %v1030, 64
  %v1201 = vpop.permute.xlu0 %1200
  %v1202 = vrot.slane %v1201, 2
  %v1204 = vadd.f32 %v1202, %v1195
  %v1205 = vxor.u32 %v1204, 2147483648
  %v1206 = vmul.f32 %v1205, 1.442695
  %v1207 = vpow.pop %v1206
  %v1208 = vadd.f32 %v1207, 1.0
  %v1209 = vrcp.pop %v1208
  %v1210 = vmul.f32 1.0, %v1209
  %v1211 = vrot.slane %v1030, 4
  %v1215 = vunpack.c.l.s4 1983009808
  %v1216 = vunpack.c.0.s8 %v1215
  %v1217 = vlaneseq
  %v1218 = vshrl.u32 %v1217, 7
  %v1219 = vsub.s32 %v1216, %v1218
  %v1220 = vrot.slane %v1195, %v1219
  %1221 = vrot.lane.b32.xlu0 %v1220, 64
  %v1222 = vpop.permute.xlu0 %1221
  %v1224 = vadd.f32 %v1211, %v1222
  %v1225 = vxor.u32 %v1224, 2147483648
  %v1226 = vmul.f32 %v1225, 1.442695
  %v1227 = vpow.pop %v1226
  %v1228 = vadd.f32 %v1227, 1.0
  %v1229 = vrcp.pop %v1228
  %v1230 = vmul.f32 1.0, %v1229
  %v1231 = vadd.f32 %v1197, %v270
  %v1232 = vmul.f32 %v1210, %v1231
  %v1233 = vrot.slane %v1201, 4
  %v1235 = vadd.f32 %v1233, %v1232
  %v1236 = vtanh.pop %v1235
  %v1237 = vsub.f32 1.0, %v1230
  %v1238 = vmul.f32 %v1237, %v1236
  %v1239 = vmul.f32 %v1230, %v1002
  %v1240 = vadd.f32 %v1238, %v1239
  %v1243 = vunpack.c.l.s4 1983009808
  %v1244 = vunpack.c.0.s8 %v1243
  %v1245 = vlaneseq
  %v1246 = vshrl.u32 %v1245, 7
  %v1247 = vsub.s32 %v1244, %v1246
  %v1248 = vrot.slane %v1125, %v1247
  %1249 = vrot.lane.b32.xlu0 %v1248, 64
  %v1250 = vpop.permute.xlu0 %1249
  %1252 = vst.msk [vmem:[%s1027] sm:$0x3] %vm293, %v1250
  %v1255 = vunpack.c.l.s4 1983009808
  %v1256 = vunpack.c.0.s8 %v1255
  %v1257 = vlaneseq
  %v1258 = vshrl.u32 %v1257, 7
  %v1259 = vsub.s32 %v1256, %v1258
  %v1260 = vrot.slane %v1240, %v1259
  %1261 = vrot.lane.b32.xlu0 %v1260, 64
  %v1262 = vpop.permute.xlu0 %1261
  %1264 = vst.msk [vmem:[%s1014] sm:$0x3] %vm307, %v1262
  %v1265 = vld [vmem:[%s551] sm:$0x3f]
  %v1266 = vld [vmem:[%s549] sm:$0x3f]
  %v1267 = vsel %vm60, %v1250, 0
  %1269 = vmatprep.subr.mxu0 %v24
  %1270 = vmatpush1.msra.mxu0 %v23
  %1271 = vmatprep.subr.mxu0 %v26
  %1272 = vmatpush1.msra.mxu0 %v25
  %1273 = vmatprep.subr.mxu0 %v28
  %1274 = vmatpush1.msra.mxu0 %v27
  %1275 = vmatprep.subr.mxu0 %v30
  %1276 = vmatpush1.msra.mxu0 %v29
  %1277 = vmatprep.subr.mxu0 %v32
  %1278 = vmatpush1.msra.mxu0 %v31
  %1279 = vmatprep.subr.mxu0 %v34
  %1280 = vmatpush1.msra.mxu0 %v33
  %1281 = vmatprep.subr.mxu0 %v36
  %1282 = vmatpush1.msra.mxu0 %v35
  %1283 = vmatprep.subr.mxu0 %v38
  %1284 = vmatpush1.msra.mxu0 %v37
  %1285 = vmatprep.subr.mxu0 0.0
  %1286 = vmatpush1.msra.mxu0 0.0
  %1287 = vmatprep.subr.mxu0 0.0
  %1288 = vmatpush1.msra.mxu0 0.0
  %1289 = vmatprep.subr.mxu0 0.0
  %1290 = vmatpush1.msra.mxu0 0.0
  %1291 = vmatprep.subr.mxu0 0.0
  %1292 = vmatpush1.msra.mxu0 0.0
  %1293 = vmatprep.subr.mxu0 0.0
  %1294 = vmatpush1.msra.mxu0 0.0
  %1295 = vmatprep.subr.mxu0 0.0
  %1296 = vmatpush1.msra.mxu0 0.0
  %1297 = vmatprep.subr.mxu0 0.0
  %1298 = vmatpush1.msra.mxu0 0.0
  %1299 = vmatprep.subr.mxu0 0.0
  %1300 = vmatpush1.msra.mxu0 0.0
  %1301 = vmatprep.subr.mxu0 0.0
  %1302 = vmatpush1.msra.mxu0 0.0
  %1303 = vmatprep.subr.mxu0 0.0
  %1304 = vmatpush1.msra.mxu0 0.0
  %1305 = vmatprep.subr.mxu0 0.0
  %1306 = vmatpush1.msra.mxu0 0.0
  %1307 = vmatprep.subr.mxu0 0.0
  %1308 = vmatpush1.msra.mxu0 0.0
  %1309 = vmatprep.subr.mxu0 0.0
  %1310 = vmatpush1.msra.mxu0 0.0
  %1311 = vmatprep.subr.mxu0 0.0
  %1312 = vmatpush1.msra.mxu0 0.0
  %1313 = vmatprep.subr.mxu0 0.0
  %1314 = vmatpush1.msra.mxu0 0.0
  %1315 = vmatprep.subr.mxu0 0.0
  %1316 = vmatpush1.msra.mxu0 0.0
  %1317 = vmatprep.subr.mxu0 0.0
  %1318 = vmatpush1.msra.mxu0 0.0
  %1319 = vmatprep.subr.mxu0 0.0
  %1320 = vmatpush1.msra.mxu0 0.0
  %1321 = vmatprep.subr.mxu0 0.0
  %1322 = vmatpush1.msra.mxu0 0.0
  %1323 = vmatprep.subr.mxu0 0.0
  %1324 = vmatpush1.msra.mxu0 0.0
  %1325 = vmatprep.subr.mxu0 0.0
  %1326 = vmatpush1.msra.mxu0 0.0
  %1327 = vmatprep.subr.mxu0 0.0
  %1328 = vmatpush1.msra.mxu0 0.0
  %1329 = vmatprep.subr.mxu0 0.0
  %1330 = vmatpush1.msra.mxu0 0.0
  %1331 = vmatprep.subr.mxu0 0.0
  %1332 = vmatpush1.msra.mxu0 0.0
  %1333 = vmatprep.mubr.f32.mxu0 0.0
  %1334 = vmatmul.mubr.f32.gmra.mrb[0].mxu0 %v1267
  %v1335 = vpop.f32.mrb[0].mxu0
  %v1336 = vadd.f32 0.0, %v1335
  %v1337 = vpop.f32.mrb[0].mxu0
  %v1338 = vadd.f32 0.0, %v1337
  %1339 = vdwg.mxu0
  %v1340 = vadd.f32 %v1265, %v1336
  %v1341 = vxor.u32 %v1340, 2147483648
  %v1342 = vmul.f32 %v1341, 1.442695
  %v1343 = vpow.pop %v1342
  %v1344 = vadd.f32 %v1343, 1.0
  %v1345 = vrcp.pop %v1344
  %v1346 = vmul.f32 1.0, %v1345
  %v1347 = vadd.f32 %v1338, %v146
  %v1348 = vmul.f32 %v1346, %v1347
  %v1350 = vrot.slane %v1265, 2
  %v1352 = vadd.f32 %v1350, %v1348
  %v1353 = vtanh.pop %v1352
  %v1354 = vsub.f32 1.0, %v1346
  %1356 = vrot.lane.b32.xlu0 %v1353, 64
  %v1357 = vpop.permute.xlu0 %1356
  %v1359 = vmul.f32 %v1354, %v1357
  %v1360 = vmul.f32 %v1346, %v1125
  %v1361 = vadd.f32 %v1359, %v1360
  %v1362 = vsel %vm60, %v1240, 0
  %1364 = vmatprep.subr.mxu0 %v40
  %1365 = vmatpush1.msra.mxu0 %v39
  %1366 = vmatprep.subr.mxu0 %v42
  %1367 = vmatpush1.msra.mxu0 %v41
  %1368 = vmatprep.subr.mxu0 %v44
  %1369 = vmatpush1.msra.mxu0 %v43
  %1370 = vmatprep.subr.mxu0 %v46
  %1371 = vmatpush1.msra.mxu0 %v45
  %1372 = vmatprep.subr.mxu0 %v48
  %1373 = vmatpush1.msra.mxu0 %v47
  %1374 = vmatprep.subr.mxu0 %v50
  %1375 = vmatpush1.msra.mxu0 %v49
  %1376 = vmatprep.subr.mxu0 %v52
  %1377 = vmatpush1.msra.mxu0 %v51
  %1378 = vmatprep.subr.mxu0 %v54
  %1379 = vmatpush1.msra.mxu0 %v53
  %1380 = vmatprep.subr.mxu0 0.0
  %1381 = vmatpush1.msra.mxu0 0.0
  %1382 = vmatprep.subr.mxu0 0.0
  %1383 = vmatpush1.msra.mxu0 0.0
  %1384 = vmatprep.subr.mxu0 0.0
  %1385 = vmatpush1.msra.mxu0 0.0
  %1386 = vmatprep.subr.mxu0 0.0
  %1387 = vmatpush1.msra.mxu0 0.0
  %1388 = vmatprep.subr.mxu0 0.0
  %1389 = vmatpush1.msra.mxu0 0.0
  %1390 = vmatprep.subr.mxu0 0.0
  %1391 = vmatpush1.msra.mxu0 0.0
  %1392 = vmatprep.subr.mxu0 0.0
  %1393 = vmatpush1.msra.mxu0 0.0
  %1394 = vmatprep.subr.mxu0 0.0
  %1395 = vmatpush1.msra.mxu0 0.0
  %1396 = vmatprep.subr.mxu0 0.0
  %1397 = vmatpush1.msra.mxu0 0.0
  %1398 = vmatprep.subr.mxu0 0.0
  %1399 = vmatpush1.msra.mxu0 0.0
  %1400 = vmatprep.subr.mxu0 0.0
  %1401 = vmatpush1.msra.mxu0 0.0
  %1402 = vmatprep.subr.mxu0 0.0
  %1403 = vmatpush1.msra.mxu0 0.0
  %1404 = vmatprep.subr.mxu0 0.0
  %1405 = vmatpush1.msra.mxu0 0.0
  %1406 = vmatprep.subr.mxu0 0.0
  %1407 = vmatpush1.msra.mxu0 0.0
  %1408 = vmatprep.subr.mxu0 0.0
  %1409 = vmatpush1.msra.mxu0 0.0
  %1410 = vmatprep.subr.mxu0 0.0
  %1411 = vmatpush1.msra.mxu0 0.0
  %1412 = vmatprep.subr.mxu0 0.0
  %1413 = vmatpush1.msra.mxu0 0.0
  %1414 = vmatprep.subr.mxu0 0.0
  %1415 = vmatpush1.msra.mxu0 0.0
  %1416 = vmatprep.subr.mxu0 0.0
  %1417 = vmatpush1.msra.mxu0 0.0
  %1418 = vmatprep.subr.mxu0 0.0
  %1419 = vmatpush1.msra.mxu0 0.0
  %1420 = vmatprep.subr.mxu0 0.0
  %1421 = vmatpush1.msra.mxu0 0.0
  %1422 = vmatprep.subr.mxu0 0.0
  %1423 = vmatpush1.msra.mxu0 0.0
  %1424 = vmatprep.subr.mxu0 0.0
  %1425 = vmatpush1.msra.mxu0 0.0
  %1426 = vmatprep.subr.mxu0 0.0
  %1427 = vmatpush1.msra.mxu0 0.0
  %1428 = vmatprep.mubr.f32.mxu0 0.0
  %1429 = vmatmul.mubr.f32.gmra.mrb[0].mxu0 %v1362
  %v1430 = vpop.f32.mrb[0].mxu0
  %v1431 = vadd.f32 0.0, %v1430
  %v1432 = vpop.f32.mrb[0].mxu0
  %v1433 = vadd.f32 0.0, %v1432
  %1434 = vdwg.mxu0
  %1436 = vrot.lane.b32.xlu0 %v1266, 64
  %v1437 = vpop.permute.xlu0 %1436
  %v1438 = vrot.slane %v1437, 2
  %v1440 = vadd.f32 %v1438, %v1431
  %v1441 = vxor.u32 %v1440, 2147483648
  %v1442 = vmul.f32 %v1441, 1.442695
  %v1443 = vpow.pop %v1442
  %v1444 = vadd.f32 %v1443, 1.0
  %v1445 = vrcp.pop %v1444
  %v1446 = vmul.f32 1.0, %v1445
  %v1447 = vrot.slane %v1266, 4
  %v1451 = vunpack.c.l.s4 1983009808
  %v1452 = vunpack.c.0.s8 %v1451
  %v1453 = vlaneseq
  %v1454 = vshrl.u32 %v1453, 7
  %v1455 = vsub.s32 %v1452, %v1454
  %v1456 = vrot.slane %v1431, %v1455
  %1457 = vrot.lane.b32.xlu0 %v1456, 64
  %v1458 = vpop.permute.xlu0 %1457
  %v1460 = vadd.f32 %v1447, %v1458
  %v1461 = vxor.u32 %v1460, 2147483648
  %v1462 = vmul.f32 %v1461, 1.442695
  %v1463 = vpow.pop %v1462
  %v1464 = vadd.f32 %v1463, 1.0
  %v1465 = vrcp.pop %v1464
  %v1466 = vmul.f32 1.0, %v1465
  %v1467 = vadd.f32 %v1433, %v270
  %v1468 = vmul.f32 %v1446, %v1467
  %v1469 = vrot.slane %v1437, 4
  %v1471 = vadd.f32 %v1469, %v1468
  %v1472 = vtanh.pop %v1471
  %v1473 = vsub.f32 1.0, %v1466
  %v1474 = vmul.f32 %v1473, %v1472
  %v1475 = vmul.f32 %v1466, %v1240
  %v1476 = vadd.f32 %v1474, %v1475
  %v1479 = vunpack.c.l.s4 1983009808
  %v1480 = vunpack.c.0.s8 %v1479
  %v1481 = vlaneseq
  %v1482 = vshrl.u32 %v1481, 7
  %v1483 = vsub.s32 %v1480, %v1482
  %v1484 = vrot.slane %v1361, %v1483
  %1485 = vrot.lane.b32.xlu0 %v1484, 64
  %v1486 = vpop.permute.xlu0 %1485
  %1488 = vst.msk [vmem:[%s787] sm:$0x3] %vm293, %v1486
  %v1491 = vunpack.c.l.s4 1983009808
  %v1492 = vunpack.c.0.s8 %v1491
  %v1493 = vlaneseq
  %v1494 = vshrl.u32 %v1493, 7
  %v1495 = vsub.s32 %v1492, %v1494
  %v1496 = vrot.slane %v1476, %v1495
  %1497 = vrot.lane.b32.xlu0 %v1496, 64
  %v1498 = vpop.permute.xlu0 %1497
  %1500 = vst.msk [vmem:[%s774] sm:$0x3] %vm307, %v1498
  %v1501 = vld [vmem:[%s311] sm:$0x3f]
  %v1502 = vld [vmem:[%s309] sm:$0x3f]
  %v1503 = vsel %vm60, %v1486, 0
  %1505 = vmatprep.subr.mxu0 %v24
  %1506 = vmatpush1.msra.mxu0 %v23
  %1507 = vmatprep.subr.mxu0 %v26
  %1508 = vmatpush1.msra.mxu0 %v25
  %1509 = vmatprep.subr.mxu0 %v28
  %1510 = vmatpush1.msra.mxu0 %v27
  %1511 = vmatprep.subr.mxu0 %v30
  %1512 = vmatpush1.msra.mxu0 %v29
  %1513 = vmatprep.subr.mxu0 %v32
  %1514 = vmatpush1.msra.mxu0 %v31
  %1515 = vmatprep.subr.mxu0 %v34
  %1516 = vmatpush1.msra.mxu0 %v33
  %1517 = vmatprep.subr.mxu0 %v36
  %1518 = vmatpush1.msra.mxu0 %v35
  %1519 = vmatprep.subr.mxu0 %v38
  %1520 = vmatpush1.msra.mxu0 %v37
  %1521 = vmatprep.subr.mxu0 0.0
  %1522 = vmatpush1.msra.mxu0 0.0
  %1523 = vmatprep.subr.mxu0 0.0
  %1524 = vmatpush1.msra.mxu0 0.0
  %1525 = vmatprep.subr.mxu0 0.0
  %1526 = vmatpush1.msra.mxu0 0.0
  %1527 = vmatprep.subr.mxu0 0.0
  %1528 = vmatpush1.msra.mxu0 0.0
  %1529 = vmatprep.subr.mxu0 0.0
  %1530 = vmatpush1.msra.mxu0 0.0
  %1531 = vmatprep.subr.mxu0 0.0
  %1532 = vmatpush1.msra.mxu0 0.0
  %1533 = vmatprep.subr.mxu0 0.0
  %1534 = vmatpush1.msra.mxu0 0.0
  %1535 = vmatprep.subr.mxu0 0.0
  %1536 = vmatpush1.msra.mxu0 0.0
  %1537 = vmatprep.subr.mxu0 0.0
  %1538 = vmatpush1.msra.mxu0 0.0
  %1539 = vmatprep.subr.mxu0 0.0
  %1540 = vmatpush1.msra.mxu0 0.0
  %1541 = vmatprep.subr.mxu0 0.0
  %1542 = vmatpush1.msra.mxu0 0.0
  %1543 = vmatprep.subr.mxu0 0.0
  %1544 = vmatpush1.msra.mxu0 0.0
  %1545 = vmatprep.subr.mxu0 0.0
  %1546 = vmatpush1.msra.mxu0 0.0
  %1547 = vmatprep.subr.mxu0 0.0
  %1548 = vmatpush1.msra.mxu0 0.0
  %1549 = vmatprep.subr.mxu0 0.0
  %1550 = vmatpush1.msra.mxu0 0.0
  %1551 = vmatprep.subr.mxu0 0.0
  %1552 = vmatpush1.msra.mxu0 0.0
  %1553 = vmatprep.subr.mxu0 0.0
  %1554 = vmatpush1.msra.mxu0 0.0
  %1555 = vmatprep.subr.mxu0 0.0
  %1556 = vmatpush1.msra.mxu0 0.0
  %1557 = vmatprep.subr.mxu0 0.0
  %1558 = vmatpush1.msra.mxu0 0.0
  %1559 = vmatprep.subr.mxu0 0.0
  %1560 = vmatpush1.msra.mxu0 0.0
  %1561 = vmatprep.subr.mxu0 0.0
  %1562 = vmatpush1.msra.mxu0 0.0
  %1563 = vmatprep.subr.mxu0 0.0
  %1564 = vmatpush1.msra.mxu0 0.0
  %1565 = vmatprep.subr.mxu0 0.0
  %1566 = vmatpush1.msra.mxu0 0.0
  %1567 = vmatprep.subr.mxu0 0.0
  %1568 = vmatpush1.msra.mxu0 0.0
  %1569 = vmatprep.mubr.f32.mxu0 0.0
  %1570 = vmatmul.mubr.f32.gmra.mrb[0].mxu0 %v1503
  %v1571 = vpop.f32.mrb[0].mxu0
  %v1572 = vadd.f32 0.0, %v1571
  %v1573 = vpop.f32.mrb[0].mxu0
  %v1574 = vadd.f32 0.0, %v1573
  %1575 = vdwg.mxu0
  %v1576 = vadd.f32 %v1501, %v1572
  %v1577 = vxor.u32 %v1576, 2147483648
  %v1578 = vmul.f32 %v1577, 1.442695
  %v1579 = vpow.pop %v1578
  %v1580 = vadd.f32 %v1579, 1.0
  %v1581 = vrcp.pop %v1580
  %v1582 = vmul.f32 1.0, %v1581
  %v1583 = vadd.f32 %v1574, %v146
  %v1584 = vmul.f32 %v1582, %v1583
  %v1586 = vrot.slane %v1501, 2
  %v1588 = vadd.f32 %v1586, %v1584
  %v1589 = vtanh.pop %v1588
  %v1590 = vsub.f32 1.0, %v1582
  %1592 = vrot.lane.b32.xlu0 %v1589, 64
  %v1593 = vpop.permute.xlu0 %1592
  %v1595 = vmul.f32 %v1590, %v1593
  %v1596 = vmul.f32 %v1582, %v1361
  %v1597 = vadd.f32 %v1595, %v1596
  %v1598 = vsel %vm60, %v1476, 0
  %1600 = vmatprep.subr.mxu0 %v40
  %1601 = vmatpush1.msra.mxu0 %v39
  %1602 = vmatprep.subr.mxu0 %v42
  %1603 = vmatpush1.msra.mxu0 %v41
  %1604 = vmatprep.subr.mxu0 %v44
  %1605 = vmatpush1.msra.mxu0 %v43
  %1606 = vmatprep.subr.mxu0 %v46
  %1607 = vmatpush1.msra.mxu0 %v45
  %1608 = vmatprep.subr.mxu0 %v48
  %1609 = vmatpush1.msra.mxu0 %v47
  %1610 = vmatprep.subr.mxu0 %v50
  %1611 = vmatpush1.msra.mxu0 %v49
  %1612 = vmatprep.subr.mxu0 %v52
  %1613 = vmatpush1.msra.mxu0 %v51
  %1614 = vmatprep.subr.mxu0 %v54
  %1615 = vmatpush1.msra.mxu0 %v53
  %1616 = vmatprep.subr.mxu0 0.0
  %1617 = vmatpush1.msra.mxu0 0.0
  %1618 = vmatprep.subr.mxu0 0.0
  %1619 = vmatpush1.msra.mxu0 0.0
  %1620 = vmatprep.subr.mxu0 0.0
  %1621 = vmatpush1.msra.mxu0 0.0
  %1622 = vmatprep.subr.mxu0 0.0
  %1623 = vmatpush1.msra.mxu0 0.0
  %1624 = vmatprep.subr.mxu0 0.0
  %1625 = vmatpush1.msra.mxu0 0.0
  %1626 = vmatprep.subr.mxu0 0.0
  %1627 = vmatpush1.msra.mxu0 0.0
  %1628 = vmatprep.subr.mxu0 0.0
  %1629 = vmatpush1.msra.mxu0 0.0
  %1630 = vmatprep.subr.mxu0 0.0
  %1631 = vmatpush1.msra.mxu0 0.0
  %1632 = vmatprep.subr.mxu0 0.0
  %1633 = vmatpush1.msra.mxu0 0.0
  %1634 = vmatprep.subr.mxu0 0.0
  %1635 = vmatpush1.msra.mxu0 0.0
  %1636 = vmatprep.subr.mxu0 0.0
  %1637 = vmatpush1.msra.mxu0 0.0
  %1638 = vmatprep.subr.mxu0 0.0
  %1639 = vmatpush1.msra.mxu0 0.0
  %1640 = vmatprep.subr.mxu0 0.0
  %1641 = vmatpush1.msra.mxu0 0.0
  %1642 = vmatprep.subr.mxu0 0.0
  %1643 = vmatpush1.msra.mxu0 0.0
  %1644 = vmatprep.subr.mxu0 0.0
  %1645 = vmatpush1.msra.mxu0 0.0
  %1646 = vmatprep.subr.mxu0 0.0
  %1647 = vmatpush1.msra.mxu0 0.0
  %1648 = vmatprep.subr.mxu0 0.0
  %1649 = vmatpush1.msra.mxu0 0.0
  %1650 = vmatprep.subr.mxu0 0.0
  %1651 = vmatpush1.msra.mxu0 0.0
  %1652 = vmatprep.subr.mxu0 0.0
  %1653 = vmatpush1.msra.mxu0 0.0
  %1654 = vmatprep.subr.mxu0 0.0
  %1655 = vmatpush1.msra.mxu0 0.0
  %1656 = vmatprep.subr.mxu0 0.0
  %1657 = vmatpush1.msra.mxu0 0.0
  %1658 = vmatprep.subr.mxu0 0.0
  %1659 = vmatpush1.msra.mxu0 0.0
  %1660 = vmatprep.subr.mxu0 0.0
  %1661 = vmatpush1.msra.mxu0 0.0
  %1662 = vmatprep.subr.mxu0 0.0
  %1663 = vmatpush1.msra.mxu0 0.0
  %1664 = vmatprep.mubr.f32.mxu0 0.0
  %1665 = vmatmul.mubr.f32.gmra.mrb[0].mxu0 %v1598
  %v1666 = vpop.f32.mrb[0].mxu0
  %v1667 = vadd.f32 0.0, %v1666
  %v1668 = vpop.f32.mrb[0].mxu0
  %v1669 = vadd.f32 0.0, %v1668
  %1670 = vdwg.mxu0
  %1672 = vrot.lane.b32.xlu0 %v1502, 64
  %v1673 = vpop.permute.xlu0 %1672
  %v1674 = vrot.slane %v1673, 2
  %v1676 = vadd.f32 %v1674, %v1667
  %v1677 = vxor.u32 %v1676, 2147483648
  %v1678 = vmul.f32 %v1677, 1.442695
  %v1679 = vpow.pop %v1678
  %v1680 = vadd.f32 %v1679, 1.0
  %v1681 = vrcp.pop %v1680
  %v1682 = vmul.f32 1.0, %v1681
  %v1683 = vrot.slane %v1502, 4
  %v1687 = vunpack.c.l.s4 1983009808
  %v1688 = vunpack.c.0.s8 %v1687
  %v1689 = vlaneseq
  %v1690 = vshrl.u32 %v1689, 7
  %v1691 = vsub.s32 %v1688, %v1690
  %v1692 = vrot.slane %v1667, %v1691
  %1693 = vrot.lane.b32.xlu0 %v1692, 64
  %v1694 = vpop.permute.xlu0 %1693
  %v1696 = vadd.f32 %v1683, %v1694
  %v1697 = vxor.u32 %v1696, 2147483648
  %v1698 = vmul.f32 %v1697, 1.442695
  %v1699 = vpow.pop %v1698
  %v1700 = vadd.f32 %v1699, 1.0
  %v1701 = vrcp.pop %v1700
  %v1702 = vmul.f32 1.0, %v1701
  %v1703 = vadd.f32 %v1669, %v270
  %v1704 = vmul.f32 %v1682, %v1703
  %v1705 = vrot.slane %v1673, 4
  %v1707 = vadd.f32 %v1705, %v1704
  %v1708 = vtanh.pop %v1707
  %v1709 = vsub.f32 1.0, %v1702
  %v1710 = vmul.f32 %v1709, %v1708
  %v1711 = vmul.f32 %v1702, %v1476
  %v1712 = vadd.f32 %v1710, %v1711
  %v1715 = vunpack.c.l.s4 1983009808
  %v1716 = vunpack.c.0.s8 %v1715
  %v1717 = vlaneseq
  %v1718 = vshrl.u32 %v1717, 7
  %v1719 = vsub.s32 %v1716, %v1718
  %v1720 = vrot.slane %v1597, %v1719
  %1721 = vrot.lane.b32.xlu0 %v1720, 64
  %v1722 = vpop.permute.xlu0 %1721
  %1724 = vst.msk [vmem:[%s547] sm:$0x3] %vm293, %v1722
  %v1727 = vunpack.c.l.s4 1983009808
  %v1728 = vunpack.c.0.s8 %v1727
  %v1729 = vlaneseq
  %v1730 = vshrl.u32 %v1729, 7
  %v1731 = vsub.s32 %v1728, %v1730
  %v1732 = vrot.slane %v1712, %v1731
  %1733 = vrot.lane.b32.xlu0 %v1732, 64
  %v1734 = vpop.permute.xlu0 %1733
  %1736 = vst.msk [vmem:[%s534] sm:$0x3] %vm307, %v1734
  %v1737 = vld [vmem:[%s58] sm:$0x3f]
  %v1738 = vld [vmem:[%s0] sm:$0x3f]
  %v1739 = vsel %vm60, %v1722, 0
  %1741 = vmatprep.subr.mxu0 %v24
  %1742 = vmatpush1.msra.mxu0 %v23
  %1743 = vmatprep.subr.mxu0 %v26
  %1744 = vmatpush1.msra.mxu0 %v25
  %1745 = vmatprep.subr.mxu0 %v28
  %1746 = vmatpush1.msra.mxu0 %v27
  %1747 = vmatprep.subr.mxu0 %v30
  %1748 = vmatpush1.msra.mxu0 %v29
  %1749 = vmatprep.subr.mxu0 %v32
  %1750 = vmatpush1.msra.mxu0 %v31
  %1751 = vmatprep.subr.mxu0 %v34
  %1752 = vmatpush1.msra.mxu0 %v33
  %1753 = vmatprep.subr.mxu0 %v36
  %1754 = vmatpush1.msra.mxu0 %v35
  %1755 = vmatprep.subr.mxu0 %v38
  %1756 = vmatpush1.msra.mxu0 %v37
  %1757 = vmatprep.subr.mxu0 0.0
  %1758 = vmatpush1.msra.mxu0 0.0
  %1759 = vmatprep.subr.mxu0 0.0
  %1760 = vmatpush1.msra.mxu0 0.0
  %1761 = vmatprep.subr.mxu0 0.0
  %1762 = vmatpush1.msra.mxu0 0.0
  %1763 = vmatprep.subr.mxu0 0.0
  %1764 = vmatpush1.msra.mxu0 0.0
  %1765 = vmatprep.subr.mxu0 0.0
  %1766 = vmatpush1.msra.mxu0 0.0
  %1767 = vmatprep.subr.mxu0 0.0
  %1768 = vmatpush1.msra.mxu0 0.0
  %1769 = vmatprep.subr.mxu0 0.0
  %1770 = vmatpush1.msra.mxu0 0.0
  %1771 = vmatprep.subr.mxu0 0.0
  %1772 = vmatpush1.msra.mxu0 0.0
  %1773 = vmatprep.subr.mxu0 0.0
  %1774 = vmatpush1.msra.mxu0 0.0
  %1775 = vmatprep.subr.mxu0 0.0
  %1776 = vmatpush1.msra.mxu0 0.0
  %1777 = vmatprep.subr.mxu0 0.0
  %1778 = vmatpush1.msra.mxu0 0.0
  %1779 = vmatprep.subr.mxu0 0.0
  %1780 = vmatpush1.msra.mxu0 0.0
  %1781 = vmatprep.subr.mxu0 0.0
  %1782 = vmatpush1.msra.mxu0 0.0
  %1783 = vmatprep.subr.mxu0 0.0
  %1784 = vmatpush1.msra.mxu0 0.0
  %1785 = vmatprep.subr.mxu0 0.0
  %1786 = vmatpush1.msra.mxu0 0.0
  %1787 = vmatprep.subr.mxu0 0.0
  %1788 = vmatpush1.msra.mxu0 0.0
  %1789 = vmatprep.subr.mxu0 0.0
  %1790 = vmatpush1.msra.mxu0 0.0
  %1791 = vmatprep.subr.mxu0 0.0
  %1792 = vmatpush1.msra.mxu0 0.0
  %1793 = vmatprep.subr.mxu0 0.0
  %1794 = vmatpush1.msra.mxu0 0.0
  %1795 = vmatprep.subr.mxu0 0.0
  %1796 = vmatpush1.msra.mxu0 0.0
  %1797 = vmatprep.subr.mxu0 0.0
  %1798 = vmatpush1.msra.mxu0 0.0
  %1799 = vmatprep.subr.mxu0 0.0
  %1800 = vmatpush1.msra.mxu0 0.0
  %1801 = vmatprep.subr.mxu0 0.0
  %1802 = vmatpush1.msra.mxu0 0.0
  %1803 = vmatprep.subr.mxu0 0.0
  %1804 = vmatpush1.msra.mxu0 0.0
  %1805 = vmatprep.mubr.f32.mxu0 0.0
  %1806 = vmatmul.mubr.f32.gmra.mrb[0].mxu0 %v1739
  %v1807 = vpop.f32.mrb[0].mxu0
  %v1808 = vadd.f32 0.0, %v1807
  %v1809 = vpop.f32.mrb[0].mxu0
  %v1810 = vadd.f32 0.0, %v1809
  %1811 = vdwg.mxu0
  %v1812 = vadd.f32 %v1737, %v1808
  %v1813 = vxor.u32 %v1812, 2147483648
  %v1814 = vmul.f32 %v1813, 1.442695
  %v1815 = vpow.pop %v1814
  %v1816 = vadd.f32 %v1815, 1.0
  %v1817 = vrcp.pop %v1816
  %v1818 = vmul.f32 1.0, %v1817
  %v1819 = vadd.f32 %v1810, %v146
  %v1820 = vmul.f32 %v1818, %v1819
  %v1822 = vrot.slane %v1737, 2
  %v1824 = vadd.f32 %v1822, %v1820
  %v1825 = vtanh.pop %v1824
  %v1826 = vsub.f32 1.0, %v1818
  %1828 = vrot.lane.b32.xlu0 %v1825, 64
  %v1829 = vpop.permute.xlu0 %1828
  %v1831 = vmul.f32 %v1826, %v1829
  %v1832 = vmul.f32 %v1818, %v1597
  %v1833 = vadd.f32 %v1831, %v1832
  %v1834 = vsel %vm60, %v1712, 0
  %1836 = vmatprep.subr.mxu0 %v40
  %1837 = vmatpush1.msra.mxu0 %v39
  %1838 = vmatprep.subr.mxu0 %v42
  %1839 = vmatpush1.msra.mxu0 %v41
  %1840 = vmatprep.subr.mxu0 %v44
  %1841 = vmatpush1.msra.mxu0 %v43
  %1842 = vmatprep.subr.mxu0 %v46
  %1843 = vmatpush1.msra.mxu0 %v45
  %1844 = vmatprep.subr.mxu0 %v48
  %1845 = vmatpush1.msra.mxu0 %v47
  %1846 = vmatprep.subr.mxu0 %v50
  %1847 = vmatpush1.msra.mxu0 %v49
  %1848 = vmatprep.subr.mxu0 %v52
  %1849 = vmatpush1.msra.mxu0 %v51
  %1850 = vmatprep.subr.mxu0 %v54
  %1851 = vmatpush1.msra.mxu0 %v53
  %1852 = vmatprep.subr.mxu0 0.0
  %1853 = vmatpush1.msra.mxu0 0.0
  %1854 = vmatprep.subr.mxu0 0.0
  %1855 = vmatpush1.msra.mxu0 0.0
  %1856 = vmatprep.subr.mxu0 0.0
  %1857 = vmatpush1.msra.mxu0 0.0
  %1858 = vmatprep.subr.mxu0 0.0
  %1859 = vmatpush1.msra.mxu0 0.0
  %1860 = vmatprep.subr.mxu0 0.0
  %1861 = vmatpush1.msra.mxu0 0.0
  %1862 = vmatprep.subr.mxu0 0.0
  %1863 = vmatpush1.msra.mxu0 0.0
  %1864 = vmatprep.subr.mxu0 0.0
  %1865 = vmatpush1.msra.mxu0 0.0
  %1866 = vmatprep.subr.mxu0 0.0
  %1867 = vmatpush1.msra.mxu0 0.0
  %1868 = vmatprep.subr.mxu0 0.0
  %1869 = vmatpush1.msra.mxu0 0.0
  %1870 = vmatprep.subr.mxu0 0.0
  %1871 = vmatpush1.msra.mxu0 0.0
  %1872 = vmatprep.subr.mxu0 0.0
  %1873 = vmatpush1.msra.mxu0 0.0
  %1874 = vmatprep.subr.mxu0 0.0
  %1875 = vmatpush1.msra.mxu0 0.0
  %1876 = vmatprep.subr.mxu0 0.0
  %1877 = vmatpush1.msra.mxu0 0.0
  %1878 = vmatprep.subr.mxu0 0.0
  %1879 = vmatpush1.msra.mxu0 0.0
  %1880 = vmatprep.subr.mxu0 0.0
  %1881 = vmatpush1.msra.mxu0 0.0
  %1882 = vmatprep.subr.mxu0 0.0
  %1883 = vmatpush1.msra.mxu0 0.0
  %1884 = vmatprep.subr.mxu0 0.0
  %1885 = vmatpush1.msra.mxu0 0.0
  %1886 = vmatprep.subr.mxu0 0.0
  %1887 = vmatpush1.msra.mxu0 0.0
  %1888 = vmatprep.subr.mxu0 0.0
  %1889 = vmatpush1.msra.mxu0 0.0
  %1890 = vmatprep.subr.mxu0 0.0
  %1891 = vmatpush1.msra.mxu0 0.0
  %1892 = vmatprep.subr.mxu0 0.0
  %1893 = vmatpush1.msra.mxu0 0.0
  %1894 = vmatprep.subr.mxu0 0.0
  %1895 = vmatpush1.msra.mxu0 0.0
  %1896 = vmatprep.subr.mxu0 0.0
  %1897 = vmatpush1.msra.mxu0 0.0
  %1898 = vmatprep.subr.mxu0 0.0
  %1899 = vmatpush1.msra.mxu0 0.0
  %1900 = vmatprep.mubr.f32.mxu0 0.0
  %1901 = vmatmul.mubr.f32.gmra.mrb[0].mxu0 %v1834
  %v1902 = vpop.f32.mrb[0].mxu0
  %v1903 = vadd.f32 0.0, %v1902
  %v1904 = vpop.f32.mrb[0].mxu0
  %v1905 = vadd.f32 0.0, %v1904
  %1906 = vdwg.mxu0
  %1908 = vrot.lane.b32.xlu0 %v1738, 64
  %v1909 = vpop.permute.xlu0 %1908
  %v1910 = vrot.slane %v1909, 2
  %v1912 = vadd.f32 %v1910, %v1903
  %v1913 = vxor.u32 %v1912, 2147483648
  %v1914 = vmul.f32 %v1913, 1.442695
  %v1915 = vpow.pop %v1914
  %v1916 = vadd.f32 %v1915, 1.0
  %v1917 = vrcp.pop %v1916
  %v1918 = vmul.f32 1.0, %v1917
  %v1919 = vrot.slane %v1738, 4
  %v1923 = vunpack.c.l.s4 1983009808
  %v1924 = vunpack.c.0.s8 %v1923
  %v1925 = vlaneseq
  %v1926 = vshrl.u32 %v1925, 7
  %v1927 = vsub.s32 %v1924, %v1926
  %v1928 = vrot.slane %v1903, %v1927
  %1929 = vrot.lane.b32.xlu0 %v1928, 64
  %v1930 = vpop.permute.xlu0 %1929
  %v1932 = vadd.f32 %v1919, %v1930
  %v1933 = vxor.u32 %v1932, 2147483648
  %v1934 = vmul.f32 %v1933, 1.442695
  %v1935 = vpow.pop %v1934
  %v1936 = vadd.f32 %v1935, 1.0
  %v1937 = vrcp.pop %v1936
  %v1938 = vmul.f32 1.0, %v1937
  %v1939 = vadd.f32 %v1905, %v270
  %v1940 = vmul.f32 %v1918, %v1939
  %v1941 = vrot.slane %v1909, 4
  %v1943 = vadd.f32 %v1941, %v1940
  %v1944 = vtanh.pop %v1943
  %v1945 = vsub.f32 1.0, %v1938
  %v1946 = vmul.f32 %v1945, %v1944
  %v1947 = vmul.f32 %v1938, %v1712
  %v1948 = vadd.f32 %v1946, %v1947
  %v1951 = vunpack.c.l.s4 1983009808
  %v1952 = vunpack.c.0.s8 %v1951
  %v1953 = vlaneseq
  %v1954 = vshrl.u32 %v1953, 7
  %v1955 = vsub.s32 %v1952, %v1954
  %v1956 = vrot.slane %v1833, %v1955
  %1957 = vrot.lane.b32.xlu0 %v1956, 64
  %v1958 = vpop.permute.xlu0 %1957
  %1960 = vst.msk [vmem:[%s306] sm:$0x3] %vm293, %v1958
  %v1963 = vunpack.c.l.s4 1983009808
  %v1964 = vunpack.c.0.s8 %v1963
  %v1965 = vlaneseq
  %v1966 = vshrl.u32 %v1965, 7
  %v1967 = vsub.s32 %v1964, %v1966
  %v1968 = vrot.slane %v1948, %v1967
  %1969 = vrot.lane.b32.xlu0 %v1968, 64
  %v1970 = vpop.permute.xlu0 %1969
  %1972 = vst.msk [vmem:[#allocation2] sm:$0x3] %vm307, %v1970
  %v1973 = vld [vmem:[%s5] sm:$0xff]
  %v1974 = vld [vmem:[%s5 + $0x8] sm:$0xff]
  %v1975 = vld [vmem:[%s5 + $0x10] sm:$0xff]
  %v1976 = vld [vmem:[%s5 + $0x18] sm:$0xff]
  %v1977 = vld [vmem:[%s5 + $0x20] sm:$0xff]
  %v1978 = vld [vmem:[%s5 + $0x28] sm:$0xff]
  %v1979 = vld [vmem:[%s5 + $0x30] sm:$0xff]
  %v1980 = vld [vmem:[%s5 + $0x38] sm:$0xff]
  %v1981 = vld [vmem:[%s5 + $0x40] sm:$0xff]
  %v1982 = vld [vmem:[%s5 + $0x48] sm:$0xff]
  %v1983 = vld [vmem:[%s5 + $0x50] sm:$0xff]
  %v1984 = vld [vmem:[%s5 + $0x58] sm:$0xff]
  %v1985 = vld [vmem:[%s5 + $0x60] sm:$0xff]
  %v1986 = vld [vmem:[%s5 + $0x68] sm:$0xff]
  %v1987 = vld [vmem:[%s5 + $0x70] sm:$0xff]
  %v1988 = vld [vmem:[%s5 + $0x78] sm:$0xff]
  %v1989 = vld [vmem:[#allocation2] sm:$0x3]
  %1990 = vmatprep.subr.mxu0 0.0
  %1991 = vmatpush1.msra.mxu0 %v1973
  %1992 = vmatprep.subr.mxu0 0.0
  %1993 = vmatpush1.msra.mxu0 %v1974
  %1994 = vmatprep.subr.mxu0 0.0
  %1995 = vmatpush1.msra.mxu0 %v1975
  %1996 = vmatprep.subr.mxu0 0.0
  %1997 = vmatpush1.msra.mxu0 %v1976
  %1998 = vmatprep.subr.mxu0 0.0
  %1999 = vmatpush1.msra.mxu0 %v1977
  %2000 = vmatprep.subr.mxu0 0.0
  %2001 = vmatpush1.msra.mxu0 %v1978
  %2002 = vmatprep.subr.mxu0 0.0
  %2003 = vmatpush1.msra.mxu0 %v1979
  %2004 = vmatprep.subr.mxu0 0.0
  %2005 = vmatpush1.msra.mxu0 %v1980
  %2006 = vmatprep.subr.mxu0 0.0
  %2007 = vmatpush1.msra.mxu0 %v1981
  %2008 = vmatprep.subr.mxu0 0.0
  %2009 = vmatpush1.msra.mxu0 %v1982
  %2010 = vmatprep.subr.mxu0 0.0
  %2011 = vmatpush1.msra.mxu0 %v1983
  %2012 = vmatprep.subr.mxu0 0.0
  %2013 = vmatpush1.msra.mxu0 %v1984
  %2014 = vmatprep.subr.mxu0 0.0
  %2015 = vmatpush1.msra.mxu0 %v1985
  %2016 = vmatprep.subr.mxu0 0.0
  %2017 = vmatpush1.msra.mxu0 %v1986
  %2018 = vmatprep.subr.mxu0 0.0
  %2019 = vmatpush1.msra.mxu0 %v1987
  %2020 = vmatprep.subr.mxu0 0.0
  %2021 = vmatpush1.msra.mxu0 %v1988
  %2022 = vmatprep.subr.mxu0 0.0
  %2023 = vmatpush1.msra.mxu0 0.0
  %2024 = vmatprep.subr.mxu0 0.0
  %2025 = vmatpush1.msra.mxu0 0.0
  %2026 = vmatprep.subr.mxu0 0.0
  %2027 = vmatpush1.msra.mxu0 0.0
  %2028 = vmatprep.subr.mxu0 0.0
  %2029 = vmatpush1.msra.mxu0 0.0
  %2030 = vmatprep.subr.mxu0 0.0
  %2031 = vmatpush1.msra.mxu0 0.0
  %2032 = vmatprep.subr.mxu0 0.0
  %2033 = vmatpush1.msra.mxu0 0.0
  %2034 = vmatprep.subr.mxu0 0.0
  %2035 = vmatpush1.msra.mxu0 0.0
  %2036 = vmatprep.subr.mxu0 0.0
  %2037 = vmatpush1.msra.mxu0 0.0
  %2038 = vmatprep.subr.mxu0 0.0
  %2039 = vmatpush1.msra.mxu0 0.0
  %2040 = vmatprep.subr.mxu0 0.0
  %2041 = vmatpush1.msra.mxu0 0.0
  %2042 = vmatprep.subr.mxu0 0.0
  %2043 = vmatpush1.msra.mxu0 0.0
  %2044 = vmatprep.subr.mxu0 0.0
  %2045 = vmatpush1.msra.mxu0 0.0
  %2046 = vmatprep.subr.mxu0 0.0
  %2047 = vmatpush1.msra.mxu0 0.0
  %2048 = vmatprep.subr.mxu0 0.0
  %2049 = vmatpush1.msra.mxu0 0.0
  %2050 = vmatprep.subr.mxu0 0.0
  %2051 = vmatpush1.msra.mxu0 0.0
  %2052 = vmatprep.subr.mxu0 0.0
  %2053 = vmatpush1.msra.mxu0 0.0
  %2054 = vmatprep.mubr.f32.mxu0 0.0
  %2055 = vmatmul.mubr.f32.gmra.mrb[0].mxu0 %v1989
  %v2056 = vpop.f32.mrb[0].mxu0
  %v2057 = vadd.f32 0.0, %v2056
  %v2058 = vpop.f32.mrb[0].mxu0
  %2059 = vdwg.mxu0
  %v2060 = vxor.u32 %v2057, 2147483648
  %v2061 = vmul.f32 %v2060, 1.442695
  %v2062 = vpow.pop %v2061
  %v2063 = vadd.f32 %v2062, 1.0
  %v2064 = vrcp.pop %v2063
  %v2065 = vmul.f32 1.0, %v2064
  %2066 = vst [vmem:[#allocation3] sm:$0x3] %v2065
  %v2067 = vld [vmem:[%s534] sm:$0x3]
  %2068 = vmatprep.subr.mxu0 0.0
  %2069 = vmatpush1.msra.mxu0 %v1973
  %2070 = vmatprep.subr.mxu0 0.0
  %2071 = vmatpush1.msra.mxu0 %v1974
  %2072 = vmatprep.subr.mxu0 0.0
  %2073 = vmatpush1.msra.mxu0 %v1975
  %2074 = vmatprep.subr.mxu0 0.0
  %2075 = vmatpush1.msra.mxu0 %v1976
  %2076 = vmatprep.subr.mxu0 0.0
  %2077 = vmatpush1.msra.mxu0 %v1977
  %2078 = vmatprep.subr.mxu0 0.0
  %2079 = vmatpush1.msra.mxu0 %v1978
  %2080 = vmatprep.subr.mxu0 0.0
  %2081 = vmatpush1.msra.mxu0 %v1979
  %2082 = vmatprep.subr.mxu0 0.0
  %2083 = vmatpush1.msra.mxu0 %v1980
  %2084 = vmatprep.subr.mxu0 0.0
  %2085 = vmatpush1.msra.mxu0 %v1981
  %2086 = vmatprep.subr.mxu0 0.0
  %2087 = vmatpush1.msra.mxu0 %v1982
  %2088 = vmatprep.subr.mxu0 0.0
  %2089 = vmatpush1.msra.mxu0 %v1983
  %2090 = vmatprep.subr.mxu0 0.0
  %2091 = vmatpush1.msra.mxu0 %v1984
  %2092 = vmatprep.subr.mxu0 0.0
  %2093 = vmatpush1.msra.mxu0 %v1985
  %2094 = vmatprep.subr.mxu0 0.0
  %2095 = vmatpush1.msra.mxu0 %v1986
  %2096 = vmatprep.subr.mxu0 0.0
  %2097 = vmatpush1.msra.mxu0 %v1987
  %2098 = vmatprep.subr.mxu0 0.0
  %2099 = vmatpush1.msra.mxu0 %v1988
  %2100 = vmatprep.subr.mxu0 0.0
  %2101 = vmatpush1.msra.mxu0 0.0
  %2102 = vmatprep.subr.mxu0 0.0
  %2103 = vmatpush1.msra.mxu0 0.0
  %2104 = vmatprep.subr.mxu0 0.0
  %2105 = vmatpush1.msra.mxu0 0.0
  %2106 = vmatprep.subr.mxu0 0.0
  %2107 = vmatpush1.msra.mxu0 0.0
  %2108 = vmatprep.subr.mxu0 0.0
  %2109 = vmatpush1.msra.mxu0 0.0
  %2110 = vmatprep.subr.mxu0 0.0
  %2111 = vmatpush1.msra.mxu0 0.0
  %2112 = vmatprep.subr.mxu0 0.0
  %2113 = vmatpush1.msra.mxu0 0.0
  %2114 = vmatprep.subr.mxu0 0.0
  %2115 = vmatpush1.msra.mxu0 0.0
  %2116 = vmatprep.subr.mxu0 0.0
  %2117 = vmatpush1.msra.mxu0 0.0
  %2118 = vmatprep.subr.mxu0 0.0
  %2119 = vmatpush1.msra.mxu0 0.0
  %2120 = vmatprep.subr.mxu0 0.0
  %2121 = vmatpush1.msra.mxu0 0.0
  %2122 = vmatprep.subr.mxu0 0.0
  %2123 = vmatpush1.msra.mxu0 0.0
  %2124 = vmatprep.subr.mxu0 0.0
  %2125 = vmatpush1.msra.mxu0 0.0
  %2126 = vmatprep.subr.mxu0 0.0
  %2127 = vmatpush1.msra.mxu0 0.0
  %2128 = vmatprep.subr.mxu0 0.0
  %2129 = vmatpush1.msra.mxu0 0.0
  %2130 = vmatprep.subr.mxu0 0.0
  %2131 = vmatpush1.msra.mxu0 0.0
  %2132 = vmatprep.mubr.f32.mxu0 0.0
  %2133 = vmatmul.mubr.f32.gmra.mrb[0].mxu0 %v2067
  %v2134 = vpop.f32.mrb[0].mxu0
  %v2135 = vadd.f32 0.0, %v2134
  %v2136 = vpop.f32.mrb[0].mxu0
  %2137 = vdwg.mxu0
  %v2138 = vxor.u32 %v2135, 2147483648
  %v2139 = vmul.f32 %v2138, 1.442695
  %v2140 = vpow.pop %v2139
  %v2141 = vadd.f32 %v2140, 1.0
  %v2142 = vrcp.pop %v2141
  %v2143 = vmul.f32 1.0, %v2142
  %s2144 = scalar_lea.vmem [#allocation3], 2
  %2145 = vst [vmem:[%s2144] sm:$0x3] %v2143
  %v2146 = vld [vmem:[%s774] sm:$0x3]
  %2147 = vmatprep.subr.mxu0 0.0
  %2148 = vmatpush1.msra.mxu0 %v1973
  %2149 = vmatprep.subr.mxu0 0.0
  %2150 = vmatpush1.msra.mxu0 %v1974
  %2151 = vmatprep.subr.mxu0 0.0
  %2152 = vmatpush1.msra.mxu0 %v1975
  %2153 = vmatprep.subr.mxu0 0.0
  %2154 = vmatpush1.msra.mxu0 %v1976
  %2155 = vmatprep.subr.mxu0 0.0
  %2156 = vmatpush1.msra.mxu0 %v1977
  %2157 = vmatprep.subr.mxu0 0.0
  %2158 = vmatpush1.msra.mxu0 %v1978
  %2159 = vmatprep.subr.mxu0 0.0
  %2160 = vmatpush1.msra.mxu0 %v1979
  %2161 = vmatprep.subr.mxu0 0.0
  %2162 = vmatpush1.msra.mxu0 %v1980
  %2163 = vmatprep.subr.mxu0 0.0
  %2164 = vmatpush1.msra.mxu0 %v1981
  %2165 = vmatprep.subr.mxu0 0.0
  %2166 = vmatpush1.msra.mxu0 %v1982
  %2167 = vmatprep.subr.mxu0 0.0
  %2168 = vmatpush1.msra.mxu0 %v1983
  %2169 = vmatprep.subr.mxu0 0.0
  %2170 = vmatpush1.msra.mxu0 %v1984
  %2171 = vmatprep.subr.mxu0 0.0
  %2172 = vmatpush1.msra.mxu0 %v1985
  %2173 = vmatprep.subr.mxu0 0.0
  %2174 = vmatpush1.msra.mxu0 %v1986
  %2175 = vmatprep.subr.mxu0 0.0
  %2176 = vmatpush1.msra.mxu0 %v1987
  %2177 = vmatprep.subr.mxu0 0.0
  %2178 = vmatpush1.msra.mxu0 %v1988
  %2179 = vmatprep.subr.mxu0 0.0
  %2180 = vmatpush1.msra.mxu0 0.0
  %2181 = vmatprep.subr.mxu0 0.0
  %2182 = vmatpush1.msra.mxu0 0.0
  %2183 = vmatprep.subr.mxu0 0.0
  %2184 = vmatpush1.msra.mxu0 0.0
  %2185 = vmatprep.subr.mxu0 0.0
  %2186 = vmatpush1.msra.mxu0 0.0
  %2187 = vmatprep.subr.mxu0 0.0
  %2188 = vmatpush1.msra.mxu0 0.0
  %2189 = vmatprep.subr.mxu0 0.0
  %2190 = vmatpush1.msra.mxu0 0.0
  %2191 = vmatprep.subr.mxu0 0.0
  %2192 = vmatpush1.msra.mxu0 0.0
  %2193 = vmatprep.subr.mxu0 0.0
  %2194 = vmatpush1.msra.mxu0 0.0
  %2195 = vmatprep.subr.mxu0 0.0
  %2196 = vmatpush1.msra.mxu0 0.0
  %2197 = vmatprep.subr.mxu0 0.0
  %2198 = vmatpush1.msra.mxu0 0.0
  %2199 = vmatprep.subr.mxu0 0.0
  %2200 = vmatpush1.msra.mxu0 0.0
  %2201 = vmatprep.subr.mxu0 0.0
  %2202 = vmatpush1.msra.mxu0 0.0
  %2203 = vmatprep.subr.mxu0 0.0
  %2204 = vmatpush1.msra.mxu0 0.0
  %2205 = vmatprep.subr.mxu0 0.0
  %2206 = vmatpush1.msra.mxu0 0.0
  %2207 = vmatprep.subr.mxu0 0.0
  %2208 = vmatpush1.msra.mxu0 0.0
  %2209 = vmatprep.subr.mxu0 0.0
  %2210 = vmatpush1.msra.mxu0 0.0
  %2211 = vmatprep.mubr.f32.mxu0 0.0
  %2212 = vmatmul.mubr.f32.gmra.mrb[0].mxu0 %v2146
  %v2213 = vpop.f32.mrb[0].mxu0
  %v2214 = vadd.f32 0.0, %v2213
  %v2215 = vpop.f32.mrb[0].mxu0
  %2216 = vdwg.mxu0
  %v2217 = vxor.u32 %v2214, 2147483648
  %v2218 = vmul.f32 %v2217, 1.442695
  %v2219 = vpow.pop %v2218
  %v2220 = vadd.f32 %v2219, 1.0
  %v2221 = vrcp.pop %v2220
  %v2222 = vmul.f32 1.0, %v2221
  %s2223 = scalar_lea.vmem [#allocation3], 4
  %2224 = vst [vmem:[%s2223] sm:$0x3] %v2222
  %v2225 = vld [vmem:[%s1014] sm:$0x3]
  %2226 = vmatprep.subr.mxu0 0.0
  %2227 = vmatpush1.msra.mxu0 %v1973
  %2228 = vmatprep.subr.mxu0 0.0
  %2229 = vmatpush1.msra.mxu0 %v1974
  %2230 = vmatprep.subr.mxu0 0.0
  %2231 = vmatpush1.msra.mxu0 %v1975
  %2232 = vmatprep.subr.mxu0 0.0
  %2233 = vmatpush1.msra.mxu0 %v1976
  %2234 = vmatprep.subr.mxu0 0.0
  %2235 = vmatpush1.msra.mxu0 %v1977
  %2236 = vmatprep.subr.mxu0 0.0
  %2237 = vmatpush1.msra.mxu0 %v1978
  %2238 = vmatprep.subr.mxu0 0.0
  %2239 = vmatpush1.msra.mxu0 %v1979
  %2240 = vmatprep.subr.mxu0 0.0
  %2241 = vmatpush1.msra.mxu0 %v1980
  %2242 = vmatprep.subr.mxu0 0.0
  %2243 = vmatpush1.msra.mxu0 %v1981
  %2244 = vmatprep.subr.mxu0 0.0
  %2245 = vmatpush1.msra.mxu0 %v1982
  %2246 = vmatprep.subr.mxu0 0.0
  %2247 = vmatpush1.msra.mxu0 %v1983
  %2248 = vmatprep.subr.mxu0 0.0
  %2249 = vmatpush1.msra.mxu0 %v1984
  %2250 = vmatprep.subr.mxu0 0.0
  %2251 = vmatpush1.msra.mxu0 %v1985
  %2252 = vmatprep.subr.mxu0 0.0
  %2253 = vmatpush1.msra.mxu0 %v1986
  %2254 = vmatprep.subr.mxu0 0.0
  %2255 = vmatpush1.msra.mxu0 %v1987
  %2256 = vmatprep.subr.mxu0 0.0
  %2257 = vmatpush1.msra.mxu0 %v1988
  %2258 = vmatprep.subr.mxu0 0.0
  %2259 = vmatpush1.msra.mxu0 0.0
  %2260 = vmatprep.subr.mxu0 0.0
  %2261 = vmatpush1.msra.mxu0 0.0
  %2262 = vmatprep.subr.mxu0 0.0
  %2263 = vmatpush1.msra.mxu0 0.0
  %2264 = vmatprep.subr.mxu0 0.0
  %2265 = vmatpush1.msra.mxu0 0.0
  %2266 = vmatprep.subr.mxu0 0.0
  %2267 = vmatpush1.msra.mxu0 0.0
  %2268 = vmatprep.subr.mxu0 0.0
  %2269 = vmatpush1.msra.mxu0 0.0
  %2270 = vmatprep.subr.mxu0 0.0
  %2271 = vmatpush1.msra.mxu0 0.0
  %2272 = vmatprep.subr.mxu0 0.0
  %2273 = vmatpush1.msra.mxu0 0.0
  %2274 = vmatprep.subr.mxu0 0.0
  %2275 = vmatpush1.msra.mxu0 0.0
  %2276 = vmatprep.subr.mxu0 0.0
  %2277 = vmatpush1.msra.mxu0 0.0
  %2278 = vmatprep.subr.mxu0 0.0
  %2279 = vmatpush1.msra.mxu0 0.0
  %2280 = vmatprep.subr.mxu0 0.0
  %2281 = vmatpush1.msra.mxu0 0.0
  %2282 = vmatprep.subr.mxu0 0.0
  %2283 = vmatpush1.msra.mxu0 0.0
  %2284 = vmatprep.subr.mxu0 0.0
  %2285 = vmatpush1.msra.mxu0 0.0
  %2286 = vmatprep.subr.mxu0 0.0
  %2287 = vmatpush1.msra.mxu0 0.0
  %2288 = vmatprep.subr.mxu0 0.0
  %2289 = vmatpush1.msra.mxu0 0.0
  %2290 = vmatprep.mubr.f32.mxu0 0.0
  %2291 = vmatmul.mubr.f32.gmra.mrb[0].mxu0 %v2225
  %v2292 = vpop.f32.mrb[0].mxu0
  %v2293 = vadd.f32 0.0, %v2292
  %v2294 = vpop.f32.mrb[0].mxu0
  %2295 = vdwg.mxu0
  %v2296 = vxor.u32 %v2293, 2147483648
  %v2297 = vmul.f32 %v2296, 1.442695
  %v2298 = vpow.pop %v2297
  %v2299 = vadd.f32 %v2298, 1.0
  %v2300 = vrcp.pop %v2299
  %v2301 = vmul.f32 1.0, %v2300
  %s2302 = scalar_lea.vmem [#allocation3], 6
  %2303 = vst [vmem:[%s2302] sm:$0x3] %v2301
  %v2304 = vld [vmem:[%s1027] sm:$0x3]
  %2305 = vmatprep.subr.mxu0 0.0
  %2306 = vmatpush1.msra.mxu0 %v1973
  %2307 = vmatprep.subr.mxu0 0.0
  %2308 = vmatpush1.msra.mxu0 %v1974
  %2309 = vmatprep.subr.mxu0 0.0
  %2310 = vmatpush1.msra.mxu0 %v1975
  %2311 = vmatprep.subr.mxu0 0.0
  %2312 = vmatpush1.msra.mxu0 %v1976
  %2313 = vmatprep.subr.mxu0 0.0
  %2314 = vmatpush1.msra.mxu0 %v1977
  %2315 = vmatprep.subr.mxu0 0.0
  %2316 = vmatpush1.msra.mxu0 %v1978
  %2317 = vmatprep.subr.mxu0 0.0
  %2318 = vmatpush1.msra.mxu0 %v1979
  %2319 = vmatprep.subr.mxu0 0.0
  %2320 = vmatpush1.msra.mxu0 %v1980
  %2321 = vmatprep.subr.mxu0 0.0
  %2322 = vmatpush1.msra.mxu0 %v1981
  %2323 = vmatprep.subr.mxu0 0.0
  %2324 = vmatpush1.msra.mxu0 %v1982
  %2325 = vmatprep.subr.mxu0 0.0
  %2326 = vmatpush1.msra.mxu0 %v1983
  %2327 = vmatprep.subr.mxu0 0.0
  %2328 = vmatpush1.msra.mxu0 %v1984
  %2329 = vmatprep.subr.mxu0 0.0
  %2330 = vmatpush1.msra.mxu0 %v1985
  %2331 = vmatprep.subr.mxu0 0.0
  %2332 = vmatpush1.msra.mxu0 %v1986
  %2333 = vmatprep.subr.mxu0 0.0
  %2334 = vmatpush1.msra.mxu0 %v1987
  %2335 = vmatprep.subr.mxu0 0.0
  %2336 = vmatpush1.msra.mxu0 %v1988
  %2337 = vmatprep.subr.mxu0 0.0
  %2338 = vmatpush1.msra.mxu0 0.0
  %2339 = vmatprep.subr.mxu0 0.0
  %2340 = vmatpush1.msra.mxu0 0.0
  %2341 = vmatprep.subr.mxu0 0.0
  %2342 = vmatpush1.msra.mxu0 0.0
  %2343 = vmatprep.subr.mxu0 0.0
  %2344 = vmatpush1.msra.mxu0 0.0
  %2345 = vmatprep.subr.mxu0 0.0
  %2346 = vmatpush1.msra.mxu0 0.0
  %2347 = vmatprep.subr.mxu0 0.0
  %2348 = vmatpush1.msra.mxu0 0.0
  %2349 = vmatprep.subr.mxu0 0.0
  %2350 = vmatpush1.msra.mxu0 0.0
  %2351 = vmatprep.subr.mxu0 0.0
  %2352 = vmatpush1.msra.mxu0 0.0
  %2353 = vmatprep.subr.mxu0 0.0
  %2354 = vmatpush1.msra.mxu0 0.0
  %2355 = vmatprep.subr.mxu0 0.0
  %2356 = vmatpush1.msra.mxu0 0.0
  %2357 = vmatprep.subr.mxu0 0.0
  %2358 = vmatpush1.msra.mxu0 0.0
  %2359 = vmatprep.subr.mxu0 0.0
  %2360 = vmatpush1.msra.mxu0 0.0
  %2361 = vmatprep.subr.mxu0 0.0
  %2362 = vmatpush1.msra.mxu0 0.0
  %2363 = vmatprep.subr.mxu0 0.0
  %2364 = vmatpush1.msra.mxu0 0.0
  %2365 = vmatprep.subr.mxu0 0.0
  %2366 = vmatpush1.msra.mxu0 0.0
  %2367 = vmatprep.subr.mxu0 0.0
  %2368 = vmatpush1.msra.mxu0 0.0
  %2369 = vmatprep.mubr.f32.mxu0 0.0
  %2370 = vmatmul.mubr.f32.gmra.mrb[0].mxu0 %v2304
  %v2371 = vpop.f32.mrb[0].mxu0
  %v2372 = vadd.f32 0.0, %v2371
  %v2373 = vpop.f32.mrb[0].mxu0
  %2374 = vdwg.mxu0
  %v2375 = vxor.u32 %v2372, 2147483648
  %v2376 = vmul.f32 %v2375, 1.442695
  %v2377 = vpow.pop %v2376
  %v2378 = vadd.f32 %v2377, 1.0
  %v2379 = vrcp.pop %v2378
  %v2380 = vmul.f32 1.0, %v2379
  %s2381 = scalar_lea.vmem [#allocation3], 8
  %2382 = vst [vmem:[%s2381] sm:$0x3] %v2380
  %v2383 = vld [vmem:[%s787] sm:$0x3]
  %2384 = vmatprep.subr.mxu0 0.0
  %2385 = vmatpush1.msra.mxu0 %v1973
  %2386 = vmatprep.subr.mxu0 0.0
  %2387 = vmatpush1.msra.mxu0 %v1974
  %2388 = vmatprep.subr.mxu0 0.0
  %2389 = vmatpush1.msra.mxu0 %v1975
  %2390 = vmatprep.subr.mxu0 0.0
  %2391 = vmatpush1.msra.mxu0 %v1976
  %2392 = vmatprep.subr.mxu0 0.0
  %2393 = vmatpush1.msra.mxu0 %v1977
  %2394 = vmatprep.subr.mxu0 0.0
  %2395 = vmatpush1.msra.mxu0 %v1978
  %2396 = vmatprep.subr.mxu0 0.0
  %2397 = vmatpush1.msra.mxu0 %v1979
  %2398 = vmatprep.subr.mxu0 0.0
  %2399 = vmatpush1.msra.mxu0 %v1980
  %2400 = vmatprep.subr.mxu0 0.0
  %2401 = vmatpush1.msra.mxu0 %v1981
  %2402 = vmatprep.subr.mxu0 0.0
  %2403 = vmatpush1.msra.mxu0 %v1982
  %2404 = vmatprep.subr.mxu0 0.0
  %2405 = vmatpush1.msra.mxu0 %v1983
  %2406 = vmatprep.subr.mxu0 0.0
  %2407 = vmatpush1.msra.mxu0 %v1984
  %2408 = vmatprep.subr.mxu0 0.0
  %2409 = vmatpush1.msra.mxu0 %v1985
  %2410 = vmatprep.subr.mxu0 0.0
  %2411 = vmatpush1.msra.mxu0 %v1986
  %2412 = vmatprep.subr.mxu0 0.0
  %2413 = vmatpush1.msra.mxu0 %v1987
  %2414 = vmatprep.subr.mxu0 0.0
  %2415 = vmatpush1.msra.mxu0 %v1988
  %2416 = vmatprep.subr.mxu0 0.0
  %2417 = vmatpush1.msra.mxu0 0.0
  %2418 = vmatprep.subr.mxu0 0.0
  %2419 = vmatpush1.msra.mxu0 0.0
  %2420 = vmatprep.subr.mxu0 0.0
  %2421 = vmatpush1.msra.mxu0 0.0
  %2422 = vmatprep.subr.mxu0 0.0
  %2423 = vmatpush1.msra.mxu0 0.0
  %2424 = vmatprep.subr.mxu0 0.0
  %2425 = vmatpush1.msra.mxu0 0.0
  %2426 = vmatprep.subr.mxu0 0.0
  %2427 = vmatpush1.msra.mxu0 0.0
  %2428 = vmatprep.subr.mxu0 0.0
  %2429 = vmatpush1.msra.mxu0 0.0
  %2430 = vmatprep.subr.mxu0 0.0
  %2431 = vmatpush1.msra.mxu0 0.0
  %2432 = vmatprep.subr.mxu0 0.0
  %2433 = vmatpush1.msra.mxu0 0.0
  %2434 = vmatprep.subr.mxu0 0.0
  %2435 = vmatpush1.msra.mxu0 0.0
  %2436 = vmatprep.subr.mxu0 0.0
  %2437 = vmatpush1.msra.mxu0 0.0
  %2438 = vmatprep.subr.mxu0 0.0
  %2439 = vmatpush1.msra.mxu0 0.0
  %2440 = vmatprep.subr.mxu0 0.0
  %2441 = vmatpush1.msra.mxu0 0.0
  %2442 = vmatprep.subr.mxu0 0.0
  %2443 = vmatpush1.msra.mxu0 0.0
  %2444 = vmatprep.subr.mxu0 0.0
  %2445 = vmatpush1.msra.mxu0 0.0
  %2446 = vmatprep.subr.mxu0 0.0
  %2447 = vmatpush1.msra.mxu0 0.0
  %2448 = vmatprep.mubr.f32.mxu0 0.0
  %2449 = vmatmul.mubr.f32.gmra.mrb[0].mxu0 %v2383
  %v2450 = vpop.f32.mrb[0].mxu0
  %v2451 = vadd.f32 0.0, %v2450
  %v2452 = vpop.f32.mrb[0].mxu0
  %2453 = vdwg.mxu0
  %v2454 = vxor.u32 %v2451, 2147483648
  %v2455 = vmul.f32 %v2454, 1.442695
  %v2456 = vpow.pop %v2455
  %v2457 = vadd.f32 %v2456, 1.0
  %v2458 = vrcp.pop %v2457
  %v2459 = vmul.f32 1.0, %v2458
  %s2460 = scalar_lea.vmem [#allocation3], 10
  %2461 = vst [vmem:[%s2460] sm:$0x3] %v2459
  %v2462 = vld [vmem:[%s547] sm:$0x3]
  %2463 = vmatprep.subr.mxu0 0.0
  %2464 = vmatpush1.msra.mxu0 %v1973
  %2465 = vmatprep.subr.mxu0 0.0
  %2466 = vmatpush1.msra.mxu0 %v1974
  %2467 = vmatprep.subr.mxu0 0.0
  %2468 = vmatpush1.msra.mxu0 %v1975
  %2469 = vmatprep.subr.mxu0 0.0
  %2470 = vmatpush1.msra.mxu0 %v1976
  %2471 = vmatprep.subr.mxu0 0.0
  %2472 = vmatpush1.msra.mxu0 %v1977
  %2473 = vmatprep.subr.mxu0 0.0
  %2474 = vmatpush1.msra.mxu0 %v1978
  %2475 = vmatprep.subr.mxu0 0.0
  %2476 = vmatpush1.msra.mxu0 %v1979
  %2477 = vmatprep.subr.mxu0 0.0
  %2478 = vmatpush1.msra.mxu0 %v1980
  %2479 = vmatprep.subr.mxu0 0.0
  %2480 = vmatpush1.msra.mxu0 %v1981
  %2481 = vmatprep.subr.mxu0 0.0
  %2482 = vmatpush1.msra.mxu0 %v1982
  %2483 = vmatprep.subr.mxu0 0.0
  %2484 = vmatpush1.msra.mxu0 %v1983
  %2485 = vmatprep.subr.mxu0 0.0
  %2486 = vmatpush1.msra.mxu0 %v1984
  %2487 = vmatprep.subr.mxu0 0.0
  %2488 = vmatpush1.msra.mxu0 %v1985
  %2489 = vmatprep.subr.mxu0 0.0
  %2490 = vmatpush1.msra.mxu0 %v1986
  %2491 = vmatprep.subr.mxu0 0.0
  %2492 = vmatpush1.msra.mxu0 %v1987
  %2493 = vmatprep.subr.mxu0 0.0
  %2494 = vmatpush1.msra.mxu0 %v1988
  %2495 = vmatprep.subr.mxu0 0.0
  %2496 = vmatpush1.msra.mxu0 0.0
  %2497 = vmatprep.subr.mxu0 0.0
  %2498 = vmatpush1.msra.mxu0 0.0
  %2499 = vmatprep.subr.mxu0 0.0
  %2500 = vmatpush1.msra.mxu0 0.0
  %2501 = vmatprep.subr.mxu0 0.0
  %2502 = vmatpush1.msra.mxu0 0.0
  %2503 = vmatprep.subr.mxu0 0.0
  %2504 = vmatpush1.msra.mxu0 0.0
  %2505 = vmatprep.subr.mxu0 0.0
  %2506 = vmatpush1.msra.mxu0 0.0
  %2507 = vmatprep.subr.mxu0 0.0
  %2508 = vmatpush1.msra.mxu0 0.0
  %2509 = vmatprep.subr.mxu0 0.0
  %2510 = vmatpush1.msra.mxu0 0.0
  %2511 = vmatprep.subr.mxu0 0.0
  %2512 = vmatpush1.msra.mxu0 0.0
  %2513 = vmatprep.subr.mxu0 0.0
  %2514 = vmatpush1.msra.mxu0 0.0
  %2515 = vmatprep.subr.mxu0 0.0
  %2516 = vmatpush1.msra.mxu0 0.0
  %2517 = vmatprep.subr.mxu0 0.0
  %2518 = vmatpush1.msra.mxu0 0.0
  %2519 = vmatprep.subr.mxu0 0.0
  %2520 = vmatpush1.msra.mxu0 0.0
  %2521 = vmatprep.subr.mxu0 0.0
  %2522 = vmatpush1.msra.mxu0 0.0
  %2523 = vmatprep.subr.mxu0 0.0
  %2524 = vmatpush1.msra.mxu0 0.0
  %2525 = vmatprep.subr.mxu0 0.0
  %2526 = vmatpush1.msra.mxu0 0.0
  %2527 = vmatprep.mubr.f32.mxu0 0.0
  %2528 = vmatmul.mubr.f32.gmra.mrb[0].mxu0 %v2462
  %v2529 = vpop.f32.mrb[0].mxu0
  %v2530 = vadd.f32 0.0, %v2529
  %v2531 = vpop.f32.mrb[0].mxu0
  %2532 = vdwg.mxu0
  %v2533 = vxor.u32 %v2530, 2147483648
  %v2534 = vmul.f32 %v2533, 1.442695
  %v2535 = vpow.pop %v2534
  %v2536 = vadd.f32 %v2535, 1.0
  %v2537 = vrcp.pop %v2536
  %v2538 = vmul.f32 1.0, %v2537
  %s2539 = scalar_lea.vmem [#allocation3], 12
  %2540 = vst [vmem:[%s2539] sm:$0x3] %v2538
  %v2541 = vld [vmem:[%s306] sm:$0x3]
  %2542 = vmatprep.subr.mxu0 0.0
  %2543 = vmatpush1.msra.mxu0 %v1973
  %2544 = vmatprep.subr.mxu0 0.0
  %2545 = vmatpush1.msra.mxu0 %v1974
  %2546 = vmatprep.subr.mxu0 0.0
  %2547 = vmatpush1.msra.mxu0 %v1975
  %2548 = vmatprep.subr.mxu0 0.0
  %2549 = vmatpush1.msra.mxu0 %v1976
  %2550 = vmatprep.subr.mxu0 0.0
  %2551 = vmatpush1.msra.mxu0 %v1977
  %2552 = vmatprep.subr.mxu0 0.0
  %2553 = vmatpush1.msra.mxu0 %v1978
  %2554 = vmatprep.subr.mxu0 0.0
  %2555 = vmatpush1.msra.mxu0 %v1979
  %2556 = vmatprep.subr.mxu0 0.0
  %2557 = vmatpush1.msra.mxu0 %v1980
  %2558 = vmatprep.subr.mxu0 0.0
  %2559 = vmatpush1.msra.mxu0 %v1981
  %2560 = vmatprep.subr.mxu0 0.0
  %2561 = vmatpush1.msra.mxu0 %v1982
  %2562 = vmatprep.subr.mxu0 0.0
  %2563 = vmatpush1.msra.mxu0 %v1983
  %2564 = vmatprep.subr.mxu0 0.0
  %2565 = vmatpush1.msra.mxu0 %v1984
  %2566 = vmatprep.subr.mxu0 0.0
  %2567 = vmatpush1.msra.mxu0 %v1985
  %2568 = vmatprep.subr.mxu0 0.0
  %2569 = vmatpush1.msra.mxu0 %v1986
  %2570 = vmatprep.subr.mxu0 0.0
  %2571 = vmatpush1.msra.mxu0 %v1987
  %2572 = vmatprep.subr.mxu0 0.0
  %2573 = vmatpush1.msra.mxu0 %v1988
  %2574 = vmatprep.subr.mxu0 0.0
  %2575 = vmatpush1.msra.mxu0 0.0
  %2576 = vmatprep.subr.mxu0 0.0
  %2577 = vmatpush1.msra.mxu0 0.0
  %2578 = vmatprep.subr.mxu0 0.0
  %2579 = vmatpush1.msra.mxu0 0.0
  %2580 = vmatprep.subr.mxu0 0.0
  %2581 = vmatpush1.msra.mxu0 0.0
  %2582 = vmatprep.subr.mxu0 0.0
  %2583 = vmatpush1.msra.mxu0 0.0
  %2584 = vmatprep.subr.mxu0 0.0
  %2585 = vmatpush1.msra.mxu0 0.0
  %2586 = vmatprep.subr.mxu0 0.0
  %2587 = vmatpush1.msra.mxu0 0.0
  %2588 = vmatprep.subr.mxu0 0.0
  %2589 = vmatpush1.msra.mxu0 0.0
  %2590 = vmatprep.subr.mxu0 0.0
  %2591 = vmatpush1.msra.mxu0 0.0
  %2592 = vmatprep.subr.mxu0 0.0
  %2593 = vmatpush1.msra.mxu0 0.0
  %2594 = vmatprep.subr.mxu0 0.0
  %2595 = vmatpush1.msra.mxu0 0.0
  %2596 = vmatprep.subr.mxu0 0.0
  %2597 = vmatpush1.msra.mxu0 0.0
  %2598 = vmatprep.subr.mxu0 0.0
  %2599 = vmatpush1.msra.mxu0 0.0
  %2600 = vmatprep.subr.mxu0 0.0
  %2601 = vmatpush1.msra.mxu0 0.0
  %2602 = vmatprep.subr.mxu0 0.0
  %2603 = vmatpush1.msra.mxu0 0.0
  %2604 = vmatprep.subr.mxu0 0.0
  %2605 = vmatpush1.msra.mxu0 0.0
  %2606 = vmatprep.mubr.f32.mxu0 0.0
  %2607 = vmatmul.mubr.f32.gmra.mrb[0].mxu0 %v2541
  %v2608 = vpop.f32.mrb[0].mxu0
  %v2609 = vadd.f32 0.0, %v2608
  %v2610 = vpop.f32.mrb[0].mxu0
  %2611 = vdwg.mxu0
  %v2612 = vxor.u32 %v2609, 2147483648
  %v2613 = vmul.f32 %v2612, 1.442695
  %v2614 = vpow.pop %v2613
  %v2615 = vadd.f32 %v2614, 1.0
  %v2616 = vrcp.pop %v2615
  %v2617 = vmul.f32 1.0, %v2616
  %s2618 = scalar_lea.vmem [#allocation3], 14
  %2619 = vst [vmem:[%s2618] sm:$0x3] %v2617
  %v2620 = vld [vmem:[#allocation2] sm:$0x3]
  %2621 = vst [vmem:[%s6] sm:$0x3] %v2620
  %v2622 = vld [vmem:[%s534] sm:$0x3]
  %v2623 = vld [vmem:[%s2144] sm:$0x3]
  %v2624 = vmul.f32 %v2623, %v2622
  %v2625 = vsub.f32 1.0, %v2623
  %v2626 = vmul.f32 %v2625, %v2620
  %v2627 = vadd.f32 %v2624, %v2626
  %s2628 = scalar_lea.vmem %s6, 2
  %2629 = vst [vmem:[%s2628] sm:$0x3] %v2627
  %v2630 = vld [vmem:[%s774] sm:$0x3]
  %v2631 = vld [vmem:[%s2223] sm:$0x3]
  %v2632 = vmul.f32 %v2631, %v2630
  %v2633 = vsub.f32 1.0, %v2631
  %v2634 = vmul.f32 %v2633, %v2627
  %v2635 = vadd.f32 %v2632, %v2634
  %s2636 = scalar_lea.vmem %s6, 4
  %2637 = vst [vmem:[%s2636] sm:$0x3] %v2635
  %v2638 = vld [vmem:[%s1014] sm:$0x3]
  %v2639 = vld [vmem:[%s2302] sm:$0x3]
  %v2640 = vmul.f32 %v2639, %v2638
  %v2641 = vsub.f32 1.0, %v2639
  %v2642 = vmul.f32 %v2641, %v2635
  %v2643 = vadd.f32 %v2640, %v2642
  %s2644 = scalar_lea.vmem %s6, 6
  %2645 = vst [vmem:[%s2644] sm:$0x3] %v2643
  %v2646 = vld [vmem:[%s1027] sm:$0x3]
  %v2647 = vld [vmem:[%s2381] sm:$0x3]
  %v2648 = vmul.f32 %v2647, %v2646
  %v2649 = vsub.f32 1.0, %v2647
  %v2650 = vmul.f32 %v2649, %v2643
  %v2651 = vadd.f32 %v2648, %v2650
  %s2652 = scalar_lea.vmem %s6, 8
  %2653 = vst [vmem:[%s2652] sm:$0x3] %v2651
  %v2654 = vld [vmem:[%s787] sm:$0x3]
  %v2655 = vld [vmem:[%s2460] sm:$0x3]
  %v2656 = vmul.f32 %v2655, %v2654
  %v2657 = vsub.f32 1.0, %v2655
  %v2658 = vmul.f32 %v2657, %v2651
  %v2659 = vadd.f32 %v2656, %v2658
  %s2660 = scalar_lea.vmem %s6, 10
  %2661 = vst [vmem:[%s2660] sm:$0x3] %v2659
  %v2662 = vld [vmem:[%s547] sm:$0x3]
  %v2663 = vld [vmem:[%s2539] sm:$0x3]
  %v2664 = vmul.f32 %v2663, %v2662
  %v2665 = vsub.f32 1.0, %v2663
  %v2666 = vmul.f32 %v2665, %v2659
  %v2667 = vadd.f32 %v2664, %v2666
  %s2668 = scalar_lea.vmem %s6, 12
  %2669 = vst [vmem:[%s2668] sm:$0x3] %v2667
  %v2670 = vld [vmem:[%s306] sm:$0x3]
  %v2671 = vld [vmem:[%s2618] sm:$0x3]
  %v2672 = vmul.f32 %v2671, %v2670
  %v2673 = vsub.f32 1.0, %v2671
  %v2674 = vmul.f32 %v2673, %v2667
  %v2675 = vadd.f32 %v2672, %v2674
  %s2676 = scalar_lea.vmem %s6, 14
  %2677 = vst [vmem:[%s2676] sm:$0x3] %v2675
  // Predicated region
  $region26: #{token_indicator_forward.8} parent=0 // pred_check
    _
  $region27: #{token_indicator_forward.8} parent=0 // pred_check_branch
    %2679 = sbr.rel (0) target = $region29
  $region28: #{token_indicator_forward.8} parent=0 // pred_region
    _
  $region29: #{token_indicator_forward.8} parent=0 // pred_fallthru
    _
  // Predicated region
  $region30: #{token_indicator_forward.8} parent=0 // pred_check
    _
  $region31: #{token_indicator_forward.8} parent=0 // pred_check_branch
    %2681 = sbr.rel (0) target = $region33
  $region32: #{token_indicator_forward.8} parent=0 // pred_region
    _
  $region33: #{token_indicator_forward.8} parent=0 // pred_fallthru
    _

</llo_original>
